<compile_context>
chip_gen: v7x
topology: tpu7x:2x2x1
jax: 0.10.0
libtpu: 0.0.40
codegen_flags: <defaults>
</compile_context>

<pallas_src>
import functools

import jax
import jax.numpy as jnp
from jax.experimental import pallas as pl
from jax.experimental.pallas import tpu as pltpu


# ----------------------------------------------------------------------------
# Fused encoder kernel
# ----------------------------------------------------------------------------
def _make_encoder_kernel(layer_cfg, latent_dim, nb, compute_dtype):
    """Builds the fused kernel.

    layer_cfg: tuple of (cin, cout, H, W, pool_after) per conv layer; H, W are
               the layer *input* spatial size (== output size, stride 1 pad 1).
    """
    n_layers = len(layer_cfg)
    taps = [(di, dj) for di in range(3) for dj in range(3)]

    # Final feature-map geometry (after the optional pool of the last layer).
    hf, wf = layer_cfg[-1][2], layer_cfg[-1][3]
    if layer_cfg[-1][4]:
        hf, wf = hf // 2, wf // 2
    cf = layer_cfg[-1][1]
    feat_dim = hf * wf * cf

    def kernel(*refs):
        # ---- unpack refs: inputs, outputs, scratch ----
        x_ref = refs[0]
        w_refs = refs[1:1 + n_layers]                 # (9*cin, cout) each
        b_refs = refs[1 + n_layers:1 + 2 * n_layers]  # (1, cout) each
        fcw_ref = refs[1 + 2 * n_layers]              # (feat_dim, 2*latent)
        fcb_ref = refs[2 + 2 * n_layers]              # (1, 2*latent)
        mu_ref = refs[3 + 2 * n_layers]               # (nb, latent)
        sig_ref = refs[4 + 2 * n_layers]              # (nb, latent)
        patch_refs = refs[5 + 2 * n_layers:5 + 3 * n_layers]
        feat_ref = refs[5 + 3 * n_layers]             # (nb, 1, feat_dim)

        x = x_ref[...].astype(compute_dtype)          # (nb, H0, W0, C0)

        for l, (cin, cout, H, W, pool) in enumerate(layer_cfg):
            # -------- im2col patch build in VMEM (zero fill == pad=1) --------
            pr = patch_refs[l]                        # (nb, H, W, 9*cin)
            pr[...] = jnp.zeros(pr.shape, pr.dtype)
            for t, (di, dj) in enumerate(taps):
                oi0, oi1 = max(0, 1 - di), min(H, H + 1 - di)
                oj0, oj1 = max(0, 1 - dj), min(W, W + 1 - dj)
                si0, sj0 = oi0 + di - 1, oj0 + dj - 1
                pr[:, oi0:oi1, oj0:oj1, t * cin:(t + 1) * cin] = (
                    x[:, si0:si0 + (oi1 - oi0), sj0:sj0 + (oj1 - oj0), :])
            patches = pr[...].reshape(nb * H * W, 9 * cin)

            # -------- one MXU matmul + bias + LeakyReLU(0.01) in f32 --------
            acc = jnp.dot(patches, w_refs[l][...],
                          preferred_element_type=jnp.float32)
            acc = acc + b_refs[l][...]
            acc = jnp.maximum(acc, 0.01 * acc)        # (nb*H*W, cout)

            # -------- fused 2x2 max-pool epilogue (floors odd dims) ---------
            if pool:
                hp, wp = H // 2, W // 2
                y = acc.reshape(nb, H, W, cout)
                if (2 * hp != H) or (2 * wp != W):
                    y = y[:, :2 * hp, :2 * wp, :]
                # pool along W: pair adjacent columns
                t2 = y.reshape(nb * 2 * hp * wp, 2, cout)
                wmax = jnp.maximum(t2[:, 0:1, :], t2[:, 1:2, :])
                # pool along H: pair adjacent rows
                t3 = wmax.reshape(nb * hp, 2, wp, cout)
                y = jnp.maximum(t3[:, 0, :, :], t3[:, 1, :, :])
                x = y.reshape(nb, hp, wp, cout).astype(compute_dtype)
            else:
                x = acc.reshape(nb, H, W, cout).astype(compute_dtype)

        # ---- flatten (PyTorch (C,H,W) order handled by permuted FC weight,
        #      kernel flattens in (i, j, c) order via lane-offset stores) ----
        for i in range(hf):
            for j in range(wf):
                off = (i * wf + j) * cf
                feat_ref[:, :, off:off + cf] = x[:, i, j:j + 1, :]
        feats = feat_ref[...].reshape(nb, feat_dim)

        # ---- Linear -> split -> (mu, softplus(sigma)) ----
        z = jnp.dot(feats, fcw_ref[...], preferred_element_type=jnp.float32)
        z = z + fcb_ref[...]
        mu_ref[...] = z[:, :latent_dim].astype(mu_ref.dtype)
        s = z[:, latent_dim:]
        sp = jnp.maximum(s, 0.0) + jnp.log(1.0 + jnp.exp(-jnp.abs(s)))
        sig_ref[...] = sp.astype(sig_ref.dtype)

    return kernel


# ----------------------------------------------------------------------------
# Forward wrapper (single pallas_call)
# ----------------------------------------------------------------------------
@functools.partial(jax.jit, static_argnames=("plan", "latent_dim",
                                             "block_batch", "compute_dtype"))
def conv_encoder_forward(x_nchw, params, plan, latent_dim,
                         block_batch=32, compute_dtype=jnp.float32):
    """x_nchw: (N, C, H, W) like PyTorch. Returns (mu, sigma), each (N, L)."""
    N, C0, H0, W0 = x_nchw.shape
    x = jnp.transpose(x_nchw, (0, 2, 3, 1))           # NCHW -> NHWC (input only)

    # ---- batch chunking (one grid step per chunk of nb images) ----
    if N <= block_batch:
        nb, npad = N, N
    else:
        assert block_batch % 8 == 0, "block_batch must be a multiple of 8"
        nb = block_batch
        npad = pl.cdiv(N, nb) * nb
    if npad != N:
        x = jnp.pad(x, ((0, npad - N), (0, 0), (0, 0), (0, 0)))

    # ---- static per-layer geometry + kernel-friendly parameter packing ----
    layer_cfg, wmats, biases = [], [], []
    h, w, cin = H0, W0, C0
    for (cw, cb), pool in zip(params["conv"], plan):
        cout = cw.shape[-1]
        layer_cfg.append((cin, cout, h, w, bool(pool)))
        wmats.append(cw.reshape(9 * cin, cout).astype(compute_dtype))
        biases.append(cb.reshape(1, cout).astype(jnp.float32))
        if pool:
            h, w = h // 2, w // 2
        cin = cout
    hf, wf, cf = h, w, cin
    feat_dim = hf * wf * cf
    two_l = 2 * latent_dim

    # FC weight rows are stored in PyTorch's view(-1, C*H*W) order (c, i, j);
    # permute once to the kernel's (i, j, c) flatten order (trace-time only).
    fc_w = params["fc_w"].reshape(cf, hf, wf, two_l)
    fc_w = jnp.transpose(fc_w, (1, 2, 0, 3)).reshape(feat_dim, two_l)
    fc_w = fc_w.astype(compute_dtype)
    fc_b = params["fc_b"].reshape(1, two_l).astype(jnp.float32)

    kernel = _make_encoder_kernel(tuple(layer_cfg), latent_dim, nb,
                                  compute_dtype)

    def const(shape):
        return pl.BlockSpec(shape, lambda n, _r=len(shape): (0,) * _r)

    in_specs = [pl.BlockSpec((nb, H0, W0, C0), lambda n: (n, 0, 0, 0))]
    in_specs += [const(wm.shape) for wm in wmats]
    in_specs += [const(bm.shape) for bm in biases]
    in_specs += [const(fc_w.shape), const(fc_b.shape)]

    scratch = [pltpu.VMEM((nb, H, W, 9 * ci), compute_dtype)
               for (ci, co, H, W, p) in layer_cfg]
    scratch.append(pltpu.VMEM((nb, 1, feat_dim), compute_dtype))

    mu, sigma = pl.pallas_call(
        kernel,
        out_shape=(jax.ShapeDtypeStruct((npad, latent_dim), jnp.float32),
                   jax.ShapeDtypeStruct((npad, latent_dim), jnp.float32)),
        grid_spec=pltpu.PrefetchScalarGridSpec(
            num_scalar_prefetch=0,
            grid=(npad // nb,),
            in_specs=in_specs,
            out_specs=[pl.BlockSpec((nb, latent_dim), lambda n: (n, 0)),
                       pl.BlockSpec((nb, latent_dim), lambda n: (n, 0))],
            scratch_shapes=scratch),
        compiler_params=pltpu.CompilerParams(
            dimension_semantics=("parallel",)),
    )(x, *wmats, *biases, fc_w, fc_b)
    return mu[:N], sigma[:N]


# ----------------------------------------------------------------------------
# Parameter construction (mirrors convEncoderNet / FeatureExtractor)
# ----------------------------------------------------------------------------
def build_conv_encoder(key, input_dim, latent_dim, input_channels, hidden_dim,
                       pool_last=False):
    """Deterministic params + pooling plan.

    Pool placement reproduces pyroved's FeatureExtractor verbatim: after each
    conv block a MaxPool(2,2) is appended iff `j + 1 < total_convs` (j = convs
    emitted so far), else iff pool_last.
    """
    total = sum(len(b) for b in hidden_dim)
    layer_ch, plan = [], []
    ch_in = input_channels
    j = 0
    for blk in hidden_dim:
        for ch in blk:
            layer_ch.append((ch_in, ch))
            plan.append(False)
            ch_in = ch
            j += 1
        if (j + 1 < total) or pool_last:
            plan[-1] = True

    conv_params = []
    for cin, cout in layer_ch:
        key, kw_, kb_ = jax.random.split(key, 3)
        fan_in = 9 * cin
        w = jax.random.normal(kw_, (3, 3, cin, cout), jnp.float32) / jnp.sqrt(fan_in)
        b = 0.01 * jax.random.normal(kb_, (cout,), jnp.float32)
        conv_params.append((w, b))

    # Spatial size after the pools the FeatureExtractor actually applies
    # (matches convEncoderNet's 2**(len(hidden_dim)-1) formula whenever that
    # PyTorch module is constructible at all).
    out_h, out_w = input_dim
    for p in plan:
        if p:
            out_h, out_w = out_h // 2, out_w // 2
    feat_dim = layer_ch[-1][1] * out_h * out_w

    key, kw_, kb_ = jax.random.split(key, 3)
    fc_w = jax.random.normal(kw_, (feat_dim, 2 * latent_dim),
                             jnp.float32) / jnp.sqrt(feat_dim)
    fc_b = 0.01 * jax.random.normal(kb_, (2 * latent_dim,), jnp.float32)

    params = {"conv": conv_params, "fc_w": fc_w, "fc_b": fc_b}
    return params, tuple(plan)


# ----------------------------------------------------------------------------
# Pure-JAX reference (for correctness check)
# ----------------------------------------------------------------------------
def _reference_forward(x_nchw, params, plan, latent_dim):
    x = jnp.transpose(x_nchw, (0, 2, 3, 1))
    for (w, b), pool in zip(params["conv"], plan):
        x = jax.lax.conv_general_dilated(
            x, w, window_strides=(1, 1), padding=((1, 1), (1, 1)),
            dimension_numbers=("NHWC", "HWIO", "NHWC"))
        x = x + b
        x = jnp.where(x >= 0, x, 0.01 * x)
        if pool:
            x = jax.lax.reduce_window(x, -jnp.inf, jax.lax.max,
                                      (1, 2, 2, 1), (1, 2, 2, 1), "VALID")
    x = jnp.transpose(x, (0, 3, 1, 2)).reshape(x.shape[0], -1)
    z = x @ params["fc_w"] + params["fc_b"]
    return z[:, :latent_dim], jax.nn.softplus(z[:, latent_dim:])


# ----------------------------------------------------------------------------
if __name__ == "__main__":
    # Small config consistent with the module:
    #   convEncoderNet(input_dim=(16,16), latent_dim=2, input_channels=1,
    #                  hidden_dim=[(8,), (16, 16), (32, 32)], pool_last=False)
    input_dim = (16, 16)
    latent_dim = 2
    input_channels = 1
    hidden_dim = ((8,), (16, 16), (32, 32))
    batch = 2

    key = jax.random.PRNGKey(0)
    key, pkey, xkey = jax.random.split(key, 3)
    params, plan = build_conv_encoder(pkey, input_dim, latent_dim,
                                      input_channels, hidden_dim,
                                      pool_last=False)
    x = jax.random.normal(xkey, (batch, input_channels, *input_dim),
                          jnp.float32)

    mu, sigma = conv_encoder_forward(x, params, plan=plan,
                                     latent_dim=latent_dim)
    jax.block_until_ready((mu, sigma))

    assert mu.shape == (batch, latent_dim), mu.shape
    assert sigma.shape == (batch, latent_dim), sigma.shape
    assert bool(jnp.all(sigma >= 0.0)), "softplus output must be non-negative"
    assert bool(jnp.all(jnp.isfinite(mu))) and bool(jnp.all(jnp.isfinite(sigma)))

    mu_ref, sigma_ref = _reference_forward(x, params, plan, latent_dim)
    assert bool(jnp.allclose(mu, mu_ref, atol=1e-4, rtol=1e-4)), (mu, mu_ref)
    assert bool(jnp.allclose(sigma, sigma_ref, atol=1e-4, rtol=1e-4)), (
        sigma, sigma_ref)

    print("KERNEL_OK")
</pallas_src>

<mosaic_0001>
module attributes {stable_mosaic.version = 11 : i64} {
  func.func @kernel(%arg0: i32, %arg1: memref<2x16x16x1xf32, #tpu.memory_space<vmem>>, %arg2: memref<9x8xf32, #tpu.memory_space<vmem>>, %arg3: memref<72x16xf32, #tpu.memory_space<vmem>>, %arg4: memref<144x16xf32, #tpu.memory_space<vmem>>, %arg5: memref<144x32xf32, #tpu.memory_space<vmem>>, %arg6: memref<288x32xf32, #tpu.memory_space<vmem>>, %arg7: memref<1x8xf32, #tpu.memory_space<vmem>>, %arg8: memref<1x16xf32, #tpu.memory_space<vmem>>, %arg9: memref<1x16xf32, #tpu.memory_space<vmem>>, %arg10: memref<1x32xf32, #tpu.memory_space<vmem>>, %arg11: memref<1x32xf32, #tpu.memory_space<vmem>>, %arg12: memref<512x4xf32, #tpu.memory_space<vmem>>, %arg13: memref<1x4xf32, #tpu.memory_space<vmem>>, %arg14: memref<2x2xf32, #tpu.memory_space<vmem>>, %arg15: memref<2x2xf32, #tpu.memory_space<vmem>>, %arg16: memref<2x16x16x9xf32, #tpu.memory_space<vmem>>, %arg17: memref<2x8x8x72xf32, #tpu.memory_space<vmem>>, %arg18: memref<2x8x8x144xf32, #tpu.memory_space<vmem>>, %arg19: memref<2x4x4x144xf32, #tpu.memory_space<vmem>>, %arg20: memref<2x4x4x288xf32, #tpu.memory_space<vmem>>, %arg21: memref<2x1x512xf32, #tpu.memory_space<vmem>>) attributes {dimension_semantics = [#tpu.dimension_semantics<parallel>], iteration_bounds = array<i64: 1>, scalar_prefetch = 0 : i64, scratch_operands = 6 : i64, tpu.core_type = #tpu.core_type<tc>, window_params = [{transform_indices = @transform_0, window_bounds = array<i64: 2, 16, 16, 1>}, {pipeline_mode = #tpu.pipeline_mode<synchronous>, transform_indices = @transform_1, window_bounds = array<i64: 9, 8>}, {pipeline_mode = #tpu.pipeline_mode<synchronous>, transform_indices = @transform_2, window_bounds = array<i64: 72, 16>}, {pipeline_mode = #tpu.pipeline_mode<synchronous>, transform_indices = @transform_3, window_bounds = array<i64: 144, 16>}, {pipeline_mode = #tpu.pipeline_mode<synchronous>, transform_indices = @transform_4, window_bounds = array<i64: 144, 32>}, {pipeline_mode = #tpu.pipeline_mode<synchronous>, transform_indices = @transform_5, window_bounds = array<i64: 288, 32>}, {pipeline_mode = #tpu.pipeline_mode<synchronous>, transform_indices = @transform_6, window_bounds = array<i64: 1, 8>}, {pipeline_mode = #tpu.pipeline_mode<synchronous>, transform_indices = @transform_7, window_bounds = array<i64: 1, 16>}, {pipeline_mode = #tpu.pipeline_mode<synchronous>, transform_indices = @transform_8, window_bounds = array<i64: 1, 16>}, {pipeline_mode = #tpu.pipeline_mode<synchronous>, transform_indices = @transform_9, window_bounds = array<i64: 1, 32>}, {pipeline_mode = #tpu.pipeline_mode<synchronous>, transform_indices = @transform_10, window_bounds = array<i64: 1, 32>}, {pipeline_mode = #tpu.pipeline_mode<synchronous>, transform_indices = @transform_11, window_bounds = array<i64: 512, 4>}, {pipeline_mode = #tpu.pipeline_mode<synchronous>, transform_indices = @transform_12, window_bounds = array<i64: 1, 4>}, {transform_indices = @transform_13, window_bounds = array<i64: 2, 2>}, {transform_indices = @transform_14, window_bounds = array<i64: 2, 2>}]} {
    %c0 = arith.constant 0 : index
    %c0_0 = arith.constant 0 : index
    %c0_1 = arith.constant 0 : index
    %c0_2 = arith.constant 0 : index
    %0 = vector.load %arg1[%c0, %c0_0, %c0_1, %c0_2] : memref<2x16x16x1xf32, #tpu.memory_space<vmem>>, vector<2x16x16x1xf32>
    %cst = arith.constant 0.000000e+00 : f32
    %1 = vector.broadcast %cst : f32 to vector<2x16x16x9xf32>
    %c0_3 = arith.constant 0 : index
    %c0_4 = arith.constant 0 : index
    %c0_5 = arith.constant 0 : index
    %c0_6 = arith.constant 0 : index
    %2 = vector.load %arg16[%c0_3, %c0_4, %c0_5, %c0_6] : memref<2x16x16x9xf32, #tpu.memory_space<vmem>>, vector<2x16x16x9xf32>
    tpu.vector_store %arg16[%c0_3, %c0_4, %c0_5, %c0_6], %1 {strides = array<i32>} : memref<2x16x16x9xf32, #tpu.memory_space<vmem>>, vector<2x16x16x9xf32>,
    %3 = vector.extract_strided_slice %0 {offsets = [0, 0, 0, 0], sizes = [2, 15, 15, 1], strides = [1, 1, 1, 1]} : vector<2x16x16x1xf32> to vector<2x15x15x1xf32>
    %c0_7 = arith.constant 0 : index
    %c1 = arith.constant 1 : index
    %c1_8 = arith.constant 1 : index
    %c0_9 = arith.constant 0 : index
    %4 = vector.load %arg16[%c0_7, %c1, %c1_8, %c0_9] : memref<2x16x16x9xf32, #tpu.memory_space<vmem>>, vector<2x15x15x1xf32>
    tpu.vector_store %arg16[%c0_7, %c1, %c1_8, %c0_9], %3 {strides = array<i32>} : memref<2x16x16x9xf32, #tpu.memory_space<vmem>>, vector<2x15x15x1xf32>,
    %5 = vector.extract_strided_slice %0 {offsets = [0, 0, 0, 0], sizes = [2, 15, 16, 1], strides = [1, 1, 1, 1]} : vector<2x16x16x1xf32> to vector<2x15x16x1xf32>
    %c0_10 = arith.constant 0 : index
    %c1_11 = arith.constant 1 : index
    %c0_12 = arith.constant 0 : index
    %c1_13 = arith.constant 1 : index
    %6 = vector.load %arg16[%c0_10, %c1_11, %c0_12, %c1_13] : memref<2x16x16x9xf32, #tpu.memory_space<vmem>>, vector<2x15x16x1xf32>
    tpu.vector_store %arg16[%c0_10, %c1_11, %c0_12, %c1_13], %5 {strides = array<i32>} : memref<2x16x16x9xf32, #tpu.memory_space<vmem>>, vector<2x15x16x1xf32>,
    %7 = vector.extract_strided_slice %0 {offsets = [0, 0, 1, 0], sizes = [2, 15, 15, 1], strides = [1, 1, 1, 1]} : vector<2x16x16x1xf32> to vector<2x15x15x1xf32>
    %c0_14 = arith.constant 0 : index
    %c1_15 = arith.constant 1 : index
    %c0_16 = arith.constant 0 : index
    %c2 = arith.constant 2 : index
    %8 = vector.load %arg16[%c0_14, %c1_15, %c0_16, %c2] : memref<2x16x16x9xf32, #tpu.memory_space<vmem>>, vector<2x15x15x1xf32>
    tpu.vector_store %arg16[%c0_14, %c1_15, %c0_16, %c2], %7 {strides = array<i32>} : memref<2x16x16x9xf32, #tpu.memory_space<vmem>>, vector<2x15x15x1xf32>,
    %9 = vector.extract_strided_slice %0 {offsets = [0, 0, 0, 0], sizes = [2, 16, 15, 1], strides = [1, 1, 1, 1]} : vector<2x16x16x1xf32> to vector<2x16x15x1xf32>
    %c0_17 = arith.constant 0 : index
    %c0_18 = arith.constant 0 : index
    %c1_19 = arith.constant 1 : index
    %c3 = arith.constant 3 : index
    %10 = vector.load %arg16[%c0_17, %c0_18, %c1_19, %c3] : memref<2x16x16x9xf32, #tpu.memory_space<vmem>>, vector<2x16x15x1xf32>
    tpu.vector_store %arg16[%c0_17, %c0_18, %c1_19, %c3], %9 {strides = array<i32>} : memref<2x16x16x9xf32, #tpu.memory_space<vmem>>, vector<2x16x15x1xf32>,
    %c0_20 = arith.constant 0 : index
    %c0_21 = arith.constant 0 : index
    %c0_22 = arith.constant 0 : index
    %c4 = arith.constant 4 : index
    %11 = vector.load %arg16[%c0_20, %c0_21, %c0_22, %c4] : memref<2x16x16x9xf32, #tpu.memory_space<vmem>>, vector<2x16x16x1xf32>
    tpu.vector_store %arg16[%c0_20, %c0_21, %c0_22, %c4], %0 {strides = array<i32>} : memref<2x16x16x9xf32, #tpu.memory_space<vmem>>, vector<2x16x16x1xf32>,
    %12 = vector.extract_strided_slice %0 {offsets = [0, 0, 1, 0], sizes = [2, 16, 15, 1], strides = [1, 1, 1, 1]} : vector<2x16x16x1xf32> to vector<2x16x15x1xf32>
    %c0_23 = arith.constant 0 : index
    %c0_24 = arith.constant 0 : index
    %c0_25 = arith.constant 0 : index
    %c5 = arith.constant 5 : index
    %13 = vector.load %arg16[%c0_23, %c0_24, %c0_25, %c5] : memref<2x16x16x9xf32, #tpu.memory_space<vmem>>, vector<2x16x15x1xf32>
    tpu.vector_store %arg16[%c0_23, %c0_24, %c0_25, %c5], %12 {strides = array<i32>} : memref<2x16x16x9xf32, #tpu.memory_space<vmem>>, vector<2x16x15x1xf32>,
    %14 = vector.extract_strided_slice %0 {offsets = [0, 1, 0, 0], sizes = [2, 15, 15, 1], strides = [1, 1, 1, 1]} : vector<2x16x16x1xf32> to vector<2x15x15x1xf32>
    %c0_26 = arith.constant 0 : index
    %c0_27 = arith.constant 0 : index
    %c1_28 = arith.constant 1 : index
    %c6 = arith.constant 6 : index
    %15 = vector.load %arg16[%c0_26, %c0_27, %c1_28, %c6] : memref<2x16x16x9xf32, #tpu.memory_space<vmem>>, vector<2x15x15x1xf32>
    tpu.vector_store %arg16[%c0_26, %c0_27, %c1_28, %c6], %14 {strides = array<i32>} : memref<2x16x16x9xf32, #tpu.memory_space<vmem>>, vector<2x15x15x1xf32>,
    %16 = vector.extract_strided_slice %0 {offsets = [0, 1, 0, 0], sizes = [2, 15, 16, 1], strides = [1, 1, 1, 1]} : vector<2x16x16x1xf32> to vector<2x15x16x1xf32>
    %c0_29 = arith.constant 0 : index
    %c0_30 = arith.constant 0 : index
    %c0_31 = arith.constant 0 : index
    %c7 = arith.constant 7 : index
    %17 = vector.load %arg16[%c0_29, %c0_30, %c0_31, %c7] : memref<2x16x16x9xf32, #tpu.memory_space<vmem>>, vector<2x15x16x1xf32>
    tpu.vector_store %arg16[%c0_29, %c0_30, %c0_31, %c7], %16 {strides = array<i32>} : memref<2x16x16x9xf32, #tpu.memory_space<vmem>>, vector<2x15x16x1xf32>,
    %18 = vector.extract_strided_slice %0 {offsets = [0, 1, 1, 0], sizes = [2, 15, 15, 1], strides = [1, 1, 1, 1]} : vector<2x16x16x1xf32> to vector<2x15x15x1xf32>
    %c0_32 = arith.constant 0 : index
    %c0_33 = arith.constant 0 : index
    %c0_34 = arith.constant 0 : index
    %c8 = arith.constant 8 : index
    %19 = vector.load %arg16[%c0_32, %c0_33, %c0_34, %c8] : memref<2x16x16x9xf32, #tpu.memory_space<vmem>>, vector<2x15x15x1xf32>
    tpu.vector_store %arg16[%c0_32, %c0_33, %c0_34, %c8], %18 {strides = array<i32>} : memref<2x16x16x9xf32, #tpu.memory_space<vmem>>, vector<2x15x15x1xf32>,
    %c0_35 = arith.constant 0 : index
    %c0_36 = arith.constant 0 : index
    %c0_37 = arith.constant 0 : index
    %c0_38 = arith.constant 0 : index
    %20 = vector.load %arg16[%c0_35, %c0_36, %c0_37, %c0_38] : memref<2x16x16x9xf32, #tpu.memory_space<vmem>>, vector<2x16x16x9xf32>
    %21 = vector.shape_cast %20 : vector<2x16x16x9xf32> to vector<512x9xf32>
    %c0_39 = arith.constant 0 : index
    %c0_40 = arith.constant 0 : index
    %22 = vector.load %arg2[%c0_39, %c0_40] : memref<9x8xf32, #tpu.memory_space<vmem>>, vector<9x8xf32>
    %cst_41 = arith.constant dense<0.000000e+00> : vector<512x8xf32>
    %23 = tpu.matmul %21, %22, %cst_41 {dimension_numbers = #tpu.dot_dimension_numbers<[1], [0], [0], [1], [0, 0, 1, 1], [], []>} : vector<512x9xf32>, vector<9x8xf32>, vector<512x8xf32> -> vector<512x8xf32>
    %c0_42 = arith.constant 0 : index
    %c0_43 = arith.constant 0 : index
    %24 = vector.load %arg7[%c0_42, %c0_43] : memref<1x8xf32, #tpu.memory_space<vmem>>, vector<1x8xf32>
    %25 = vector.broadcast %24 : vector<1x8xf32> to vector<512x8xf32>
    %26 = arith.addf %23, %25 : vector<512x8xf32>
    %cst_44 = arith.constant 0.00999999977 : f32
    %27 = vector.broadcast %cst_44 : f32 to vector<512x8xf32>
    %28 = arith.mulf %27, %26 : vector<512x8xf32>
    %29 = arith.maximumf %26, %28 : vector<512x8xf32>
    %30 = vector.shape_cast %29 : vector<512x8xf32> to vector<2x16x16x8xf32>
    %31 = vector.shape_cast %30 : vector<2x16x16x8xf32> to vector<256x2x8xf32>
    %32 = vector.extract_strided_slice %31 {offsets = [0, 0, 0], sizes = [256, 1, 8], strides = [1, 1, 1]} : vector<256x2x8xf32> to vector<256x1x8xf32>
    %33 = vector.extract_strided_slice %31 {offsets = [0, 1, 0], sizes = [256, 1, 8], strides = [1, 1, 1]} : vector<256x2x8xf32> to vector<256x1x8xf32>
    %34 = arith.maximumf %32, %33 : vector<256x1x8xf32>
    %35 = vector.shape_cast %34 : vector<256x1x8xf32> to vector<16x2x8x8xf32>
    %36 = vector.extract_strided_slice %35 {offsets = [0, 0, 0, 0], sizes = [16, 1, 8, 8], strides = [1, 1, 1, 1]} : vector<16x2x8x8xf32> to vector<16x1x8x8xf32>
    %37 = vector.shape_cast %36 : vector<16x1x8x8xf32> to vector<16x8x8xf32>
    %38 = vector.extract_strided_slice %35 {offsets = [0, 1, 0, 0], sizes = [16, 1, 8, 8], strides = [1, 1, 1, 1]} : vector<16x2x8x8xf32> to vector<16x1x8x8xf32>
    %39 = vector.shape_cast %38 : vector<16x1x8x8xf32> to vector<16x8x8xf32>
    %40 = arith.maximumf %37, %39 : vector<16x8x8xf32>
    %41 = vector.shape_cast %40 : vector<16x8x8xf32> to vector<2x8x8x8xf32>
    %cst_45 = arith.constant 0.000000e+00 : f32
    %42 = vector.broadcast %cst_45 : f32 to vector<2x8x8x72xf32>
    %c0_46 = arith.constant 0 : index
    %c0_47 = arith.constant 0 : index
    %c0_48 = arith.constant 0 : index
    %c0_49 = arith.constant 0 : index
    %43 = vector.load %arg17[%c0_46, %c0_47, %c0_48, %c0_49] : memref<2x8x8x72xf32, #tpu.memory_space<vmem>>, vector<2x8x8x72xf32>
    tpu.vector_store %arg17[%c0_46, %c0_47, %c0_48, %c0_49], %42 {strides = array<i32>} : memref<2x8x8x72xf32, #tpu.memory_space<vmem>>, vector<2x8x8x72xf32>,
    %44 = vector.extract_strided_slice %41 {offsets = [0, 0, 0, 0], sizes = [2, 7, 7, 8], strides = [1, 1, 1, 1]} : vector<2x8x8x8xf32> to vector<2x7x7x8xf32>
    %c0_50 = arith.constant 0 : index
    %c1_51 = arith.constant 1 : index
    %c1_52 = arith.constant 1 : index
    %c0_53 = arith.constant 0 : index
    %45 = vector.load %arg17[%c0_50, %c1_51, %c1_52, %c0_53] : memref<2x8x8x72xf32, #tpu.memory_space<vmem>>, vector<2x7x7x8xf32>
    tpu.vector_store %arg17[%c0_50, %c1_51, %c1_52, %c0_53], %44 {strides = array<i32>} : memref<2x8x8x72xf32, #tpu.memory_space<vmem>>, vector<2x7x7x8xf32>,
    %46 = vector.extract_strided_slice %41 {offsets = [0, 0, 0, 0], sizes = [2, 7, 8, 8], strides = [1, 1, 1, 1]} : vector<2x8x8x8xf32> to vector<2x7x8x8xf32>
    %c0_54 = arith.constant 0 : index
    %c1_55 = arith.constant 1 : index
    %c0_56 = arith.constant 0 : index
    %c8_57 = arith.constant 8 : index
    %47 = vector.load %arg17[%c0_54, %c1_55, %c0_56, %c8_57] : memref<2x8x8x72xf32, #tpu.memory_space<vmem>>, vector<2x7x8x8xf32>
    tpu.vector_store %arg17[%c0_54, %c1_55, %c0_56, %c8_57], %46 {strides = array<i32>} : memref<2x8x8x72xf32, #tpu.memory_space<vmem>>, vector<2x7x8x8xf32>,
    %48 = vector.extract_strided_slice %41 {offsets = [0, 0, 1, 0], sizes = [2, 7, 7, 8], strides = [1, 1, 1, 1]} : vector<2x8x8x8xf32> to vector<2x7x7x8xf32>
    %c0_58 = arith.constant 0 : index
    %c1_59 = arith.constant 1 : index
    %c0_60 = arith.constant 0 : index
    %c16 = arith.constant 16 : index
    %49 = vector.load %arg17[%c0_58, %c1_59, %c0_60, %c16] : memref<2x8x8x72xf32, #tpu.memory_space<vmem>>, vector<2x7x7x8xf32>
    tpu.vector_store %arg17[%c0_58, %c1_59, %c0_60, %c16], %48 {strides = array<i32>} : memref<2x8x8x72xf32, #tpu.memory_space<vmem>>, vector<2x7x7x8xf32>,
    %50 = vector.extract_strided_slice %41 {offsets = [0, 0, 0, 0], sizes = [2, 8, 7, 8], strides = [1, 1, 1, 1]} : vector<2x8x8x8xf32> to vector<2x8x7x8xf32>
    %c0_61 = arith.constant 0 : index
    %c0_62 = arith.constant 0 : index
    %c1_63 = arith.constant 1 : index
    %c24 = arith.constant 24 : index
    %51 = vector.load %arg17[%c0_61, %c0_62, %c1_63, %c24] : memref<2x8x8x72xf32, #tpu.memory_space<vmem>>, vector<2x8x7x8xf32>
    tpu.vector_store %arg17[%c0_61, %c0_62, %c1_63, %c24], %50 {strides = array<i32>} : memref<2x8x8x72xf32, #tpu.memory_space<vmem>>, vector<2x8x7x8xf32>,
    %c0_64 = arith.constant 0 : index
    %c0_65 = arith.constant 0 : index
    %c0_66 = arith.constant 0 : index
    %c32 = arith.constant 32 : index
    %52 = vector.load %arg17[%c0_64, %c0_65, %c0_66, %c32] : memref<2x8x8x72xf32, #tpu.memory_space<vmem>>, vector<2x8x8x8xf32>
    tpu.vector_store %arg17[%c0_64, %c0_65, %c0_66, %c32], %41 {strides = array<i32>} : memref<2x8x8x72xf32, #tpu.memory_space<vmem>>, vector<2x8x8x8xf32>,
    %53 = vector.extract_strided_slice %41 {offsets = [0, 0, 1, 0], sizes = [2, 8, 7, 8], strides = [1, 1, 1, 1]} : vector<2x8x8x8xf32> to vector<2x8x7x8xf32>
    %c0_67 = arith.constant 0 : index
    %c0_68 = arith.constant 0 : index
    %c0_69 = arith.constant 0 : index
    %c40 = arith.constant 40 : index
    %54 = vector.load %arg17[%c0_67, %c0_68, %c0_69, %c40] : memref<2x8x8x72xf32, #tpu.memory_space<vmem>>, vector<2x8x7x8xf32>
    tpu.vector_store %arg17[%c0_67, %c0_68, %c0_69, %c40], %53 {strides = array<i32>} : memref<2x8x8x72xf32, #tpu.memory_space<vmem>>, vector<2x8x7x8xf32>,
    %55 = vector.extract_strided_slice %41 {offsets = [0, 1, 0, 0], sizes = [2, 7, 7, 8], strides = [1, 1, 1, 1]} : vector<2x8x8x8xf32> to vector<2x7x7x8xf32>
    %c0_70 = arith.constant 0 : index
    %c0_71 = arith.constant 0 : index
    %c1_72 = arith.constant 1 : index
    %c48 = arith.constant 48 : index
    %56 = vector.load %arg17[%c0_70, %c0_71, %c1_72, %c48] : memref<2x8x8x72xf32, #tpu.memory_space<vmem>>, vector<2x7x7x8xf32>
    tpu.vector_store %arg17[%c0_70, %c0_71, %c1_72, %c48], %55 {strides = array<i32>} : memref<2x8x8x72xf32, #tpu.memory_space<vmem>>, vector<2x7x7x8xf32>,
    %57 = vector.extract_strided_slice %41 {offsets = [0, 1, 0, 0], sizes = [2, 7, 8, 8], strides = [1, 1, 1, 1]} : vector<2x8x8x8xf32> to vector<2x7x8x8xf32>
    %c0_73 = arith.constant 0 : index
    %c0_74 = arith.constant 0 : index
    %c0_75 = arith.constant 0 : index
    %c56 = arith.constant 56 : index
    %58 = vector.load %arg17[%c0_73, %c0_74, %c0_75, %c56] : memref<2x8x8x72xf32, #tpu.memory_space<vmem>>, vector<2x7x8x8xf32>
    tpu.vector_store %arg17[%c0_73, %c0_74, %c0_75, %c56], %57 {strides = array<i32>} : memref<2x8x8x72xf32, #tpu.memory_space<vmem>>, vector<2x7x8x8xf32>,
    %59 = vector.extract_strided_slice %41 {offsets = [0, 1, 1, 0], sizes = [2, 7, 7, 8], strides = [1, 1, 1, 1]} : vector<2x8x8x8xf32> to vector<2x7x7x8xf32>
    %c0_76 = arith.constant 0 : index
    %c0_77 = arith.constant 0 : index
    %c0_78 = arith.constant 0 : index
    %c64 = arith.constant 64 : index
    %60 = vector.load %arg17[%c0_76, %c0_77, %c0_78, %c64] : memref<2x8x8x72xf32, #tpu.memory_space<vmem>>, vector<2x7x7x8xf32>
    tpu.vector_store %arg17[%c0_76, %c0_77, %c0_78, %c64], %59 {strides = array<i32>} : memref<2x8x8x72xf32, #tpu.memory_space<vmem>>, vector<2x7x7x8xf32>,
    %c0_79 = arith.constant 0 : index
    %c0_80 = arith.constant 0 : index
    %c0_81 = arith.constant 0 : index
    %c0_82 = arith.constant 0 : index
    %61 = vector.load %arg17[%c0_79, %c0_80, %c0_81, %c0_82] : memref<2x8x8x72xf32, #tpu.memory_space<vmem>>, vector<2x8x8x72xf32>
    %62 = vector.shape_cast %61 : vector<2x8x8x72xf32> to vector<128x72xf32>
    %c0_83 = arith.constant 0 : index
    %c0_84 = arith.constant 0 : index
    %63 = vector.load %arg3[%c0_83, %c0_84] : memref<72x16xf32, #tpu.memory_space<vmem>>, vector<72x16xf32>
    %cst_85 = arith.constant dense<0.000000e+00> : vector<128x16xf32>
    %64 = tpu.matmul %62, %63, %cst_85 {dimension_numbers = #tpu.dot_dimension_numbers<[1], [0], [0], [1], [0, 0, 1, 1], [], []>} : vector<128x72xf32>, vector<72x16xf32>, vector<128x16xf32> -> vector<128x16xf32>
    %c0_86 = arith.constant 0 : index
    %c0_87 = arith.constant 0 : index
    %65 = vector.load %arg8[%c0_86, %c0_87] : memref<1x16xf32, #tpu.memory_space<vmem>>, vector<1x16xf32>
    %66 = vector.broadcast %65 : vector<1x16xf32> to vector<128x16xf32>
    %67 = arith.addf %64, %66 : vector<128x16xf32>
    %cst_88 = arith.constant 0.00999999977 : f32
    %68 = vector.broadcast %cst_88 : f32 to vector<128x16xf32>
    %69 = arith.mulf %68, %67 : vector<128x16xf32>
    %70 = arith.maximumf %67, %69 : vector<128x16xf32>
    %71 = vector.shape_cast %70 : vector<128x16xf32> to vector<2x8x8x16xf32>
    %cst_89 = arith.constant 0.000000e+00 : f32
    %72 = vector.broadcast %cst_89 : f32 to vector<2x8x8x144xf32>
    %c0_90 = arith.constant 0 : index
    %c0_91 = arith.constant 0 : index
    %c0_92 = arith.constant 0 : index
    %c0_93 = arith.constant 0 : index
    %73 = vector.load %arg18[%c0_90, %c0_91, %c0_92, %c0_93] : memref<2x8x8x144xf32, #tpu.memory_space<vmem>>, vector<2x8x8x144xf32>
    tpu.vector_store %arg18[%c0_90, %c0_91, %c0_92, %c0_93], %72 {strides = array<i32>} : memref<2x8x8x144xf32, #tpu.memory_space<vmem>>, vector<2x8x8x144xf32>,
    %74 = vector.extract_strided_slice %71 {offsets = [0, 0, 0, 0], sizes = [2, 7, 7, 16], strides = [1, 1, 1, 1]} : vector<2x8x8x16xf32> to vector<2x7x7x16xf32>
    %c0_94 = arith.constant 0 : index
    %c1_95 = arith.constant 1 : index
    %c1_96 = arith.constant 1 : index
    %c0_97 = arith.constant 0 : index
    %75 = vector.load %arg18[%c0_94, %c1_95, %c1_96, %c0_97] : memref<2x8x8x144xf32, #tpu.memory_space<vmem>>, vector<2x7x7x16xf32>
    tpu.vector_store %arg18[%c0_94, %c1_95, %c1_96, %c0_97], %74 {strides = array<i32>} : memref<2x8x8x144xf32, #tpu.memory_space<vmem>>, vector<2x7x7x16xf32>,
    %76 = vector.extract_strided_slice %71 {offsets = [0, 0, 0, 0], sizes = [2, 7, 8, 16], strides = [1, 1, 1, 1]} : vector<2x8x8x16xf32> to vector<2x7x8x16xf32>
    %c0_98 = arith.constant 0 : index
    %c1_99 = arith.constant 1 : index
    %c0_100 = arith.constant 0 : index
    %c16_101 = arith.constant 16 : index
    %77 = vector.load %arg18[%c0_98, %c1_99, %c0_100, %c16_101] : memref<2x8x8x144xf32, #tpu.memory_space<vmem>>, vector<2x7x8x16xf32>
    tpu.vector_store %arg18[%c0_98, %c1_99, %c0_100, %c16_101], %76 {strides = array<i32>} : memref<2x8x8x144xf32, #tpu.memory_space<vmem>>, vector<2x7x8x16xf32>,
    %78 = vector.extract_strided_slice %71 {offsets = [0, 0, 1, 0], sizes = [2, 7, 7, 16], strides = [1, 1, 1, 1]} : vector<2x8x8x16xf32> to vector<2x7x7x16xf32>
    %c0_102 = arith.constant 0 : index
    %c1_103 = arith.constant 1 : index
    %c0_104 = arith.constant 0 : index
    %c32_105 = arith.constant 32 : index
    %79 = vector.load %arg18[%c0_102, %c1_103, %c0_104, %c32_105] : memref<2x8x8x144xf32, #tpu.memory_space<vmem>>, vector<2x7x7x16xf32>
    tpu.vector_store %arg18[%c0_102, %c1_103, %c0_104, %c32_105], %78 {strides = array<i32>} : memref<2x8x8x144xf32, #tpu.memory_space<vmem>>, vector<2x7x7x16xf32>,
    %80 = vector.extract_strided_slice %71 {offsets = [0, 0, 0, 0], sizes = [2, 8, 7, 16], strides = [1, 1, 1, 1]} : vector<2x8x8x16xf32> to vector<2x8x7x16xf32>
    %c0_106 = arith.constant 0 : index
    %c0_107 = arith.constant 0 : index
    %c1_108 = arith.constant 1 : index
    %c48_109 = arith.constant 48 : index
    %81 = vector.load %arg18[%c0_106, %c0_107, %c1_108, %c48_109] : memref<2x8x8x144xf32, #tpu.memory_space<vmem>>, vector<2x8x7x16xf32>
    tpu.vector_store %arg18[%c0_106, %c0_107, %c1_108, %c48_109], %80 {strides = array<i32>} : memref<2x8x8x144xf32, #tpu.memory_space<vmem>>, vector<2x8x7x16xf32>,
    %c0_110 = arith.constant 0 : index
    %c0_111 = arith.constant 0 : index
    %c0_112 = arith.constant 0 : index
    %c64_113 = arith.constant 64 : index
    %82 = vector.load %arg18[%c0_110, %c0_111, %c0_112, %c64_113] : memref<2x8x8x144xf32, #tpu.memory_space<vmem>>, vector<2x8x8x16xf32>
    tpu.vector_store %arg18[%c0_110, %c0_111, %c0_112, %c64_113], %71 {strides = array<i32>} : memref<2x8x8x144xf32, #tpu.memory_space<vmem>>, vector<2x8x8x16xf32>,
    %83 = vector.extract_strided_slice %71 {offsets = [0, 0, 1, 0], sizes = [2, 8, 7, 16], strides = [1, 1, 1, 1]} : vector<2x8x8x16xf32> to vector<2x8x7x16xf32>
    %c0_114 = arith.constant 0 : index
    %c0_115 = arith.constant 0 : index
    %c0_116 = arith.constant 0 : index
    %c80 = arith.constant 80 : index
    %84 = vector.load %arg18[%c0_114, %c0_115, %c0_116, %c80] : memref<2x8x8x144xf32, #tpu.memory_space<vmem>>, vector<2x8x7x16xf32>
    tpu.vector_store %arg18[%c0_114, %c0_115, %c0_116, %c80], %83 {strides = array<i32>} : memref<2x8x8x144xf32, #tpu.memory_space<vmem>>, vector<2x8x7x16xf32>,
    %85 = vector.extract_strided_slice %71 {offsets = [0, 1, 0, 0], sizes = [2, 7, 7, 16], strides = [1, 1, 1, 1]} : vector<2x8x8x16xf32> to vector<2x7x7x16xf32>
    %c0_117 = arith.constant 0 : index
    %c0_118 = arith.constant 0 : index
    %c1_119 = arith.constant 1 : index
    %c96 = arith.constant 96 : index
    %86 = vector.load %arg18[%c0_117, %c0_118, %c1_119, %c96] : memref<2x8x8x144xf32, #tpu.memory_space<vmem>>, vector<2x7x7x16xf32>
    tpu.vector_store %arg18[%c0_117, %c0_118, %c1_119, %c96], %85 {strides = array<i32>} : memref<2x8x8x144xf32, #tpu.memory_space<vmem>>, vector<2x7x7x16xf32>,
    %87 = vector.extract_strided_slice %71 {offsets = [0, 1, 0, 0], sizes = [2, 7, 8, 16], strides = [1, 1, 1, 1]} : vector<2x8x8x16xf32> to vector<2x7x8x16xf32>
    %c0_120 = arith.constant 0 : index
    %c0_121 = arith.constant 0 : index
    %c0_122 = arith.constant 0 : index
    %c112 = arith.constant 112 : index
    %88 = vector.load %arg18[%c0_120, %c0_121, %c0_122, %c112] : memref<2x8x8x144xf32, #tpu.memory_space<vmem>>, vector<2x7x8x16xf32>
    tpu.vector_store %arg18[%c0_120, %c0_121, %c0_122, %c112], %87 {strides = array<i32>} : memref<2x8x8x144xf32, #tpu.memory_space<vmem>>, vector<2x7x8x16xf32>,
    %89 = vector.extract_strided_slice %71 {offsets = [0, 1, 1, 0], sizes = [2, 7, 7, 16], strides = [1, 1, 1, 1]} : vector<2x8x8x16xf32> to vector<2x7x7x16xf32>
    %c0_123 = arith.constant 0 : index
    %c0_124 = arith.constant 0 : index
    %c0_125 = arith.constant 0 : index
    %c128 = arith.constant 128 : index
    %90 = vector.load %arg18[%c0_123, %c0_124, %c0_125, %c128] : memref<2x8x8x144xf32, #tpu.memory_space<vmem>>, vector<2x7x7x16xf32>
    tpu.vector_store %arg18[%c0_123, %c0_124, %c0_125, %c128], %89 {strides = array<i32>} : memref<2x8x8x144xf32, #tpu.memory_space<vmem>>, vector<2x7x7x16xf32>,
    %c0_126 = arith.constant 0 : index
    %c0_127 = arith.constant 0 : index
    %c0_128 = arith.constant 0 : index
    %c0_129 = arith.constant 0 : index
    %91 = vector.load %arg18[%c0_126, %c0_127, %c0_128, %c0_129] : memref<2x8x8x144xf32, #tpu.memory_space<vmem>>, vector<2x8x8x144xf32>
    %92 = vector.shape_cast %91 : vector<2x8x8x144xf32> to vector<128x144xf32>
    %c0_130 = arith.constant 0 : index
    %c0_131 = arith.constant 0 : index
    %93 = vector.load %arg4[%c0_130, %c0_131] : memref<144x16xf32, #tpu.memory_space<vmem>>, vector<144x16xf32>
    %cst_132 = arith.constant dense<0.000000e+00> : vector<128x16xf32>
    %94 = tpu.matmul %92, %93, %cst_132 {dimension_numbers = #tpu.dot_dimension_numbers<[1], [0], [0], [1], [0, 0, 1, 1], [], []>} : vector<128x144xf32>, vector<144x16xf32>, vector<128x16xf32> -> vector<128x16xf32>
    %c0_133 = arith.constant 0 : index
    %c0_134 = arith.constant 0 : index
    %95 = vector.load %arg9[%c0_133, %c0_134] : memref<1x16xf32, #tpu.memory_space<vmem>>, vector<1x16xf32>
    %96 = vector.broadcast %95 : vector<1x16xf32> to vector<128x16xf32>
    %97 = arith.addf %94, %96 : vector<128x16xf32>
    %cst_135 = arith.constant 0.00999999977 : f32
    %98 = vector.broadcast %cst_135 : f32 to vector<128x16xf32>
    %99 = arith.mulf %98, %97 : vector<128x16xf32>
    %100 = arith.maximumf %97, %99 : vector<128x16xf32>
    %101 = vector.shape_cast %100 : vector<128x16xf32> to vector<2x8x8x16xf32>
    %102 = vector.shape_cast %101 : vector<2x8x8x16xf32> to vector<64x2x16xf32>
    %103 = vector.extract_strided_slice %102 {offsets = [0, 0, 0], sizes = [64, 1, 16], strides = [1, 1, 1]} : vector<64x2x16xf32> to vector<64x1x16xf32>
    %104 = vector.extract_strided_slice %102 {offsets = [0, 1, 0], sizes = [64, 1, 16], strides = [1, 1, 1]} : vector<64x2x16xf32> to vector<64x1x16xf32>
    %105 = arith.maximumf %103, %104 : vector<64x1x16xf32>
    %106 = vector.shape_cast %105 : vector<64x1x16xf32> to vector<8x2x4x16xf32>
    %107 = vector.extract_strided_slice %106 {offsets = [0, 0, 0, 0], sizes = [8, 1, 4, 16], strides = [1, 1, 1, 1]} : vector<8x2x4x16xf32> to vector<8x1x4x16xf32>
    %108 = vector.shape_cast %107 : vector<8x1x4x16xf32> to vector<8x4x16xf32>
    %109 = vector.extract_strided_slice %106 {offsets = [0, 1, 0, 0], sizes = [8, 1, 4, 16], strides = [1, 1, 1, 1]} : vector<8x2x4x16xf32> to vector<8x1x4x16xf32>
    %110 = vector.shape_cast %109 : vector<8x1x4x16xf32> to vector<8x4x16xf32>
    %111 = arith.maximumf %108, %110 : vector<8x4x16xf32>
    %112 = vector.shape_cast %111 : vector<8x4x16xf32> to vector<2x4x4x16xf32>
    %cst_136 = arith.constant 0.000000e+00 : f32
    %113 = vector.broadcast %cst_136 : f32 to vector<2x4x4x144xf32>
    %c0_137 = arith.constant 0 : index
    %c0_138 = arith.constant 0 : index
    %c0_139 = arith.constant 0 : index
    %c0_140 = arith.constant 0 : index
    %114 = vector.load %arg19[%c0_137, %c0_138, %c0_139, %c0_140] : memref<2x4x4x144xf32, #tpu.memory_space<vmem>>, vector<2x4x4x144xf32>
    tpu.vector_store %arg19[%c0_137, %c0_138, %c0_139, %c0_140], %113 {strides = array<i32>} : memref<2x4x4x144xf32, #tpu.memory_space<vmem>>, vector<2x4x4x144xf32>,
    %115 = vector.extract_strided_slice %112 {offsets = [0, 0, 0, 0], sizes = [2, 3, 3, 16], strides = [1, 1, 1, 1]} : vector<2x4x4x16xf32> to vector<2x3x3x16xf32>
    %c0_141 = arith.constant 0 : index
    %c1_142 = arith.constant 1 : index
    %c1_143 = arith.constant 1 : index
    %c0_144 = arith.constant 0 : index
    %116 = vector.load %arg19[%c0_141, %c1_142, %c1_143, %c0_144] : memref<2x4x4x144xf32, #tpu.memory_space<vmem>>, vector<2x3x3x16xf32>
    tpu.vector_store %arg19[%c0_141, %c1_142, %c1_143, %c0_144], %115 {strides = array<i32>} : memref<2x4x4x144xf32, #tpu.memory_space<vmem>>, vector<2x3x3x16xf32>,
    %117 = vector.extract_strided_slice %112 {offsets = [0, 0, 0, 0], sizes = [2, 3, 4, 16], strides = [1, 1, 1, 1]} : vector<2x4x4x16xf32> to vector<2x3x4x16xf32>
    %c0_145 = arith.constant 0 : index
    %c1_146 = arith.constant 1 : index
    %c0_147 = arith.constant 0 : index
    %c16_148 = arith.constant 16 : index
    %118 = vector.load %arg19[%c0_145, %c1_146, %c0_147, %c16_148] : memref<2x4x4x144xf32, #tpu.memory_space<vmem>>, vector<2x3x4x16xf32>
    tpu.vector_store %arg19[%c0_145, %c1_146, %c0_147, %c16_148], %117 {strides = array<i32>} : memref<2x4x4x144xf32, #tpu.memory_space<vmem>>, vector<2x3x4x16xf32>,
    %119 = vector.extract_strided_slice %112 {offsets = [0, 0, 1, 0], sizes = [2, 3, 3, 16], strides = [1, 1, 1, 1]} : vector<2x4x4x16xf32> to vector<2x3x3x16xf32>
    %c0_149 = arith.constant 0 : index
    %c1_150 = arith.constant 1 : index
    %c0_151 = arith.constant 0 : index
    %c32_152 = arith.constant 32 : index
    %120 = vector.load %arg19[%c0_149, %c1_150, %c0_151, %c32_152] : memref<2x4x4x144xf32, #tpu.memory_space<vmem>>, vector<2x3x3x16xf32>
    tpu.vector_store %arg19[%c0_149, %c1_150, %c0_151, %c32_152], %119 {strides = array<i32>} : memref<2x4x4x144xf32, #tpu.memory_space<vmem>>, vector<2x3x3x16xf32>,
    %121 = vector.extract_strided_slice %112 {offsets = [0, 0, 0, 0], sizes = [2, 4, 3, 16], strides = [1, 1, 1, 1]} : vector<2x4x4x16xf32> to vector<2x4x3x16xf32>
    %c0_153 = arith.constant 0 : index
    %c0_154 = arith.constant 0 : index
    %c1_155 = arith.constant 1 : index
    %c48_156 = arith.constant 48 : index
    %122 = vector.load %arg19[%c0_153, %c0_154, %c1_155, %c48_156] : memref<2x4x4x144xf32, #tpu.memory_space<vmem>>, vector<2x4x3x16xf32>
    tpu.vector_store %arg19[%c0_153, %c0_154, %c1_155, %c48_156], %121 {strides = array<i32>} : memref<2x4x4x144xf32, #tpu.memory_space<vmem>>, vector<2x4x3x16xf32>,
    %c0_157 = arith.constant 0 : index
    %c0_158 = arith.constant 0 : index
    %c0_159 = arith.constant 0 : index
    %c64_160 = arith.constant 64 : index
    %123 = vector.load %arg19[%c0_157, %c0_158, %c0_159, %c64_160] : memref<2x4x4x144xf32, #tpu.memory_space<vmem>>, vector<2x4x4x16xf32>
    tpu.vector_store %arg19[%c0_157, %c0_158, %c0_159, %c64_160], %112 {strides = array<i32>} : memref<2x4x4x144xf32, #tpu.memory_space<vmem>>, vector<2x4x4x16xf32>,
    %124 = vector.extract_strided_slice %112 {offsets = [0, 0, 1, 0], sizes = [2, 4, 3, 16], strides = [1, 1, 1, 1]} : vector<2x4x4x16xf32> to vector<2x4x3x16xf32>
    %c0_161 = arith.constant 0 : index
    %c0_162 = arith.constant 0 : index
    %c0_163 = arith.constant 0 : index
    %c80_164 = arith.constant 80 : index
    %125 = vector.load %arg19[%c0_161, %c0_162, %c0_163, %c80_164] : memref<2x4x4x144xf32, #tpu.memory_space<vmem>>, vector<2x4x3x16xf32>
    tpu.vector_store %arg19[%c0_161, %c0_162, %c0_163, %c80_164], %124 {strides = array<i32>} : memref<2x4x4x144xf32, #tpu.memory_space<vmem>>, vector<2x4x3x16xf32>,
    %126 = vector.extract_strided_slice %112 {offsets = [0, 1, 0, 0], sizes = [2, 3, 3, 16], strides = [1, 1, 1, 1]} : vector<2x4x4x16xf32> to vector<2x3x3x16xf32>
    %c0_165 = arith.constant 0 : index
    %c0_166 = arith.constant 0 : index
    %c1_167 = arith.constant 1 : index
    %c96_168 = arith.constant 96 : index
    %127 = vector.load %arg19[%c0_165, %c0_166, %c1_167, %c96_168] : memref<2x4x4x144xf32, #tpu.memory_space<vmem>>, vector<2x3x3x16xf32>
    tpu.vector_store %arg19[%c0_165, %c0_166, %c1_167, %c96_168], %126 {strides = array<i32>} : memref<2x4x4x144xf32, #tpu.memory_space<vmem>>, vector<2x3x3x16xf32>,
    %128 = vector.extract_strided_slice %112 {offsets = [0, 1, 0, 0], sizes = [2, 3, 4, 16], strides = [1, 1, 1, 1]} : vector<2x4x4x16xf32> to vector<2x3x4x16xf32>
    %c0_169 = arith.constant 0 : index
    %c0_170 = arith.constant 0 : index
    %c0_171 = arith.constant 0 : index
    %c112_172 = arith.constant 112 : index
    %129 = vector.load %arg19[%c0_169, %c0_170, %c0_171, %c112_172] : memref<2x4x4x144xf32, #tpu.memory_space<vmem>>, vector<2x3x4x16xf32>
    tpu.vector_store %arg19[%c0_169, %c0_170, %c0_171, %c112_172], %128 {strides = array<i32>} : memref<2x4x4x144xf32, #tpu.memory_space<vmem>>, vector<2x3x4x16xf32>,
    %130 = vector.extract_strided_slice %112 {offsets = [0, 1, 1, 0], sizes = [2, 3, 3, 16], strides = [1, 1, 1, 1]} : vector<2x4x4x16xf32> to vector<2x3x3x16xf32>
    %c0_173 = arith.constant 0 : index
    %c0_174 = arith.constant 0 : index
    %c0_175 = arith.constant 0 : index
    %c128_176 = arith.constant 128 : index
    %131 = vector.load %arg19[%c0_173, %c0_174, %c0_175, %c128_176] : memref<2x4x4x144xf32, #tpu.memory_space<vmem>>, vector<2x3x3x16xf32>
    tpu.vector_store %arg19[%c0_173, %c0_174, %c0_175, %c128_176], %130 {strides = array<i32>} : memref<2x4x4x144xf32, #tpu.memory_space<vmem>>, vector<2x3x3x16xf32>,
    %c0_177 = arith.constant 0 : index
    %c0_178 = arith.constant 0 : index
    %c0_179 = arith.constant 0 : index
    %c0_180 = arith.constant 0 : index
    %132 = vector.load %arg19[%c0_177, %c0_178, %c0_179, %c0_180] : memref<2x4x4x144xf32, #tpu.memory_space<vmem>>, vector<2x4x4x144xf32>
    %133 = vector.shape_cast %132 : vector<2x4x4x144xf32> to vector<32x144xf32>
    %c0_181 = arith.constant 0 : index
    %c0_182 = arith.constant 0 : index
    %134 = vector.load %arg5[%c0_181, %c0_182] : memref<144x32xf32, #tpu.memory_space<vmem>>, vector<144x32xf32>
    %cst_183 = arith.constant dense<0.000000e+00> : vector<32x32xf32>
    %135 = tpu.matmul %133, %134, %cst_183 {dimension_numbers = #tpu.dot_dimension_numbers<[1], [0], [0], [1], [0, 0, 1, 1], [], []>} : vector<32x144xf32>, vector<144x32xf32>, vector<32x32xf32> -> vector<32x32xf32>
    %c0_184 = arith.constant 0 : index
    %c0_185 = arith.constant 0 : index
    %136 = vector.load %arg10[%c0_184, %c0_185] : memref<1x32xf32, #tpu.memory_space<vmem>>, vector<1x32xf32>
    %137 = vector.broadcast %136 : vector<1x32xf32> to vector<32x32xf32>
    %138 = arith.addf %135, %137 : vector<32x32xf32>
    %cst_186 = arith.constant 0.00999999977 : f32
    %139 = vector.broadcast %cst_186 : f32 to vector<32x32xf32>
    %140 = arith.mulf %139, %138 : vector<32x32xf32>
    %141 = arith.maximumf %138, %140 : vector<32x32xf32>
    %142 = vector.shape_cast %141 : vector<32x32xf32> to vector<2x4x4x32xf32>
    %cst_187 = arith.constant 0.000000e+00 : f32
    %143 = vector.broadcast %cst_187 : f32 to vector<2x4x4x288xf32>
    %c0_188 = arith.constant 0 : index
    %c0_189 = arith.constant 0 : index
    %c0_190 = arith.constant 0 : index
    %c0_191 = arith.constant 0 : index
    %144 = vector.load %arg20[%c0_188, %c0_189, %c0_190, %c0_191] : memref<2x4x4x288xf32, #tpu.memory_space<vmem>>, vector<2x4x4x288xf32>
    tpu.vector_store %arg20[%c0_188, %c0_189, %c0_190, %c0_191], %143 {strides = array<i32>} : memref<2x4x4x288xf32, #tpu.memory_space<vmem>>, vector<2x4x4x288xf32>,
    %145 = vector.extract_strided_slice %142 {offsets = [0, 0, 0, 0], sizes = [2, 3, 3, 32], strides = [1, 1, 1, 1]} : vector<2x4x4x32xf32> to vector<2x3x3x32xf32>
    %c0_192 = arith.constant 0 : index
    %c1_193 = arith.constant 1 : index
    %c1_194 = arith.constant 1 : index
    %c0_195 = arith.constant 0 : index
    %146 = vector.load %arg20[%c0_192, %c1_193, %c1_194, %c0_195] : memref<2x4x4x288xf32, #tpu.memory_space<vmem>>, vector<2x3x3x32xf32>
    tpu.vector_store %arg20[%c0_192, %c1_193, %c1_194, %c0_195], %145 {strides = array<i32>} : memref<2x4x4x288xf32, #tpu.memory_space<vmem>>, vector<2x3x3x32xf32>,
    %147 = vector.extract_strided_slice %142 {offsets = [0, 0, 0, 0], sizes = [2, 3, 4, 32], strides = [1, 1, 1, 1]} : vector<2x4x4x32xf32> to vector<2x3x4x32xf32>
    %c0_196 = arith.constant 0 : index
    %c1_197 = arith.constant 1 : index
    %c0_198 = arith.constant 0 : index
    %c32_199 = arith.constant 32 : index
    %148 = vector.load %arg20[%c0_196, %c1_197, %c0_198, %c32_199] : memref<2x4x4x288xf32, #tpu.memory_space<vmem>>, vector<2x3x4x32xf32>
    tpu.vector_store %arg20[%c0_196, %c1_197, %c0_198, %c32_199], %147 {strides = array<i32>} : memref<2x4x4x288xf32, #tpu.memory_space<vmem>>, vector<2x3x4x32xf32>,
    %149 = vector.extract_strided_slice %142 {offsets = [0, 0, 1, 0], sizes = [2, 3, 3, 32], strides = [1, 1, 1, 1]} : vector<2x4x4x32xf32> to vector<2x3x3x32xf32>
    %c0_200 = arith.constant 0 : index
    %c1_201 = arith.constant 1 : index
    %c0_202 = arith.constant 0 : index
    %c64_203 = arith.constant 64 : index
    %150 = vector.load %arg20[%c0_200, %c1_201, %c0_202, %c64_203] : memref<2x4x4x288xf32, #tpu.memory_space<vmem>>, vector<2x3x3x32xf32>
    tpu.vector_store %arg20[%c0_200, %c1_201, %c0_202, %c64_203], %149 {strides = array<i32>} : memref<2x4x4x288xf32, #tpu.memory_space<vmem>>, vector<2x3x3x32xf32>,
    %151 = vector.extract_strided_slice %142 {offsets = [0, 0, 0, 0], sizes = [2, 4, 3, 32], strides = [1, 1, 1, 1]} : vector<2x4x4x32xf32> to vector<2x4x3x32xf32>
    %c0_204 = arith.constant 0 : index
    %c0_205 = arith.constant 0 : index
    %c1_206 = arith.constant 1 : index
    %c96_207 = arith.constant 96 : index
    %152 = vector.load %arg20[%c0_204, %c0_205, %c1_206, %c96_207] : memref<2x4x4x288xf32, #tpu.memory_space<vmem>>, vector<2x4x3x32xf32>
    tpu.vector_store %arg20[%c0_204, %c0_205, %c1_206, %c96_207], %151 {strides = array<i32>} : memref<2x4x4x288xf32, #tpu.memory_space<vmem>>, vector<2x4x3x32xf32>,
    %c0_208 = arith.constant 0 : index
    %c0_209 = arith.constant 0 : index
    %c0_210 = arith.constant 0 : index
    %c128_211 = arith.constant 128 : index
    %153 = vector.load %arg20[%c0_208, %c0_209, %c0_210, %c128_211] : memref<2x4x4x288xf32, #tpu.memory_space<vmem>>, vector<2x4x4x32xf32>
    tpu.vector_store %arg20[%c0_208, %c0_209, %c0_210, %c128_211], %142 {strides = array<i32>} : memref<2x4x4x288xf32, #tpu.memory_space<vmem>>, vector<2x4x4x32xf32>,
    %154 = vector.extract_strided_slice %142 {offsets = [0, 0, 1, 0], sizes = [2, 4, 3, 32], strides = [1, 1, 1, 1]} : vector<2x4x4x32xf32> to vector<2x4x3x32xf32>
    %c0_212 = arith.constant 0 : index
    %c0_213 = arith.constant 0 : index
    %c0_214 = arith.constant 0 : index
    %c160 = arith.constant 160 : index
    %155 = vector.load %arg20[%c0_212, %c0_213, %c0_214, %c160] : memref<2x4x4x288xf32, #tpu.memory_space<vmem>>, vector<2x4x3x32xf32>
    tpu.vector_store %arg20[%c0_212, %c0_213, %c0_214, %c160], %154 {strides = array<i32>} : memref<2x4x4x288xf32, #tpu.memory_space<vmem>>, vector<2x4x3x32xf32>,
    %156 = vector.extract_strided_slice %142 {offsets = [0, 1, 0, 0], sizes = [2, 3, 3, 32], strides = [1, 1, 1, 1]} : vector<2x4x4x32xf32> to vector<2x3x3x32xf32>
    %c0_215 = arith.constant 0 : index
    %c0_216 = arith.constant 0 : index
    %c1_217 = arith.constant 1 : index
    %c192 = arith.constant 192 : index
    %157 = vector.load %arg20[%c0_215, %c0_216, %c1_217, %c192] : memref<2x4x4x288xf32, #tpu.memory_space<vmem>>, vector<2x3x3x32xf32>
    tpu.vector_store %arg20[%c0_215, %c0_216, %c1_217, %c192], %156 {strides = array<i32>} : memref<2x4x4x288xf32, #tpu.memory_space<vmem>>, vector<2x3x3x32xf32>,
    %158 = vector.extract_strided_slice %142 {offsets = [0, 1, 0, 0], sizes = [2, 3, 4, 32], strides = [1, 1, 1, 1]} : vector<2x4x4x32xf32> to vector<2x3x4x32xf32>
    %c0_218 = arith.constant 0 : index
    %c0_219 = arith.constant 0 : index
    %c0_220 = arith.constant 0 : index
    %c224 = arith.constant 224 : index
    %159 = vector.load %arg20[%c0_218, %c0_219, %c0_220, %c224] : memref<2x4x4x288xf32, #tpu.memory_space<vmem>>, vector<2x3x4x32xf32>
    tpu.vector_store %arg20[%c0_218, %c0_219, %c0_220, %c224], %158 {strides = array<i32>} : memref<2x4x4x288xf32, #tpu.memory_space<vmem>>, vector<2x3x4x32xf32>,
    %160 = vector.extract_strided_slice %142 {offsets = [0, 1, 1, 0], sizes = [2, 3, 3, 32], strides = [1, 1, 1, 1]} : vector<2x4x4x32xf32> to vector<2x3x3x32xf32>
    %c0_221 = arith.constant 0 : index
    %c0_222 = arith.constant 0 : index
    %c0_223 = arith.constant 0 : index
    %c256 = arith.constant 256 : index
    %161 = vector.load %arg20[%c0_221, %c0_222, %c0_223, %c256] : memref<2x4x4x288xf32, #tpu.memory_space<vmem>>, vector<2x3x3x32xf32>
    tpu.vector_store %arg20[%c0_221, %c0_222, %c0_223, %c256], %160 {strides = array<i32>} : memref<2x4x4x288xf32, #tpu.memory_space<vmem>>, vector<2x3x3x32xf32>,
    %c0_224 = arith.constant 0 : index
    %c0_225 = arith.constant 0 : index
    %c0_226 = arith.constant 0 : index
    %c0_227 = arith.constant 0 : index
    %162 = vector.load %arg20[%c0_224, %c0_225, %c0_226, %c0_227] : memref<2x4x4x288xf32, #tpu.memory_space<vmem>>, vector<2x4x4x288xf32>
    %163 = vector.shape_cast %162 : vector<2x4x4x288xf32> to vector<32x288xf32>
    %c0_228 = arith.constant 0 : index
    %c0_229 = arith.constant 0 : index
    %164 = vector.load %arg6[%c0_228, %c0_229] : memref<288x32xf32, #tpu.memory_space<vmem>>, vector<288x32xf32>
    %cst_230 = arith.constant dense<0.000000e+00> : vector<32x32xf32>
    %165 = tpu.matmul %163, %164, %cst_230 {dimension_numbers = #tpu.dot_dimension_numbers<[1], [0], [0], [1], [0, 0, 1, 1], [], []>} : vector<32x288xf32>, vector<288x32xf32>, vector<32x32xf32> -> vector<32x32xf32>
    %c0_231 = arith.constant 0 : index
    %c0_232 = arith.constant 0 : index
    %166 = vector.load %arg11[%c0_231, %c0_232] : memref<1x32xf32, #tpu.memory_space<vmem>>, vector<1x32xf32>
    %167 = vector.broadcast %166 : vector<1x32xf32> to vector<32x32xf32>
    %168 = arith.addf %165, %167 : vector<32x32xf32>
    %cst_233 = arith.constant 0.00999999977 : f32
    %169 = vector.broadcast %cst_233 : f32 to vector<32x32xf32>
    %170 = arith.mulf %169, %168 : vector<32x32xf32>
    %171 = arith.maximumf %168, %170 : vector<32x32xf32>
    %172 = vector.shape_cast %171 : vector<32x32xf32> to vector<2x4x4x32xf32>
    %173 = vector.extract_strided_slice %172 {offsets = [0, 0, 0, 0], sizes = [2, 1, 1, 32], strides = [1, 1, 1, 1]} : vector<2x4x4x32xf32> to vector<2x1x1x32xf32>
    %174 = vector.shape_cast %173 : vector<2x1x1x32xf32> to vector<2x1x32xf32>
    %c0_234 = arith.constant 0 : index
    %c0_235 = arith.constant 0 : index
    %c0_236 = arith.constant 0 : index
    %175 = vector.load %arg21[%c0_234, %c0_235, %c0_236] : memref<2x1x512xf32, #tpu.memory_space<vmem>>, vector<2x1x32xf32>
    tpu.vector_store %arg21[%c0_234, %c0_235, %c0_236], %174 {strides = array<i32>} : memref<2x1x512xf32, #tpu.memory_space<vmem>>, vector<2x1x32xf32>,
    %176 = vector.extract_strided_slice %172 {offsets = [0, 0, 1, 0], sizes = [2, 1, 1, 32], strides = [1, 1, 1, 1]} : vector<2x4x4x32xf32> to vector<2x1x1x32xf32>
    %177 = vector.shape_cast %176 : vector<2x1x1x32xf32> to vector<2x1x32xf32>
    %c0_237 = arith.constant 0 : index
    %c0_238 = arith.constant 0 : index
    %c32_239 = arith.constant 32 : index
    %178 = vector.load %arg21[%c0_237, %c0_238, %c32_239] : memref<2x1x512xf32, #tpu.memory_space<vmem>>, vector<2x1x32xf32>
    tpu.vector_store %arg21[%c0_237, %c0_238, %c32_239], %177 {strides = array<i32>} : memref<2x1x512xf32, #tpu.memory_space<vmem>>, vector<2x1x32xf32>,
    %179 = vector.extract_strided_slice %172 {offsets = [0, 0, 2, 0], sizes = [2, 1, 1, 32], strides = [1, 1, 1, 1]} : vector<2x4x4x32xf32> to vector<2x1x1x32xf32>
    %180 = vector.shape_cast %179 : vector<2x1x1x32xf32> to vector<2x1x32xf32>
    %c0_240 = arith.constant 0 : index
    %c0_241 = arith.constant 0 : index
    %c64_242 = arith.constant 64 : index
    %181 = vector.load %arg21[%c0_240, %c0_241, %c64_242] : memref<2x1x512xf32, #tpu.memory_space<vmem>>, vector<2x1x32xf32>
    tpu.vector_store %arg21[%c0_240, %c0_241, %c64_242], %180 {strides = array<i32>} : memref<2x1x512xf32, #tpu.memory_space<vmem>>, vector<2x1x32xf32>,
    %182 = vector.extract_strided_slice %172 {offsets = [0, 0, 3, 0], sizes = [2, 1, 1, 32], strides = [1, 1, 1, 1]} : vector<2x4x4x32xf32> to vector<2x1x1x32xf32>
    %183 = vector.shape_cast %182 : vector<2x1x1x32xf32> to vector<2x1x32xf32>
    %c0_243 = arith.constant 0 : index
    %c0_244 = arith.constant 0 : index
    %c96_245 = arith.constant 96 : index
    %184 = vector.load %arg21[%c0_243, %c0_244, %c96_245] : memref<2x1x512xf32, #tpu.memory_space<vmem>>, vector<2x1x32xf32>
    tpu.vector_store %arg21[%c0_243, %c0_244, %c96_245], %183 {strides = array<i32>} : memref<2x1x512xf32, #tpu.memory_space<vmem>>, vector<2x1x32xf32>,
    %185 = vector.extract_strided_slice %172 {offsets = [0, 1, 0, 0], sizes = [2, 1, 1, 32], strides = [1, 1, 1, 1]} : vector<2x4x4x32xf32> to vector<2x1x1x32xf32>
    %186 = vector.shape_cast %185 : vector<2x1x1x32xf32> to vector<2x1x32xf32>
    %c0_246 = arith.constant 0 : index
    %c0_247 = arith.constant 0 : index
    %c128_248 = arith.constant 128 : index
    %187 = vector.load %arg21[%c0_246, %c0_247, %c128_248] : memref<2x1x512xf32, #tpu.memory_space<vmem>>, vector<2x1x32xf32>
    tpu.vector_store %arg21[%c0_246, %c0_247, %c128_248], %186 {strides = array<i32>} : memref<2x1x512xf32, #tpu.memory_space<vmem>>, vector<2x1x32xf32>,
    %188 = vector.extract_strided_slice %172 {offsets = [0, 1, 1, 0], sizes = [2, 1, 1, 32], strides = [1, 1, 1, 1]} : vector<2x4x4x32xf32> to vector<2x1x1x32xf32>
    %189 = vector.shape_cast %188 : vector<2x1x1x32xf32> to vector<2x1x32xf32>
    %c0_249 = arith.constant 0 : index
    %c0_250 = arith.constant 0 : index
    %c160_251 = arith.constant 160 : index
    %190 = vector.load %arg21[%c0_249, %c0_250, %c160_251] : memref<2x1x512xf32, #tpu.memory_space<vmem>>, vector<2x1x32xf32>
    tpu.vector_store %arg21[%c0_249, %c0_250, %c160_251], %189 {strides = array<i32>} : memref<2x1x512xf32, #tpu.memory_space<vmem>>, vector<2x1x32xf32>,
    %191 = vector.extract_strided_slice %172 {offsets = [0, 1, 2, 0], sizes = [2, 1, 1, 32], strides = [1, 1, 1, 1]} : vector<2x4x4x32xf32> to vector<2x1x1x32xf32>
    %192 = vector.shape_cast %191 : vector<2x1x1x32xf32> to vector<2x1x32xf32>
    %c0_252 = arith.constant 0 : index
    %c0_253 = arith.constant 0 : index
    %c192_254 = arith.constant 192 : index
    %193 = vector.load %arg21[%c0_252, %c0_253, %c192_254] : memref<2x1x512xf32, #tpu.memory_space<vmem>>, vector<2x1x32xf32>
    tpu.vector_store %arg21[%c0_252, %c0_253, %c192_254], %192 {strides = array<i32>} : memref<2x1x512xf32, #tpu.memory_space<vmem>>, vector<2x1x32xf32>,
    %194 = vector.extract_strided_slice %172 {offsets = [0, 1, 3, 0], sizes = [2, 1, 1, 32], strides = [1, 1, 1, 1]} : vector<2x4x4x32xf32> to vector<2x1x1x32xf32>
    %195 = vector.shape_cast %194 : vector<2x1x1x32xf32> to vector<2x1x32xf32>
    %c0_255 = arith.constant 0 : index
    %c0_256 = arith.constant 0 : index
    %c224_257 = arith.constant 224 : index
    %196 = vector.load %arg21[%c0_255, %c0_256, %c224_257] : memref<2x1x512xf32, #tpu.memory_space<vmem>>, vector<2x1x32xf32>
    tpu.vector_store %arg21[%c0_255, %c0_256, %c224_257], %195 {strides = array<i32>} : memref<2x1x512xf32, #tpu.memory_space<vmem>>, vector<2x1x32xf32>,
    %197 = vector.extract_strided_slice %172 {offsets = [0, 2, 0, 0], sizes = [2, 1, 1, 32], strides = [1, 1, 1, 1]} : vector<2x4x4x32xf32> to vector<2x1x1x32xf32>
    %198 = vector.shape_cast %197 : vector<2x1x1x32xf32> to vector<2x1x32xf32>
    %c0_258 = arith.constant 0 : index
    %c0_259 = arith.constant 0 : index
    %c256_260 = arith.constant 256 : index
    %199 = vector.load %arg21[%c0_258, %c0_259, %c256_260] : memref<2x1x512xf32, #tpu.memory_space<vmem>>, vector<2x1x32xf32>
    tpu.vector_store %arg21[%c0_258, %c0_259, %c256_260], %198 {strides = array<i32>} : memref<2x1x512xf32, #tpu.memory_space<vmem>>, vector<2x1x32xf32>,
    %200 = vector.extract_strided_slice %172 {offsets = [0, 2, 1, 0], sizes = [2, 1, 1, 32], strides = [1, 1, 1, 1]} : vector<2x4x4x32xf32> to vector<2x1x1x32xf32>
    %201 = vector.shape_cast %200 : vector<2x1x1x32xf32> to vector<2x1x32xf32>
    %c0_261 = arith.constant 0 : index
    %c0_262 = arith.constant 0 : index
    %c288 = arith.constant 288 : index
    %202 = vector.load %arg21[%c0_261, %c0_262, %c288] : memref<2x1x512xf32, #tpu.memory_space<vmem>>, vector<2x1x32xf32>
    tpu.vector_store %arg21[%c0_261, %c0_262, %c288], %201 {strides = array<i32>} : memref<2x1x512xf32, #tpu.memory_space<vmem>>, vector<2x1x32xf32>,
    %203 = vector.extract_strided_slice %172 {offsets = [0, 2, 2, 0], sizes = [2, 1, 1, 32], strides = [1, 1, 1, 1]} : vector<2x4x4x32xf32> to vector<2x1x1x32xf32>
    %204 = vector.shape_cast %203 : vector<2x1x1x32xf32> to vector<2x1x32xf32>
    %c0_263 = arith.constant 0 : index
    %c0_264 = arith.constant 0 : index
    %c320 = arith.constant 320 : index
    %205 = vector.load %arg21[%c0_263, %c0_264, %c320] : memref<2x1x512xf32, #tpu.memory_space<vmem>>, vector<2x1x32xf32>
    tpu.vector_store %arg21[%c0_263, %c0_264, %c320], %204 {strides = array<i32>} : memref<2x1x512xf32, #tpu.memory_space<vmem>>, vector<2x1x32xf32>,
    %206 = vector.extract_strided_slice %172 {offsets = [0, 2, 3, 0], sizes = [2, 1, 1, 32], strides = [1, 1, 1, 1]} : vector<2x4x4x32xf32> to vector<2x1x1x32xf32>
    %207 = vector.shape_cast %206 : vector<2x1x1x32xf32> to vector<2x1x32xf32>
    %c0_265 = arith.constant 0 : index
    %c0_266 = arith.constant 0 : index
    %c352 = arith.constant 352 : index
    %208 = vector.load %arg21[%c0_265, %c0_266, %c352] : memref<2x1x512xf32, #tpu.memory_space<vmem>>, vector<2x1x32xf32>
    tpu.vector_store %arg21[%c0_265, %c0_266, %c352], %207 {strides = array<i32>} : memref<2x1x512xf32, #tpu.memory_space<vmem>>, vector<2x1x32xf32>,
    %209 = vector.extract_strided_slice %172 {offsets = [0, 3, 0, 0], sizes = [2, 1, 1, 32], strides = [1, 1, 1, 1]} : vector<2x4x4x32xf32> to vector<2x1x1x32xf32>
    %210 = vector.shape_cast %209 : vector<2x1x1x32xf32> to vector<2x1x32xf32>
    %c0_267 = arith.constant 0 : index
    %c0_268 = arith.constant 0 : index
    %c384 = arith.constant 384 : index
    %211 = vector.load %arg21[%c0_267, %c0_268, %c384] : memref<2x1x512xf32, #tpu.memory_space<vmem>>, vector<2x1x32xf32>
    tpu.vector_store %arg21[%c0_267, %c0_268, %c384], %210 {strides = array<i32>} : memref<2x1x512xf32, #tpu.memory_space<vmem>>, vector<2x1x32xf32>,
    %212 = vector.extract_strided_slice %172 {offsets = [0, 3, 1, 0], sizes = [2, 1, 1, 32], strides = [1, 1, 1, 1]} : vector<2x4x4x32xf32> to vector<2x1x1x32xf32>
    %213 = vector.shape_cast %212 : vector<2x1x1x32xf32> to vector<2x1x32xf32>
    %c0_269 = arith.constant 0 : index
    %c0_270 = arith.constant 0 : index
    %c416 = arith.constant 416 : index
    %214 = vector.load %arg21[%c0_269, %c0_270, %c416] : memref<2x1x512xf32, #tpu.memory_space<vmem>>, vector<2x1x32xf32>
    tpu.vector_store %arg21[%c0_269, %c0_270, %c416], %213 {strides = array<i32>} : memref<2x1x512xf32, #tpu.memory_space<vmem>>, vector<2x1x32xf32>,
    %215 = vector.extract_strided_slice %172 {offsets = [0, 3, 2, 0], sizes = [2, 1, 1, 32], strides = [1, 1, 1, 1]} : vector<2x4x4x32xf32> to vector<2x1x1x32xf32>
    %216 = vector.shape_cast %215 : vector<2x1x1x32xf32> to vector<2x1x32xf32>
    %c0_271 = arith.constant 0 : index
    %c0_272 = arith.constant 0 : index
    %c448 = arith.constant 448 : index
    %217 = vector.load %arg21[%c0_271, %c0_272, %c448] : memref<2x1x512xf32, #tpu.memory_space<vmem>>, vector<2x1x32xf32>
    tpu.vector_store %arg21[%c0_271, %c0_272, %c448], %216 {strides = array<i32>} : memref<2x1x512xf32, #tpu.memory_space<vmem>>, vector<2x1x32xf32>,
    %218 = vector.extract_strided_slice %172 {offsets = [0, 3, 3, 0], sizes = [2, 1, 1, 32], strides = [1, 1, 1, 1]} : vector<2x4x4x32xf32> to vector<2x1x1x32xf32>
    %219 = vector.shape_cast %218 : vector<2x1x1x32xf32> to vector<2x1x32xf32>
    %c0_273 = arith.constant 0 : index
    %c0_274 = arith.constant 0 : index
    %c480 = arith.constant 480 : index
    %220 = vector.load %arg21[%c0_273, %c0_274, %c480] : memref<2x1x512xf32, #tpu.memory_space<vmem>>, vector<2x1x32xf32>
    tpu.vector_store %arg21[%c0_273, %c0_274, %c480], %219 {strides = array<i32>} : memref<2x1x512xf32, #tpu.memory_space<vmem>>, vector<2x1x32xf32>,
    %c0_275 = arith.constant 0 : index
    %c0_276 = arith.constant 0 : index
    %c0_277 = arith.constant 0 : index
    %221 = vector.load %arg21[%c0_275, %c0_276, %c0_277] : memref<2x1x512xf32, #tpu.memory_space<vmem>>, vector<2x1x512xf32>
    %222 = vector.shape_cast %221 : vector<2x1x512xf32> to vector<2x512xf32>
    %c0_278 = arith.constant 0 : index
    %c0_279 = arith.constant 0 : index
    %223 = vector.load %arg12[%c0_278, %c0_279] : memref<512x4xf32, #tpu.memory_space<vmem>>, vector<512x4xf32>
    %cst_280 = arith.constant dense<0.000000e+00> : vector<2x4xf32>
    %224 = tpu.matmul %222, %223, %cst_280 {dimension_numbers = #tpu.dot_dimension_numbers<[1], [0], [0], [1], [0, 0, 1, 1], [], []>} : vector<2x512xf32>, vector<512x4xf32>, vector<2x4xf32> -> vector<2x4xf32>
    %c0_281 = arith.constant 0 : index
    %c0_282 = arith.constant 0 : index
    %225 = vector.load %arg13[%c0_281, %c0_282] : memref<1x4xf32, #tpu.memory_space<vmem>>, vector<1x4xf32>
    %226 = vector.broadcast %225 : vector<1x4xf32> to vector<2x4xf32>
    %227 = arith.addf %224, %226 : vector<2x4xf32>
    %228 = vector.extract_strided_slice %227 {offsets = [0, 0], sizes = [2, 2], strides = [1, 1]} : vector<2x4xf32> to vector<2x2xf32>
    %c0_283 = arith.constant 0 : index
    %c0_284 = arith.constant 0 : index
    %229 = vector.load %arg14[%c0_283, %c0_284] : memref<2x2xf32, #tpu.memory_space<vmem>>, vector<2x2xf32>
    tpu.vector_store %arg14[%c0_283, %c0_284], %228 {strides = array<i32>} : memref<2x2xf32, #tpu.memory_space<vmem>>, vector<2x2xf32>,
    %230 = vector.extract_strided_slice %227 {offsets = [0, 2], sizes = [2, 2], strides = [1, 1]} : vector<2x4xf32> to vector<2x2xf32>
    %cst_285 = arith.constant 0.000000e+00 : f32
    %231 = vector.broadcast %cst_285 : f32 to vector<2x2xf32>
    %232 = arith.maximumf %230, %231 : vector<2x2xf32>
    %233 = math.absf %230 : vector<2x2xf32>
    %cst_286 = arith.constant 0.000000e+00 : f32
    %234 = vector.broadcast %cst_286 : f32 to vector<2x2xf32>
    %235 = arith.subf %234, %233 : vector<2x2xf32>
    %236 = math.exp %235 : vector<2x2xf32>
    %cst_287 = arith.constant 1.000000e+00 : f32
    %237 = vector.broadcast %cst_287 : f32 to vector<2x2xf32>
    %238 = arith.addf %237, %236 : vector<2x2xf32>
    %239 = math.log %238 : vector<2x2xf32>
    %240 = arith.addf %232, %239 : vector<2x2xf32>
    %c0_288 = arith.constant 0 : index
    %c0_289 = arith.constant 0 : index
    %241 = vector.load %arg15[%c0_288, %c0_289] : memref<2x2xf32, #tpu.memory_space<vmem>>, vector<2x2xf32>
    tpu.vector_store %arg15[%c0_288, %c0_289], %240 {strides = array<i32>} : memref<2x2xf32, #tpu.memory_space<vmem>>, vector<2x2xf32>,
    return
  }
  func.func @transform_0(%arg0: i32) -> (i32, i32, i32, i32) {
    %c0_i32 = arith.constant 0 : i32
    %c0_i32_0 = arith.constant 0 : i32
    %c0_i32_1 = arith.constant 0 : i32
    %c0_i32_2 = arith.constant 0 : i32
    return %arg0, %c0_i32, %c0_i32_0, %c0_i32_1 : i32, i32, i32, i32
  }
  func.func @transform_1(%arg0: i32) -> (i32, i32) {
    %c0_i32 = arith.constant 0 : i32
    %c0_i32_0 = arith.constant 0 : i32
    %c0_i32_1 = arith.constant 0 : i32
    return %c0_i32, %c0_i32_0 : i32, i32
  }
  func.func @transform_2(%arg0: i32) -> (i32, i32) {
    %c0_i32 = arith.constant 0 : i32
    %c0_i32_0 = arith.constant 0 : i32
    %c0_i32_1 = arith.constant 0 : i32
    return %c0_i32, %c0_i32_0 : i32, i32
  }
  func.func @transform_3(%arg0: i32) -> (i32, i32) {
    %c0_i32 = arith.constant 0 : i32
    %c0_i32_0 = arith.constant 0 : i32
    %c0_i32_1 = arith.constant 0 : i32
    return %c0_i32, %c0_i32_0 : i32, i32
  }
  func.func @transform_4(%arg0: i32) -> (i32, i32) {
    %c0_i32 = arith.constant 0 : i32
    %c0_i32_0 = arith.constant 0 : i32
    %c0_i32_1 = arith.constant 0 : i32
    return %c0_i32, %c0_i32_0 : i32, i32
  }
  func.func @transform_5(%arg0: i32) -> (i32, i32) {
    %c0_i32 = arith.constant 0 : i32
    %c0_i32_0 = arith.constant 0 : i32
    %c0_i32_1 = arith.constant 0 : i32
    return %c0_i32, %c0_i32_0 : i32, i32
  }
  func.func @transform_6(%arg0: i32) -> (i32, i32) {
    %c0_i32 = arith.constant 0 : i32
    %c0_i32_0 = arith.constant 0 : i32
    %c0_i32_1 = arith.constant 0 : i32
    return %c0_i32, %c0_i32_0 : i32, i32
  }
  func.func @transform_7(%arg0: i32) -> (i32, i32) {
    %c0_i32 = arith.constant 0 : i32
    %c0_i32_0 = arith.constant 0 : i32
    %c0_i32_1 = arith.constant 0 : i32
    return %c0_i32, %c0_i32_0 : i32, i32
  }
  func.func @transform_8(%arg0: i32) -> (i32, i32) {
    %c0_i32 = arith.constant 0 : i32
    %c0_i32_0 = arith.constant 0 : i32
    %c0_i32_1 = arith.constant 0 : i32
    return %c0_i32, %c0_i32_0 : i32, i32
  }
  func.func @transform_9(%arg0: i32) -> (i32, i32) {
    %c0_i32 = arith.constant 0 : i32
    %c0_i32_0 = arith.constant 0 : i32
    %c0_i32_1 = arith.constant 0 : i32
    return %c0_i32, %c0_i32_0 : i32, i32
  }
  func.func @transform_10(%arg0: i32) -> (i32, i32) {
    %c0_i32 = arith.constant 0 : i32
    %c0_i32_0 = arith.constant 0 : i32
    %c0_i32_1 = arith.constant 0 : i32
    return %c0_i32, %c0_i32_0 : i32, i32
  }
  func.func @transform_11(%arg0: i32) -> (i32, i32) {
    %c0_i32 = arith.constant 0 : i32
    %c0_i32_0 = arith.constant 0 : i32
    %c0_i32_1 = arith.constant 0 : i32
    return %c0_i32, %c0_i32_0 : i32, i32
  }
  func.func @transform_12(%arg0: i32) -> (i32, i32) {
    %c0_i32 = arith.constant 0 : i32
    %c0_i32_0 = arith.constant 0 : i32
    %c0_i32_1 = arith.constant 0 : i32
    return %c0_i32, %c0_i32_0 : i32, i32
  }
  func.func @transform_13(%arg0: i32) -> (i32, i32) {
    %c0_i32 = arith.constant 0 : i32
    %c0_i32_0 = arith.constant 0 : i32
    return %arg0, %c0_i32 : i32, i32
  }
  func.func @transform_14(%arg0: i32) -> (i32, i32) {
    %c0_i32 = arith.constant 0 : i32
    %c0_i32_0 = arith.constant 0 : i32
    return %arg0, %c0_i32 : i32, i32
  }
}

</mosaic_0001>

<llo_original>
// kernel: conv_encoder_forward.1
$region0: #{conv_encoder_forward.1}
  #allocation0 [shape = 'u32[]', space=smem, size = 0x4, offset = 0x4, fixed_abs, tag = 'smem constant byte address 0x4 - core index']
  #allocation1 [shape = 'u32[144,128]{1,0:T(1,128)}', space=vmem, size = 0x12000, scoped, tag = 'internal scratch']
  #allocation2 [shape = 'f32[2,16,16,9]{3,2,1,0:T(8,128)}', space=vmem, size = 0x40000, scoped, tag = 'scratch operand']
  #allocation3 [shape = 'f32[2,8,8,72]{3,2,1,0:T(8,128)}', space=vmem, size = 0x10000, scoped, tag = 'scratch operand']
  #allocation4 [shape = 'f32[2,8,8,144]{3,2,1,0:T(8,128)}', space=vmem, size = 0x20000, scoped, tag = 'scratch operand']
  #allocation5 [shape = 'f32[2,4,4,144]{3,2,1,0:T(4,128)}', space=vmem, size = 0x8000, scoped, tag = 'scratch operand']
  #allocation6 [shape = 'f32[2,4,4,288]{3,2,1,0:T(4,128)}', space=vmem, size = 0xc000, scoped, tag = 'scratch operand']
  #allocation7 [shape = 'f32[2,1,512]{2,1,0:T(1,128)}', space=vmem, size = 0x1000, scoped, tag = 'scratch operand']
  %s0 = inlined_call_operand.vmem [shape: f32[2,16,16,1], index: 0, kind: input, shape index: {}]
  %s1 = inlined_call_operand.vmem [shape: f32[9,8], index: 1, kind: input, shape index: {}]
  %s2 = inlined_call_operand.vmem [shape: f32[72,16], index: 2, kind: input, shape index: {}]
  %s3 = inlined_call_operand.vmem [shape: f32[144,16], index: 3, kind: input, shape index: {}]
  %s4 = inlined_call_operand.vmem [shape: f32[144,32], index: 4, kind: input, shape index: {}]
  %s5 = inlined_call_operand.vmem [shape: f32[288,32], index: 5, kind: input, shape index: {}]
  %s6 = inlined_call_operand.vmem [shape: f32[1,8], index: 6, kind: input, shape index: {}]
  %s7 = inlined_call_operand.vmem [shape: f32[1,16], index: 7, kind: input, shape index: {}]
  %s8 = inlined_call_operand.vmem [shape: f32[1,16], index: 8, kind: input, shape index: {}]
  %s9 = inlined_call_operand.vmem [shape: f32[1,32], index: 9, kind: input, shape index: {}]
  %s10 = inlined_call_operand.vmem [shape: f32[1,32], index: 10, kind: input, shape index: {}]
  %s11 = inlined_call_operand.vmem [shape: f32[512,4], index: 11, kind: input, shape index: {}]
  %s12 = inlined_call_operand.vmem [shape: f32[1,4], index: 12, kind: input, shape index: {}]
  %s13 = inlined_call_operand.hbm [shape: f32[2,2], index: 13, kind: output, shape index: {0}]
  %s14 = inlined_call_operand.hbm [shape: f32[2,2], index: 14, kind: output, shape index: {1}]
  %15 = xla_tuple %s13, %s14
  %s16 = sld [smem:[#allocation0]]
  $region70: #{conv_encoder_forward.1} parent=0
    _
  %s18 = ssub.s32 1, %s16
  %s19 = scalar_select 0, %s18, %s16
  $region1: #{conv_encoder_forward.1} parent=0
    #allocation8 [shape = 'u8[1024]{0}', space=vmem, size = 0x400, scoped, tag = 'output window, operand 0, single buffered']
    #allocation9 [shape = 's32[1]{0}', space=sflag, size = 0x4, scoped, tag = 'scoped memory for conv_encoder_forward.1']
    #allocation10 [shape = 'u8[1024]{0}', space=vmem, size = 0x400, scoped, tag = 'output window, operand 1, single buffered']
    #allocation11 [shape = 's32[1]{0}', space=sflag, size = 0x4, scoped, tag = 'scoped memory for conv_encoder_forward.1']
    %20 = vsyncpa [#allocation9], 0
    %21 = vsyncpa [#allocation11], 0
    // Predicated region
    $region2: #{conv_encoder_forward.1} parent=1 // pred_check
      _
    $region3: #{conv_encoder_forward.1} parent=1 // pred_check_branch
      %23 = sbr.rel (0) target = $region5
    $region4: #{conv_encoder_forward.1} parent=1 // pred_region
      _
    $region5: #{conv_encoder_forward.1} parent=1 // pred_fallthru
      _
    // Predicated region
    $region6: #{conv_encoder_forward.1} parent=1 // pred_check
      _
    $region7: #{conv_encoder_forward.1} parent=1 // pred_check_branch
      %25 = sbr.rel (0) target = $region9
    $region8: #{conv_encoder_forward.1} parent=1 // pred_region
      _
    $region9: #{conv_encoder_forward.1} parent=1 // pred_fallthru
      _
    // Predicated region
    $region10: #{conv_encoder_forward.1} parent=1 // pred_check
      _
    $region11: #{conv_encoder_forward.1} parent=1 // pred_check_branch
      %27 = sbr.rel (0) target = $region13
    $region12: #{conv_encoder_forward.1} parent=1 // pred_region
      _
    $region13: #{conv_encoder_forward.1} parent=1 // pred_fallthru
      _
    // Predicated region
    $region14: #{conv_encoder_forward.1} parent=1 // pred_check
      _
    $region15: #{conv_encoder_forward.1} parent=1 // pred_check_branch
      %29 = sbr.rel (0) target = $region17
    $region16: #{conv_encoder_forward.1} parent=1 // pred_region
      _
    $region17: #{conv_encoder_forward.1} parent=1 // pred_fallthru
      _
    // Predicated region
    $region18: #{conv_encoder_forward.1} parent=1 // pred_check
      _
    $region19: #{conv_encoder_forward.1} parent=1 // pred_check_branch
      %31 = sbr.rel (0) target = $region21
    $region20: #{conv_encoder_forward.1} parent=1 // pred_region
      _
    $region21: #{conv_encoder_forward.1} parent=1 // pred_fallthru
      _
    // Predicated region
    $region22: #{conv_encoder_forward.1} parent=1 // pred_check
      _
    $region23: #{conv_encoder_forward.1} parent=1 // pred_check_branch
      %33 = sbr.rel (0) target = $region25
    $region24: #{conv_encoder_forward.1} parent=1 // pred_region
      _
    $region25: #{conv_encoder_forward.1} parent=1 // pred_fallthru
      _
    // Predicated region
    $region26: #{conv_encoder_forward.1} parent=1 // pred_check
      _
    $region27: #{conv_encoder_forward.1} parent=1 // pred_check_branch
      %35 = sbr.rel (0) target = $region29
    $region28: #{conv_encoder_forward.1} parent=1 // pred_region
      _
    $region29: #{conv_encoder_forward.1} parent=1 // pred_fallthru
      _
    // Predicated region
    $region30: #{conv_encoder_forward.1} parent=1 // pred_check
      _
    $region31: #{conv_encoder_forward.1} parent=1 // pred_check_branch
      %37 = sbr.rel (0) target = $region33
    $region32: #{conv_encoder_forward.1} parent=1 // pred_region
      _
    $region33: #{conv_encoder_forward.1} parent=1 // pred_fallthru
      _
    // Predicated region
    $region34: #{conv_encoder_forward.1} parent=1 // pred_check
      _
    $region35: #{conv_encoder_forward.1} parent=1 // pred_check_branch
      %39 = sbr.rel (0) target = $region37
    $region36: #{conv_encoder_forward.1} parent=1 // pred_region
      _
    $region37: #{conv_encoder_forward.1} parent=1 // pred_fallthru
      _
    // Predicated region
    $region38: #{conv_encoder_forward.1} parent=1 // pred_check
      _
    $region39: #{conv_encoder_forward.1} parent=1 // pred_check_branch
      %41 = sbr.rel (0) target = $region41
    $region40: #{conv_encoder_forward.1} parent=1 // pred_region
      _
    $region41: #{conv_encoder_forward.1} parent=1 // pred_fallthru
      _
    // Predicated region
    $region42: #{conv_encoder_forward.1} parent=1 // pred_check
      _
    $region43: #{conv_encoder_forward.1} parent=1 // pred_check_branch
      %43 = sbr.rel (0) target = $region45
    $region44: #{conv_encoder_forward.1} parent=1 // pred_region
      _
    $region45: #{conv_encoder_forward.1} parent=1 // pred_fallthru
      _
    // Predicated region
    $region46: #{conv_encoder_forward.1} parent=1 // pred_check
      _
    $region47: #{conv_encoder_forward.1} parent=1 // pred_check_branch
      %45 = sbr.rel (0) target = $region49
    $region48: #{conv_encoder_forward.1} parent=1 // pred_region
      _
    $region49: #{conv_encoder_forward.1} parent=1 // pred_fallthru
      _
    // Predicated region
    $region50: #{conv_encoder_forward.1} parent=1 // pred_check
      _
    $region51: #{conv_encoder_forward.1} parent=1 // pred_check_branch
      %47 = sbr.rel (0) target = $region53
    $region52: #{conv_encoder_forward.1} parent=1 // pred_region
      _
    $region53: #{conv_encoder_forward.1} parent=1 // pred_fallthru
      _
    %v48 = vld [vmem:[%s0] sm:$0xff]
    %v49 = vld [vmem:[%s0 + $0x8] sm:$0xff]
    %v50 = vld [vmem:[%s0 + $0x10] sm:$0xff]
    %v51 = vld [vmem:[%s0 + $0x18] sm:$0xff]
    %v52 = vld [vmem:[%s0 + $0x20] sm:$0xff]
    %v53 = vld [vmem:[%s0 + $0x28] sm:$0xff]
    %v54 = vld [vmem:[%s0 + $0x30] sm:$0xff]
    %v55 = vld [vmem:[%s0 + $0x38] sm:$0xff]
    %v56 = vld [vmem:[%s0 + $0x40] sm:$0xff]
    %v57 = vld [vmem:[%s0 + $0x48] sm:$0xff]
    %v58 = vld [vmem:[%s0 + $0x50] sm:$0xff]
    %v59 = vld [vmem:[%s0 + $0x58] sm:$0xff]
    %v60 = vld [vmem:[%s0 + $0x60] sm:$0xff]
    %v61 = vld [vmem:[%s0 + $0x68] sm:$0xff]
    %v62 = vld [vmem:[%s0 + $0x70] sm:$0xff]
    %v63 = vld [vmem:[%s0 + $0x78] sm:$0xff]
    %v64 = vld [vmem:[%s0 + $0x80] sm:$0xff]
    %v65 = vld [vmem:[%s0 + $0x88] sm:$0xff]
    %v66 = vld [vmem:[%s0 + $0x90] sm:$0xff]
    %v67 = vld [vmem:[%s0 + $0x98] sm:$0xff]
    %v68 = vld [vmem:[%s0 + $0xa0] sm:$0xff]
    %v69 = vld [vmem:[%s0 + $0xa8] sm:$0xff]
    %v70 = vld [vmem:[%s0 + $0xb0] sm:$0xff]
    %v71 = vld [vmem:[%s0 + $0xb8] sm:$0xff]
    %v72 = vld [vmem:[%s0 + $0xc0] sm:$0xff]
    %v73 = vld [vmem:[%s0 + $0xc8] sm:$0xff]
    %v74 = vld [vmem:[%s0 + $0xd0] sm:$0xff]
    %v75 = vld [vmem:[%s0 + $0xd8] sm:$0xff]
    %v76 = vld [vmem:[%s0 + $0xe0] sm:$0xff]
    %v77 = vld [vmem:[%s0 + $0xe8] sm:$0xff]
    %v78 = vld [vmem:[%s0 + $0xf0] sm:$0xff]
    %v79 = vld [vmem:[%s0 + $0xf8] sm:$0xff]
    %v80 = vld [vmem:[%s0 + $0x100] sm:$0xff]
    %v81 = vld [vmem:[%s0 + $0x108] sm:$0xff]
    %v82 = vld [vmem:[%s0 + $0x110] sm:$0xff]
    %v83 = vld [vmem:[%s0 + $0x118] sm:$0xff]
    %v84 = vld [vmem:[%s0 + $0x120] sm:$0xff]
    %v85 = vld [vmem:[%s0 + $0x128] sm:$0xff]
    %v86 = vld [vmem:[%s0 + $0x130] sm:$0xff]
    %v87 = vld [vmem:[%s0 + $0x138] sm:$0xff]
    %v88 = vld [vmem:[%s0 + $0x140] sm:$0xff]
    %v89 = vld [vmem:[%s0 + $0x148] sm:$0xff]
    %v90 = vld [vmem:[%s0 + $0x150] sm:$0xff]
    %v91 = vld [vmem:[%s0 + $0x158] sm:$0xff]
    %v92 = vld [vmem:[%s0 + $0x160] sm:$0xff]
    %v93 = vld [vmem:[%s0 + $0x168] sm:$0xff]
    %v94 = vld [vmem:[%s0 + $0x170] sm:$0xff]
    %v95 = vld [vmem:[%s0 + $0x178] sm:$0xff]
    %v96 = vld [vmem:[%s0 + $0x180] sm:$0xff]
    %v97 = vld [vmem:[%s0 + $0x188] sm:$0xff]
    %v98 = vld [vmem:[%s0 + $0x190] sm:$0xff]
    %v99 = vld [vmem:[%s0 + $0x198] sm:$0xff]
    %v100 = vld [vmem:[%s0 + $0x1a0] sm:$0xff]
    %v101 = vld [vmem:[%s0 + $0x1a8] sm:$0xff]
    %v102 = vld [vmem:[%s0 + $0x1b0] sm:$0xff]
    %v103 = vld [vmem:[%s0 + $0x1b8] sm:$0xff]
    %v104 = vld [vmem:[%s0 + $0x1c0] sm:$0xff]
    %v105 = vld [vmem:[%s0 + $0x1c8] sm:$0xff]
    %v106 = vld [vmem:[%s0 + $0x1d0] sm:$0xff]
    %v107 = vld [vmem:[%s0 + $0x1d8] sm:$0xff]
    %v108 = vld [vmem:[%s0 + $0x1e0] sm:$0xff]
    %v109 = vld [vmem:[%s0 + $0x1e8] sm:$0xff]
    %v110 = vld [vmem:[%s0 + $0x1f0] sm:$0xff]
    %v111 = vld [vmem:[%s0 + $0x1f8] sm:$0xff]
    %vm112 = vcmask 72704
    %113 = vst.msk [vmem:[#allocation2] sm:$0xff] %vm112, 0.0
    %114 = vst.msk [vmem:[#allocation2 + $0x8] sm:$0xff] %vm112, 0.0
    %115 = vst.msk [vmem:[#allocation2 + $0x10] sm:$0xff] %vm112, 0.0
    %116 = vst.msk [vmem:[#allocation2 + $0x18] sm:$0xff] %vm112, 0.0
    %117 = vst.msk [vmem:[#allocation2 + $0x20] sm:$0xff] %vm112, 0.0
    %118 = vst.msk [vmem:[#allocation2 + $0x28] sm:$0xff] %vm112, 0.0
    %119 = vst.msk [vmem:[#allocation2 + $0x30] sm:$0xff] %vm112, 0.0
    %120 = vst.msk [vmem:[#allocation2 + $0x38] sm:$0xff] %vm112, 0.0
    %121 = vst.msk [vmem:[#allocation2 + $0x40] sm:$0xff] %vm112, 0.0
    %122 = vst.msk [vmem:[#allocation2 + $0x48] sm:$0xff] %vm112, 0.0
    %123 = vst.msk [vmem:[#allocation2 + $0x50] sm:$0xff] %vm112, 0.0
    %124 = vst.msk [vmem:[#allocation2 + $0x58] sm:$0xff] %vm112, 0.0
    %125 = vst.msk [vmem:[#allocation2 + $0x60] sm:$0xff] %vm112, 0.0
    %126 = vst.msk [vmem:[#allocation2 + $0x68] sm:$0xff] %vm112, 0.0
    %127 = vst.msk [vmem:[#allocation2 + $0x70] sm:$0xff] %vm112, 0.0
    %128 = vst.msk [vmem:[#allocation2 + $0x78] sm:$0xff] %vm112, 0.0
    %129 = vst.msk [vmem:[#allocation2 + $0x80] sm:$0xff] %vm112, 0.0
    %130 = vst.msk [vmem:[#allocation2 + $0x88] sm:$0xff] %vm112, 0.0
    %131 = vst.msk [vmem:[#allocation2 + $0x90] sm:$0xff] %vm112, 0.0
    %132 = vst.msk [vmem:[#allocation2 + $0x98] sm:$0xff] %vm112, 0.0
    %133 = vst.msk [vmem:[#allocation2 + $0xa0] sm:$0xff] %vm112, 0.0
    %134 = vst.msk [vmem:[#allocation2 + $0xa8] sm:$0xff] %vm112, 0.0
    %135 = vst.msk [vmem:[#allocation2 + $0xb0] sm:$0xff] %vm112, 0.0
    %136 = vst.msk [vmem:[#allocation2 + $0xb8] sm:$0xff] %vm112, 0.0
    %137 = vst.msk [vmem:[#allocation2 + $0xc0] sm:$0xff] %vm112, 0.0
    %138 = vst.msk [vmem:[#allocation2 + $0xc8] sm:$0xff] %vm112, 0.0
    %139 = vst.msk [vmem:[#allocation2 + $0xd0] sm:$0xff] %vm112, 0.0
    %140 = vst.msk [vmem:[#allocation2 + $0xd8] sm:$0xff] %vm112, 0.0
    %141 = vst.msk [vmem:[#allocation2 + $0xe0] sm:$0xff] %vm112, 0.0
    %142 = vst.msk [vmem:[#allocation2 + $0xe8] sm:$0xff] %vm112, 0.0
    %143 = vst.msk [vmem:[#allocation2 + $0xf0] sm:$0xff] %vm112, 0.0
    %144 = vst.msk [vmem:[#allocation2 + $0xf8] sm:$0xff] %vm112, 0.0
    %145 = vst.msk [vmem:[#allocation2 + $0x100] sm:$0xff] %vm112, 0.0
    %146 = vst.msk [vmem:[#allocation2 + $0x108] sm:$0xff] %vm112, 0.0
    %147 = vst.msk [vmem:[#allocation2 + $0x110] sm:$0xff] %vm112, 0.0
    %148 = vst.msk [vmem:[#allocation2 + $0x118] sm:$0xff] %vm112, 0.0
    %149 = vst.msk [vmem:[#allocation2 + $0x120] sm:$0xff] %vm112, 0.0
    %150 = vst.msk [vmem:[#allocation2 + $0x128] sm:$0xff] %vm112, 0.0
    %151 = vst.msk [vmem:[#allocation2 + $0x130] sm:$0xff] %vm112, 0.0
    %152 = vst.msk [vmem:[#allocation2 + $0x138] sm:$0xff] %vm112, 0.0
    %153 = vst.msk [vmem:[#allocation2 + $0x140] sm:$0xff] %vm112, 0.0
    %154 = vst.msk [vmem:[#allocation2 + $0x148] sm:$0xff] %vm112, 0.0
    %155 = vst.msk [vmem:[#allocation2 + $0x150] sm:$0xff] %vm112, 0.0
    %156 = vst.msk [vmem:[#allocation2 + $0x158] sm:$0xff] %vm112, 0.0
    %157 = vst.msk [vmem:[#allocation2 + $0x160] sm:$0xff] %vm112, 0.0
    %158 = vst.msk [vmem:[#allocation2 + $0x168] sm:$0xff] %vm112, 0.0
    %159 = vst.msk [vmem:[#allocation2 + $0x170] sm:$0xff] %vm112, 0.0
    %160 = vst.msk [vmem:[#allocation2 + $0x178] sm:$0xff] %vm112, 0.0
    %161 = vst.msk [vmem:[#allocation2 + $0x180] sm:$0xff] %vm112, 0.0
    %162 = vst.msk [vmem:[#allocation2 + $0x188] sm:$0xff] %vm112, 0.0
    %163 = vst.msk [vmem:[#allocation2 + $0x190] sm:$0xff] %vm112, 0.0
    %164 = vst.msk [vmem:[#allocation2 + $0x198] sm:$0xff] %vm112, 0.0
    %165 = vst.msk [vmem:[#allocation2 + $0x1a0] sm:$0xff] %vm112, 0.0
    %166 = vst.msk [vmem:[#allocation2 + $0x1a8] sm:$0xff] %vm112, 0.0
    %167 = vst.msk [vmem:[#allocation2 + $0x1b0] sm:$0xff] %vm112, 0.0
    %168 = vst.msk [vmem:[#allocation2 + $0x1b8] sm:$0xff] %vm112, 0.0
    %169 = vst.msk [vmem:[#allocation2 + $0x1c0] sm:$0xff] %vm112, 0.0
    %170 = vst.msk [vmem:[#allocation2 + $0x1c8] sm:$0xff] %vm112, 0.0
    %171 = vst.msk [vmem:[#allocation2 + $0x1d0] sm:$0xff] %vm112, 0.0
    %172 = vst.msk [vmem:[#allocation2 + $0x1d8] sm:$0xff] %vm112, 0.0
    %173 = vst.msk [vmem:[#allocation2 + $0x1e0] sm:$0xff] %vm112, 0.0
    %174 = vst.msk [vmem:[#allocation2 + $0x1e8] sm:$0xff] %vm112, 0.0
    %175 = vst.msk [vmem:[#allocation2 + $0x1f0] sm:$0xff] %vm112, 0.0
    %176 = vst.msk [vmem:[#allocation2 + $0x1f8] sm:$0xff] %vm112, 0.0
    %s177 = scalar_lea.vmem [#allocation2], 16
    %vm178 = vcmask 7168
    %179 = vst.msk [vmem:[%s177 + $0x1] sm:$0xff] %vm178, %v48
    %vm180 = vcmask 6144
    %181 = vst.msk [vmem:[%s177 + $0x9] sm:$0x7f] %vm180, %v49
    %182 = vst.msk [vmem:[%s177 + $0x11] sm:$0xff] %vm178, %v50
    %183 = vst.msk [vmem:[%s177 + $0x19] sm:$0x7f] %vm180, %v51
    %184 = vst.msk [vmem:[%s177 + $0x21] sm:$0xff] %vm178, %v52
    %185 = vst.msk [vmem:[%s177 + $0x29] sm:$0x7f] %vm180, %v53
    %186 = vst.msk [vmem:[%s177 + $0x31] sm:$0xff] %vm178, %v54
    %187 = vst.msk [vmem:[%s177 + $0x39] sm:$0x7f] %vm180, %v55
    %188 = vst.msk [vmem:[%s177 + $0x41] sm:$0xff] %vm178, %v56
    %189 = vst.msk [vmem:[%s177 + $0x49] sm:$0x7f] %vm180, %v57
    %190 = vst.msk [vmem:[%s177 + $0x51] sm:$0xff] %vm178, %v58
    %191 = vst.msk [vmem:[%s177 + $0x59] sm:$0x7f] %vm180, %v59
    %192 = vst.msk [vmem:[%s177 + $0x61] sm:$0xff] %vm178, %v60
    %193 = vst.msk [vmem:[%s177 + $0x69] sm:$0x7f] %vm180, %v61
    %194 = vst.msk [vmem:[%s177 + $0x71] sm:$0xff] %vm178, %v62
    %195 = vst.msk [vmem:[%s177 + $0x79] sm:$0x7f] %vm180, %v63
    %196 = vst.msk [vmem:[%s177 + $0x81] sm:$0xff] %vm178, %v64
    %197 = vst.msk [vmem:[%s177 + $0x89] sm:$0x7f] %vm180, %v65
    %198 = vst.msk [vmem:[%s177 + $0x91] sm:$0xff] %vm178, %v66
    %199 = vst.msk [vmem:[%s177 + $0x99] sm:$0x7f] %vm180, %v67
    %200 = vst.msk [vmem:[%s177 + $0xa1] sm:$0xff] %vm178, %v68
    %201 = vst.msk [vmem:[%s177 + $0xa9] sm:$0x7f] %vm180, %v69
    %202 = vst.msk [vmem:[%s177 + $0xb1] sm:$0xff] %vm178, %v70
    %203 = vst.msk [vmem:[%s177 + $0xb9] sm:$0x7f] %vm180, %v71
    %204 = vst.msk [vmem:[%s177 + $0xc1] sm:$0xff] %vm178, %v72
    %205 = vst.msk [vmem:[%s177 + $0xc9] sm:$0x7f] %vm180, %v73
    %206 = vst.msk [vmem:[%s177 + $0xd1] sm:$0xff] %vm178, %v74
    %207 = vst.msk [vmem:[%s177 + $0xd9] sm:$0x7f] %vm180, %v75
    %208 = vst.msk [vmem:[%s177 + $0xe1] sm:$0xff] %vm178, %v76
    %209 = vst.msk [vmem:[%s177 + $0xe9] sm:$0x7f] %vm180, %v77
    %210 = vst.msk [vmem:[%s177 + $0x101] sm:$0xff] %vm178, %v80
    %211 = vst.msk [vmem:[%s177 + $0x109] sm:$0x7f] %vm180, %v81
    %212 = vst.msk [vmem:[%s177 + $0x111] sm:$0xff] %vm178, %v82
    %213 = vst.msk [vmem:[%s177 + $0x119] sm:$0x7f] %vm180, %v83
    %214 = vst.msk [vmem:[%s177 + $0x121] sm:$0xff] %vm178, %v84
    %215 = vst.msk [vmem:[%s177 + $0x129] sm:$0x7f] %vm180, %v85
    %216 = vst.msk [vmem:[%s177 + $0x131] sm:$0xff] %vm178, %v86
    %217 = vst.msk [vmem:[%s177 + $0x139] sm:$0x7f] %vm180, %v87
    %218 = vst.msk [vmem:[%s177 + $0x141] sm:$0xff] %vm178, %v88
    %219 = vst.msk [vmem:[%s177 + $0x149] sm:$0x7f] %vm180, %v89
    %220 = vst.msk [vmem:[%s177 + $0x151] sm:$0xff] %vm178, %v90
    %221 = vst.msk [vmem:[%s177 + $0x159] sm:$0x7f] %vm180, %v91
    %222 = vst.msk [vmem:[%s177 + $0x161] sm:$0xff] %vm178, %v92
    %223 = vst.msk [vmem:[%s177 + $0x169] sm:$0x7f] %vm180, %v93
    %224 = vst.msk [vmem:[%s177 + $0x171] sm:$0xff] %vm178, %v94
    %225 = vst.msk [vmem:[%s177 + $0x179] sm:$0x7f] %vm180, %v95
    %226 = vst.msk [vmem:[%s177 + $0x181] sm:$0xff] %vm178, %v96
    %227 = vst.msk [vmem:[%s177 + $0x189] sm:$0x7f] %vm180, %v97
    %228 = vst.msk [vmem:[%s177 + $0x191] sm:$0xff] %vm178, %v98
    %229 = vst.msk [vmem:[%s177 + $0x199] sm:$0x7f] %vm180, %v99
    %230 = vst.msk [vmem:[%s177 + $0x1a1] sm:$0xff] %vm178, %v100
    %231 = vst.msk [vmem:[%s177 + $0x1a9] sm:$0x7f] %vm180, %v101
    %232 = vst.msk [vmem:[%s177 + $0x1b1] sm:$0xff] %vm178, %v102
    %233 = vst.msk [vmem:[%s177 + $0x1b9] sm:$0x7f] %vm180, %v103
    %234 = vst.msk [vmem:[%s177 + $0x1c1] sm:$0xff] %vm178, %v104
    %235 = vst.msk [vmem:[%s177 + $0x1c9] sm:$0x7f] %vm180, %v105
    %236 = vst.msk [vmem:[%s177 + $0x1d1] sm:$0xff] %vm178, %v106
    %237 = vst.msk [vmem:[%s177 + $0x1d9] sm:$0x7f] %vm180, %v107
    %238 = vst.msk [vmem:[%s177 + $0x1e1] sm:$0xff] %vm178, %v108
    %239 = vst.msk [vmem:[%s177 + $0x1e9] sm:$0x7f] %vm180, %v109
    %300 = vrot.lane.b32.xlu0 %v48, 1
    %v301 = vpop.permute.xlu0 %300
    %302 = vrot.lane.b32.xlu0 %v49, 1
    %v303 = vpop.permute.xlu0 %302
    %304 = vrot.lane.b32.xlu0 %v50, 1
    %v305 = vpop.permute.xlu0 %304
    %306 = vrot.lane.b32.xlu0 %v51, 1
    %v307 = vpop.permute.xlu0 %306
    %308 = vrot.lane.b32.xlu0 %v52, 1
    %v309 = vpop.permute.xlu0 %308
    %310 = vrot.lane.b32.xlu0 %v53, 1
    %v311 = vpop.permute.xlu0 %310
    %312 = vrot.lane.b32.xlu0 %v54, 1
    %v313 = vpop.permute.xlu0 %312
    %314 = vrot.lane.b32.xlu0 %v55, 1
    %v315 = vpop.permute.xlu0 %314
    %316 = vrot.lane.b32.xlu0 %v56, 1
    %v317 = vpop.permute.xlu0 %316
    %318 = vrot.lane.b32.xlu0 %v57, 1
    %v319 = vpop.permute.xlu0 %318
    %320 = vrot.lane.b32.xlu0 %v58, 1
    %v321 = vpop.permute.xlu0 %320
    %322 = vrot.lane.b32.xlu0 %v59, 1
    %v323 = vpop.permute.xlu0 %322
    %324 = vrot.lane.b32.xlu0 %v60, 1
    %v325 = vpop.permute.xlu0 %324
    %326 = vrot.lane.b32.xlu0 %v61, 1
    %v327 = vpop.permute.xlu0 %326
    %328 = vrot.lane.b32.xlu0 %v62, 1
    %v329 = vpop.permute.xlu0 %328
    %330 = vrot.lane.b32.xlu0 %v63, 1
    %v331 = vpop.permute.xlu0 %330
    %332 = vrot.lane.b32.xlu0 %v64, 1
    %v333 = vpop.permute.xlu0 %332
    %334 = vrot.lane.b32.xlu0 %v65, 1
    %v335 = vpop.permute.xlu0 %334
    %336 = vrot.lane.b32.xlu0 %v66, 1
    %v337 = vpop.permute.xlu0 %336
    %338 = vrot.lane.b32.xlu0 %v67, 1
    %v339 = vpop.permute.xlu0 %338
    %340 = vrot.lane.b32.xlu0 %v68, 1
    %v341 = vpop.permute.xlu0 %340
    %342 = vrot.lane.b32.xlu0 %v69, 1
    %v343 = vpop.permute.xlu0 %342
    %344 = vrot.lane.b32.xlu0 %v70, 1
    %v345 = vpop.permute.xlu0 %344
    %346 = vrot.lane.b32.xlu0 %v71, 1
    %v347 = vpop.permute.xlu0 %346
    %348 = vrot.lane.b32.xlu0 %v72, 1
    %v349 = vpop.permute.xlu0 %348
    %350 = vrot.lane.b32.xlu0 %v73, 1
    %v351 = vpop.permute.xlu0 %350
    %352 = vrot.lane.b32.xlu0 %v74, 1
    %v353 = vpop.permute.xlu0 %352
    %354 = vrot.lane.b32.xlu0 %v75, 1
    %v355 = vpop.permute.xlu0 %354
    %356 = vrot.lane.b32.xlu0 %v76, 1
    %v357 = vpop.permute.xlu0 %356
    %358 = vrot.lane.b32.xlu0 %v77, 1
    %v359 = vpop.permute.xlu0 %358
    %360 = vrot.lane.b32.xlu0 %v80, 1
    %v361 = vpop.permute.xlu0 %360
    %362 = vrot.lane.b32.xlu0 %v81, 1
    %v363 = vpop.permute.xlu0 %362
    %364 = vrot.lane.b32.xlu0 %v82, 1
    %v365 = vpop.permute.xlu0 %364
    %366 = vrot.lane.b32.xlu0 %v83, 1
    %v367 = vpop.permute.xlu0 %366
    %368 = vrot.lane.b32.xlu0 %v84, 1
    %v369 = vpop.permute.xlu0 %368
    %370 = vrot.lane.b32.xlu0 %v85, 1
    %v371 = vpop.permute.xlu0 %370
    %372 = vrot.lane.b32.xlu0 %v86, 1
    %v373 = vpop.permute.xlu0 %372
    %374 = vrot.lane.b32.xlu0 %v87, 1
    %v375 = vpop.permute.xlu0 %374
    %376 = vrot.lane.b32.xlu0 %v88, 1
    %v377 = vpop.permute.xlu0 %376
    %378 = vrot.lane.b32.xlu0 %v89, 1
    %v379 = vpop.permute.xlu0 %378
    %380 = vrot.lane.b32.xlu0 %v90, 1
    %v381 = vpop.permute.xlu0 %380
    %382 = vrot.lane.b32.xlu0 %v91, 1
    %v383 = vpop.permute.xlu0 %382
    %384 = vrot.lane.b32.xlu0 %v92, 1
    %v385 = vpop.permute.xlu0 %384
    %386 = vrot.lane.b32.xlu0 %v93, 1
    %v387 = vpop.permute.xlu0 %386
    %388 = vrot.lane.b32.xlu0 %v94, 1
    %v389 = vpop.permute.xlu0 %388
    %390 = vrot.lane.b32.xlu0 %v95, 1
    %v391 = vpop.permute.xlu0 %390
    %392 = vrot.lane.b32.xlu0 %v96, 1
    %v393 = vpop.permute.xlu0 %392
    %394 = vrot.lane.b32.xlu0 %v97, 1
    %v395 = vpop.permute.xlu0 %394
    %396 = vrot.lane.b32.xlu0 %v98, 1
    %v397 = vpop.permute.xlu0 %396
    %398 = vrot.lane.b32.xlu0 %v99, 1
    %v399 = vpop.permute.xlu0 %398
    %400 = vrot.lane.b32.xlu0 %v100, 1
    %v401 = vpop.permute.xlu0 %400
    %402 = vrot.lane.b32.xlu0 %v101, 1
    %v403 = vpop.permute.xlu0 %402
    %404 = vrot.lane.b32.xlu0 %v102, 1
    %v405 = vpop.permute.xlu0 %404
    %406 = vrot.lane.b32.xlu0 %v103, 1
    %v407 = vpop.permute.xlu0 %406
    %408 = vrot.lane.b32.xlu0 %v104, 1
    %v409 = vpop.permute.xlu0 %408
    %410 = vrot.lane.b32.xlu0 %v105, 1
    %v411 = vpop.permute.xlu0 %410
    %412 = vrot.lane.b32.xlu0 %v106, 1
    %v413 = vpop.permute.xlu0 %412
    %414 = vrot.lane.b32.xlu0 %v107, 1
    %v415 = vpop.permute.xlu0 %414
    %416 = vrot.lane.b32.xlu0 %v108, 1
    %v417 = vpop.permute.xlu0 %416
    %418 = vrot.lane.b32.xlu0 %v109, 1
    %v419 = vpop.permute.xlu0 %418
    %vm480 = vcmask 15368
    %481 = vst.msk [vmem:[%s177] sm:$0xff] %vm480, %v301
    %482 = vst.msk [vmem:[%s177 + $0x8] sm:$0xff] %vm480, %v303
    %483 = vst.msk [vmem:[%s177 + $0x10] sm:$0xff] %vm480, %v305
    %484 = vst.msk [vmem:[%s177 + $0x18] sm:$0xff] %vm480, %v307
    %485 = vst.msk [vmem:[%s177 + $0x20] sm:$0xff] %vm480, %v309
    %486 = vst.msk [vmem:[%s177 + $0x28] sm:$0xff] %vm480, %v311
    %487 = vst.msk [vmem:[%s177 + $0x30] sm:$0xff] %vm480, %v313
    %488 = vst.msk [vmem:[%s177 + $0x38] sm:$0xff] %vm480, %v315
    %489 = vst.msk [vmem:[%s177 + $0x40] sm:$0xff] %vm480, %v317
    %490 = vst.msk [vmem:[%s177 + $0x48] sm:$0xff] %vm480, %v319
    %491 = vst.msk [vmem:[%s177 + $0x50] sm:$0xff] %vm480, %v321
    %492 = vst.msk [vmem:[%s177 + $0x58] sm:$0xff] %vm480, %v323
    %493 = vst.msk [vmem:[%s177 + $0x60] sm:$0xff] %vm480, %v325
    %494 = vst.msk [vmem:[%s177 + $0x68] sm:$0xff] %vm480, %v327
    %495 = vst.msk [vmem:[%s177 + $0x70] sm:$0xff] %vm480, %v329
    %496 = vst.msk [vmem:[%s177 + $0x78] sm:$0xff] %vm480, %v331
    %497 = vst.msk [vmem:[%s177 + $0x80] sm:$0xff] %vm480, %v333
    %498 = vst.msk [vmem:[%s177 + $0x88] sm:$0xff] %vm480, %v335
    %499 = vst.msk [vmem:[%s177 + $0x90] sm:$0xff] %vm480, %v337
    %500 = vst.msk [vmem:[%s177 + $0x98] sm:$0xff] %vm480, %v339
    %501 = vst.msk [vmem:[%s177 + $0xa0] sm:$0xff] %vm480, %v341
    %502 = vst.msk [vmem:[%s177 + $0xa8] sm:$0xff] %vm480, %v343
    %503 = vst.msk [vmem:[%s177 + $0xb0] sm:$0xff] %vm480, %v345
    %504 = vst.msk [vmem:[%s177 + $0xb8] sm:$0xff] %vm480, %v347
    %505 = vst.msk [vmem:[%s177 + $0xc0] sm:$0xff] %vm480, %v349
    %506 = vst.msk [vmem:[%s177 + $0xc8] sm:$0xff] %vm480, %v351
    %507 = vst.msk [vmem:[%s177 + $0xd0] sm:$0xff] %vm480, %v353
    %508 = vst.msk [vmem:[%s177 + $0xd8] sm:$0xff] %vm480, %v355
    %509 = vst.msk [vmem:[%s177 + $0xe0] sm:$0xff] %vm480, %v357
    %510 = vst.msk [vmem:[%s177 + $0xe8] sm:$0xff] %vm480, %v359
    %511 = vst.msk [vmem:[%s177 + $0x100] sm:$0xff] %vm480, %v361
    %512 = vst.msk [vmem:[%s177 + $0x108] sm:$0xff] %vm480, %v363
    %513 = vst.msk [vmem:[%s177 + $0x110] sm:$0xff] %vm480, %v365
    %514 = vst.msk [vmem:[%s177 + $0x118] sm:$0xff] %vm480, %v367
    %515 = vst.msk [vmem:[%s177 + $0x120] sm:$0xff] %vm480, %v369
    %516 = vst.msk [vmem:[%s177 + $0x128] sm:$0xff] %vm480, %v371
    %517 = vst.msk [vmem:[%s177 + $0x130] sm:$0xff] %vm480, %v373
    %518 = vst.msk [vmem:[%s177 + $0x138] sm:$0xff] %vm480, %v375
    %519 = vst.msk [vmem:[%s177 + $0x140] sm:$0xff] %vm480, %v377
    %520 = vst.msk [vmem:[%s177 + $0x148] sm:$0xff] %vm480, %v379
    %521 = vst.msk [vmem:[%s177 + $0x150] sm:$0xff] %vm480, %v381
    %522 = vst.msk [vmem:[%s177 + $0x158] sm:$0xff] %vm480, %v383
    %523 = vst.msk [vmem:[%s177 + $0x160] sm:$0xff] %vm480, %v385
    %524 = vst.msk [vmem:[%s177 + $0x168] sm:$0xff] %vm480, %v387
    %525 = vst.msk [vmem:[%s177 + $0x170] sm:$0xff] %vm480, %v389
    %526 = vst.msk [vmem:[%s177 + $0x178] sm:$0xff] %vm480, %v391
    %527 = vst.msk [vmem:[%s177 + $0x180] sm:$0xff] %vm480, %v393
    %528 = vst.msk [vmem:[%s177 + $0x188] sm:$0xff] %vm480, %v395
    %529 = vst.msk [vmem:[%s177 + $0x190] sm:$0xff] %vm480, %v397
    %530 = vst.msk [vmem:[%s177 + $0x198] sm:$0xff] %vm480, %v399
    %531 = vst.msk [vmem:[%s177 + $0x1a0] sm:$0xff] %vm480, %v401
    %532 = vst.msk [vmem:[%s177 + $0x1a8] sm:$0xff] %vm480, %v403
    %533 = vst.msk [vmem:[%s177 + $0x1b0] sm:$0xff] %vm480, %v405
    %534 = vst.msk [vmem:[%s177 + $0x1b8] sm:$0xff] %vm480, %v407
    %535 = vst.msk [vmem:[%s177 + $0x1c0] sm:$0xff] %vm480, %v409
    %536 = vst.msk [vmem:[%s177 + $0x1c8] sm:$0xff] %vm480, %v411
    %537 = vst.msk [vmem:[%s177 + $0x1d0] sm:$0xff] %vm480, %v413
    %538 = vst.msk [vmem:[%s177 + $0x1d8] sm:$0xff] %vm480, %v415
    %539 = vst.msk [vmem:[%s177 + $0x1e0] sm:$0xff] %vm480, %v417
    %540 = vst.msk [vmem:[%s177 + $0x1e8] sm:$0xff] %vm480, %v419
    %541 = vrot.lane.b32.xlu0 %v48, 2
    %v542 = vpop.permute.xlu0 %541
    %543 = vrot.lane.b32.xlu0 %v49, 2
    %v544 = vpop.permute.xlu0 %543
    %545 = vrot.lane.b32.xlu0 %v50, 2
    %v546 = vpop.permute.xlu0 %545
    %547 = vrot.lane.b32.xlu0 %v51, 2
    %v548 = vpop.permute.xlu0 %547
    %549 = vrot.lane.b32.xlu0 %v52, 2
    %v550 = vpop.permute.xlu0 %549
    %551 = vrot.lane.b32.xlu0 %v53, 2
    %v552 = vpop.permute.xlu0 %551
    %553 = vrot.lane.b32.xlu0 %v54, 2
    %v554 = vpop.permute.xlu0 %553
    %555 = vrot.lane.b32.xlu0 %v55, 2
    %v556 = vpop.permute.xlu0 %555
    %557 = vrot.lane.b32.xlu0 %v56, 2
    %v558 = vpop.permute.xlu0 %557
    %559 = vrot.lane.b32.xlu0 %v57, 2
    %v560 = vpop.permute.xlu0 %559
    %561 = vrot.lane.b32.xlu0 %v58, 2
    %v562 = vpop.permute.xlu0 %561
    %563 = vrot.lane.b32.xlu0 %v59, 2
    %v564 = vpop.permute.xlu0 %563
    %565 = vrot.lane.b32.xlu0 %v60, 2
    %v566 = vpop.permute.xlu0 %565
    %567 = vrot.lane.b32.xlu0 %v61, 2
    %v568 = vpop.permute.xlu0 %567
    %569 = vrot.lane.b32.xlu0 %v62, 2
    %v570 = vpop.permute.xlu0 %569
    %571 = vrot.lane.b32.xlu0 %v63, 2
    %v572 = vpop.permute.xlu0 %571
    %573 = vrot.lane.b32.xlu0 %v64, 2
    %v574 = vpop.permute.xlu0 %573
    %575 = vrot.lane.b32.xlu0 %v65, 2
    %v576 = vpop.permute.xlu0 %575
    %577 = vrot.lane.b32.xlu0 %v66, 2
    %v578 = vpop.permute.xlu0 %577
    %579 = vrot.lane.b32.xlu0 %v67, 2
    %v580 = vpop.permute.xlu0 %579
    %581 = vrot.lane.b32.xlu0 %v68, 2
    %v582 = vpop.permute.xlu0 %581
    %583 = vrot.lane.b32.xlu0 %v69, 2
    %v584 = vpop.permute.xlu0 %583
    %585 = vrot.lane.b32.xlu0 %v70, 2
    %v586 = vpop.permute.xlu0 %585
    %587 = vrot.lane.b32.xlu0 %v71, 2
    %v588 = vpop.permute.xlu0 %587
    %589 = vrot.lane.b32.xlu0 %v72, 2
    %v590 = vpop.permute.xlu0 %589
    %591 = vrot.lane.b32.xlu0 %v73, 2
    %v592 = vpop.permute.xlu0 %591
    %593 = vrot.lane.b32.xlu0 %v74, 2
    %v594 = vpop.permute.xlu0 %593
    %595 = vrot.lane.b32.xlu0 %v75, 2
    %v596 = vpop.permute.xlu0 %595
    %597 = vrot.lane.b32.xlu0 %v76, 2
    %v598 = vpop.permute.xlu0 %597
    %599 = vrot.lane.b32.xlu0 %v77, 2
    %v600 = vpop.permute.xlu0 %599
    %601 = vrot.lane.b32.xlu0 %v80, 2
    %v602 = vpop.permute.xlu0 %601
    %603 = vrot.lane.b32.xlu0 %v81, 2
    %v604 = vpop.permute.xlu0 %603
    %605 = vrot.lane.b32.xlu0 %v82, 2
    %v606 = vpop.permute.xlu0 %605
    %607 = vrot.lane.b32.xlu0 %v83, 2
    %v608 = vpop.permute.xlu0 %607
    %609 = vrot.lane.b32.xlu0 %v84, 2
    %v610 = vpop.permute.xlu0 %609
    %611 = vrot.lane.b32.xlu0 %v85, 2
    %v612 = vpop.permute.xlu0 %611
    %613 = vrot.lane.b32.xlu0 %v86, 2
    %v614 = vpop.permute.xlu0 %613
    %615 = vrot.lane.b32.xlu0 %v87, 2
    %v616 = vpop.permute.xlu0 %615
    %617 = vrot.lane.b32.xlu0 %v88, 2
    %v618 = vpop.permute.xlu0 %617
    %619 = vrot.lane.b32.xlu0 %v89, 2
    %v620 = vpop.permute.xlu0 %619
    %621 = vrot.lane.b32.xlu0 %v90, 2
    %v622 = vpop.permute.xlu0 %621
    %623 = vrot.lane.b32.xlu0 %v91, 2
    %v624 = vpop.permute.xlu0 %623
    %625 = vrot.lane.b32.xlu0 %v92, 2
    %v626 = vpop.permute.xlu0 %625
    %627 = vrot.lane.b32.xlu0 %v93, 2
    %v628 = vpop.permute.xlu0 %627
    %629 = vrot.lane.b32.xlu0 %v94, 2
    %v630 = vpop.permute.xlu0 %629
    %631 = vrot.lane.b32.xlu0 %v95, 2
    %v632 = vpop.permute.xlu0 %631
    %633 = vrot.lane.b32.xlu0 %v96, 2
    %v634 = vpop.permute.xlu0 %633
    %635 = vrot.lane.b32.xlu0 %v97, 2
    %v636 = vpop.permute.xlu0 %635
    %637 = vrot.lane.b32.xlu0 %v98, 2
    %v638 = vpop.permute.xlu0 %637
    %639 = vrot.lane.b32.xlu0 %v99, 2
    %v640 = vpop.permute.xlu0 %639
    %641 = vrot.lane.b32.xlu0 %v100, 2
    %v642 = vpop.permute.xlu0 %641
    %643 = vrot.lane.b32.xlu0 %v101, 2
    %v644 = vpop.permute.xlu0 %643
    %645 = vrot.lane.b32.xlu0 %v102, 2
    %v646 = vpop.permute.xlu0 %645
    %647 = vrot.lane.b32.xlu0 %v103, 2
    %v648 = vpop.permute.xlu0 %647
    %649 = vrot.lane.b32.xlu0 %v104, 2
    %v650 = vpop.permute.xlu0 %649
    %651 = vrot.lane.b32.xlu0 %v105, 2
    %v652 = vpop.permute.xlu0 %651
    %653 = vrot.lane.b32.xlu0 %v106, 2
    %v654 = vpop.permute.xlu0 %653
    %655 = vrot.lane.b32.xlu0 %v107, 2
    %v656 = vpop.permute.xlu0 %655
    %657 = vrot.lane.b32.xlu0 %v108, 2
    %v658 = vpop.permute.xlu0 %657
    %659 = vrot.lane.b32.xlu0 %v109, 2
    %v660 = vpop.permute.xlu0 %659
    %vm721 = vcmask 23569
    %722 = vst.msk [vmem:[%s177 - $0x1] sm:$0xfe] %vm721, %v542
    %vm723 = vcmask 23568
    %724 = vst.msk [vmem:[%s177 + $0x7] sm:$0xff] %vm723, %v544
    %725 = vst.msk [vmem:[%s177 + $0xf] sm:$0xfe] %vm721, %v546
    %726 = vst.msk [vmem:[%s177 + $0x17] sm:$0xff] %vm723, %v548
    %727 = vst.msk [vmem:[%s177 + $0x1f] sm:$0xfe] %vm721, %v550
    %728 = vst.msk [vmem:[%s177 + $0x27] sm:$0xff] %vm723, %v552
    %729 = vst.msk [vmem:[%s177 + $0x2f] sm:$0xfe] %vm721, %v554
    %730 = vst.msk [vmem:[%s177 + $0x37] sm:$0xff] %vm723, %v556
    %731 = vst.msk [vmem:[%s177 + $0x3f] sm:$0xfe] %vm721, %v558
    %732 = vst.msk [vmem:[%s177 + $0x47] sm:$0xff] %vm723, %v560
    %733 = vst.msk [vmem:[%s177 + $0x4f] sm:$0xfe] %vm721, %v562
    %734 = vst.msk [vmem:[%s177 + $0x57] sm:$0xff] %vm723, %v564
    %735 = vst.msk [vmem:[%s177 + $0x5f] sm:$0xfe] %vm721, %v566
    %736 = vst.msk [vmem:[%s177 + $0x67] sm:$0xff] %vm723, %v568
    %737 = vst.msk [vmem:[%s177 + $0x6f] sm:$0xfe] %vm721, %v570
    %738 = vst.msk [vmem:[%s177 + $0x77] sm:$0xff] %vm723, %v572
    %739 = vst.msk [vmem:[%s177 + $0x7f] sm:$0xfe] %vm721, %v574
    %740 = vst.msk [vmem:[%s177 + $0x87] sm:$0xff] %vm723, %v576
    %741 = vst.msk [vmem:[%s177 + $0x8f] sm:$0xfe] %vm721, %v578
    %742 = vst.msk [vmem:[%s177 + $0x97] sm:$0xff] %vm723, %v580
    %743 = vst.msk [vmem:[%s177 + $0x9f] sm:$0xfe] %vm721, %v582
    %744 = vst.msk [vmem:[%s177 + $0xa7] sm:$0xff] %vm723, %v584
    %745 = vst.msk [vmem:[%s177 + $0xaf] sm:$0xfe] %vm721, %v586
    %746 = vst.msk [vmem:[%s177 + $0xb7] sm:$0xff] %vm723, %v588
    %747 = vst.msk [vmem:[%s177 + $0xbf] sm:$0xfe] %vm721, %v590
    %748 = vst.msk [vmem:[%s177 + $0xc7] sm:$0xff] %vm723, %v592
    %749 = vst.msk [vmem:[%s177 + $0xcf] sm:$0xfe] %vm721, %v594
    %750 = vst.msk [vmem:[%s177 + $0xd7] sm:$0xff] %vm723, %v596
    %751 = vst.msk [vmem:[%s177 + $0xdf] sm:$0xfe] %vm721, %v598
    %752 = vst.msk [vmem:[%s177 + $0xe7] sm:$0xff] %vm723, %v600
    %753 = vst.msk [vmem:[%s177 + $0xff] sm:$0xfe] %vm721, %v602
    %754 = vst.msk [vmem:[%s177 + $0x107] sm:$0xff] %vm723, %v604
    %755 = vst.msk [vmem:[%s177 + $0x10f] sm:$0xfe] %vm721, %v606
    %756 = vst.msk [vmem:[%s177 + $0x117] sm:$0xff] %vm723, %v608
    %757 = vst.msk [vmem:[%s177 + $0x11f] sm:$0xfe] %vm721, %v610
    %758 = vst.msk [vmem:[%s177 + $0x127] sm:$0xff] %vm723, %v612
    %759 = vst.msk [vmem:[%s177 + $0x12f] sm:$0xfe] %vm721, %v614
    %760 = vst.msk [vmem:[%s177 + $0x137] sm:$0xff] %vm723, %v616
    %761 = vst.msk [vmem:[%s177 + $0x13f] sm:$0xfe] %vm721, %v618
    %762 = vst.msk [vmem:[%s177 + $0x147] sm:$0xff] %vm723, %v620
    %763 = vst.msk [vmem:[%s177 + $0x14f] sm:$0xfe] %vm721, %v622
    %764 = vst.msk [vmem:[%s177 + $0x157] sm:$0xff] %vm723, %v624
    %765 = vst.msk [vmem:[%s177 + $0x15f] sm:$0xfe] %vm721, %v626
    %766 = vst.msk [vmem:[%s177 + $0x167] sm:$0xff] %vm723, %v628
    %767 = vst.msk [vmem:[%s177 + $0x16f] sm:$0xfe] %vm721, %v630
    %768 = vst.msk [vmem:[%s177 + $0x177] sm:$0xff] %vm723, %v632
    %769 = vst.msk [vmem:[%s177 + $0x17f] sm:$0xfe] %vm721, %v634
    %770 = vst.msk [vmem:[%s177 + $0x187] sm:$0xff] %vm723, %v636
    %771 = vst.msk [vmem:[%s177 + $0x18f] sm:$0xfe] %vm721, %v638
    %772 = vst.msk [vmem:[%s177 + $0x197] sm:$0xff] %vm723, %v640
    %773 = vst.msk [vmem:[%s177 + $0x19f] sm:$0xfe] %vm721, %v642
    %774 = vst.msk [vmem:[%s177 + $0x1a7] sm:$0xff] %vm723, %v644
    %775 = vst.msk [vmem:[%s177 + $0x1af] sm:$0xfe] %vm721, %v646
    %776 = vst.msk [vmem:[%s177 + $0x1b7] sm:$0xff] %vm723, %v648
    %777 = vst.msk [vmem:[%s177 + $0x1bf] sm:$0xfe] %vm721, %v650
    %778 = vst.msk [vmem:[%s177 + $0x1c7] sm:$0xff] %vm723, %v652
    %779 = vst.msk [vmem:[%s177 + $0x1cf] sm:$0xfe] %vm721, %v654
    %780 = vst.msk [vmem:[%s177 + $0x1d7] sm:$0xff] %vm723, %v656
    %781 = vst.msk [vmem:[%s177 + $0x1df] sm:$0xfe] %vm721, %v658
    %782 = vst.msk [vmem:[%s177 + $0x1e7] sm:$0xff] %vm723, %v660
    %787 = vrot.lane.b32.xlu0 %v48, 3
    %v788 = vpop.permute.xlu0 %787
    %789 = vrot.lane.b32.xlu0 %v49, 3
    %v790 = vpop.permute.xlu0 %789
    %791 = vrot.lane.b32.xlu0 %v50, 3
    %v792 = vpop.permute.xlu0 %791
    %793 = vrot.lane.b32.xlu0 %v51, 3
    %v794 = vpop.permute.xlu0 %793
    %795 = vrot.lane.b32.xlu0 %v52, 3
    %v796 = vpop.permute.xlu0 %795
    %797 = vrot.lane.b32.xlu0 %v53, 3
    %v798 = vpop.permute.xlu0 %797
    %799 = vrot.lane.b32.xlu0 %v54, 3
    %v800 = vpop.permute.xlu0 %799
    %801 = vrot.lane.b32.xlu0 %v55, 3
    %v802 = vpop.permute.xlu0 %801
    %803 = vrot.lane.b32.xlu0 %v56, 3
    %v804 = vpop.permute.xlu0 %803
    %805 = vrot.lane.b32.xlu0 %v57, 3
    %v806 = vpop.permute.xlu0 %805
    %807 = vrot.lane.b32.xlu0 %v58, 3
    %v808 = vpop.permute.xlu0 %807
    %809 = vrot.lane.b32.xlu0 %v59, 3
    %v810 = vpop.permute.xlu0 %809
    %811 = vrot.lane.b32.xlu0 %v60, 3
    %v812 = vpop.permute.xlu0 %811
    %813 = vrot.lane.b32.xlu0 %v61, 3
    %v814 = vpop.permute.xlu0 %813
    %815 = vrot.lane.b32.xlu0 %v62, 3
    %v816 = vpop.permute.xlu0 %815
    %817 = vrot.lane.b32.xlu0 %v63, 3
    %v818 = vpop.permute.xlu0 %817
    %819 = vrot.lane.b32.xlu0 %v64, 3
    %v820 = vpop.permute.xlu0 %819
    %821 = vrot.lane.b32.xlu0 %v65, 3
    %v822 = vpop.permute.xlu0 %821
    %823 = vrot.lane.b32.xlu0 %v66, 3
    %v824 = vpop.permute.xlu0 %823
    %825 = vrot.lane.b32.xlu0 %v67, 3
    %v826 = vpop.permute.xlu0 %825
    %827 = vrot.lane.b32.xlu0 %v68, 3
    %v828 = vpop.permute.xlu0 %827
    %829 = vrot.lane.b32.xlu0 %v69, 3
    %v830 = vpop.permute.xlu0 %829
    %831 = vrot.lane.b32.xlu0 %v70, 3
    %v832 = vpop.permute.xlu0 %831
    %833 = vrot.lane.b32.xlu0 %v71, 3
    %v834 = vpop.permute.xlu0 %833
    %835 = vrot.lane.b32.xlu0 %v72, 3
    %v836 = vpop.permute.xlu0 %835
    %837 = vrot.lane.b32.xlu0 %v73, 3
    %v838 = vpop.permute.xlu0 %837
    %839 = vrot.lane.b32.xlu0 %v74, 3
    %v840 = vpop.permute.xlu0 %839
    %841 = vrot.lane.b32.xlu0 %v75, 3
    %v842 = vpop.permute.xlu0 %841
    %843 = vrot.lane.b32.xlu0 %v76, 3
    %v844 = vpop.permute.xlu0 %843
    %845 = vrot.lane.b32.xlu0 %v77, 3
    %v846 = vpop.permute.xlu0 %845
    %847 = vrot.lane.b32.xlu0 %v78, 3
    %v848 = vpop.permute.xlu0 %847
    %849 = vrot.lane.b32.xlu0 %v79, 3
    %v850 = vpop.permute.xlu0 %849
    %851 = vrot.lane.b32.xlu0 %v80, 3
    %v852 = vpop.permute.xlu0 %851
    %853 = vrot.lane.b32.xlu0 %v81, 3
    %v854 = vpop.permute.xlu0 %853
    %855 = vrot.lane.b32.xlu0 %v82, 3
    %v856 = vpop.permute.xlu0 %855
    %857 = vrot.lane.b32.xlu0 %v83, 3
    %v858 = vpop.permute.xlu0 %857
    %859 = vrot.lane.b32.xlu0 %v84, 3
    %v860 = vpop.permute.xlu0 %859
    %861 = vrot.lane.b32.xlu0 %v85, 3
    %v862 = vpop.permute.xlu0 %861
    %863 = vrot.lane.b32.xlu0 %v86, 3
    %v864 = vpop.permute.xlu0 %863
    %865 = vrot.lane.b32.xlu0 %v87, 3
    %v866 = vpop.permute.xlu0 %865
    %867 = vrot.lane.b32.xlu0 %v88, 3
    %v868 = vpop.permute.xlu0 %867
    %869 = vrot.lane.b32.xlu0 %v89, 3
    %v870 = vpop.permute.xlu0 %869
    %871 = vrot.lane.b32.xlu0 %v90, 3
    %v872 = vpop.permute.xlu0 %871
    %873 = vrot.lane.b32.xlu0 %v91, 3
    %v874 = vpop.permute.xlu0 %873
    %875 = vrot.lane.b32.xlu0 %v92, 3
    %v876 = vpop.permute.xlu0 %875
    %877 = vrot.lane.b32.xlu0 %v93, 3
    %v878 = vpop.permute.xlu0 %877
    %879 = vrot.lane.b32.xlu0 %v94, 3
    %v880 = vpop.permute.xlu0 %879
    %881 = vrot.lane.b32.xlu0 %v95, 3
    %v882 = vpop.permute.xlu0 %881
    %883 = vrot.lane.b32.xlu0 %v96, 3
    %v884 = vpop.permute.xlu0 %883
    %885 = vrot.lane.b32.xlu0 %v97, 3
    %v886 = vpop.permute.xlu0 %885
    %887 = vrot.lane.b32.xlu0 %v98, 3
    %v888 = vpop.permute.xlu0 %887
    %889 = vrot.lane.b32.xlu0 %v99, 3
    %v890 = vpop.permute.xlu0 %889
    %891 = vrot.lane.b32.xlu0 %v100, 3
    %v892 = vpop.permute.xlu0 %891
    %893 = vrot.lane.b32.xlu0 %v101, 3
    %v894 = vpop.permute.xlu0 %893
    %895 = vrot.lane.b32.xlu0 %v102, 3
    %v896 = vpop.permute.xlu0 %895
    %897 = vrot.lane.b32.xlu0 %v103, 3
    %v898 = vpop.permute.xlu0 %897
    %899 = vrot.lane.b32.xlu0 %v104, 3
    %v900 = vpop.permute.xlu0 %899
    %901 = vrot.lane.b32.xlu0 %v105, 3
    %v902 = vpop.permute.xlu0 %901
    %903 = vrot.lane.b32.xlu0 %v106, 3
    %v904 = vpop.permute.xlu0 %903
    %905 = vrot.lane.b32.xlu0 %v107, 3
    %v906 = vpop.permute.xlu0 %905
    %907 = vrot.lane.b32.xlu0 %v108, 3
    %v908 = vpop.permute.xlu0 %907
    %909 = vrot.lane.b32.xlu0 %v109, 3
    %v910 = vpop.permute.xlu0 %909
    %911 = vrot.lane.b32.xlu0 %v110, 3
    %v912 = vpop.permute.xlu0 %911
    %913 = vrot.lane.b32.xlu0 %v111, 3
    %v914 = vpop.permute.xlu0 %913
    %vm979 = vcmask 31768
    %980 = vst.msk [vmem:[#allocation2 + $0x1] sm:$0xff] %vm979, %v788
    %vm981 = vcmask 30744
    %982 = vst.msk [vmem:[#allocation2 + $0x9] sm:$0x7f] %vm981, %v790
    %983 = vst.msk [vmem:[#allocation2 + $0x11] sm:$0xff] %vm979, %v792
    %984 = vst.msk [vmem:[#allocation2 + $0x19] sm:$0x7f] %vm981, %v794
    %985 = vst.msk [vmem:[#allocation2 + $0x21] sm:$0xff] %vm979, %v796
    %986 = vst.msk [vmem:[#allocation2 + $0x29] sm:$0x7f] %vm981, %v798
    %987 = vst.msk [vmem:[#allocation2 + $0x31] sm:$0xff] %vm979, %v800
    %988 = vst.msk [vmem:[#allocation2 + $0x39] sm:$0x7f] %vm981, %v802
    %989 = vst.msk [vmem:[#allocation2 + $0x41] sm:$0xff] %vm979, %v804
    %990 = vst.msk [vmem:[#allocation2 + $0x49] sm:$0x7f] %vm981, %v806
    %991 = vst.msk [vmem:[#allocation2 + $0x51] sm:$0xff] %vm979, %v808
    %992 = vst.msk [vmem:[#allocation2 + $0x59] sm:$0x7f] %vm981, %v810
    %993 = vst.msk [vmem:[#allocation2 + $0x61] sm:$0xff] %vm979, %v812
    %994 = vst.msk [vmem:[#allocation2 + $0x69] sm:$0x7f] %vm981, %v814
    %995 = vst.msk [vmem:[#allocation2 + $0x71] sm:$0xff] %vm979, %v816
    %996 = vst.msk [vmem:[#allocation2 + $0x79] sm:$0x7f] %vm981, %v818
    %997 = vst.msk [vmem:[#allocation2 + $0x81] sm:$0xff] %vm979, %v820
    %998 = vst.msk [vmem:[#allocation2 + $0x89] sm:$0x7f] %vm981, %v822
    %999 = vst.msk [vmem:[#allocation2 + $0x91] sm:$0xff] %vm979, %v824
    %1000 = vst.msk [vmem:[#allocation2 + $0x99] sm:$0x7f] %vm981, %v826
    %1001 = vst.msk [vmem:[#allocation2 + $0xa1] sm:$0xff] %vm979, %v828
    %1002 = vst.msk [vmem:[#allocation2 + $0xa9] sm:$0x7f] %vm981, %v830
    %1003 = vst.msk [vmem:[#allocation2 + $0xb1] sm:$0xff] %vm979, %v832
    %1004 = vst.msk [vmem:[#allocation2 + $0xb9] sm:$0x7f] %vm981, %v834
    %1005 = vst.msk [vmem:[#allocation2 + $0xc1] sm:$0xff] %vm979, %v836
    %1006 = vst.msk [vmem:[#allocation2 + $0xc9] sm:$0x7f] %vm981, %v838
    %1007 = vst.msk [vmem:[#allocation2 + $0xd1] sm:$0xff] %vm979, %v840
    %1008 = vst.msk [vmem:[#allocation2 + $0xd9] sm:$0x7f] %vm981, %v842
    %1009 = vst.msk [vmem:[#allocation2 + $0xe1] sm:$0xff] %vm979, %v844
    %1010 = vst.msk [vmem:[#allocation2 + $0xe9] sm:$0x7f] %vm981, %v846
    %1011 = vst.msk [vmem:[#allocation2 + $0xf1] sm:$0xff] %vm979, %v848
    %1012 = vst.msk [vmem:[#allocation2 + $0xf9] sm:$0x7f] %vm981, %v850
    %1013 = vst.msk [vmem:[#allocation2 + $0x101] sm:$0xff] %vm979, %v852
    %1014 = vst.msk [vmem:[#allocation2 + $0x109] sm:$0x7f] %vm981, %v854
    %1015 = vst.msk [vmem:[#allocation2 + $0x111] sm:$0xff] %vm979, %v856
    %1016 = vst.msk [vmem:[#allocation2 + $0x119] sm:$0x7f] %vm981, %v858
    %1017 = vst.msk [vmem:[#allocation2 + $0x121] sm:$0xff] %vm979, %v860
    %1018 = vst.msk [vmem:[#allocation2 + $0x129] sm:$0x7f] %vm981, %v862
    %1019 = vst.msk [vmem:[#allocation2 + $0x131] sm:$0xff] %vm979, %v864
    %1020 = vst.msk [vmem:[#allocation2 + $0x139] sm:$0x7f] %vm981, %v866
    %1021 = vst.msk [vmem:[#allocation2 + $0x141] sm:$0xff] %vm979, %v868
    %1022 = vst.msk [vmem:[#allocation2 + $0x149] sm:$0x7f] %vm981, %v870
    %1023 = vst.msk [vmem:[#allocation2 + $0x151] sm:$0xff] %vm979, %v872
    %1024 = vst.msk [vmem:[#allocation2 + $0x159] sm:$0x7f] %vm981, %v874
    %1025 = vst.msk [vmem:[#allocation2 + $0x161] sm:$0xff] %vm979, %v876
    %1026 = vst.msk [vmem:[#allocation2 + $0x169] sm:$0x7f] %vm981, %v878
    %1027 = vst.msk [vmem:[#allocation2 + $0x171] sm:$0xff] %vm979, %v880
    %1028 = vst.msk [vmem:[#allocation2 + $0x179] sm:$0x7f] %vm981, %v882
    %1029 = vst.msk [vmem:[#allocation2 + $0x181] sm:$0xff] %vm979, %v884
    %1030 = vst.msk [vmem:[#allocation2 + $0x189] sm:$0x7f] %vm981, %v886
    %1031 = vst.msk [vmem:[#allocation2 + $0x191] sm:$0xff] %vm979, %v888
    %1032 = vst.msk [vmem:[#allocation2 + $0x199] sm:$0x7f] %vm981, %v890
    %1033 = vst.msk [vmem:[#allocation2 + $0x1a1] sm:$0xff] %vm979, %v892
    %1034 = vst.msk [vmem:[#allocation2 + $0x1a9] sm:$0x7f] %vm981, %v894
    %1035 = vst.msk [vmem:[#allocation2 + $0x1b1] sm:$0xff] %vm979, %v896
    %1036 = vst.msk [vmem:[#allocation2 + $0x1b9] sm:$0x7f] %vm981, %v898
    %1037 = vst.msk [vmem:[#allocation2 + $0x1c1] sm:$0xff] %vm979, %v900
    %1038 = vst.msk [vmem:[#allocation2 + $0x1c9] sm:$0x7f] %vm981, %v902
    %1039 = vst.msk [vmem:[#allocation2 + $0x1d1] sm:$0xff] %vm979, %v904
    %1040 = vst.msk [vmem:[#allocation2 + $0x1d9] sm:$0x7f] %vm981, %v906
    %1041 = vst.msk [vmem:[#allocation2 + $0x1e1] sm:$0xff] %vm979, %v908
    %1042 = vst.msk [vmem:[#allocation2 + $0x1e9] sm:$0x7f] %vm981, %v910
    %1043 = vst.msk [vmem:[#allocation2 + $0x1f1] sm:$0xff] %vm979, %v912
    %1044 = vst.msk [vmem:[#allocation2 + $0x1f9] sm:$0x7f] %vm981, %v914
    %1045 = vrot.lane.b32.xlu0 %v48, 4
    %v1046 = vpop.permute.xlu0 %1045
    %1047 = vrot.lane.b32.xlu0 %v49, 4
    %v1048 = vpop.permute.xlu0 %1047
    %1049 = vrot.lane.b32.xlu0 %v50, 4
    %v1050 = vpop.permute.xlu0 %1049
    %1051 = vrot.lane.b32.xlu0 %v51, 4
    %v1052 = vpop.permute.xlu0 %1051
    %1053 = vrot.lane.b32.xlu0 %v52, 4
    %v1054 = vpop.permute.xlu0 %1053
    %1055 = vrot.lane.b32.xlu0 %v53, 4
    %v1056 = vpop.permute.xlu0 %1055
    %1057 = vrot.lane.b32.xlu0 %v54, 4
    %v1058 = vpop.permute.xlu0 %1057
    %1059 = vrot.lane.b32.xlu0 %v55, 4
    %v1060 = vpop.permute.xlu0 %1059
    %1061 = vrot.lane.b32.xlu0 %v56, 4
    %v1062 = vpop.permute.xlu0 %1061
    %1063 = vrot.lane.b32.xlu0 %v57, 4
    %v1064 = vpop.permute.xlu0 %1063
    %1065 = vrot.lane.b32.xlu0 %v58, 4
    %v1066 = vpop.permute.xlu0 %1065
    %1067 = vrot.lane.b32.xlu0 %v59, 4
    %v1068 = vpop.permute.xlu0 %1067
    %1069 = vrot.lane.b32.xlu0 %v60, 4
    %v1070 = vpop.permute.xlu0 %1069
    %1071 = vrot.lane.b32.xlu0 %v61, 4
    %v1072 = vpop.permute.xlu0 %1071
    %1073 = vrot.lane.b32.xlu0 %v62, 4
    %v1074 = vpop.permute.xlu0 %1073
    %1075 = vrot.lane.b32.xlu0 %v63, 4
    %v1076 = vpop.permute.xlu0 %1075
    %1077 = vrot.lane.b32.xlu0 %v64, 4
    %v1078 = vpop.permute.xlu0 %1077
    %1079 = vrot.lane.b32.xlu0 %v65, 4
    %v1080 = vpop.permute.xlu0 %1079
    %1081 = vrot.lane.b32.xlu0 %v66, 4
    %v1082 = vpop.permute.xlu0 %1081
    %1083 = vrot.lane.b32.xlu0 %v67, 4
    %v1084 = vpop.permute.xlu0 %1083
    %1085 = vrot.lane.b32.xlu0 %v68, 4
    %v1086 = vpop.permute.xlu0 %1085
    %1087 = vrot.lane.b32.xlu0 %v69, 4
    %v1088 = vpop.permute.xlu0 %1087
    %1089 = vrot.lane.b32.xlu0 %v70, 4
    %v1090 = vpop.permute.xlu0 %1089
    %1091 = vrot.lane.b32.xlu0 %v71, 4
    %v1092 = vpop.permute.xlu0 %1091
    %1093 = vrot.lane.b32.xlu0 %v72, 4
    %v1094 = vpop.permute.xlu0 %1093
    %1095 = vrot.lane.b32.xlu0 %v73, 4
    %v1096 = vpop.permute.xlu0 %1095
    %1097 = vrot.lane.b32.xlu0 %v74, 4
    %v1098 = vpop.permute.xlu0 %1097
    %1099 = vrot.lane.b32.xlu0 %v75, 4
    %v1100 = vpop.permute.xlu0 %1099
    %1101 = vrot.lane.b32.xlu0 %v76, 4
    %v1102 = vpop.permute.xlu0 %1101
    %1103 = vrot.lane.b32.xlu0 %v77, 4
    %v1104 = vpop.permute.xlu0 %1103
    %1105 = vrot.lane.b32.xlu0 %v78, 4
    %v1106 = vpop.permute.xlu0 %1105
    %1107 = vrot.lane.b32.xlu0 %v79, 4
    %v1108 = vpop.permute.xlu0 %1107
    %1109 = vrot.lane.b32.xlu0 %v80, 4
    %v1110 = vpop.permute.xlu0 %1109
    %1111 = vrot.lane.b32.xlu0 %v81, 4
    %v1112 = vpop.permute.xlu0 %1111
    %1113 = vrot.lane.b32.xlu0 %v82, 4
    %v1114 = vpop.permute.xlu0 %1113
    %1115 = vrot.lane.b32.xlu0 %v83, 4
    %v1116 = vpop.permute.xlu0 %1115
    %1117 = vrot.lane.b32.xlu0 %v84, 4
    %v1118 = vpop.permute.xlu0 %1117
    %1119 = vrot.lane.b32.xlu0 %v85, 4
    %v1120 = vpop.permute.xlu0 %1119
    %1121 = vrot.lane.b32.xlu0 %v86, 4
    %v1122 = vpop.permute.xlu0 %1121
    %1123 = vrot.lane.b32.xlu0 %v87, 4
    %v1124 = vpop.permute.xlu0 %1123
    %1125 = vrot.lane.b32.xlu0 %v88, 4
    %v1126 = vpop.permute.xlu0 %1125
    %1127 = vrot.lane.b32.xlu0 %v89, 4
    %v1128 = vpop.permute.xlu0 %1127
    %1129 = vrot.lane.b32.xlu0 %v90, 4
    %v1130 = vpop.permute.xlu0 %1129
    %1131 = vrot.lane.b32.xlu0 %v91, 4
    %v1132 = vpop.permute.xlu0 %1131
    %1133 = vrot.lane.b32.xlu0 %v92, 4
    %v1134 = vpop.permute.xlu0 %1133
    %1135 = vrot.lane.b32.xlu0 %v93, 4
    %v1136 = vpop.permute.xlu0 %1135
    %1137 = vrot.lane.b32.xlu0 %v94, 4
    %v1138 = vpop.permute.xlu0 %1137
    %1139 = vrot.lane.b32.xlu0 %v95, 4
    %v1140 = vpop.permute.xlu0 %1139
    %1141 = vrot.lane.b32.xlu0 %v96, 4
    %v1142 = vpop.permute.xlu0 %1141
    %1143 = vrot.lane.b32.xlu0 %v97, 4
    %v1144 = vpop.permute.xlu0 %1143
    %1145 = vrot.lane.b32.xlu0 %v98, 4
    %v1146 = vpop.permute.xlu0 %1145
    %1147 = vrot.lane.b32.xlu0 %v99, 4
    %v1148 = vpop.permute.xlu0 %1147
    %1149 = vrot.lane.b32.xlu0 %v100, 4
    %v1150 = vpop.permute.xlu0 %1149
    %1151 = vrot.lane.b32.xlu0 %v101, 4
    %v1152 = vpop.permute.xlu0 %1151
    %1153 = vrot.lane.b32.xlu0 %v102, 4
    %v1154 = vpop.permute.xlu0 %1153
    %1155 = vrot.lane.b32.xlu0 %v103, 4
    %v1156 = vpop.permute.xlu0 %1155
    %1157 = vrot.lane.b32.xlu0 %v104, 4
    %v1158 = vpop.permute.xlu0 %1157
    %1159 = vrot.lane.b32.xlu0 %v105, 4
    %v1160 = vpop.permute.xlu0 %1159
    %1161 = vrot.lane.b32.xlu0 %v106, 4
    %v1162 = vpop.permute.xlu0 %1161
    %1163 = vrot.lane.b32.xlu0 %v107, 4
    %v1164 = vpop.permute.xlu0 %1163
    %1165 = vrot.lane.b32.xlu0 %v108, 4
    %v1166 = vpop.permute.xlu0 %1165
    %1167 = vrot.lane.b32.xlu0 %v109, 4
    %v1168 = vpop.permute.xlu0 %1167
    %1169 = vrot.lane.b32.xlu0 %v110, 4
    %v1170 = vpop.permute.xlu0 %1169
    %1171 = vrot.lane.b32.xlu0 %v111, 4
    %v1172 = vpop.permute.xlu0 %1171
    %vm1237 = vcmask 39968
    %1238 = vst.msk [vmem:[#allocation2] sm:$0xff] %vm1237, %v1046
    %1239 = vst.msk [vmem:[#allocation2 + $0x8] sm:$0xff] %vm1237, %v1048
    %1240 = vst.msk [vmem:[#allocation2 + $0x10] sm:$0xff] %vm1237, %v1050
    %1241 = vst.msk [vmem:[#allocation2 + $0x18] sm:$0xff] %vm1237, %v1052
    %1242 = vst.msk [vmem:[#allocation2 + $0x20] sm:$0xff] %vm1237, %v1054
    %1243 = vst.msk [vmem:[#allocation2 + $0x28] sm:$0xff] %vm1237, %v1056
    %1244 = vst.msk [vmem:[#allocation2 + $0x30] sm:$0xff] %vm1237, %v1058
    %1245 = vst.msk [vmem:[#allocation2 + $0x38] sm:$0xff] %vm1237, %v1060
    %1246 = vst.msk [vmem:[#allocation2 + $0x40] sm:$0xff] %vm1237, %v1062
    %1247 = vst.msk [vmem:[#allocation2 + $0x48] sm:$0xff] %vm1237, %v1064
    %1248 = vst.msk [vmem:[#allocation2 + $0x50] sm:$0xff] %vm1237, %v1066
    %1249 = vst.msk [vmem:[#allocation2 + $0x58] sm:$0xff] %vm1237, %v1068
    %1250 = vst.msk [vmem:[#allocation2 + $0x60] sm:$0xff] %vm1237, %v1070
    %1251 = vst.msk [vmem:[#allocation2 + $0x68] sm:$0xff] %vm1237, %v1072
    %1252 = vst.msk [vmem:[#allocation2 + $0x70] sm:$0xff] %vm1237, %v1074
    %1253 = vst.msk [vmem:[#allocation2 + $0x78] sm:$0xff] %vm1237, %v1076
    %1254 = vst.msk [vmem:[#allocation2 + $0x80] sm:$0xff] %vm1237, %v1078
    %1255 = vst.msk [vmem:[#allocation2 + $0x88] sm:$0xff] %vm1237, %v1080
    %1256 = vst.msk [vmem:[#allocation2 + $0x90] sm:$0xff] %vm1237, %v1082
    %1257 = vst.msk [vmem:[#allocation2 + $0x98] sm:$0xff] %vm1237, %v1084
    %1258 = vst.msk [vmem:[#allocation2 + $0xa0] sm:$0xff] %vm1237, %v1086
    %1259 = vst.msk [vmem:[#allocation2 + $0xa8] sm:$0xff] %vm1237, %v1088
    %1260 = vst.msk [vmem:[#allocation2 + $0xb0] sm:$0xff] %vm1237, %v1090
    %1261 = vst.msk [vmem:[#allocation2 + $0xb8] sm:$0xff] %vm1237, %v1092
    %1262 = vst.msk [vmem:[#allocation2 + $0xc0] sm:$0xff] %vm1237, %v1094
    %1263 = vst.msk [vmem:[#allocation2 + $0xc8] sm:$0xff] %vm1237, %v1096
    %1264 = vst.msk [vmem:[#allocation2 + $0xd0] sm:$0xff] %vm1237, %v1098
    %1265 = vst.msk [vmem:[#allocation2 + $0xd8] sm:$0xff] %vm1237, %v1100
    %1266 = vst.msk [vmem:[#allocation2 + $0xe0] sm:$0xff] %vm1237, %v1102
    %1267 = vst.msk [vmem:[#allocation2 + $0xe8] sm:$0xff] %vm1237, %v1104
    %1268 = vst.msk [vmem:[#allocation2 + $0xf0] sm:$0xff] %vm1237, %v1106
    %1269 = vst.msk [vmem:[#allocation2 + $0xf8] sm:$0xff] %vm1237, %v1108
    %1270 = vst.msk [vmem:[#allocation2 + $0x100] sm:$0xff] %vm1237, %v1110
    %1271 = vst.msk [vmem:[#allocation2 + $0x108] sm:$0xff] %vm1237, %v1112
    %1272 = vst.msk [vmem:[#allocation2 + $0x110] sm:$0xff] %vm1237, %v1114
    %1273 = vst.msk [vmem:[#allocation2 + $0x118] sm:$0xff] %vm1237, %v1116
    %1274 = vst.msk [vmem:[#allocation2 + $0x120] sm:$0xff] %vm1237, %v1118
    %1275 = vst.msk [vmem:[#allocation2 + $0x128] sm:$0xff] %vm1237, %v1120
    %1276 = vst.msk [vmem:[#allocation2 + $0x130] sm:$0xff] %vm1237, %v1122
    %1277 = vst.msk [vmem:[#allocation2 + $0x138] sm:$0xff] %vm1237, %v1124
    %1278 = vst.msk [vmem:[#allocation2 + $0x140] sm:$0xff] %vm1237, %v1126
    %1279 = vst.msk [vmem:[#allocation2 + $0x148] sm:$0xff] %vm1237, %v1128
    %1280 = vst.msk [vmem:[#allocation2 + $0x150] sm:$0xff] %vm1237, %v1130
    %1281 = vst.msk [vmem:[#allocation2 + $0x158] sm:$0xff] %vm1237, %v1132
    %1282 = vst.msk [vmem:[#allocation2 + $0x160] sm:$0xff] %vm1237, %v1134
    %1283 = vst.msk [vmem:[#allocation2 + $0x168] sm:$0xff] %vm1237, %v1136
    %1284 = vst.msk [vmem:[#allocation2 + $0x170] sm:$0xff] %vm1237, %v1138
    %1285 = vst.msk [vmem:[#allocation2 + $0x178] sm:$0xff] %vm1237, %v1140
    %1286 = vst.msk [vmem:[#allocation2 + $0x180] sm:$0xff] %vm1237, %v1142
    %1287 = vst.msk [vmem:[#allocation2 + $0x188] sm:$0xff] %vm1237, %v1144
    %1288 = vst.msk [vmem:[#allocation2 + $0x190] sm:$0xff] %vm1237, %v1146
    %1289 = vst.msk [vmem:[#allocation2 + $0x198] sm:$0xff] %vm1237, %v1148
    %1290 = vst.msk [vmem:[#allocation2 + $0x1a0] sm:$0xff] %vm1237, %v1150
    %1291 = vst.msk [vmem:[#allocation2 + $0x1a8] sm:$0xff] %vm1237, %v1152
    %1292 = vst.msk [vmem:[#allocation2 + $0x1b0] sm:$0xff] %vm1237, %v1154
    %1293 = vst.msk [vmem:[#allocation2 + $0x1b8] sm:$0xff] %vm1237, %v1156
    %1294 = vst.msk [vmem:[#allocation2 + $0x1c0] sm:$0xff] %vm1237, %v1158
    %1295 = vst.msk [vmem:[#allocation2 + $0x1c8] sm:$0xff] %vm1237, %v1160
    %1296 = vst.msk [vmem:[#allocation2 + $0x1d0] sm:$0xff] %vm1237, %v1162
    %1297 = vst.msk [vmem:[#allocation2 + $0x1d8] sm:$0xff] %vm1237, %v1164
    %1298 = vst.msk [vmem:[#allocation2 + $0x1e0] sm:$0xff] %vm1237, %v1166
    %1299 = vst.msk [vmem:[#allocation2 + $0x1e8] sm:$0xff] %vm1237, %v1168
    %1300 = vst.msk [vmem:[#allocation2 + $0x1f0] sm:$0xff] %vm1237, %v1170
    %1301 = vst.msk [vmem:[#allocation2 + $0x1f8] sm:$0xff] %vm1237, %v1172
    %1302 = vrot.lane.b32.xlu0 %v48, 5
    %v1303 = vpop.permute.xlu0 %1302
    %1304 = vrot.lane.b32.xlu0 %v49, 5
    %v1305 = vpop.permute.xlu0 %1304
    %1306 = vrot.lane.b32.xlu0 %v50, 5
    %v1307 = vpop.permute.xlu0 %1306
    %1308 = vrot.lane.b32.xlu0 %v51, 5
    %v1309 = vpop.permute.xlu0 %1308
    %1310 = vrot.lane.b32.xlu0 %v52, 5
    %v1311 = vpop.permute.xlu0 %1310
    %1312 = vrot.lane.b32.xlu0 %v53, 5
    %v1313 = vpop.permute.xlu0 %1312
    %1314 = vrot.lane.b32.xlu0 %v54, 5
    %v1315 = vpop.permute.xlu0 %1314
    %1316 = vrot.lane.b32.xlu0 %v55, 5
    %v1317 = vpop.permute.xlu0 %1316
    %1318 = vrot.lane.b32.xlu0 %v56, 5
    %v1319 = vpop.permute.xlu0 %1318
    %1320 = vrot.lane.b32.xlu0 %v57, 5
    %v1321 = vpop.permute.xlu0 %1320
    %1322 = vrot.lane.b32.xlu0 %v58, 5
    %v1323 = vpop.permute.xlu0 %1322
    %1324 = vrot.lane.b32.xlu0 %v59, 5
    %v1325 = vpop.permute.xlu0 %1324
    %1326 = vrot.lane.b32.xlu0 %v60, 5
    %v1327 = vpop.permute.xlu0 %1326
    %1328 = vrot.lane.b32.xlu0 %v61, 5
    %v1329 = vpop.permute.xlu0 %1328
    %1330 = vrot.lane.b32.xlu0 %v62, 5
    %v1331 = vpop.permute.xlu0 %1330
    %1332 = vrot.lane.b32.xlu0 %v63, 5
    %v1333 = vpop.permute.xlu0 %1332
    %1334 = vrot.lane.b32.xlu0 %v64, 5
    %v1335 = vpop.permute.xlu0 %1334
    %1336 = vrot.lane.b32.xlu0 %v65, 5
    %v1337 = vpop.permute.xlu0 %1336
    %1338 = vrot.lane.b32.xlu0 %v66, 5
    %v1339 = vpop.permute.xlu0 %1338
    %1340 = vrot.lane.b32.xlu0 %v67, 5
    %v1341 = vpop.permute.xlu0 %1340
    %1342 = vrot.lane.b32.xlu0 %v68, 5
    %v1343 = vpop.permute.xlu0 %1342
    %1344 = vrot.lane.b32.xlu0 %v69, 5
    %v1345 = vpop.permute.xlu0 %1344
    %1346 = vrot.lane.b32.xlu0 %v70, 5
    %v1347 = vpop.permute.xlu0 %1346
    %1348 = vrot.lane.b32.xlu0 %v71, 5
    %v1349 = vpop.permute.xlu0 %1348
    %1350 = vrot.lane.b32.xlu0 %v72, 5
    %v1351 = vpop.permute.xlu0 %1350
    %1352 = vrot.lane.b32.xlu0 %v73, 5
    %v1353 = vpop.permute.xlu0 %1352
    %1354 = vrot.lane.b32.xlu0 %v74, 5
    %v1355 = vpop.permute.xlu0 %1354
    %1356 = vrot.lane.b32.xlu0 %v75, 5
    %v1357 = vpop.permute.xlu0 %1356
    %1358 = vrot.lane.b32.xlu0 %v76, 5
    %v1359 = vpop.permute.xlu0 %1358
    %1360 = vrot.lane.b32.xlu0 %v77, 5
    %v1361 = vpop.permute.xlu0 %1360
    %1362 = vrot.lane.b32.xlu0 %v78, 5
    %v1363 = vpop.permute.xlu0 %1362
    %1364 = vrot.lane.b32.xlu0 %v79, 5
    %v1365 = vpop.permute.xlu0 %1364
    %1366 = vrot.lane.b32.xlu0 %v80, 5
    %v1367 = vpop.permute.xlu0 %1366
    %1368 = vrot.lane.b32.xlu0 %v81, 5
    %v1369 = vpop.permute.xlu0 %1368
    %1370 = vrot.lane.b32.xlu0 %v82, 5
    %v1371 = vpop.permute.xlu0 %1370
    %1372 = vrot.lane.b32.xlu0 %v83, 5
    %v1373 = vpop.permute.xlu0 %1372
    %1374 = vrot.lane.b32.xlu0 %v84, 5
    %v1375 = vpop.permute.xlu0 %1374
    %1376 = vrot.lane.b32.xlu0 %v85, 5
    %v1377 = vpop.permute.xlu0 %1376
    %1378 = vrot.lane.b32.xlu0 %v86, 5
    %v1379 = vpop.permute.xlu0 %1378
    %1380 = vrot.lane.b32.xlu0 %v87, 5
    %v1381 = vpop.permute.xlu0 %1380
    %1382 = vrot.lane.b32.xlu0 %v88, 5
    %v1383 = vpop.permute.xlu0 %1382
    %1384 = vrot.lane.b32.xlu0 %v89, 5
    %v1385 = vpop.permute.xlu0 %1384
    %1386 = vrot.lane.b32.xlu0 %v90, 5
    %v1387 = vpop.permute.xlu0 %1386
    %1388 = vrot.lane.b32.xlu0 %v91, 5
    %v1389 = vpop.permute.xlu0 %1388
    %1390 = vrot.lane.b32.xlu0 %v92, 5
    %v1391 = vpop.permute.xlu0 %1390
    %1392 = vrot.lane.b32.xlu0 %v93, 5
    %v1393 = vpop.permute.xlu0 %1392
    %1394 = vrot.lane.b32.xlu0 %v94, 5
    %v1395 = vpop.permute.xlu0 %1394
    %1396 = vrot.lane.b32.xlu0 %v95, 5
    %v1397 = vpop.permute.xlu0 %1396
    %1398 = vrot.lane.b32.xlu0 %v96, 5
    %v1399 = vpop.permute.xlu0 %1398
    %1400 = vrot.lane.b32.xlu0 %v97, 5
    %v1401 = vpop.permute.xlu0 %1400
    %1402 = vrot.lane.b32.xlu0 %v98, 5
    %v1403 = vpop.permute.xlu0 %1402
    %1404 = vrot.lane.b32.xlu0 %v99, 5
    %v1405 = vpop.permute.xlu0 %1404
    %1406 = vrot.lane.b32.xlu0 %v100, 5
    %v1407 = vpop.permute.xlu0 %1406
    %1408 = vrot.lane.b32.xlu0 %v101, 5
    %v1409 = vpop.permute.xlu0 %1408
    %1410 = vrot.lane.b32.xlu0 %v102, 5
    %v1411 = vpop.permute.xlu0 %1410
    %1412 = vrot.lane.b32.xlu0 %v103, 5
    %v1413 = vpop.permute.xlu0 %1412
    %1414 = vrot.lane.b32.xlu0 %v104, 5
    %v1415 = vpop.permute.xlu0 %1414
    %1416 = vrot.lane.b32.xlu0 %v105, 5
    %v1417 = vpop.permute.xlu0 %1416
    %1418 = vrot.lane.b32.xlu0 %v106, 5
    %v1419 = vpop.permute.xlu0 %1418
    %1420 = vrot.lane.b32.xlu0 %v107, 5
    %v1421 = vpop.permute.xlu0 %1420
    %1422 = vrot.lane.b32.xlu0 %v108, 5
    %v1423 = vpop.permute.xlu0 %1422
    %1424 = vrot.lane.b32.xlu0 %v109, 5
    %v1425 = vpop.permute.xlu0 %1424
    %1426 = vrot.lane.b32.xlu0 %v110, 5
    %v1427 = vpop.permute.xlu0 %1426
    %1428 = vrot.lane.b32.xlu0 %v111, 5
    %v1429 = vpop.permute.xlu0 %1428
    %vm1494 = vcmask 48169
    %1495 = vst.msk [vmem:[#allocation2 - $0x1] sm:$0xfe] %vm1494, %v1303
    %vm1496 = vcmask 48168
    %1497 = vst.msk [vmem:[#allocation2 + $0x7] sm:$0xff] %vm1496, %v1305
    %1498 = vst.msk [vmem:[#allocation2 + $0xf] sm:$0xfe] %vm1494, %v1307
    %1499 = vst.msk [vmem:[#allocation2 + $0x17] sm:$0xff] %vm1496, %v1309
    %1500 = vst.msk [vmem:[#allocation2 + $0x1f] sm:$0xfe] %vm1494, %v1311
    %1501 = vst.msk [vmem:[#allocation2 + $0x27] sm:$0xff] %vm1496, %v1313
    %1502 = vst.msk [vmem:[#allocation2 + $0x2f] sm:$0xfe] %vm1494, %v1315
    %1503 = vst.msk [vmem:[#allocation2 + $0x37] sm:$0xff] %vm1496, %v1317
    %1504 = vst.msk [vmem:[#allocation2 + $0x3f] sm:$0xfe] %vm1494, %v1319
    %1505 = vst.msk [vmem:[#allocation2 + $0x47] sm:$0xff] %vm1496, %v1321
    %1506 = vst.msk [vmem:[#allocation2 + $0x4f] sm:$0xfe] %vm1494, %v1323
    %1507 = vst.msk [vmem:[#allocation2 + $0x57] sm:$0xff] %vm1496, %v1325
    %1508 = vst.msk [vmem:[#allocation2 + $0x5f] sm:$0xfe] %vm1494, %v1327
    %1509 = vst.msk [vmem:[#allocation2 + $0x67] sm:$0xff] %vm1496, %v1329
    %1510 = vst.msk [vmem:[#allocation2 + $0x6f] sm:$0xfe] %vm1494, %v1331
    %1511 = vst.msk [vmem:[#allocation2 + $0x77] sm:$0xff] %vm1496, %v1333
    %1512 = vst.msk [vmem:[#allocation2 + $0x7f] sm:$0xfe] %vm1494, %v1335
    %1513 = vst.msk [vmem:[#allocation2 + $0x87] sm:$0xff] %vm1496, %v1337
    %1514 = vst.msk [vmem:[#allocation2 + $0x8f] sm:$0xfe] %vm1494, %v1339
    %1515 = vst.msk [vmem:[#allocation2 + $0x97] sm:$0xff] %vm1496, %v1341
    %1516 = vst.msk [vmem:[#allocation2 + $0x9f] sm:$0xfe] %vm1494, %v1343
    %1517 = vst.msk [vmem:[#allocation2 + $0xa7] sm:$0xff] %vm1496, %v1345
    %1518 = vst.msk [vmem:[#allocation2 + $0xaf] sm:$0xfe] %vm1494, %v1347
    %1519 = vst.msk [vmem:[#allocation2 + $0xb7] sm:$0xff] %vm1496, %v1349
    %1520 = vst.msk [vmem:[#allocation2 + $0xbf] sm:$0xfe] %vm1494, %v1351
    %1521 = vst.msk [vmem:[#allocation2 + $0xc7] sm:$0xff] %vm1496, %v1353
    %1522 = vst.msk [vmem:[#allocation2 + $0xcf] sm:$0xfe] %vm1494, %v1355
    %1523 = vst.msk [vmem:[#allocation2 + $0xd7] sm:$0xff] %vm1496, %v1357
    %1524 = vst.msk [vmem:[#allocation2 + $0xdf] sm:$0xfe] %vm1494, %v1359
    %1525 = vst.msk [vmem:[#allocation2 + $0xe7] sm:$0xff] %vm1496, %v1361
    %1526 = vst.msk [vmem:[#allocation2 + $0xef] sm:$0xfe] %vm1494, %v1363
    %1527 = vst.msk [vmem:[#allocation2 + $0xf7] sm:$0xff] %vm1496, %v1365
    %1528 = vst.msk [vmem:[#allocation2 + $0xff] sm:$0xfe] %vm1494, %v1367
    %1529 = vst.msk [vmem:[#allocation2 + $0x107] sm:$0xff] %vm1496, %v1369
    %1530 = vst.msk [vmem:[#allocation2 + $0x10f] sm:$0xfe] %vm1494, %v1371
    %1531 = vst.msk [vmem:[#allocation2 + $0x117] sm:$0xff] %vm1496, %v1373
    %1532 = vst.msk [vmem:[#allocation2 + $0x11f] sm:$0xfe] %vm1494, %v1375
    %1533 = vst.msk [vmem:[#allocation2 + $0x127] sm:$0xff] %vm1496, %v1377
    %1534 = vst.msk [vmem:[#allocation2 + $0x12f] sm:$0xfe] %vm1494, %v1379
    %1535 = vst.msk [vmem:[#allocation2 + $0x137] sm:$0xff] %vm1496, %v1381
    %1536 = vst.msk [vmem:[#allocation2 + $0x13f] sm:$0xfe] %vm1494, %v1383
    %1537 = vst.msk [vmem:[#allocation2 + $0x147] sm:$0xff] %vm1496, %v1385
    %1538 = vst.msk [vmem:[#allocation2 + $0x14f] sm:$0xfe] %vm1494, %v1387
    %1539 = vst.msk [vmem:[#allocation2 + $0x157] sm:$0xff] %vm1496, %v1389
    %1540 = vst.msk [vmem:[#allocation2 + $0x15f] sm:$0xfe] %vm1494, %v1391
    %1541 = vst.msk [vmem:[#allocation2 + $0x167] sm:$0xff] %vm1496, %v1393
    %1542 = vst.msk [vmem:[#allocation2 + $0x16f] sm:$0xfe] %vm1494, %v1395
    %1543 = vst.msk [vmem:[#allocation2 + $0x177] sm:$0xff] %vm1496, %v1397
    %1544 = vst.msk [vmem:[#allocation2 + $0x17f] sm:$0xfe] %vm1494, %v1399
    %1545 = vst.msk [vmem:[#allocation2 + $0x187] sm:$0xff] %vm1496, %v1401
    %1546 = vst.msk [vmem:[#allocation2 + $0x18f] sm:$0xfe] %vm1494, %v1403
    %1547 = vst.msk [vmem:[#allocation2 + $0x197] sm:$0xff] %vm1496, %v1405
    %1548 = vst.msk [vmem:[#allocation2 + $0x19f] sm:$0xfe] %vm1494, %v1407
    %1549 = vst.msk [vmem:[#allocation2 + $0x1a7] sm:$0xff] %vm1496, %v1409
    %1550 = vst.msk [vmem:[#allocation2 + $0x1af] sm:$0xfe] %vm1494, %v1411
    %1551 = vst.msk [vmem:[#allocation2 + $0x1b7] sm:$0xff] %vm1496, %v1413
    %1552 = vst.msk [vmem:[#allocation2 + $0x1bf] sm:$0xfe] %vm1494, %v1415
    %1553 = vst.msk [vmem:[#allocation2 + $0x1c7] sm:$0xff] %vm1496, %v1417
    %1554 = vst.msk [vmem:[#allocation2 + $0x1cf] sm:$0xfe] %vm1494, %v1419
    %1555 = vst.msk [vmem:[#allocation2 + $0x1d7] sm:$0xff] %vm1496, %v1421
    %1556 = vst.msk [vmem:[#allocation2 + $0x1df] sm:$0xfe] %vm1494, %v1423
    %1557 = vst.msk [vmem:[#allocation2 + $0x1e7] sm:$0xff] %vm1496, %v1425
    %1558 = vst.msk [vmem:[#allocation2 + $0x1ef] sm:$0xfe] %vm1494, %v1427
    %1559 = vst.msk [vmem:[#allocation2 + $0x1f7] sm:$0xff] %vm1496, %v1429
    %1560 = vrot.lane.b32.xlu0 %v50, 6
    %v1561 = vpop.permute.xlu0 %1560
    %1562 = vrot.lane.b32.xlu0 %v51, 6
    %v1563 = vpop.permute.xlu0 %1562
    %1564 = vrot.lane.b32.xlu0 %v52, 6
    %v1565 = vpop.permute.xlu0 %1564
    %1566 = vrot.lane.b32.xlu0 %v53, 6
    %v1567 = vpop.permute.xlu0 %1566
    %1568 = vrot.lane.b32.xlu0 %v54, 6
    %v1569 = vpop.permute.xlu0 %1568
    %1570 = vrot.lane.b32.xlu0 %v55, 6
    %v1571 = vpop.permute.xlu0 %1570
    %1572 = vrot.lane.b32.xlu0 %v56, 6
    %v1573 = vpop.permute.xlu0 %1572
    %1574 = vrot.lane.b32.xlu0 %v57, 6
    %v1575 = vpop.permute.xlu0 %1574
    %1576 = vrot.lane.b32.xlu0 %v58, 6
    %v1577 = vpop.permute.xlu0 %1576
    %1578 = vrot.lane.b32.xlu0 %v59, 6
    %v1579 = vpop.permute.xlu0 %1578
    %1580 = vrot.lane.b32.xlu0 %v60, 6
    %v1581 = vpop.permute.xlu0 %1580
    %1582 = vrot.lane.b32.xlu0 %v61, 6
    %v1583 = vpop.permute.xlu0 %1582
    %1584 = vrot.lane.b32.xlu0 %v62, 6
    %v1585 = vpop.permute.xlu0 %1584
    %1586 = vrot.lane.b32.xlu0 %v63, 6
    %v1587 = vpop.permute.xlu0 %1586
    %1588 = vrot.lane.b32.xlu0 %v64, 6
    %v1589 = vpop.permute.xlu0 %1588
    %1590 = vrot.lane.b32.xlu0 %v65, 6
    %v1591 = vpop.permute.xlu0 %1590
    %1592 = vrot.lane.b32.xlu0 %v66, 6
    %v1593 = vpop.permute.xlu0 %1592
    %1594 = vrot.lane.b32.xlu0 %v67, 6
    %v1595 = vpop.permute.xlu0 %1594
    %1596 = vrot.lane.b32.xlu0 %v68, 6
    %v1597 = vpop.permute.xlu0 %1596
    %1598 = vrot.lane.b32.xlu0 %v69, 6
    %v1599 = vpop.permute.xlu0 %1598
    %1600 = vrot.lane.b32.xlu0 %v70, 6
    %v1601 = vpop.permute.xlu0 %1600
    %1602 = vrot.lane.b32.xlu0 %v71, 6
    %v1603 = vpop.permute.xlu0 %1602
    %1604 = vrot.lane.b32.xlu0 %v72, 6
    %v1605 = vpop.permute.xlu0 %1604
    %1606 = vrot.lane.b32.xlu0 %v73, 6
    %v1607 = vpop.permute.xlu0 %1606
    %1608 = vrot.lane.b32.xlu0 %v74, 6
    %v1609 = vpop.permute.xlu0 %1608
    %1610 = vrot.lane.b32.xlu0 %v75, 6
    %v1611 = vpop.permute.xlu0 %1610
    %1612 = vrot.lane.b32.xlu0 %v76, 6
    %v1613 = vpop.permute.xlu0 %1612
    %1614 = vrot.lane.b32.xlu0 %v77, 6
    %v1615 = vpop.permute.xlu0 %1614
    %1616 = vrot.lane.b32.xlu0 %v78, 6
    %v1617 = vpop.permute.xlu0 %1616
    %1618 = vrot.lane.b32.xlu0 %v79, 6
    %v1619 = vpop.permute.xlu0 %1618
    %1620 = vrot.lane.b32.xlu0 %v82, 6
    %v1621 = vpop.permute.xlu0 %1620
    %1622 = vrot.lane.b32.xlu0 %v83, 6
    %v1623 = vpop.permute.xlu0 %1622
    %1624 = vrot.lane.b32.xlu0 %v84, 6
    %v1625 = vpop.permute.xlu0 %1624
    %1626 = vrot.lane.b32.xlu0 %v85, 6
    %v1627 = vpop.permute.xlu0 %1626
    %1628 = vrot.lane.b32.xlu0 %v86, 6
    %v1629 = vpop.permute.xlu0 %1628
    %1630 = vrot.lane.b32.xlu0 %v87, 6
    %v1631 = vpop.permute.xlu0 %1630
    %1632 = vrot.lane.b32.xlu0 %v88, 6
    %v1633 = vpop.permute.xlu0 %1632
    %1634 = vrot.lane.b32.xlu0 %v89, 6
    %v1635 = vpop.permute.xlu0 %1634
    %1636 = vrot.lane.b32.xlu0 %v90, 6
    %v1637 = vpop.permute.xlu0 %1636
    %1638 = vrot.lane.b32.xlu0 %v91, 6
    %v1639 = vpop.permute.xlu0 %1638
    %1640 = vrot.lane.b32.xlu0 %v92, 6
    %v1641 = vpop.permute.xlu0 %1640
    %1642 = vrot.lane.b32.xlu0 %v93, 6
    %v1643 = vpop.permute.xlu0 %1642
    %1644 = vrot.lane.b32.xlu0 %v94, 6
    %v1645 = vpop.permute.xlu0 %1644
    %1646 = vrot.lane.b32.xlu0 %v95, 6
    %v1647 = vpop.permute.xlu0 %1646
    %1648 = vrot.lane.b32.xlu0 %v96, 6
    %v1649 = vpop.permute.xlu0 %1648
    %1650 = vrot.lane.b32.xlu0 %v97, 6
    %v1651 = vpop.permute.xlu0 %1650
    %1652 = vrot.lane.b32.xlu0 %v98, 6
    %v1653 = vpop.permute.xlu0 %1652
    %1654 = vrot.lane.b32.xlu0 %v99, 6
    %v1655 = vpop.permute.xlu0 %1654
    %1656 = vrot.lane.b32.xlu0 %v100, 6
    %v1657 = vpop.permute.xlu0 %1656
    %1658 = vrot.lane.b32.xlu0 %v101, 6
    %v1659 = vpop.permute.xlu0 %1658
    %1660 = vrot.lane.b32.xlu0 %v102, 6
    %v1661 = vpop.permute.xlu0 %1660
    %1662 = vrot.lane.b32.xlu0 %v103, 6
    %v1663 = vpop.permute.xlu0 %1662
    %1664 = vrot.lane.b32.xlu0 %v104, 6
    %v1665 = vpop.permute.xlu0 %1664
    %1666 = vrot.lane.b32.xlu0 %v105, 6
    %v1667 = vpop.permute.xlu0 %1666
    %1668 = vrot.lane.b32.xlu0 %v106, 6
    %v1669 = vpop.permute.xlu0 %1668
    %1670 = vrot.lane.b32.xlu0 %v107, 6
    %v1671 = vpop.permute.xlu0 %1670
    %1672 = vrot.lane.b32.xlu0 %v108, 6
    %v1673 = vpop.permute.xlu0 %1672
    %1674 = vrot.lane.b32.xlu0 %v109, 6
    %v1675 = vpop.permute.xlu0 %1674
    %1676 = vrot.lane.b32.xlu0 %v110, 6
    %v1677 = vpop.permute.xlu0 %1676
    %1678 = vrot.lane.b32.xlu0 %v111, 6
    %v1679 = vpop.permute.xlu0 %1678
    %vm1740 = vcmask 56368
    %1741 = vst.msk [vmem:[#allocation2 + $0x1] sm:$0xff] %vm1740, %v1561
    %vm1742 = vcmask 55344
    %1743 = vst.msk [vmem:[#allocation2 + $0x9] sm:$0x7f] %vm1742, %v1563
    %1744 = vst.msk [vmem:[#allocation2 + $0x11] sm:$0xff] %vm1740, %v1565
    %1745 = vst.msk [vmem:[#allocation2 + $0x19] sm:$0x7f] %vm1742, %v1567
    %1746 = vst.msk [vmem:[#allocation2 + $0x21] sm:$0xff] %vm1740, %v1569
    %1747 = vst.msk [vmem:[#allocation2 + $0x29] sm:$0x7f] %vm1742, %v1571
    %1748 = vst.msk [vmem:[#allocation2 + $0x31] sm:$0xff] %vm1740, %v1573
    %1749 = vst.msk [vmem:[#allocation2 + $0x39] sm:$0x7f] %vm1742, %v1575
    %1750 = vst.msk [vmem:[#allocation2 + $0x41] sm:$0xff] %vm1740, %v1577
    %1751 = vst.msk [vmem:[#allocation2 + $0x49] sm:$0x7f] %vm1742, %v1579
    %1752 = vst.msk [vmem:[#allocation2 + $0x51] sm:$0xff] %vm1740, %v1581
    %1753 = vst.msk [vmem:[#allocation2 + $0x59] sm:$0x7f] %vm1742, %v1583
    %1754 = vst.msk [vmem:[#allocation2 + $0x61] sm:$0xff] %vm1740, %v1585
    %1755 = vst.msk [vmem:[#allocation2 + $0x69] sm:$0x7f] %vm1742, %v1587
    %1756 = vst.msk [vmem:[#allocation2 + $0x71] sm:$0xff] %vm1740, %v1589
    %1757 = vst.msk [vmem:[#allocation2 + $0x79] sm:$0x7f] %vm1742, %v1591
    %1758 = vst.msk [vmem:[#allocation2 + $0x81] sm:$0xff] %vm1740, %v1593
    %1759 = vst.msk [vmem:[#allocation2 + $0x89] sm:$0x7f] %vm1742, %v1595
    %1760 = vst.msk [vmem:[#allocation2 + $0x91] sm:$0xff] %vm1740, %v1597
    %1761 = vst.msk [vmem:[#allocation2 + $0x99] sm:$0x7f] %vm1742, %v1599
    %1762 = vst.msk [vmem:[#allocation2 + $0xa1] sm:$0xff] %vm1740, %v1601
    %1763 = vst.msk [vmem:[#allocation2 + $0xa9] sm:$0x7f] %vm1742, %v1603
    %1764 = vst.msk [vmem:[#allocation2 + $0xb1] sm:$0xff] %vm1740, %v1605
    %1765 = vst.msk [vmem:[#allocation2 + $0xb9] sm:$0x7f] %vm1742, %v1607
    %1766 = vst.msk [vmem:[#allocation2 + $0xc1] sm:$0xff] %vm1740, %v1609
    %1767 = vst.msk [vmem:[#allocation2 + $0xc9] sm:$0x7f] %vm1742, %v1611
    %1768 = vst.msk [vmem:[#allocation2 + $0xd1] sm:$0xff] %vm1740, %v1613
    %1769 = vst.msk [vmem:[#allocation2 + $0xd9] sm:$0x7f] %vm1742, %v1615
    %1770 = vst.msk [vmem:[#allocation2 + $0xe1] sm:$0xff] %vm1740, %v1617
    %1771 = vst.msk [vmem:[#allocation2 + $0xe9] sm:$0x7f] %vm1742, %v1619
    %1772 = vst.msk [vmem:[#allocation2 + $0x101] sm:$0xff] %vm1740, %v1621
    %1773 = vst.msk [vmem:[#allocation2 + $0x109] sm:$0x7f] %vm1742, %v1623
    %1774 = vst.msk [vmem:[#allocation2 + $0x111] sm:$0xff] %vm1740, %v1625
    %1775 = vst.msk [vmem:[#allocation2 + $0x119] sm:$0x7f] %vm1742, %v1627
    %1776 = vst.msk [vmem:[#allocation2 + $0x121] sm:$0xff] %vm1740, %v1629
    %1777 = vst.msk [vmem:[#allocation2 + $0x129] sm:$0x7f] %vm1742, %v1631
    %1778 = vst.msk [vmem:[#allocation2 + $0x131] sm:$0xff] %vm1740, %v1633
    %1779 = vst.msk [vmem:[#allocation2 + $0x139] sm:$0x7f] %vm1742, %v1635
    %1780 = vst.msk [vmem:[#allocation2 + $0x141] sm:$0xff] %vm1740, %v1637
    %1781 = vst.msk [vmem:[#allocation2 + $0x149] sm:$0x7f] %vm1742, %v1639
    %1782 = vst.msk [vmem:[#allocation2 + $0x151] sm:$0xff] %vm1740, %v1641
    %1783 = vst.msk [vmem:[#allocation2 + $0x159] sm:$0x7f] %vm1742, %v1643
    %1784 = vst.msk [vmem:[#allocation2 + $0x161] sm:$0xff] %vm1740, %v1645
    %1785 = vst.msk [vmem:[#allocation2 + $0x169] sm:$0x7f] %vm1742, %v1647
    %1786 = vst.msk [vmem:[#allocation2 + $0x171] sm:$0xff] %vm1740, %v1649
    %1787 = vst.msk [vmem:[#allocation2 + $0x179] sm:$0x7f] %vm1742, %v1651
    %1788 = vst.msk [vmem:[#allocation2 + $0x181] sm:$0xff] %vm1740, %v1653
    %1789 = vst.msk [vmem:[#allocation2 + $0x189] sm:$0x7f] %vm1742, %v1655
    %1790 = vst.msk [vmem:[#allocation2 + $0x191] sm:$0xff] %vm1740, %v1657
    %1791 = vst.msk [vmem:[#allocation2 + $0x199] sm:$0x7f] %vm1742, %v1659
    %1792 = vst.msk [vmem:[#allocation2 + $0x1a1] sm:$0xff] %vm1740, %v1661
    %1793 = vst.msk [vmem:[#allocation2 + $0x1a9] sm:$0x7f] %vm1742, %v1663
    %1794 = vst.msk [vmem:[#allocation2 + $0x1b1] sm:$0xff] %vm1740, %v1665
    %1795 = vst.msk [vmem:[#allocation2 + $0x1b9] sm:$0x7f] %vm1742, %v1667
    %1796 = vst.msk [vmem:[#allocation2 + $0x1c1] sm:$0xff] %vm1740, %v1669
    %1797 = vst.msk [vmem:[#allocation2 + $0x1c9] sm:$0x7f] %vm1742, %v1671
    %1798 = vst.msk [vmem:[#allocation2 + $0x1d1] sm:$0xff] %vm1740, %v1673
    %1799 = vst.msk [vmem:[#allocation2 + $0x1d9] sm:$0x7f] %vm1742, %v1675
    %1800 = vst.msk [vmem:[#allocation2 + $0x1e1] sm:$0xff] %vm1740, %v1677
    %1801 = vst.msk [vmem:[#allocation2 + $0x1e9] sm:$0x7f] %vm1742, %v1679
    %1802 = vrot.lane.b32.xlu0 %v50, 7
    %v1803 = vpop.permute.xlu0 %1802
    %1804 = vrot.lane.b32.xlu0 %v51, 7
    %v1805 = vpop.permute.xlu0 %1804
    %1806 = vrot.lane.b32.xlu0 %v52, 7
    %v1807 = vpop.permute.xlu0 %1806
    %1808 = vrot.lane.b32.xlu0 %v53, 7
    %v1809 = vpop.permute.xlu0 %1808
    %1810 = vrot.lane.b32.xlu0 %v54, 7
    %v1811 = vpop.permute.xlu0 %1810
    %1812 = vrot.lane.b32.xlu0 %v55, 7
    %v1813 = vpop.permute.xlu0 %1812
    %1814 = vrot.lane.b32.xlu0 %v56, 7
    %v1815 = vpop.permute.xlu0 %1814
    %1816 = vrot.lane.b32.xlu0 %v57, 7
    %v1817 = vpop.permute.xlu0 %1816
    %1818 = vrot.lane.b32.xlu0 %v58, 7
    %v1819 = vpop.permute.xlu0 %1818
    %1820 = vrot.lane.b32.xlu0 %v59, 7
    %v1821 = vpop.permute.xlu0 %1820
    %1822 = vrot.lane.b32.xlu0 %v60, 7
    %v1823 = vpop.permute.xlu0 %1822
    %1824 = vrot.lane.b32.xlu0 %v61, 7
    %v1825 = vpop.permute.xlu0 %1824
    %1826 = vrot.lane.b32.xlu0 %v62, 7
    %v1827 = vpop.permute.xlu0 %1826
    %1828 = vrot.lane.b32.xlu0 %v63, 7
    %v1829 = vpop.permute.xlu0 %1828
    %1830 = vrot.lane.b32.xlu0 %v64, 7
    %v1831 = vpop.permute.xlu0 %1830
    %1832 = vrot.lane.b32.xlu0 %v65, 7
    %v1833 = vpop.permute.xlu0 %1832
    %1834 = vrot.lane.b32.xlu0 %v66, 7
    %v1835 = vpop.permute.xlu0 %1834
    %1836 = vrot.lane.b32.xlu0 %v67, 7
    %v1837 = vpop.permute.xlu0 %1836
    %1838 = vrot.lane.b32.xlu0 %v68, 7
    %v1839 = vpop.permute.xlu0 %1838
    %1840 = vrot.lane.b32.xlu0 %v69, 7
    %v1841 = vpop.permute.xlu0 %1840
    %1842 = vrot.lane.b32.xlu0 %v70, 7
    %v1843 = vpop.permute.xlu0 %1842
    %1844 = vrot.lane.b32.xlu0 %v71, 7
    %v1845 = vpop.permute.xlu0 %1844
    %1846 = vrot.lane.b32.xlu0 %v72, 7
    %v1847 = vpop.permute.xlu0 %1846
    %1848 = vrot.lane.b32.xlu0 %v73, 7
    %v1849 = vpop.permute.xlu0 %1848
    %1850 = vrot.lane.b32.xlu0 %v74, 7
    %v1851 = vpop.permute.xlu0 %1850
    %1852 = vrot.lane.b32.xlu0 %v75, 7
    %v1853 = vpop.permute.xlu0 %1852
    %1854 = vrot.lane.b32.xlu0 %v76, 7
    %v1855 = vpop.permute.xlu0 %1854
    %1856 = vrot.lane.b32.xlu0 %v77, 7
    %v1857 = vpop.permute.xlu0 %1856
    %1858 = vrot.lane.b32.xlu0 %v78, 7
    %v1859 = vpop.permute.xlu0 %1858
    %1860 = vrot.lane.b32.xlu0 %v79, 7
    %v1861 = vpop.permute.xlu0 %1860
    %1862 = vrot.lane.b32.xlu0 %v82, 7
    %v1863 = vpop.permute.xlu0 %1862
    %1864 = vrot.lane.b32.xlu0 %v83, 7
    %v1865 = vpop.permute.xlu0 %1864
    %1866 = vrot.lane.b32.xlu0 %v84, 7
    %v1867 = vpop.permute.xlu0 %1866
    %1868 = vrot.lane.b32.xlu0 %v85, 7
    %v1869 = vpop.permute.xlu0 %1868
    %1870 = vrot.lane.b32.xlu0 %v86, 7
    %v1871 = vpop.permute.xlu0 %1870
    %1872 = vrot.lane.b32.xlu0 %v87, 7
    %v1873 = vpop.permute.xlu0 %1872
    %1874 = vrot.lane.b32.xlu0 %v88, 7
    %v1875 = vpop.permute.xlu0 %1874
    %1876 = vrot.lane.b32.xlu0 %v89, 7
    %v1877 = vpop.permute.xlu0 %1876
    %1878 = vrot.lane.b32.xlu0 %v90, 7
    %v1879 = vpop.permute.xlu0 %1878
    %1880 = vrot.lane.b32.xlu0 %v91, 7
    %v1881 = vpop.permute.xlu0 %1880
    %1882 = vrot.lane.b32.xlu0 %v92, 7
    %v1883 = vpop.permute.xlu0 %1882
    %1884 = vrot.lane.b32.xlu0 %v93, 7
    %v1885 = vpop.permute.xlu0 %1884
    %1886 = vrot.lane.b32.xlu0 %v94, 7
    %v1887 = vpop.permute.xlu0 %1886
    %1888 = vrot.lane.b32.xlu0 %v95, 7
    %v1889 = vpop.permute.xlu0 %1888
    %1890 = vrot.lane.b32.xlu0 %v96, 7
    %v1891 = vpop.permute.xlu0 %1890
    %1892 = vrot.lane.b32.xlu0 %v97, 7
    %v1893 = vpop.permute.xlu0 %1892
    %1894 = vrot.lane.b32.xlu0 %v98, 7
    %v1895 = vpop.permute.xlu0 %1894
    %1896 = vrot.lane.b32.xlu0 %v99, 7
    %v1897 = vpop.permute.xlu0 %1896
    %1898 = vrot.lane.b32.xlu0 %v100, 7
    %v1899 = vpop.permute.xlu0 %1898
    %1900 = vrot.lane.b32.xlu0 %v101, 7
    %v1901 = vpop.permute.xlu0 %1900
    %1902 = vrot.lane.b32.xlu0 %v102, 7
    %v1903 = vpop.permute.xlu0 %1902
    %1904 = vrot.lane.b32.xlu0 %v103, 7
    %v1905 = vpop.permute.xlu0 %1904
    %1906 = vrot.lane.b32.xlu0 %v104, 7
    %v1907 = vpop.permute.xlu0 %1906
    %1908 = vrot.lane.b32.xlu0 %v105, 7
    %v1909 = vpop.permute.xlu0 %1908
    %1910 = vrot.lane.b32.xlu0 %v106, 7
    %v1911 = vpop.permute.xlu0 %1910
    %1912 = vrot.lane.b32.xlu0 %v107, 7
    %v1913 = vpop.permute.xlu0 %1912
    %1914 = vrot.lane.b32.xlu0 %v108, 7
    %v1915 = vpop.permute.xlu0 %1914
    %1916 = vrot.lane.b32.xlu0 %v109, 7
    %v1917 = vpop.permute.xlu0 %1916
    %1918 = vrot.lane.b32.xlu0 %v110, 7
    %v1919 = vpop.permute.xlu0 %1918
    %1920 = vrot.lane.b32.xlu0 %v111, 7
    %v1921 = vpop.permute.xlu0 %1920
    %vm1982 = vcmask 64568
    %1983 = vst.msk [vmem:[#allocation2] sm:$0xff] %vm1982, %v1803
    %1984 = vst.msk [vmem:[#allocation2 + $0x8] sm:$0xff] %vm1982, %v1805
    %1985 = vst.msk [vmem:[#allocation2 + $0x10] sm:$0xff] %vm1982, %v1807
    %1986 = vst.msk [vmem:[#allocation2 + $0x18] sm:$0xff] %vm1982, %v1809
    %1987 = vst.msk [vmem:[#allocation2 + $0x20] sm:$0xff] %vm1982, %v1811
    %1988 = vst.msk [vmem:[#allocation2 + $0x28] sm:$0xff] %vm1982, %v1813
    %1989 = vst.msk [vmem:[#allocation2 + $0x30] sm:$0xff] %vm1982, %v1815
    %1990 = vst.msk [vmem:[#allocation2 + $0x38] sm:$0xff] %vm1982, %v1817
    %1991 = vst.msk [vmem:[#allocation2 + $0x40] sm:$0xff] %vm1982, %v1819
    %1992 = vst.msk [vmem:[#allocation2 + $0x48] sm:$0xff] %vm1982, %v1821
    %1993 = vst.msk [vmem:[#allocation2 + $0x50] sm:$0xff] %vm1982, %v1823
    %1994 = vst.msk [vmem:[#allocation2 + $0x58] sm:$0xff] %vm1982, %v1825
    %1995 = vst.msk [vmem:[#allocation2 + $0x60] sm:$0xff] %vm1982, %v1827
    %1996 = vst.msk [vmem:[#allocation2 + $0x68] sm:$0xff] %vm1982, %v1829
    %1997 = vst.msk [vmem:[#allocation2 + $0x70] sm:$0xff] %vm1982, %v1831
    %1998 = vst.msk [vmem:[#allocation2 + $0x78] sm:$0xff] %vm1982, %v1833
    %1999 = vst.msk [vmem:[#allocation2 + $0x80] sm:$0xff] %vm1982, %v1835
    %2000 = vst.msk [vmem:[#allocation2 + $0x88] sm:$0xff] %vm1982, %v1837
    %2001 = vst.msk [vmem:[#allocation2 + $0x90] sm:$0xff] %vm1982, %v1839
    %2002 = vst.msk [vmem:[#allocation2 + $0x98] sm:$0xff] %vm1982, %v1841
    %2003 = vst.msk [vmem:[#allocation2 + $0xa0] sm:$0xff] %vm1982, %v1843
    %2004 = vst.msk [vmem:[#allocation2 + $0xa8] sm:$0xff] %vm1982, %v1845
    %2005 = vst.msk [vmem:[#allocation2 + $0xb0] sm:$0xff] %vm1982, %v1847
    %2006 = vst.msk [vmem:[#allocation2 + $0xb8] sm:$0xff] %vm1982, %v1849
    %2007 = vst.msk [vmem:[#allocation2 + $0xc0] sm:$0xff] %vm1982, %v1851
    %2008 = vst.msk [vmem:[#allocation2 + $0xc8] sm:$0xff] %vm1982, %v1853
    %2009 = vst.msk [vmem:[#allocation2 + $0xd0] sm:$0xff] %vm1982, %v1855
    %2010 = vst.msk [vmem:[#allocation2 + $0xd8] sm:$0xff] %vm1982, %v1857
    %2011 = vst.msk [vmem:[#allocation2 + $0xe0] sm:$0xff] %vm1982, %v1859
    %2012 = vst.msk [vmem:[#allocation2 + $0xe8] sm:$0xff] %vm1982, %v1861
    %2013 = vst.msk [vmem:[#allocation2 + $0x100] sm:$0xff] %vm1982, %v1863
    %2014 = vst.msk [vmem:[#allocation2 + $0x108] sm:$0xff] %vm1982, %v1865
    %2015 = vst.msk [vmem:[#allocation2 + $0x110] sm:$0xff] %vm1982, %v1867
    %2016 = vst.msk [vmem:[#allocation2 + $0x118] sm:$0xff] %vm1982, %v1869
    %2017 = vst.msk [vmem:[#allocation2 + $0x120] sm:$0xff] %vm1982, %v1871
    %2018 = vst.msk [vmem:[#allocation2 + $0x128] sm:$0xff] %vm1982, %v1873
    %2019 = vst.msk [vmem:[#allocation2 + $0x130] sm:$0xff] %vm1982, %v1875
    %2020 = vst.msk [vmem:[#allocation2 + $0x138] sm:$0xff] %vm1982, %v1877
    %2021 = vst.msk [vmem:[#allocation2 + $0x140] sm:$0xff] %vm1982, %v1879
    %2022 = vst.msk [vmem:[#allocation2 + $0x148] sm:$0xff] %vm1982, %v1881
    %2023 = vst.msk [vmem:[#allocation2 + $0x150] sm:$0xff] %vm1982, %v1883
    %2024 = vst.msk [vmem:[#allocation2 + $0x158] sm:$0xff] %vm1982, %v1885
    %2025 = vst.msk [vmem:[#allocation2 + $0x160] sm:$0xff] %vm1982, %v1887
    %2026 = vst.msk [vmem:[#allocation2 + $0x168] sm:$0xff] %vm1982, %v1889
    %2027 = vst.msk [vmem:[#allocation2 + $0x170] sm:$0xff] %vm1982, %v1891
    %2028 = vst.msk [vmem:[#allocation2 + $0x178] sm:$0xff] %vm1982, %v1893
    %2029 = vst.msk [vmem:[#allocation2 + $0x180] sm:$0xff] %vm1982, %v1895
    %2030 = vst.msk [vmem:[#allocation2 + $0x188] sm:$0xff] %vm1982, %v1897
    %2031 = vst.msk [vmem:[#allocation2 + $0x190] sm:$0xff] %vm1982, %v1899
    %2032 = vst.msk [vmem:[#allocation2 + $0x198] sm:$0xff] %vm1982, %v1901
    %2033 = vst.msk [vmem:[#allocation2 + $0x1a0] sm:$0xff] %vm1982, %v1903
    %2034 = vst.msk [vmem:[#allocation2 + $0x1a8] sm:$0xff] %vm1982, %v1905
    %2035 = vst.msk [vmem:[#allocation2 + $0x1b0] sm:$0xff] %vm1982, %v1907
    %2036 = vst.msk [vmem:[#allocation2 + $0x1b8] sm:$0xff] %vm1982, %v1909
    %2037 = vst.msk [vmem:[#allocation2 + $0x1c0] sm:$0xff] %vm1982, %v1911
    %2038 = vst.msk [vmem:[#allocation2 + $0x1c8] sm:$0xff] %vm1982, %v1913
    %2039 = vst.msk [vmem:[#allocation2 + $0x1d0] sm:$0xff] %vm1982, %v1915
    %2040 = vst.msk [vmem:[#allocation2 + $0x1d8] sm:$0xff] %vm1982, %v1917
    %2041 = vst.msk [vmem:[#allocation2 + $0x1e0] sm:$0xff] %vm1982, %v1919
    %2042 = vst.msk [vmem:[#allocation2 + $0x1e8] sm:$0xff] %vm1982, %v1921
    %2043 = vrot.lane.b32.xlu0 %v50, 8
    %v2044 = vpop.permute.xlu0 %2043
    %2045 = vrot.lane.b32.xlu0 %v51, 8
    %v2046 = vpop.permute.xlu0 %2045
    %2047 = vrot.lane.b32.xlu0 %v52, 8
    %v2048 = vpop.permute.xlu0 %2047
    %2049 = vrot.lane.b32.xlu0 %v53, 8
    %v2050 = vpop.permute.xlu0 %2049
    %2051 = vrot.lane.b32.xlu0 %v54, 8
    %v2052 = vpop.permute.xlu0 %2051
    %2053 = vrot.lane.b32.xlu0 %v55, 8
    %v2054 = vpop.permute.xlu0 %2053
    %2055 = vrot.lane.b32.xlu0 %v56, 8
    %v2056 = vpop.permute.xlu0 %2055
    %2057 = vrot.lane.b32.xlu0 %v57, 8
    %v2058 = vpop.permute.xlu0 %2057
    %2059 = vrot.lane.b32.xlu0 %v58, 8
    %v2060 = vpop.permute.xlu0 %2059
    %2061 = vrot.lane.b32.xlu0 %v59, 8
    %v2062 = vpop.permute.xlu0 %2061
    %2063 = vrot.lane.b32.xlu0 %v60, 8
    %v2064 = vpop.permute.xlu0 %2063
    %2065 = vrot.lane.b32.xlu0 %v61, 8
    %v2066 = vpop.permute.xlu0 %2065
    %2067 = vrot.lane.b32.xlu0 %v62, 8
    %v2068 = vpop.permute.xlu0 %2067
    %2069 = vrot.lane.b32.xlu0 %v63, 8
    %v2070 = vpop.permute.xlu0 %2069
    %2071 = vrot.lane.b32.xlu0 %v64, 8
    %v2072 = vpop.permute.xlu0 %2071
    %2073 = vrot.lane.b32.xlu0 %v65, 8
    %v2074 = vpop.permute.xlu0 %2073
    %2075 = vrot.lane.b32.xlu0 %v66, 8
    %v2076 = vpop.permute.xlu0 %2075
    %2077 = vrot.lane.b32.xlu0 %v67, 8
    %v2078 = vpop.permute.xlu0 %2077
    %2079 = vrot.lane.b32.xlu0 %v68, 8
    %v2080 = vpop.permute.xlu0 %2079
    %2081 = vrot.lane.b32.xlu0 %v69, 8
    %v2082 = vpop.permute.xlu0 %2081
    %2083 = vrot.lane.b32.xlu0 %v70, 8
    %v2084 = vpop.permute.xlu0 %2083
    %2085 = vrot.lane.b32.xlu0 %v71, 8
    %v2086 = vpop.permute.xlu0 %2085
    %2087 = vrot.lane.b32.xlu0 %v72, 8
    %v2088 = vpop.permute.xlu0 %2087
    %2089 = vrot.lane.b32.xlu0 %v73, 8
    %v2090 = vpop.permute.xlu0 %2089
    %2091 = vrot.lane.b32.xlu0 %v74, 8
    %v2092 = vpop.permute.xlu0 %2091
    %2093 = vrot.lane.b32.xlu0 %v75, 8
    %v2094 = vpop.permute.xlu0 %2093
    %2095 = vrot.lane.b32.xlu0 %v76, 8
    %v2096 = vpop.permute.xlu0 %2095
    %2097 = vrot.lane.b32.xlu0 %v77, 8
    %v2098 = vpop.permute.xlu0 %2097
    %2099 = vrot.lane.b32.xlu0 %v78, 8
    %v2100 = vpop.permute.xlu0 %2099
    %2101 = vrot.lane.b32.xlu0 %v79, 8
    %v2102 = vpop.permute.xlu0 %2101
    %2103 = vrot.lane.b32.xlu0 %v82, 8
    %v2104 = vpop.permute.xlu0 %2103
    %2105 = vrot.lane.b32.xlu0 %v83, 8
    %v2106 = vpop.permute.xlu0 %2105
    %2107 = vrot.lane.b32.xlu0 %v84, 8
    %v2108 = vpop.permute.xlu0 %2107
    %2109 = vrot.lane.b32.xlu0 %v85, 8
    %v2110 = vpop.permute.xlu0 %2109
    %2111 = vrot.lane.b32.xlu0 %v86, 8
    %v2112 = vpop.permute.xlu0 %2111
    %2113 = vrot.lane.b32.xlu0 %v87, 8
    %v2114 = vpop.permute.xlu0 %2113
    %2115 = vrot.lane.b32.xlu0 %v88, 8
    %v2116 = vpop.permute.xlu0 %2115
    %2117 = vrot.lane.b32.xlu0 %v89, 8
    %v2118 = vpop.permute.xlu0 %2117
    %2119 = vrot.lane.b32.xlu0 %v90, 8
    %v2120 = vpop.permute.xlu0 %2119
    %2121 = vrot.lane.b32.xlu0 %v91, 8
    %v2122 = vpop.permute.xlu0 %2121
    %2123 = vrot.lane.b32.xlu0 %v92, 8
    %v2124 = vpop.permute.xlu0 %2123
    %2125 = vrot.lane.b32.xlu0 %v93, 8
    %v2126 = vpop.permute.xlu0 %2125
    %2127 = vrot.lane.b32.xlu0 %v94, 8
    %v2128 = vpop.permute.xlu0 %2127
    %2129 = vrot.lane.b32.xlu0 %v95, 8
    %v2130 = vpop.permute.xlu0 %2129
    %2131 = vrot.lane.b32.xlu0 %v96, 8
    %v2132 = vpop.permute.xlu0 %2131
    %2133 = vrot.lane.b32.xlu0 %v97, 8
    %v2134 = vpop.permute.xlu0 %2133
    %2135 = vrot.lane.b32.xlu0 %v98, 8
    %v2136 = vpop.permute.xlu0 %2135
    %2137 = vrot.lane.b32.xlu0 %v99, 8
    %v2138 = vpop.permute.xlu0 %2137
    %2139 = vrot.lane.b32.xlu0 %v100, 8
    %v2140 = vpop.permute.xlu0 %2139
    %2141 = vrot.lane.b32.xlu0 %v101, 8
    %v2142 = vpop.permute.xlu0 %2141
    %2143 = vrot.lane.b32.xlu0 %v102, 8
    %v2144 = vpop.permute.xlu0 %2143
    %2145 = vrot.lane.b32.xlu0 %v103, 8
    %v2146 = vpop.permute.xlu0 %2145
    %2147 = vrot.lane.b32.xlu0 %v104, 8
    %v2148 = vpop.permute.xlu0 %2147
    %2149 = vrot.lane.b32.xlu0 %v105, 8
    %v2150 = vpop.permute.xlu0 %2149
    %2151 = vrot.lane.b32.xlu0 %v106, 8
    %v2152 = vpop.permute.xlu0 %2151
    %2153 = vrot.lane.b32.xlu0 %v107, 8
    %v2154 = vpop.permute.xlu0 %2153
    %2155 = vrot.lane.b32.xlu0 %v108, 8
    %v2156 = vpop.permute.xlu0 %2155
    %2157 = vrot.lane.b32.xlu0 %v109, 8
    %v2158 = vpop.permute.xlu0 %2157
    %2159 = vrot.lane.b32.xlu0 %v110, 8
    %v2160 = vpop.permute.xlu0 %2159
    %2161 = vrot.lane.b32.xlu0 %v111, 8
    %v2162 = vpop.permute.xlu0 %2161
    %vm2223 = vcmask 72769
    %2224 = vst.msk [vmem:[#allocation2 - $0x1] sm:$0xfe] %vm2223, %v2044
    %vm2225 = vcmask 72768
    %2226 = vst.msk [vmem:[#allocation2 + $0x7] sm:$0xff] %vm2225, %v2046
    %2227 = vst.msk [vmem:[#allocation2 + $0xf] sm:$0xfe] %vm2223, %v2048
    %2228 = vst.msk [vmem:[#allocation2 + $0x17] sm:$0xff] %vm2225, %v2050
    %2229 = vst.msk [vmem:[#allocation2 + $0x1f] sm:$0xfe] %vm2223, %v2052
    %2230 = vst.msk [vmem:[#allocation2 + $0x27] sm:$0xff] %vm2225, %v2054
    %2231 = vst.msk [vmem:[#allocation2 + $0x2f] sm:$0xfe] %vm2223, %v2056
    %2232 = vst.msk [vmem:[#allocation2 + $0x37] sm:$0xff] %vm2225, %v2058
    %2233 = vst.msk [vmem:[#allocation2 + $0x3f] sm:$0xfe] %vm2223, %v2060
    %2234 = vst.msk [vmem:[#allocation2 + $0x47] sm:$0xff] %vm2225, %v2062
    %2235 = vst.msk [vmem:[#allocation2 + $0x4f] sm:$0xfe] %vm2223, %v2064
    %2236 = vst.msk [vmem:[#allocation2 + $0x57] sm:$0xff] %vm2225, %v2066
    %2237 = vst.msk [vmem:[#allocation2 + $0x5f] sm:$0xfe] %vm2223, %v2068
    %2238 = vst.msk [vmem:[#allocation2 + $0x67] sm:$0xff] %vm2225, %v2070
    %2239 = vst.msk [vmem:[#allocation2 + $0x6f] sm:$0xfe] %vm2223, %v2072
    %2240 = vst.msk [vmem:[#allocation2 + $0x77] sm:$0xff] %vm2225, %v2074
    %2241 = vst.msk [vmem:[#allocation2 + $0x7f] sm:$0xfe] %vm2223, %v2076
    %2242 = vst.msk [vmem:[#allocation2 + $0x87] sm:$0xff] %vm2225, %v2078
    %2243 = vst.msk [vmem:[#allocation2 + $0x8f] sm:$0xfe] %vm2223, %v2080
    %2244 = vst.msk [vmem:[#allocation2 + $0x97] sm:$0xff] %vm2225, %v2082
    %2245 = vst.msk [vmem:[#allocation2 + $0x9f] sm:$0xfe] %vm2223, %v2084
    %2246 = vst.msk [vmem:[#allocation2 + $0xa7] sm:$0xff] %vm2225, %v2086
    %2247 = vst.msk [vmem:[#allocation2 + $0xaf] sm:$0xfe] %vm2223, %v2088
    %2248 = vst.msk [vmem:[#allocation2 + $0xb7] sm:$0xff] %vm2225, %v2090
    %2249 = vst.msk [vmem:[#allocation2 + $0xbf] sm:$0xfe] %vm2223, %v2092
    %2250 = vst.msk [vmem:[#allocation2 + $0xc7] sm:$0xff] %vm2225, %v2094
    %2251 = vst.msk [vmem:[#allocation2 + $0xcf] sm:$0xfe] %vm2223, %v2096
    %2252 = vst.msk [vmem:[#allocation2 + $0xd7] sm:$0xff] %vm2225, %v2098
    %2253 = vst.msk [vmem:[#allocation2 + $0xdf] sm:$0xfe] %vm2223, %v2100
    %2254 = vst.msk [vmem:[#allocation2 + $0xe7] sm:$0xff] %vm2225, %v2102
    %2255 = vst.msk [vmem:[#allocation2 + $0xff] sm:$0xfe] %vm2223, %v2104
    %2256 = vst.msk [vmem:[#allocation2 + $0x107] sm:$0xff] %vm2225, %v2106
    %2257 = vst.msk [vmem:[#allocation2 + $0x10f] sm:$0xfe] %vm2223, %v2108
    %2258 = vst.msk [vmem:[#allocation2 + $0x117] sm:$0xff] %vm2225, %v2110
    %2259 = vst.msk [vmem:[#allocation2 + $0x11f] sm:$0xfe] %vm2223, %v2112
    %2260 = vst.msk [vmem:[#allocation2 + $0x127] sm:$0xff] %vm2225, %v2114
    %2261 = vst.msk [vmem:[#allocation2 + $0x12f] sm:$0xfe] %vm2223, %v2116
    %2262 = vst.msk [vmem:[#allocation2 + $0x137] sm:$0xff] %vm2225, %v2118
    %2263 = vst.msk [vmem:[#allocation2 + $0x13f] sm:$0xfe] %vm2223, %v2120
    %2264 = vst.msk [vmem:[#allocation2 + $0x147] sm:$0xff] %vm2225, %v2122
    %2265 = vst.msk [vmem:[#allocation2 + $0x14f] sm:$0xfe] %vm2223, %v2124
    %2266 = vst.msk [vmem:[#allocation2 + $0x157] sm:$0xff] %vm2225, %v2126
    %2267 = vst.msk [vmem:[#allocation2 + $0x15f] sm:$0xfe] %vm2223, %v2128
    %2268 = vst.msk [vmem:[#allocation2 + $0x167] sm:$0xff] %vm2225, %v2130
    %2269 = vst.msk [vmem:[#allocation2 + $0x16f] sm:$0xfe] %vm2223, %v2132
    %2270 = vst.msk [vmem:[#allocation2 + $0x177] sm:$0xff] %vm2225, %v2134
    %2271 = vst.msk [vmem:[#allocation2 + $0x17f] sm:$0xfe] %vm2223, %v2136
    %2272 = vst.msk [vmem:[#allocation2 + $0x187] sm:$0xff] %vm2225, %v2138
    %2273 = vst.msk [vmem:[#allocation2 + $0x18f] sm:$0xfe] %vm2223, %v2140
    %2274 = vst.msk [vmem:[#allocation2 + $0x197] sm:$0xff] %vm2225, %v2142
    %2275 = vst.msk [vmem:[#allocation2 + $0x19f] sm:$0xfe] %vm2223, %v2144
    %2276 = vst.msk [vmem:[#allocation2 + $0x1a7] sm:$0xff] %vm2225, %v2146
    %2277 = vst.msk [vmem:[#allocation2 + $0x1af] sm:$0xfe] %vm2223, %v2148
    %2278 = vst.msk [vmem:[#allocation2 + $0x1b7] sm:$0xff] %vm2225, %v2150
    %2279 = vst.msk [vmem:[#allocation2 + $0x1bf] sm:$0xfe] %vm2223, %v2152
    %2280 = vst.msk [vmem:[#allocation2 + $0x1c7] sm:$0xff] %vm2225, %v2154
    %2281 = vst.msk [vmem:[#allocation2 + $0x1cf] sm:$0xfe] %vm2223, %v2156
    %2282 = vst.msk [vmem:[#allocation2 + $0x1d7] sm:$0xff] %vm2225, %v2158
    %2283 = vst.msk [vmem:[#allocation2 + $0x1df] sm:$0xfe] %vm2223, %v2160
    %2284 = vst.msk [vmem:[#allocation2 + $0x1e7] sm:$0xff] %vm2225, %v2162
    %v2285 = vld [vmem:[#allocation2] sm:$0xff]
    %v2286 = vld [vmem:[#allocation2 + $0x8] sm:$0xff]
    %v2287 = vld [vmem:[#allocation2 + $0x10] sm:$0xff]
    %v2288 = vld [vmem:[#allocation2 + $0x18] sm:$0xff]
    %v2289 = vld [vmem:[#allocation2 + $0x20] sm:$0xff]
    %v2290 = vld [vmem:[#allocation2 + $0x28] sm:$0xff]
    %v2291 = vld [vmem:[#allocation2 + $0x30] sm:$0xff]
    %v2292 = vld [vmem:[#allocation2 + $0x38] sm:$0xff]
    %v2293 = vld [vmem:[#allocation2 + $0x40] sm:$0xff]
    %v2294 = vld [vmem:[#allocation2 + $0x48] sm:$0xff]
    %v2295 = vld [vmem:[#allocation2 + $0x50] sm:$0xff]
    %v2296 = vld [vmem:[#allocation2 + $0x58] sm:$0xff]
    %v2297 = vld [vmem:[#allocation2 + $0x60] sm:$0xff]
    %v2298 = vld [vmem:[#allocation2 + $0x68] sm:$0xff]
    %v2299 = vld [vmem:[#allocation2 + $0x70] sm:$0xff]
    %v2300 = vld [vmem:[#allocation2 + $0x78] sm:$0xff]
    %v2301 = vld [vmem:[#allocation2 + $0x80] sm:$0xff]
    %v2302 = vld [vmem:[#allocation2 + $0x88] sm:$0xff]
    %v2303 = vld [vmem:[#allocation2 + $0x90] sm:$0xff]
    %v2304 = vld [vmem:[#allocation2 + $0x98] sm:$0xff]
    %v2305 = vld [vmem:[#allocation2 + $0xa0] sm:$0xff]
    %v2306 = vld [vmem:[#allocation2 + $0xa8] sm:$0xff]
    %v2307 = vld [vmem:[#allocation2 + $0xb0] sm:$0xff]
    %v2308 = vld [vmem:[#allocation2 + $0xb8] sm:$0xff]
    %v2309 = vld [vmem:[#allocation2 + $0xc0] sm:$0xff]
    %v2310 = vld [vmem:[#allocation2 + $0xc8] sm:$0xff]
    %v2311 = vld [vmem:[#allocation2 + $0xd0] sm:$0xff]
    %v2312 = vld [vmem:[#allocation2 + $0xd8] sm:$0xff]
    %v2313 = vld [vmem:[#allocation2 + $0xe0] sm:$0xff]
    %v2314 = vld [vmem:[#allocation2 + $0xe8] sm:$0xff]
    %v2315 = vld [vmem:[#allocation2 + $0xf0] sm:$0xff]
    %v2316 = vld [vmem:[#allocation2 + $0xf8] sm:$0xff]
    %v2317 = vld [vmem:[#allocation2 + $0x100] sm:$0xff]
    %v2318 = vld [vmem:[#allocation2 + $0x108] sm:$0xff]
    %v2319 = vld [vmem:[#allocation2 + $0x110] sm:$0xff]
    %v2320 = vld [vmem:[#allocation2 + $0x118] sm:$0xff]
    %v2321 = vld [vmem:[#allocation2 + $0x120] sm:$0xff]
    %v2322 = vld [vmem:[#allocation2 + $0x128] sm:$0xff]
    %v2323 = vld [vmem:[#allocation2 + $0x130] sm:$0xff]
    %v2324 = vld [vmem:[#allocation2 + $0x138] sm:$0xff]
    %v2325 = vld [vmem:[#allocation2 + $0x140] sm:$0xff]
    %v2326 = vld [vmem:[#allocation2 + $0x148] sm:$0xff]
    %v2327 = vld [vmem:[#allocation2 + $0x150] sm:$0xff]
    %v2328 = vld [vmem:[#allocation2 + $0x158] sm:$0xff]
    %v2329 = vld [vmem:[#allocation2 + $0x160] sm:$0xff]
    %v2330 = vld [vmem:[#allocation2 + $0x168] sm:$0xff]
    %v2331 = vld [vmem:[#allocation2 + $0x170] sm:$0xff]
    %v2332 = vld [vmem:[#allocation2 + $0x178] sm:$0xff]
    %v2333 = vld [vmem:[#allocation2 + $0x180] sm:$0xff]
    %v2334 = vld [vmem:[#allocation2 + $0x188] sm:$0xff]
    %v2335 = vld [vmem:[#allocation2 + $0x190] sm:$0xff]
    %v2336 = vld [vmem:[#allocation2 + $0x198] sm:$0xff]
    %v2337 = vld [vmem:[#allocation2 + $0x1a0] sm:$0xff]
    %v2338 = vld [vmem:[#allocation2 + $0x1a8] sm:$0xff]
    %v2339 = vld [vmem:[#allocation2 + $0x1b0] sm:$0xff]
    %v2340 = vld [vmem:[#allocation2 + $0x1b8] sm:$0xff]
    %v2341 = vld [vmem:[#allocation2 + $0x1c0] sm:$0xff]
    %v2342 = vld [vmem:[#allocation2 + $0x1c8] sm:$0xff]
    %v2343 = vld [vmem:[#allocation2 + $0x1d0] sm:$0xff]
    %v2344 = vld [vmem:[#allocation2 + $0x1d8] sm:$0xff]
    %v2345 = vld [vmem:[#allocation2 + $0x1e0] sm:$0xff]
    %v2346 = vld [vmem:[#allocation2 + $0x1e8] sm:$0xff]
    %v2347 = vld [vmem:[#allocation2 + $0x1f0] sm:$0xff]
    %v2348 = vld [vmem:[#allocation2 + $0x1f8] sm:$0xff]
    %v2349 = vld [vmem:[%s1] sm:$0xff]
    %v2350 = vld [vmem:[%s1 + $0x8] sm:$0x1]
    %v2351 = vld [vmem:[%s6] sm:$0x1]
    %v2353 = vlaneseq
    %v2354 = vshrl.u32 %v2353, 7
    %v2355 = vsub.s32 0, %v2354
    %v2356 = vrot.slane %v2351, %v2355
    %v2359 = vsel %vm112, %v2285, 0
    %v2362 = vsel %vm112, %v2286, 0
    %v2365 = vsel %vm112, %v2287, 0
    %v2368 = vsel %vm112, %v2288, 0
    %v2371 = vsel %vm112, %v2289, 0
    %v2374 = vsel %vm112, %v2290, 0
    %v2377 = vsel %vm112, %v2291, 0
    %v2380 = vsel %vm112, %v2292, 0
    %v2383 = vsel %vm112, %v2293, 0
    %v2386 = vsel %vm112, %v2294, 0
    %v2389 = vsel %vm112, %v2295, 0
    %v2392 = vsel %vm112, %v2296, 0
    %v2395 = vsel %vm112, %v2297, 0
    %v2398 = vsel %vm112, %v2298, 0
    %v2401 = vsel %vm112, %v2299, 0
    %v2404 = vsel %vm112, %v2300, 0
    %v2407 = vsel %vm112, %v2301, 0
    %v2410 = vsel %vm112, %v2302, 0
    %v2413 = vsel %vm112, %v2303, 0
    %v2416 = vsel %vm112, %v2304, 0
    %v2419 = vsel %vm112, %v2305, 0
    %v2422 = vsel %vm112, %v2306, 0
    %v2425 = vsel %vm112, %v2307, 0
    %v2428 = vsel %vm112, %v2308, 0
    %v2431 = vsel %vm112, %v2309, 0
    %v2434 = vsel %vm112, %v2310, 0
    %v2437 = vsel %vm112, %v2311, 0
    %v2440 = vsel %vm112, %v2312, 0
    %v2443 = vsel %vm112, %v2313, 0
    %v2446 = vsel %vm112, %v2314, 0
    %v2449 = vsel %vm112, %v2315, 0
    %v2452 = vsel %vm112, %v2316, 0
    %v2455 = vsel %vm112, %v2317, 0
    %v2458 = vsel %vm112, %v2318, 0
    %v2461 = vsel %vm112, %v2319, 0
    %v2464 = vsel %vm112, %v2320, 0
    %v2467 = vsel %vm112, %v2321, 0
    %v2470 = vsel %vm112, %v2322, 0
    %v2473 = vsel %vm112, %v2323, 0
    %v2476 = vsel %vm112, %v2324, 0
    %v2479 = vsel %vm112, %v2325, 0
    %v2482 = vsel %vm112, %v2326, 0
    %v2485 = vsel %vm112, %v2327, 0
    %v2488 = vsel %vm112, %v2328, 0
    %v2491 = vsel %vm112, %v2329, 0
    %v2494 = vsel %vm112, %v2330, 0
    %v2497 = vsel %vm112, %v2331, 0
    %v2500 = vsel %vm112, %v2332, 0
    %v2503 = vsel %vm112, %v2333, 0
    %v2506 = vsel %vm112, %v2334, 0
    %v2509 = vsel %vm112, %v2335, 0
    %v2512 = vsel %vm112, %v2336, 0
    %v2515 = vsel %vm112, %v2337, 0
    %v2518 = vsel %vm112, %v2338, 0
    %v2521 = vsel %vm112, %v2339, 0
    %v2524 = vsel %vm112, %v2340, 0
    %v2527 = vsel %vm112, %v2341, 0
    %v2530 = vsel %vm112, %v2342, 0
    %v2533 = vsel %vm112, %v2343, 0
    %v2536 = vsel %vm112, %v2344, 0
    %v2539 = vsel %vm112, %v2345, 0
    %v2542 = vsel %vm112, %v2346, 0
    %v2545 = vsel %vm112, %v2347, 0
    %v2548 = vsel %vm112, %v2348, 0
    %vm2550 = vcmask 1040384
    %v2552 = vsel %vm2550, %v2350, 0
    %2554 = vmatprep.subr.mxu0 0.0
    %2555 = vmatpush1.msra.mxu0 %v2349
    %2556 = vmatprep.subr.mxu0 0.0
    %2557 = vmatpush1.msra.mxu0 %v2552
    %2558 = vmatprep.subr.mxu0 0.0
    %2559 = vmatpush1.msra.mxu0 0.0
    %2560 = vmatprep.subr.mxu0 0.0
    %2561 = vmatpush1.msra.mxu0 0.0
    %2562 = vmatprep.subr.mxu0 0.0
    %2563 = vmatpush1.msra.mxu0 0.0
    %2564 = vmatprep.subr.mxu0 0.0
    %2565 = vmatpush1.msra.mxu0 0.0
    %2566 = vmatprep.subr.mxu0 0.0
    %2567 = vmatpush1.msra.mxu0 0.0
    %2568 = vmatprep.subr.mxu0 0.0
    %2569 = vmatpush1.msra.mxu0 0.0
    %2570 = vmatprep.subr.mxu0 0.0
    %2571 = vmatpush1.msra.mxu0 0.0
    %2572 = vmatprep.subr.mxu0 0.0
    %2573 = vmatpush1.msra.mxu0 0.0
    %2574 = vmatprep.subr.mxu0 0.0
    %2575 = vmatpush1.msra.mxu0 0.0
    %2576 = vmatprep.subr.mxu0 0.0
    %2577 = vmatpush1.msra.mxu0 0.0
    %2578 = vmatprep.subr.mxu0 0.0
    %2579 = vmatpush1.msra.mxu0 0.0
    %2580 = vmatprep.subr.mxu0 0.0
    %2581 = vmatpush1.msra.mxu0 0.0
    %2582 = vmatprep.subr.mxu0 0.0
    %2583 = vmatpush1.msra.mxu0 0.0
    %2584 = vmatprep.subr.mxu0 0.0
    %2585 = vmatpush1.msra.mxu0 0.0
    %2586 = vmatprep.subr.mxu0 0.0
    %2587 = vmatpush1.msra.mxu0 0.0
    %2588 = vmatprep.subr.mxu0 0.0
    %2589 = vmatpush1.msra.mxu0 0.0
    %2590 = vmatprep.subr.mxu0 0.0
    %2591 = vmatpush1.msra.mxu0 0.0
    %2592 = vmatprep.subr.mxu0 0.0
    %2593 = vmatpush1.msra.mxu0 0.0
    %2594 = vmatprep.subr.mxu0 0.0
    %2595 = vmatpush1.msra.mxu0 0.0
    %2596 = vmatprep.subr.mxu0 0.0
    %2597 = vmatpush1.msra.mxu0 0.0
    %2598 = vmatprep.subr.mxu0 0.0
    %2599 = vmatpush1.msra.mxu0 0.0
    %2600 = vmatprep.subr.mxu0 0.0
    %2601 = vmatpush1.msra.mxu0 0.0
    %2602 = vmatprep.subr.mxu0 0.0
    %2603 = vmatpush1.msra.mxu0 0.0
    %2604 = vmatprep.subr.mxu0 0.0
    %2605 = vmatpush1.msra.mxu0 0.0
    %2606 = vmatprep.subr.mxu0 0.0
    %2607 = vmatpush1.msra.mxu0 0.0
    %2608 = vmatprep.subr.mxu0 0.0
    %2609 = vmatpush1.msra.mxu0 0.0
    %2610 = vmatprep.subr.mxu0 0.0
    %2611 = vmatpush1.msra.mxu0 0.0
    %2612 = vmatprep.subr.mxu0 0.0
    %2613 = vmatpush1.msra.mxu0 0.0
    %2614 = vmatprep.subr.mxu0 0.0
    %2615 = vmatpush1.msra.mxu0 0.0
    %2616 = vmatprep.subr.mxu0 0.0
    %2617 = vmatpush1.msra.mxu0 0.0
    %2618 = vmatprep.mubr.f32.mxu0 0.0
    %2619 = vmatmul.mubr.f32.gmra.mrb[0].mxu0 %v2359
    %v2620 = vpop.f32.mrb[0].mxu0
    %v2621 = vadd.f32 %v2356, %v2620
    %v2622 = vpop.f32.mrb[0].mxu0
    %2623 = vmatprep.mubr.f32.mxu0 0.0
    %2624 = vmatmul.mubr.f32.gmra.mrb[0].mxu0 %v2362
    %v2625 = vpop.f32.mrb[0].mxu0
    %v2626 = vadd.f32 %v2356, %v2625
    %v2627 = vpop.f32.mrb[0].mxu0
    %2628 = vmatprep.mubr.f32.mxu0 0.0
    %2629 = vmatmul.mubr.f32.gmra.mrb[0].mxu0 %v2365
    %v2630 = vpop.f32.mrb[0].mxu0
    %v2631 = vadd.f32 %v2356, %v2630
    %v2632 = vpop.f32.mrb[0].mxu0
    %2633 = vmatprep.mubr.f32.mxu0 0.0
    %2634 = vmatmul.mubr.f32.gmra.mrb[0].mxu0 %v2368
    %v2635 = vpop.f32.mrb[0].mxu0
    %v2636 = vadd.f32 %v2356, %v2635
    %v2637 = vpop.f32.mrb[0].mxu0
    %2638 = vmatprep.mubr.f32.mxu0 0.0
    %2639 = vmatmul.mubr.f32.gmra.mrb[0].mxu0 %v2371
    %v2640 = vpop.f32.mrb[0].mxu0
    %v2641 = vadd.f32 %v2356, %v2640
    %v2642 = vpop.f32.mrb[0].mxu0
    %2643 = vmatprep.mubr.f32.mxu0 0.0
    %2644 = vmatmul.mubr.f32.gmra.mrb[0].mxu0 %v2374
    %v2645 = vpop.f32.mrb[0].mxu0
    %v2646 = vadd.f32 %v2356, %v2645
    %v2647 = vpop.f32.mrb[0].mxu0
    %2648 = vmatprep.mubr.f32.mxu0 0.0
    %2649 = vmatmul.mubr.f32.gmra.mrb[0].mxu0 %v2377
    %v2650 = vpop.f32.mrb[0].mxu0
    %v2651 = vadd.f32 %v2356, %v2650
    %v2652 = vpop.f32.mrb[0].mxu0
    %2653 = vmatprep.mubr.f32.mxu0 0.0
    %2654 = vmatmul.mubr.f32.gmra.mrb[0].mxu0 %v2380
    %v2655 = vpop.f32.mrb[0].mxu0
    %v2656 = vadd.f32 %v2356, %v2655
    %v2657 = vpop.f32.mrb[0].mxu0
    %2658 = vmatprep.mubr.f32.mxu0 0.0
    %2659 = vmatmul.mubr.f32.gmra.mrb[0].mxu0 %v2383
    %v2660 = vpop.f32.mrb[0].mxu0
    %v2661 = vadd.f32 %v2356, %v2660
    %v2662 = vpop.f32.mrb[0].mxu0
    %2663 = vmatprep.mubr.f32.mxu0 0.0
    %2664 = vmatmul.mubr.f32.gmra.mrb[0].mxu0 %v2386
    %v2665 = vpop.f32.mrb[0].mxu0
    %v2666 = vadd.f32 %v2356, %v2665
    %v2667 = vpop.f32.mrb[0].mxu0
    %2668 = vmatprep.mubr.f32.mxu0 0.0
    %2669 = vmatmul.mubr.f32.gmra.mrb[0].mxu0 %v2389
    %v2670 = vpop.f32.mrb[0].mxu0
    %v2671 = vadd.f32 %v2356, %v2670
    %v2672 = vpop.f32.mrb[0].mxu0
    %2673 = vmatprep.mubr.f32.mxu0 0.0
    %2674 = vmatmul.mubr.f32.gmra.mrb[0].mxu0 %v2392
    %v2675 = vpop.f32.mrb[0].mxu0
    %v2676 = vadd.f32 %v2356, %v2675
    %v2677 = vpop.f32.mrb[0].mxu0
    %2678 = vmatprep.mubr.f32.mxu0 0.0
    %2679 = vmatmul.mubr.f32.gmra.mrb[0].mxu0 %v2395
    %v2680 = vpop.f32.mrb[0].mxu0
    %v2681 = vadd.f32 %v2356, %v2680
    %v2682 = vpop.f32.mrb[0].mxu0
    %2683 = vmatprep.mubr.f32.mxu0 0.0
    %2684 = vmatmul.mubr.f32.gmra.mrb[0].mxu0 %v2398
    %v2685 = vpop.f32.mrb[0].mxu0
    %v2686 = vadd.f32 %v2356, %v2685
    %v2687 = vpop.f32.mrb[0].mxu0
    %2688 = vmatprep.mubr.f32.mxu0 0.0
    %2689 = vmatmul.mubr.f32.gmra.mrb[0].mxu0 %v2401
    %v2690 = vpop.f32.mrb[0].mxu0
    %v2691 = vadd.f32 %v2356, %v2690
    %v2692 = vpop.f32.mrb[0].mxu0
    %2693 = vmatprep.mubr.f32.mxu0 0.0
    %2694 = vmatmul.mubr.f32.gmra.mrb[0].mxu0 %v2404
    %v2695 = vpop.f32.mrb[0].mxu0
    %v2696 = vadd.f32 %v2356, %v2695
    %v2697 = vpop.f32.mrb[0].mxu0
    %2698 = vmatprep.mubr.f32.mxu0 0.0
    %2699 = vmatmul.mubr.f32.gmra.mrb[0].mxu0 %v2407
    %v2700 = vpop.f32.mrb[0].mxu0
    %v2701 = vadd.f32 %v2356, %v2700
    %v2702 = vpop.f32.mrb[0].mxu0
    %2703 = vmatprep.mubr.f32.mxu0 0.0
    %2704 = vmatmul.mubr.f32.gmra.mrb[0].mxu0 %v2410
    %v2705 = vpop.f32.mrb[0].mxu0
    %v2706 = vadd.f32 %v2356, %v2705
    %v2707 = vpop.f32.mrb[0].mxu0
    %2708 = vmatprep.mubr.f32.mxu0 0.0
    %2709 = vmatmul.mubr.f32.gmra.mrb[0].mxu0 %v2413
    %v2710 = vpop.f32.mrb[0].mxu0
    %v2711 = vadd.f32 %v2356, %v2710
    %v2712 = vpop.f32.mrb[0].mxu0
    %2713 = vmatprep.mubr.f32.mxu0 0.0
    %2714 = vmatmul.mubr.f32.gmra.mrb[0].mxu0 %v2416
    %v2715 = vpop.f32.mrb[0].mxu0
    %v2716 = vadd.f32 %v2356, %v2715
    %v2717 = vpop.f32.mrb[0].mxu0
    %2718 = vmatprep.mubr.f32.mxu0 0.0
    %2719 = vmatmul.mubr.f32.gmra.mrb[0].mxu0 %v2419
    %v2720 = vpop.f32.mrb[0].mxu0
    %v2721 = vadd.f32 %v2356, %v2720
    %v2722 = vpop.f32.mrb[0].mxu0
    %2723 = vmatprep.mubr.f32.mxu0 0.0
    %2724 = vmatmul.mubr.f32.gmra.mrb[0].mxu0 %v2422
    %v2725 = vpop.f32.mrb[0].mxu0
    %v2726 = vadd.f32 %v2356, %v2725
    %v2727 = vpop.f32.mrb[0].mxu0
    %2728 = vmatprep.mubr.f32.mxu0 0.0
    %2729 = vmatmul.mubr.f32.gmra.mrb[0].mxu0 %v2425
    %v2730 = vpop.f32.mrb[0].mxu0
    %v2731 = vadd.f32 %v2356, %v2730
    %v2732 = vpop.f32.mrb[0].mxu0
    %2733 = vmatprep.mubr.f32.mxu0 0.0
    %2734 = vmatmul.mubr.f32.gmra.mrb[0].mxu0 %v2428
    %v2735 = vpop.f32.mrb[0].mxu0
    %v2736 = vadd.f32 %v2356, %v2735
    %v2737 = vpop.f32.mrb[0].mxu0
    %2738 = vmatprep.mubr.f32.mxu0 0.0
    %2739 = vmatmul.mubr.f32.gmra.mrb[0].mxu0 %v2431
    %v2740 = vpop.f32.mrb[0].mxu0
    %v2741 = vadd.f32 %v2356, %v2740
    %v2742 = vpop.f32.mrb[0].mxu0
    %2743 = vmatprep.mubr.f32.mxu0 0.0
    %2744 = vmatmul.mubr.f32.gmra.mrb[0].mxu0 %v2434
    %v2745 = vpop.f32.mrb[0].mxu0
    %v2746 = vadd.f32 %v2356, %v2745
    %v2747 = vpop.f32.mrb[0].mxu0
    %2748 = vmatprep.mubr.f32.mxu0 0.0
    %2749 = vmatmul.mubr.f32.gmra.mrb[0].mxu0 %v2437
    %v2750 = vpop.f32.mrb[0].mxu0
    %v2751 = vadd.f32 %v2356, %v2750
    %v2752 = vpop.f32.mrb[0].mxu0
    %2753 = vmatprep.mubr.f32.mxu0 0.0
    %2754 = vmatmul.mubr.f32.gmra.mrb[0].mxu0 %v2440
    %v2755 = vpop.f32.mrb[0].mxu0
    %v2756 = vadd.f32 %v2356, %v2755
    %v2757 = vpop.f32.mrb[0].mxu0
    %2758 = vmatprep.mubr.f32.mxu0 0.0
    %2759 = vmatmul.mubr.f32.gmra.mrb[0].mxu0 %v2443
    %v2760 = vpop.f32.mrb[0].mxu0
    %v2761 = vadd.f32 %v2356, %v2760
    %v2762 = vpop.f32.mrb[0].mxu0
    %2763 = vmatprep.mubr.f32.mxu0 0.0
    %2764 = vmatmul.mubr.f32.gmra.mrb[0].mxu0 %v2446
    %v2765 = vpop.f32.mrb[0].mxu0
    %v2766 = vadd.f32 %v2356, %v2765
    %v2767 = vpop.f32.mrb[0].mxu0
    %2768 = vmatprep.mubr.f32.mxu0 0.0
    %2769 = vmatmul.mubr.f32.gmra.mrb[0].mxu0 %v2449
    %v2770 = vpop.f32.mrb[0].mxu0
    %v2771 = vadd.f32 %v2356, %v2770
    %v2772 = vpop.f32.mrb[0].mxu0
    %2773 = vmatprep.mubr.f32.mxu0 0.0
    %2774 = vmatmul.mubr.f32.gmra.mrb[0].mxu0 %v2452
    %v2775 = vpop.f32.mrb[0].mxu0
    %v2776 = vadd.f32 %v2356, %v2775
    %v2777 = vpop.f32.mrb[0].mxu0
    %2778 = vmatprep.mubr.f32.mxu0 0.0
    %2779 = vmatmul.mubr.f32.gmra.mrb[0].mxu0 %v2455
    %v2780 = vpop.f32.mrb[0].mxu0
    %v2781 = vadd.f32 %v2356, %v2780
    %v2782 = vpop.f32.mrb[0].mxu0
    %2783 = vmatprep.mubr.f32.mxu0 0.0
    %2784 = vmatmul.mubr.f32.gmra.mrb[0].mxu0 %v2458
    %v2785 = vpop.f32.mrb[0].mxu0
    %v2786 = vadd.f32 %v2356, %v2785
    %v2787 = vpop.f32.mrb[0].mxu0
    %2788 = vmatprep.mubr.f32.mxu0 0.0
    %2789 = vmatmul.mubr.f32.gmra.mrb[0].mxu0 %v2461
    %v2790 = vpop.f32.mrb[0].mxu0
    %v2791 = vadd.f32 %v2356, %v2790
    %v2792 = vpop.f32.mrb[0].mxu0
    %2793 = vmatprep.mubr.f32.mxu0 0.0
    %2794 = vmatmul.mubr.f32.gmra.mrb[0].mxu0 %v2464
    %v2795 = vpop.f32.mrb[0].mxu0
    %v2796 = vadd.f32 %v2356, %v2795
    %v2797 = vpop.f32.mrb[0].mxu0
    %2798 = vmatprep.mubr.f32.mxu0 0.0
    %2799 = vmatmul.mubr.f32.gmra.mrb[0].mxu0 %v2467
    %v2800 = vpop.f32.mrb[0].mxu0
    %v2801 = vadd.f32 %v2356, %v2800
    %v2802 = vpop.f32.mrb[0].mxu0
    %2803 = vmatprep.mubr.f32.mxu0 0.0
    %2804 = vmatmul.mubr.f32.gmra.mrb[0].mxu0 %v2470
    %v2805 = vpop.f32.mrb[0].mxu0
    %v2806 = vadd.f32 %v2356, %v2805
    %v2807 = vpop.f32.mrb[0].mxu0
    %2808 = vmatprep.mubr.f32.mxu0 0.0
    %2809 = vmatmul.mubr.f32.gmra.mrb[0].mxu0 %v2473
    %v2810 = vpop.f32.mrb[0].mxu0
    %v2811 = vadd.f32 %v2356, %v2810
    %v2812 = vpop.f32.mrb[0].mxu0
    %2813 = vmatprep.mubr.f32.mxu0 0.0
    %2814 = vmatmul.mubr.f32.gmra.mrb[0].mxu0 %v2476
    %v2815 = vpop.f32.mrb[0].mxu0
    %v2816 = vadd.f32 %v2356, %v2815
    %v2817 = vpop.f32.mrb[0].mxu0
    %2818 = vmatprep.mubr.f32.mxu0 0.0
    %2819 = vmatmul.mubr.f32.gmra.mrb[0].mxu0 %v2479
    %v2820 = vpop.f32.mrb[0].mxu0
    %v2821 = vadd.f32 %v2356, %v2820
    %v2822 = vpop.f32.mrb[0].mxu0
    %2823 = vmatprep.mubr.f32.mxu0 0.0
    %2824 = vmatmul.mubr.f32.gmra.mrb[0].mxu0 %v2482
    %v2825 = vpop.f32.mrb[0].mxu0
    %v2826 = vadd.f32 %v2356, %v2825
    %v2827 = vpop.f32.mrb[0].mxu0
    %2828 = vmatprep.mubr.f32.mxu0 0.0
    %2829 = vmatmul.mubr.f32.gmra.mrb[0].mxu0 %v2485
    %v2830 = vpop.f32.mrb[0].mxu0
    %v2831 = vadd.f32 %v2356, %v2830
    %v2832 = vpop.f32.mrb[0].mxu0
    %2833 = vmatprep.mubr.f32.mxu0 0.0
    %2834 = vmatmul.mubr.f32.gmra.mrb[0].mxu0 %v2488
    %v2835 = vpop.f32.mrb[0].mxu0
    %v2836 = vadd.f32 %v2356, %v2835
    %v2837 = vpop.f32.mrb[0].mxu0
    %2838 = vmatprep.mubr.f32.mxu0 0.0
    %2839 = vmatmul.mubr.f32.gmra.mrb[0].mxu0 %v2491
    %v2840 = vpop.f32.mrb[0].mxu0
    %v2841 = vadd.f32 %v2356, %v2840
    %v2842 = vpop.f32.mrb[0].mxu0
    %2843 = vmatprep.mubr.f32.mxu0 0.0
    %2844 = vmatmul.mubr.f32.gmra.mrb[0].mxu0 %v2494
    %v2845 = vpop.f32.mrb[0].mxu0
    %v2846 = vadd.f32 %v2356, %v2845
    %v2847 = vpop.f32.mrb[0].mxu0
    %2848 = vmatprep.mubr.f32.mxu0 0.0
    %2849 = vmatmul.mubr.f32.gmra.mrb[0].mxu0 %v2497
    %v2850 = vpop.f32.mrb[0].mxu0
    %v2851 = vadd.f32 %v2356, %v2850
    %v2852 = vpop.f32.mrb[0].mxu0
    %2853 = vmatprep.mubr.f32.mxu0 0.0
    %2854 = vmatmul.mubr.f32.gmra.mrb[0].mxu0 %v2500
    %v2855 = vpop.f32.mrb[0].mxu0
    %v2856 = vadd.f32 %v2356, %v2855
    %v2857 = vpop.f32.mrb[0].mxu0
    %2858 = vmatprep.mubr.f32.mxu0 0.0
    %2859 = vmatmul.mubr.f32.gmra.mrb[0].mxu0 %v2503
    %v2860 = vpop.f32.mrb[0].mxu0
    %v2861 = vadd.f32 %v2356, %v2860
    %v2862 = vpop.f32.mrb[0].mxu0
    %2863 = vmatprep.mubr.f32.mxu0 0.0
    %2864 = vmatmul.mubr.f32.gmra.mrb[0].mxu0 %v2506
    %v2865 = vpop.f32.mrb[0].mxu0
    %v2866 = vadd.f32 %v2356, %v2865
    %v2867 = vpop.f32.mrb[0].mxu0
    %2868 = vmatprep.mubr.f32.mxu0 0.0
    %2869 = vmatmul.mubr.f32.gmra.mrb[0].mxu0 %v2509
    %v2870 = vpop.f32.mrb[0].mxu0
    %v2871 = vadd.f32 %v2356, %v2870
    %v2872 = vpop.f32.mrb[0].mxu0
    %2873 = vmatprep.mubr.f32.mxu0 0.0
    %2874 = vmatmul.mubr.f32.gmra.mrb[0].mxu0 %v2512
    %v2875 = vpop.f32.mrb[0].mxu0
    %v2876 = vadd.f32 %v2356, %v2875
    %v2877 = vpop.f32.mrb[0].mxu0
    %2878 = vmatprep.mubr.f32.mxu0 0.0
    %2879 = vmatmul.mubr.f32.gmra.mrb[0].mxu0 %v2515
    %v2880 = vpop.f32.mrb[0].mxu0
    %v2881 = vadd.f32 %v2356, %v2880
    %v2882 = vpop.f32.mrb[0].mxu0
    %2883 = vmatprep.mubr.f32.mxu0 0.0
    %2884 = vmatmul.mubr.f32.gmra.mrb[0].mxu0 %v2518
    %v2885 = vpop.f32.mrb[0].mxu0
    %v2886 = vadd.f32 %v2356, %v2885
    %v2887 = vpop.f32.mrb[0].mxu0
    %2888 = vmatprep.mubr.f32.mxu0 0.0
    %2889 = vmatmul.mubr.f32.gmra.mrb[0].mxu0 %v2521
    %v2890 = vpop.f32.mrb[0].mxu0
    %v2891 = vadd.f32 %v2356, %v2890
    %v2892 = vpop.f32.mrb[0].mxu0
    %2893 = vmatprep.mubr.f32.mxu0 0.0
    %2894 = vmatmul.mubr.f32.gmra.mrb[0].mxu0 %v2524
    %v2895 = vpop.f32.mrb[0].mxu0
    %v2896 = vadd.f32 %v2356, %v2895
    %v2897 = vpop.f32.mrb[0].mxu0
    %2898 = vmatprep.mubr.f32.mxu0 0.0
    %2899 = vmatmul.mubr.f32.gmra.mrb[0].mxu0 %v2527
    %v2900 = vpop.f32.mrb[0].mxu0
    %v2901 = vadd.f32 %v2356, %v2900
    %v2902 = vpop.f32.mrb[0].mxu0
    %2903 = vmatprep.mubr.f32.mxu0 0.0
    %2904 = vmatmul.mubr.f32.gmra.mrb[0].mxu0 %v2530
    %v2905 = vpop.f32.mrb[0].mxu0
    %v2906 = vadd.f32 %v2356, %v2905
    %v2907 = vpop.f32.mrb[0].mxu0
    %2908 = vmatprep.mubr.f32.mxu0 0.0
    %2909 = vmatmul.mubr.f32.gmra.mrb[0].mxu0 %v2533
    %v2910 = vpop.f32.mrb[0].mxu0
    %v2911 = vadd.f32 %v2356, %v2910
    %v2912 = vpop.f32.mrb[0].mxu0
    %2913 = vmatprep.mubr.f32.mxu0 0.0
    %2914 = vmatmul.mubr.f32.gmra.mrb[0].mxu0 %v2536
    %v2915 = vpop.f32.mrb[0].mxu0
    %v2916 = vadd.f32 %v2356, %v2915
    %v2917 = vpop.f32.mrb[0].mxu0
    %2918 = vmatprep.mubr.f32.mxu0 0.0
    %2919 = vmatmul.mubr.f32.gmra.mrb[0].mxu0 %v2539
    %v2920 = vpop.f32.mrb[0].mxu0
    %v2921 = vadd.f32 %v2356, %v2920
    %v2922 = vpop.f32.mrb[0].mxu0
    %2923 = vmatprep.mubr.f32.mxu0 0.0
    %2924 = vmatmul.mubr.f32.gmra.mrb[0].mxu0 %v2542
    %v2925 = vpop.f32.mrb[0].mxu0
    %v2926 = vadd.f32 %v2356, %v2925
    %v2927 = vpop.f32.mrb[0].mxu0
    %2928 = vmatprep.mubr.f32.mxu0 0.0
    %2929 = vmatmul.mubr.f32.gmra.mrb[0].mxu0 %v2545
    %v2930 = vpop.f32.mrb[0].mxu0
    %v2931 = vadd.f32 %v2356, %v2930
    %v2932 = vpop.f32.mrb[0].mxu0
    %2933 = vmatprep.mubr.f32.mxu0 0.0
    %2934 = vmatmul.mubr.f32.gmra.mrb[0].mxu0 %v2548
    %v2935 = vpop.f32.mrb[0].mxu0
    %v2936 = vadd.f32 %v2356, %v2935
    %v2937 = vpop.f32.mrb[0].mxu0
    %2938 = vdwg.mxu0
    %v2939 = vmul.f32 %v2621, 0.01
    %v2940 = vmul.f32 %v2626, 0.01
    %v2941 = vmul.f32 %v2631, 0.01
    %v2942 = vmul.f32 %v2636, 0.01
    %v2943 = vmul.f32 %v2641, 0.01
    %v2944 = vmul.f32 %v2646, 0.01
    %v2945 = vmul.f32 %v2651, 0.01
    %v2946 = vmul.f32 %v2656, 0.01
    %v2947 = vmul.f32 %v2661, 0.01
    %v2948 = vmul.f32 %v2666, 0.01
    %v2949 = vmul.f32 %v2671, 0.01
    %v2950 = vmul.f32 %v2676, 0.01
    %v2951 = vmul.f32 %v2681, 0.01
    %v2952 = vmul.f32 %v2686, 0.01
    %v2953 = vmul.f32 %v2691, 0.01
    %v2954 = vmul.f32 %v2696, 0.01
    %v2955 = vmul.f32 %v2701, 0.01
    %v2956 = vmul.f32 %v2706, 0.01
    %v2957 = vmul.f32 %v2711, 0.01
    %v2958 = vmul.f32 %v2716, 0.01
    %v2959 = vmul.f32 %v2721, 0.01
    %v2960 = vmul.f32 %v2726, 0.01
    %v2961 = vmul.f32 %v2731, 0.01
    %v2962 = vmul.f32 %v2736, 0.01
    %v2963 = vmul.f32 %v2741, 0.01
    %v2964 = vmul.f32 %v2746, 0.01
    %v2965 = vmul.f32 %v2751, 0.01
    %v2966 = vmul.f32 %v2756, 0.01
    %v2967 = vmul.f32 %v2761, 0.01
    %v2968 = vmul.f32 %v2766, 0.01
    %v2969 = vmul.f32 %v2771, 0.01
    %v2970 = vmul.f32 %v2776, 0.01
    %v2971 = vmul.f32 %v2781, 0.01
    %v2972 = vmul.f32 %v2786, 0.01
    %v2973 = vmul.f32 %v2791, 0.01
    %v2974 = vmul.f32 %v2796, 0.01
    %v2975 = vmul.f32 %v2801, 0.01
    %v2976 = vmul.f32 %v2806, 0.01
    %v2977 = vmul.f32 %v2811, 0.01
    %v2978 = vmul.f32 %v2816, 0.01
    %v2979 = vmul.f32 %v2821, 0.01
    %v2980 = vmul.f32 %v2826, 0.01
    %v2981 = vmul.f32 %v2831, 0.01
    %v2982 = vmul.f32 %v2836, 0.01
    %v2983 = vmul.f32 %v2841, 0.01
    %v2984 = vmul.f32 %v2846, 0.01
    %v2985 = vmul.f32 %v2851, 0.01
    %v2986 = vmul.f32 %v2856, 0.01
    %v2987 = vmul.f32 %v2861, 0.01
    %v2988 = vmul.f32 %v2866, 0.01
    %v2989 = vmul.f32 %v2871, 0.01
    %v2990 = vmul.f32 %v2876, 0.01
    %v2991 = vmul.f32 %v2881, 0.01
    %v2992 = vmul.f32 %v2886, 0.01
    %v2993 = vmul.f32 %v2891, 0.01
    %v2994 = vmul.f32 %v2896, 0.01
    %v2995 = vmul.f32 %v2901, 0.01
    %v2996 = vmul.f32 %v2906, 0.01
    %v2997 = vmul.f32 %v2911, 0.01
    %v2998 = vmul.f32 %v2916, 0.01
    %v2999 = vmul.f32 %v2921, 0.01
    %v3000 = vmul.f32 %v2926, 0.01
    %v3001 = vmul.f32 %v2931, 0.01
    %v3002 = vmul.f32 %v2936, 0.01
    %v3003 = vmax.f32 %v2621, %v2939
    %v3004 = vmax.f32 %v2626, %v2940
    %v3005 = vmax.f32 %v2631, %v2941
    %v3006 = vmax.f32 %v2636, %v2942
    %v3007 = vmax.f32 %v2641, %v2943
    %v3008 = vmax.f32 %v2646, %v2944
    %v3009 = vmax.f32 %v2651, %v2945
    %v3010 = vmax.f32 %v2656, %v2946
    %v3011 = vmax.f32 %v2661, %v2947
    %v3012 = vmax.f32 %v2666, %v2948
    %v3013 = vmax.f32 %v2671, %v2949
    %v3014 = vmax.f32 %v2676, %v2950
    %v3015 = vmax.f32 %v2681, %v2951
    %v3016 = vmax.f32 %v2686, %v2952
    %v3017 = vmax.f32 %v2691, %v2953
    %v3018 = vmax.f32 %v2696, %v2954
    %v3019 = vmax.f32 %v2701, %v2955
    %v3020 = vmax.f32 %v2706, %v2956
    %v3021 = vmax.f32 %v2711, %v2957
    %v3022 = vmax.f32 %v2716, %v2958
    %v3023 = vmax.f32 %v2721, %v2959
    %v3024 = vmax.f32 %v2726, %v2960
    %v3025 = vmax.f32 %v2731, %v2961
    %v3026 = vmax.f32 %v2736, %v2962
    %v3027 = vmax.f32 %v2741, %v2963
    %v3028 = vmax.f32 %v2746, %v2964
    %v3029 = vmax.f32 %v2751, %v2965
    %v3030 = vmax.f32 %v2756, %v2966
    %v3031 = vmax.f32 %v2761, %v2967
    %v3032 = vmax.f32 %v2766, %v2968
    %v3033 = vmax.f32 %v2771, %v2969
    %v3034 = vmax.f32 %v2776, %v2970
    %v3035 = vmax.f32 %v2781, %v2971
    %v3036 = vmax.f32 %v2786, %v2972
    %v3037 = vmax.f32 %v2791, %v2973
    %v3038 = vmax.f32 %v2796, %v2974
    %v3039 = vmax.f32 %v2801, %v2975
    %v3040 = vmax.f32 %v2806, %v2976
    %v3041 = vmax.f32 %v2811, %v2977
    %v3042 = vmax.f32 %v2816, %v2978
    %v3043 = vmax.f32 %v2821, %v2979
    %v3044 = vmax.f32 %v2826, %v2980
    %v3045 = vmax.f32 %v2831, %v2981
    %v3046 = vmax.f32 %v2836, %v2982
    %v3047 = vmax.f32 %v2841, %v2983
    %v3048 = vmax.f32 %v2846, %v2984
    %v3049 = vmax.f32 %v2851, %v2985
    %v3050 = vmax.f32 %v2856, %v2986
    %v3051 = vmax.f32 %v2861, %v2987
    %v3052 = vmax.f32 %v2866, %v2988
    %v3053 = vmax.f32 %v2871, %v2989
    %v3054 = vmax.f32 %v2876, %v2990
    %v3055 = vmax.f32 %v2881, %v2991
    %v3056 = vmax.f32 %v2886, %v2992
    %v3057 = vmax.f32 %v2891, %v2993
    %v3058 = vmax.f32 %v2896, %v2994
    %v3059 = vmax.f32 %v2901, %v2995
    %v3060 = vmax.f32 %v2906, %v2996
    %v3061 = vmax.f32 %v2911, %v2997
    %v3062 = vmax.f32 %v2916, %v2998
    %v3063 = vmax.f32 %v2921, %v2999
    %v3064 = vmax.f32 %v2926, %v3000
    %v3065 = vmax.f32 %v2931, %v3001
    %v3066 = vmax.f32 %v2936, %v3002
    %v3131 = vcombine.high %v3003, %v3003
    %v3133 = vunpack.c.l.s4 1983009808
    %v3134 = vunpack.c.0.s8 %v3133
    %v3135 = vlaneseq
    %v3136 = vshrl.u32 %v3135, 7
    %v3137 = vsub.s32 %v3134, %v3136
    %v3138 = vrot.slane %v3003, %v3137
    %v3140 = vunpack.c.l.s4 1983009808
    %v3141 = vunpack.c.0.s8 %v3140
    %v3142 = vlaneseq
    %v3143 = vshrl.u32 %v3142, 7
    %v3144 = vsub.s32 %v3141, %v3143
    %v3145 = vrot.slane %v3131, %v3144
    %v3146 = vcombine.high %v3138, %v3138
    %v3147 = vcombine.high %v3145, %v3145
    %v3148 = vcombine.high %v3004, %v3004
    %v3150 = vunpack.c.l.s4 1983009808
    %v3151 = vunpack.c.0.s8 %v3150
    %v3152 = vlaneseq
    %v3153 = vshrl.u32 %v3152, 7
    %v3154 = vsub.s32 %v3151, %v3153
    %v3155 = vrot.slane %v3004, %v3154
    %v3157 = vunpack.c.l.s4 1983009808
    %v3158 = vunpack.c.0.s8 %v3157
    %v3159 = vlaneseq
    %v3160 = vshrl.u32 %v3159, 7
    %v3161 = vsub.s32 %v3158, %v3160
    %v3162 = vrot.slane %v3148, %v3161
    %v3163 = vcombine.high %v3155, %v3155
    %v3164 = vcombine.high %v3162, %v3162
    %v3165 = vcombine.high %v3005, %v3005
    %v3167 = vunpack.c.l.s4 1983009808
    %v3168 = vunpack.c.0.s8 %v3167
    %v3169 = vlaneseq
    %v3170 = vshrl.u32 %v3169, 7
    %v3171 = vsub.s32 %v3168, %v3170
    %v3172 = vrot.slane %v3005, %v3171
    %v3174 = vunpack.c.l.s4 1983009808
    %v3175 = vunpack.c.0.s8 %v3174
    %v3176 = vlaneseq
    %v3177 = vshrl.u32 %v3176, 7
    %v3178 = vsub.s32 %v3175, %v3177
    %v3179 = vrot.slane %v3165, %v3178
    %v3180 = vcombine.high %v3172, %v3172
    %v3181 = vcombine.high %v3179, %v3179
    %v3182 = vcombine.high %v3006, %v3006
    %v3184 = vunpack.c.l.s4 1983009808
    %v3185 = vunpack.c.0.s8 %v3184
    %v3186 = vlaneseq
    %v3187 = vshrl.u32 %v3186, 7
    %v3188 = vsub.s32 %v3185, %v3187
    %v3189 = vrot.slane %v3006, %v3188
    %v3191 = vunpack.c.l.s4 1983009808
    %v3192 = vunpack.c.0.s8 %v3191
    %v3193 = vlaneseq
    %v3194 = vshrl.u32 %v3193, 7
    %v3195 = vsub.s32 %v3192, %v3194
    %v3196 = vrot.slane %v3182, %v3195
    %v3197 = vcombine.high %v3189, %v3189
    %v3198 = vcombine.high %v3196, %v3196
    %v3199 = vcombine.high %v3007, %v3007
    %v3201 = vunpack.c.l.s4 1983009808
    %v3202 = vunpack.c.0.s8 %v3201
    %v3203 = vlaneseq
    %v3204 = vshrl.u32 %v3203, 7
    %v3205 = vsub.s32 %v3202, %v3204
    %v3206 = vrot.slane %v3007, %v3205
    %v3208 = vunpack.c.l.s4 1983009808
    %v3209 = vunpack.c.0.s8 %v3208
    %v3210 = vlaneseq
    %v3211 = vshrl.u32 %v3210, 7
    %v3212 = vsub.s32 %v3209, %v3211
    %v3213 = vrot.slane %v3199, %v3212
    %v3214 = vcombine.high %v3206, %v3206
    %v3215 = vcombine.high %v3213, %v3213
    %v3216 = vcombine.high %v3008, %v3008
    %v3218 = vunpack.c.l.s4 1983009808
    %v3219 = vunpack.c.0.s8 %v3218
    %v3220 = vlaneseq
    %v3221 = vshrl.u32 %v3220, 7
    %v3222 = vsub.s32 %v3219, %v3221
    %v3223 = vrot.slane %v3008, %v3222
    %v3225 = vunpack.c.l.s4 1983009808
    %v3226 = vunpack.c.0.s8 %v3225
    %v3227 = vlaneseq
    %v3228 = vshrl.u32 %v3227, 7
    %v3229 = vsub.s32 %v3226, %v3228
    %v3230 = vrot.slane %v3216, %v3229
    %v3231 = vcombine.high %v3223, %v3223
    %v3232 = vcombine.high %v3230, %v3230
    %v3233 = vcombine.high %v3009, %v3009
    %v3235 = vunpack.c.l.s4 1983009808
    %v3236 = vunpack.c.0.s8 %v3235
    %v3237 = vlaneseq
    %v3238 = vshrl.u32 %v3237, 7
    %v3239 = vsub.s32 %v3236, %v3238
    %v3240 = vrot.slane %v3009, %v3239
    %v3242 = vunpack.c.l.s4 1983009808
    %v3243 = vunpack.c.0.s8 %v3242
    %v3244 = vlaneseq
    %v3245 = vshrl.u32 %v3244, 7
    %v3246 = vsub.s32 %v3243, %v3245
    %v3247 = vrot.slane %v3233, %v3246
    %v3248 = vcombine.high %v3240, %v3240
    %v3249 = vcombine.high %v3247, %v3247
    %v3250 = vcombine.high %v3010, %v3010
    %v3252 = vunpack.c.l.s4 1983009808
    %v3253 = vunpack.c.0.s8 %v3252
    %v3254 = vlaneseq
    %v3255 = vshrl.u32 %v3254, 7
    %v3256 = vsub.s32 %v3253, %v3255
    %v3257 = vrot.slane %v3010, %v3256
    %v3259 = vunpack.c.l.s4 1983009808
    %v3260 = vunpack.c.0.s8 %v3259
    %v3261 = vlaneseq
    %v3262 = vshrl.u32 %v3261, 7
    %v3263 = vsub.s32 %v3260, %v3262
    %v3264 = vrot.slane %v3250, %v3263
    %v3265 = vcombine.high %v3257, %v3257
    %v3266 = vcombine.high %v3264, %v3264
    %v3267 = vcombine.high %v3011, %v3011
    %v3269 = vunpack.c.l.s4 1983009808
    %v3270 = vunpack.c.0.s8 %v3269
    %v3271 = vlaneseq
    %v3272 = vshrl.u32 %v3271, 7
    %v3273 = vsub.s32 %v3270, %v3272
    %v3274 = vrot.slane %v3011, %v3273
    %v3276 = vunpack.c.l.s4 1983009808
    %v3277 = vunpack.c.0.s8 %v3276
    %v3278 = vlaneseq
    %v3279 = vshrl.u32 %v3278, 7
    %v3280 = vsub.s32 %v3277, %v3279
    %v3281 = vrot.slane %v3267, %v3280
    %v3282 = vcombine.high %v3274, %v3274
    %v3283 = vcombine.high %v3281, %v3281
    %v3284 = vcombine.high %v3012, %v3012
    %v3286 = vunpack.c.l.s4 1983009808
    %v3287 = vunpack.c.0.s8 %v3286
    %v3288 = vlaneseq
    %v3289 = vshrl.u32 %v3288, 7
    %v3290 = vsub.s32 %v3287, %v3289
    %v3291 = vrot.slane %v3012, %v3290
    %v3293 = vunpack.c.l.s4 1983009808
    %v3294 = vunpack.c.0.s8 %v3293
    %v3295 = vlaneseq
    %v3296 = vshrl.u32 %v3295, 7
    %v3297 = vsub.s32 %v3294, %v3296
    %v3298 = vrot.slane %v3284, %v3297
    %v3299 = vcombine.high %v3291, %v3291
    %v3300 = vcombine.high %v3298, %v3298
    %v3301 = vcombine.high %v3013, %v3013
    %v3303 = vunpack.c.l.s4 1983009808
    %v3304 = vunpack.c.0.s8 %v3303
    %v3305 = vlaneseq
    %v3306 = vshrl.u32 %v3305, 7
    %v3307 = vsub.s32 %v3304, %v3306
    %v3308 = vrot.slane %v3013, %v3307
    %v3310 = vunpack.c.l.s4 1983009808
    %v3311 = vunpack.c.0.s8 %v3310
    %v3312 = vlaneseq
    %v3313 = vshrl.u32 %v3312, 7
    %v3314 = vsub.s32 %v3311, %v3313
    %v3315 = vrot.slane %v3301, %v3314
    %v3316 = vcombine.high %v3308, %v3308
    %v3317 = vcombine.high %v3315, %v3315
    %v3318 = vcombine.high %v3014, %v3014
    %v3320 = vunpack.c.l.s4 1983009808
    %v3321 = vunpack.c.0.s8 %v3320
    %v3322 = vlaneseq
    %v3323 = vshrl.u32 %v3322, 7
    %v3324 = vsub.s32 %v3321, %v3323
    %v3325 = vrot.slane %v3014, %v3324
    %v3327 = vunpack.c.l.s4 1983009808
    %v3328 = vunpack.c.0.s8 %v3327
    %v3329 = vlaneseq
    %v3330 = vshrl.u32 %v3329, 7
    %v3331 = vsub.s32 %v3328, %v3330
    %v3332 = vrot.slane %v3318, %v3331
    %v3333 = vcombine.high %v3325, %v3325
    %v3334 = vcombine.high %v3332, %v3332
    %v3335 = vcombine.high %v3015, %v3015
    %v3337 = vunpack.c.l.s4 1983009808
    %v3338 = vunpack.c.0.s8 %v3337
    %v3339 = vlaneseq
    %v3340 = vshrl.u32 %v3339, 7
    %v3341 = vsub.s32 %v3338, %v3340
    %v3342 = vrot.slane %v3015, %v3341
    %v3344 = vunpack.c.l.s4 1983009808
    %v3345 = vunpack.c.0.s8 %v3344
    %v3346 = vlaneseq
    %v3347 = vshrl.u32 %v3346, 7
    %v3348 = vsub.s32 %v3345, %v3347
    %v3349 = vrot.slane %v3335, %v3348
    %v3350 = vcombine.high %v3342, %v3342
    %v3351 = vcombine.high %v3349, %v3349
    %v3352 = vcombine.high %v3016, %v3016
    %v3354 = vunpack.c.l.s4 1983009808
    %v3355 = vunpack.c.0.s8 %v3354
    %v3356 = vlaneseq
    %v3357 = vshrl.u32 %v3356, 7
    %v3358 = vsub.s32 %v3355, %v3357
    %v3359 = vrot.slane %v3016, %v3358
    %v3361 = vunpack.c.l.s4 1983009808
    %v3362 = vunpack.c.0.s8 %v3361
    %v3363 = vlaneseq
    %v3364 = vshrl.u32 %v3363, 7
    %v3365 = vsub.s32 %v3362, %v3364
    %v3366 = vrot.slane %v3352, %v3365
    %v3367 = vcombine.high %v3359, %v3359
    %v3368 = vcombine.high %v3366, %v3366
    %v3369 = vcombine.high %v3017, %v3017
    %v3371 = vunpack.c.l.s4 1983009808
    %v3372 = vunpack.c.0.s8 %v3371
    %v3373 = vlaneseq
    %v3374 = vshrl.u32 %v3373, 7
    %v3375 = vsub.s32 %v3372, %v3374
    %v3376 = vrot.slane %v3017, %v3375
    %v3378 = vunpack.c.l.s4 1983009808
    %v3379 = vunpack.c.0.s8 %v3378
    %v3380 = vlaneseq
    %v3381 = vshrl.u32 %v3380, 7
    %v3382 = vsub.s32 %v3379, %v3381
    %v3383 = vrot.slane %v3369, %v3382
    %v3384 = vcombine.high %v3376, %v3376
    %v3385 = vcombine.high %v3383, %v3383
    %v3386 = vcombine.high %v3018, %v3018
    %v3388 = vunpack.c.l.s4 1983009808
    %v3389 = vunpack.c.0.s8 %v3388
    %v3390 = vlaneseq
    %v3391 = vshrl.u32 %v3390, 7
    %v3392 = vsub.s32 %v3389, %v3391
    %v3393 = vrot.slane %v3018, %v3392
    %v3395 = vunpack.c.l.s4 1983009808
    %v3396 = vunpack.c.0.s8 %v3395
    %v3397 = vlaneseq
    %v3398 = vshrl.u32 %v3397, 7
    %v3399 = vsub.s32 %v3396, %v3398
    %v3400 = vrot.slane %v3386, %v3399
    %v3401 = vcombine.high %v3393, %v3393
    %v3402 = vcombine.high %v3400, %v3400
    %v3403 = vcombine.high %v3019, %v3019
    %v3405 = vunpack.c.l.s4 1983009808
    %v3406 = vunpack.c.0.s8 %v3405
    %v3407 = vlaneseq
    %v3408 = vshrl.u32 %v3407, 7
    %v3409 = vsub.s32 %v3406, %v3408
    %v3410 = vrot.slane %v3019, %v3409
    %v3412 = vunpack.c.l.s4 1983009808
    %v3413 = vunpack.c.0.s8 %v3412
    %v3414 = vlaneseq
    %v3415 = vshrl.u32 %v3414, 7
    %v3416 = vsub.s32 %v3413, %v3415
    %v3417 = vrot.slane %v3403, %v3416
    %v3418 = vcombine.high %v3410, %v3410
    %v3419 = vcombine.high %v3417, %v3417
    %v3420 = vcombine.high %v3020, %v3020
    %v3422 = vunpack.c.l.s4 1983009808
    %v3423 = vunpack.c.0.s8 %v3422
    %v3424 = vlaneseq
    %v3425 = vshrl.u32 %v3424, 7
    %v3426 = vsub.s32 %v3423, %v3425
    %v3427 = vrot.slane %v3020, %v3426
    %v3429 = vunpack.c.l.s4 1983009808
    %v3430 = vunpack.c.0.s8 %v3429
    %v3431 = vlaneseq
    %v3432 = vshrl.u32 %v3431, 7
    %v3433 = vsub.s32 %v3430, %v3432
    %v3434 = vrot.slane %v3420, %v3433
    %v3435 = vcombine.high %v3427, %v3427
    %v3436 = vcombine.high %v3434, %v3434
    %v3437 = vcombine.high %v3021, %v3021
    %v3439 = vunpack.c.l.s4 1983009808
    %v3440 = vunpack.c.0.s8 %v3439
    %v3441 = vlaneseq
    %v3442 = vshrl.u32 %v3441, 7
    %v3443 = vsub.s32 %v3440, %v3442
    %v3444 = vrot.slane %v3021, %v3443
    %v3446 = vunpack.c.l.s4 1983009808
    %v3447 = vunpack.c.0.s8 %v3446
    %v3448 = vlaneseq
    %v3449 = vshrl.u32 %v3448, 7
    %v3450 = vsub.s32 %v3447, %v3449
    %v3451 = vrot.slane %v3437, %v3450
    %v3452 = vcombine.high %v3444, %v3444
    %v3453 = vcombine.high %v3451, %v3451
    %v3454 = vcombine.high %v3022, %v3022
    %v3456 = vunpack.c.l.s4 1983009808
    %v3457 = vunpack.c.0.s8 %v3456
    %v3458 = vlaneseq
    %v3459 = vshrl.u32 %v3458, 7
    %v3460 = vsub.s32 %v3457, %v3459
    %v3461 = vrot.slane %v3022, %v3460
    %v3463 = vunpack.c.l.s4 1983009808
    %v3464 = vunpack.c.0.s8 %v3463
    %v3465 = vlaneseq
    %v3466 = vshrl.u32 %v3465, 7
    %v3467 = vsub.s32 %v3464, %v3466
    %v3468 = vrot.slane %v3454, %v3467
    %v3469 = vcombine.high %v3461, %v3461
    %v3470 = vcombine.high %v3468, %v3468
    %v3471 = vcombine.high %v3023, %v3023
    %v3473 = vunpack.c.l.s4 1983009808
    %v3474 = vunpack.c.0.s8 %v3473
    %v3475 = vlaneseq
    %v3476 = vshrl.u32 %v3475, 7
    %v3477 = vsub.s32 %v3474, %v3476
    %v3478 = vrot.slane %v3023, %v3477
    %v3480 = vunpack.c.l.s4 1983009808
    %v3481 = vunpack.c.0.s8 %v3480
    %v3482 = vlaneseq
    %v3483 = vshrl.u32 %v3482, 7
    %v3484 = vsub.s32 %v3481, %v3483
    %v3485 = vrot.slane %v3471, %v3484
    %v3486 = vcombine.high %v3478, %v3478
    %v3487 = vcombine.high %v3485, %v3485
    %v3488 = vcombine.high %v3024, %v3024
    %v3490 = vunpack.c.l.s4 1983009808
    %v3491 = vunpack.c.0.s8 %v3490
    %v3492 = vlaneseq
    %v3493 = vshrl.u32 %v3492, 7
    %v3494 = vsub.s32 %v3491, %v3493
    %v3495 = vrot.slane %v3024, %v3494
    %v3497 = vunpack.c.l.s4 1983009808
    %v3498 = vunpack.c.0.s8 %v3497
    %v3499 = vlaneseq
    %v3500 = vshrl.u32 %v3499, 7
    %v3501 = vsub.s32 %v3498, %v3500
    %v3502 = vrot.slane %v3488, %v3501
    %v3503 = vcombine.high %v3495, %v3495
    %v3504 = vcombine.high %v3502, %v3502
    %v3505 = vcombine.high %v3025, %v3025
    %v3507 = vunpack.c.l.s4 1983009808
    %v3508 = vunpack.c.0.s8 %v3507
    %v3509 = vlaneseq
    %v3510 = vshrl.u32 %v3509, 7
    %v3511 = vsub.s32 %v3508, %v3510
    %v3512 = vrot.slane %v3025, %v3511
    %v3514 = vunpack.c.l.s4 1983009808
    %v3515 = vunpack.c.0.s8 %v3514
    %v3516 = vlaneseq
    %v3517 = vshrl.u32 %v3516, 7
    %v3518 = vsub.s32 %v3515, %v3517
    %v3519 = vrot.slane %v3505, %v3518
    %v3520 = vcombine.high %v3512, %v3512
    %v3521 = vcombine.high %v3519, %v3519
    %v3522 = vcombine.high %v3026, %v3026
    %v3524 = vunpack.c.l.s4 1983009808
    %v3525 = vunpack.c.0.s8 %v3524
    %v3526 = vlaneseq
    %v3527 = vshrl.u32 %v3526, 7
    %v3528 = vsub.s32 %v3525, %v3527
    %v3529 = vrot.slane %v3026, %v3528
    %v3531 = vunpack.c.l.s4 1983009808
    %v3532 = vunpack.c.0.s8 %v3531
    %v3533 = vlaneseq
    %v3534 = vshrl.u32 %v3533, 7
    %v3535 = vsub.s32 %v3532, %v3534
    %v3536 = vrot.slane %v3522, %v3535
    %v3537 = vcombine.high %v3529, %v3529
    %v3538 = vcombine.high %v3536, %v3536
    %v3539 = vcombine.high %v3027, %v3027
    %v3541 = vunpack.c.l.s4 1983009808
    %v3542 = vunpack.c.0.s8 %v3541
    %v3543 = vlaneseq
    %v3544 = vshrl.u32 %v3543, 7
    %v3545 = vsub.s32 %v3542, %v3544
    %v3546 = vrot.slane %v3027, %v3545
    %v3548 = vunpack.c.l.s4 1983009808
    %v3549 = vunpack.c.0.s8 %v3548
    %v3550 = vlaneseq
    %v3551 = vshrl.u32 %v3550, 7
    %v3552 = vsub.s32 %v3549, %v3551
    %v3553 = vrot.slane %v3539, %v3552
    %v3554 = vcombine.high %v3546, %v3546
    %v3555 = vcombine.high %v3553, %v3553
    %v3556 = vcombine.high %v3028, %v3028
    %v3558 = vunpack.c.l.s4 1983009808
    %v3559 = vunpack.c.0.s8 %v3558
    %v3560 = vlaneseq
    %v3561 = vshrl.u32 %v3560, 7
    %v3562 = vsub.s32 %v3559, %v3561
    %v3563 = vrot.slane %v3028, %v3562
    %v3565 = vunpack.c.l.s4 1983009808
    %v3566 = vunpack.c.0.s8 %v3565
    %v3567 = vlaneseq
    %v3568 = vshrl.u32 %v3567, 7
    %v3569 = vsub.s32 %v3566, %v3568
    %v3570 = vrot.slane %v3556, %v3569
    %v3571 = vcombine.high %v3563, %v3563
    %v3572 = vcombine.high %v3570, %v3570
    %v3573 = vcombine.high %v3029, %v3029
    %v3575 = vunpack.c.l.s4 1983009808
    %v3576 = vunpack.c.0.s8 %v3575
    %v3577 = vlaneseq
    %v3578 = vshrl.u32 %v3577, 7
    %v3579 = vsub.s32 %v3576, %v3578
    %v3580 = vrot.slane %v3029, %v3579
    %v3582 = vunpack.c.l.s4 1983009808
    %v3583 = vunpack.c.0.s8 %v3582
    %v3584 = vlaneseq
    %v3585 = vshrl.u32 %v3584, 7
    %v3586 = vsub.s32 %v3583, %v3585
    %v3587 = vrot.slane %v3573, %v3586
    %v3588 = vcombine.high %v3580, %v3580
    %v3589 = vcombine.high %v3587, %v3587
    %v3590 = vcombine.high %v3030, %v3030
    %v3592 = vunpack.c.l.s4 1983009808
    %v3593 = vunpack.c.0.s8 %v3592
    %v3594 = vlaneseq
    %v3595 = vshrl.u32 %v3594, 7
    %v3596 = vsub.s32 %v3593, %v3595
    %v3597 = vrot.slane %v3030, %v3596
    %v3599 = vunpack.c.l.s4 1983009808
    %v3600 = vunpack.c.0.s8 %v3599
    %v3601 = vlaneseq
    %v3602 = vshrl.u32 %v3601, 7
    %v3603 = vsub.s32 %v3600, %v3602
    %v3604 = vrot.slane %v3590, %v3603
    %v3605 = vcombine.high %v3597, %v3597
    %v3606 = vcombine.high %v3604, %v3604
    %v3607 = vcombine.high %v3031, %v3031
    %v3609 = vunpack.c.l.s4 1983009808
    %v3610 = vunpack.c.0.s8 %v3609
    %v3611 = vlaneseq
    %v3612 = vshrl.u32 %v3611, 7
    %v3613 = vsub.s32 %v3610, %v3612
    %v3614 = vrot.slane %v3031, %v3613
    %v3616 = vunpack.c.l.s4 1983009808
    %v3617 = vunpack.c.0.s8 %v3616
    %v3618 = vlaneseq
    %v3619 = vshrl.u32 %v3618, 7
    %v3620 = vsub.s32 %v3617, %v3619
    %v3621 = vrot.slane %v3607, %v3620
    %v3622 = vcombine.high %v3614, %v3614
    %v3623 = vcombine.high %v3621, %v3621
    %v3624 = vcombine.high %v3032, %v3032
    %v3626 = vunpack.c.l.s4 1983009808
    %v3627 = vunpack.c.0.s8 %v3626
    %v3628 = vlaneseq
    %v3629 = vshrl.u32 %v3628, 7
    %v3630 = vsub.s32 %v3627, %v3629
    %v3631 = vrot.slane %v3032, %v3630
    %v3633 = vunpack.c.l.s4 1983009808
    %v3634 = vunpack.c.0.s8 %v3633
    %v3635 = vlaneseq
    %v3636 = vshrl.u32 %v3635, 7
    %v3637 = vsub.s32 %v3634, %v3636
    %v3638 = vrot.slane %v3624, %v3637
    %v3639 = vcombine.high %v3631, %v3631
    %v3640 = vcombine.high %v3638, %v3638
    %v3641 = vcombine.high %v3033, %v3033
    %v3643 = vunpack.c.l.s4 1983009808
    %v3644 = vunpack.c.0.s8 %v3643
    %v3645 = vlaneseq
    %v3646 = vshrl.u32 %v3645, 7
    %v3647 = vsub.s32 %v3644, %v3646
    %v3648 = vrot.slane %v3033, %v3647
    %v3650 = vunpack.c.l.s4 1983009808
    %v3651 = vunpack.c.0.s8 %v3650
    %v3652 = vlaneseq
    %v3653 = vshrl.u32 %v3652, 7
    %v3654 = vsub.s32 %v3651, %v3653
    %v3655 = vrot.slane %v3641, %v3654
    %v3656 = vcombine.high %v3648, %v3648
    %v3657 = vcombine.high %v3655, %v3655
    %v3658 = vcombine.high %v3034, %v3034
    %v3660 = vunpack.c.l.s4 1983009808
    %v3661 = vunpack.c.0.s8 %v3660
    %v3662 = vlaneseq
    %v3663 = vshrl.u32 %v3662, 7
    %v3664 = vsub.s32 %v3661, %v3663
    %v3665 = vrot.slane %v3034, %v3664
    %v3667 = vunpack.c.l.s4 1983009808
    %v3668 = vunpack.c.0.s8 %v3667
    %v3669 = vlaneseq
    %v3670 = vshrl.u32 %v3669, 7
    %v3671 = vsub.s32 %v3668, %v3670
    %v3672 = vrot.slane %v3658, %v3671
    %v3673 = vcombine.high %v3665, %v3665
    %v3674 = vcombine.high %v3672, %v3672
    %v3675 = vcombine.high %v3035, %v3035
    %v3677 = vunpack.c.l.s4 1983009808
    %v3678 = vunpack.c.0.s8 %v3677
    %v3679 = vlaneseq
    %v3680 = vshrl.u32 %v3679, 7
    %v3681 = vsub.s32 %v3678, %v3680
    %v3682 = vrot.slane %v3035, %v3681
    %v3684 = vunpack.c.l.s4 1983009808
    %v3685 = vunpack.c.0.s8 %v3684
    %v3686 = vlaneseq
    %v3687 = vshrl.u32 %v3686, 7
    %v3688 = vsub.s32 %v3685, %v3687
    %v3689 = vrot.slane %v3675, %v3688
    %v3690 = vcombine.high %v3682, %v3682
    %v3691 = vcombine.high %v3689, %v3689
    %v3692 = vcombine.high %v3036, %v3036
    %v3694 = vunpack.c.l.s4 1983009808
    %v3695 = vunpack.c.0.s8 %v3694
    %v3696 = vlaneseq
    %v3697 = vshrl.u32 %v3696, 7
    %v3698 = vsub.s32 %v3695, %v3697
    %v3699 = vrot.slane %v3036, %v3698
    %v3701 = vunpack.c.l.s4 1983009808
    %v3702 = vunpack.c.0.s8 %v3701
    %v3703 = vlaneseq
    %v3704 = vshrl.u32 %v3703, 7
    %v3705 = vsub.s32 %v3702, %v3704
    %v3706 = vrot.slane %v3692, %v3705
    %v3707 = vcombine.high %v3699, %v3699
    %v3708 = vcombine.high %v3706, %v3706
    %v3709 = vcombine.high %v3037, %v3037
    %v3711 = vunpack.c.l.s4 1983009808
    %v3712 = vunpack.c.0.s8 %v3711
    %v3713 = vlaneseq
    %v3714 = vshrl.u32 %v3713, 7
    %v3715 = vsub.s32 %v3712, %v3714
    %v3716 = vrot.slane %v3037, %v3715
    %v3718 = vunpack.c.l.s4 1983009808
    %v3719 = vunpack.c.0.s8 %v3718
    %v3720 = vlaneseq
    %v3721 = vshrl.u32 %v3720, 7
    %v3722 = vsub.s32 %v3719, %v3721
    %v3723 = vrot.slane %v3709, %v3722
    %v3724 = vcombine.high %v3716, %v3716
    %v3725 = vcombine.high %v3723, %v3723
    %v3726 = vcombine.high %v3038, %v3038
    %v3728 = vunpack.c.l.s4 1983009808
    %v3729 = vunpack.c.0.s8 %v3728
    %v3730 = vlaneseq
    %v3731 = vshrl.u32 %v3730, 7
    %v3732 = vsub.s32 %v3729, %v3731
    %v3733 = vrot.slane %v3038, %v3732
    %v3735 = vunpack.c.l.s4 1983009808
    %v3736 = vunpack.c.0.s8 %v3735
    %v3737 = vlaneseq
    %v3738 = vshrl.u32 %v3737, 7
    %v3739 = vsub.s32 %v3736, %v3738
    %v3740 = vrot.slane %v3726, %v3739
    %v3741 = vcombine.high %v3733, %v3733
    %v3742 = vcombine.high %v3740, %v3740
    %v3743 = vcombine.high %v3039, %v3039
    %v3745 = vunpack.c.l.s4 1983009808
    %v3746 = vunpack.c.0.s8 %v3745
    %v3747 = vlaneseq
    %v3748 = vshrl.u32 %v3747, 7
    %v3749 = vsub.s32 %v3746, %v3748
    %v3750 = vrot.slane %v3039, %v3749
    %v3752 = vunpack.c.l.s4 1983009808
    %v3753 = vunpack.c.0.s8 %v3752
    %v3754 = vlaneseq
    %v3755 = vshrl.u32 %v3754, 7
    %v3756 = vsub.s32 %v3753, %v3755
    %v3757 = vrot.slane %v3743, %v3756
    %v3758 = vcombine.high %v3750, %v3750
    %v3759 = vcombine.high %v3757, %v3757
    %v3760 = vcombine.high %v3040, %v3040
    %v3762 = vunpack.c.l.s4 1983009808
    %v3763 = vunpack.c.0.s8 %v3762
    %v3764 = vlaneseq
    %v3765 = vshrl.u32 %v3764, 7
    %v3766 = vsub.s32 %v3763, %v3765
    %v3767 = vrot.slane %v3040, %v3766
    %v3769 = vunpack.c.l.s4 1983009808
    %v3770 = vunpack.c.0.s8 %v3769
    %v3771 = vlaneseq
    %v3772 = vshrl.u32 %v3771, 7
    %v3773 = vsub.s32 %v3770, %v3772
    %v3774 = vrot.slane %v3760, %v3773
    %v3775 = vcombine.high %v3767, %v3767
    %v3776 = vcombine.high %v3774, %v3774
    %v3777 = vcombine.high %v3041, %v3041
    %v3779 = vunpack.c.l.s4 1983009808
    %v3780 = vunpack.c.0.s8 %v3779
    %v3781 = vlaneseq
    %v3782 = vshrl.u32 %v3781, 7
    %v3783 = vsub.s32 %v3780, %v3782
    %v3784 = vrot.slane %v3041, %v3783
    %v3786 = vunpack.c.l.s4 1983009808
    %v3787 = vunpack.c.0.s8 %v3786
    %v3788 = vlaneseq
    %v3789 = vshrl.u32 %v3788, 7
    %v3790 = vsub.s32 %v3787, %v3789
    %v3791 = vrot.slane %v3777, %v3790
    %v3792 = vcombine.high %v3784, %v3784
    %v3793 = vcombine.high %v3791, %v3791
    %v3794 = vcombine.high %v3042, %v3042
    %v3796 = vunpack.c.l.s4 1983009808
    %v3797 = vunpack.c.0.s8 %v3796
    %v3798 = vlaneseq
    %v3799 = vshrl.u32 %v3798, 7
    %v3800 = vsub.s32 %v3797, %v3799
    %v3801 = vrot.slane %v3042, %v3800
    %v3803 = vunpack.c.l.s4 1983009808
    %v3804 = vunpack.c.0.s8 %v3803
    %v3805 = vlaneseq
    %v3806 = vshrl.u32 %v3805, 7
    %v3807 = vsub.s32 %v3804, %v3806
    %v3808 = vrot.slane %v3794, %v3807
    %v3809 = vcombine.high %v3801, %v3801
    %v3810 = vcombine.high %v3808, %v3808
    %v3811 = vcombine.high %v3043, %v3043
    %v3813 = vunpack.c.l.s4 1983009808
    %v3814 = vunpack.c.0.s8 %v3813
    %v3815 = vlaneseq
    %v3816 = vshrl.u32 %v3815, 7
    %v3817 = vsub.s32 %v3814, %v3816
    %v3818 = vrot.slane %v3043, %v3817
    %v3820 = vunpack.c.l.s4 1983009808
    %v3821 = vunpack.c.0.s8 %v3820
    %v3822 = vlaneseq
    %v3823 = vshrl.u32 %v3822, 7
    %v3824 = vsub.s32 %v3821, %v3823
    %v3825 = vrot.slane %v3811, %v3824
    %v3826 = vcombine.high %v3818, %v3818
    %v3827 = vcombine.high %v3825, %v3825
    %v3828 = vcombine.high %v3044, %v3044
    %v3830 = vunpack.c.l.s4 1983009808
    %v3831 = vunpack.c.0.s8 %v3830
    %v3832 = vlaneseq
    %v3833 = vshrl.u32 %v3832, 7
    %v3834 = vsub.s32 %v3831, %v3833
    %v3835 = vrot.slane %v3044, %v3834
    %v3837 = vunpack.c.l.s4 1983009808
    %v3838 = vunpack.c.0.s8 %v3837
    %v3839 = vlaneseq
    %v3840 = vshrl.u32 %v3839, 7
    %v3841 = vsub.s32 %v3838, %v3840
    %v3842 = vrot.slane %v3828, %v3841
    %v3843 = vcombine.high %v3835, %v3835
    %v3844 = vcombine.high %v3842, %v3842
    %v3845 = vcombine.high %v3045, %v3045
    %v3847 = vunpack.c.l.s4 1983009808
    %v3848 = vunpack.c.0.s8 %v3847
    %v3849 = vlaneseq
    %v3850 = vshrl.u32 %v3849, 7
    %v3851 = vsub.s32 %v3848, %v3850
    %v3852 = vrot.slane %v3045, %v3851
    %v3854 = vunpack.c.l.s4 1983009808
    %v3855 = vunpack.c.0.s8 %v3854
    %v3856 = vlaneseq
    %v3857 = vshrl.u32 %v3856, 7
    %v3858 = vsub.s32 %v3855, %v3857
    %v3859 = vrot.slane %v3845, %v3858
    %v3860 = vcombine.high %v3852, %v3852
    %v3861 = vcombine.high %v3859, %v3859
    %v3862 = vcombine.high %v3046, %v3046
    %v3864 = vunpack.c.l.s4 1983009808
    %v3865 = vunpack.c.0.s8 %v3864
    %v3866 = vlaneseq
    %v3867 = vshrl.u32 %v3866, 7
    %v3868 = vsub.s32 %v3865, %v3867
    %v3869 = vrot.slane %v3046, %v3868
    %v3871 = vunpack.c.l.s4 1983009808
    %v3872 = vunpack.c.0.s8 %v3871
    %v3873 = vlaneseq
    %v3874 = vshrl.u32 %v3873, 7
    %v3875 = vsub.s32 %v3872, %v3874
    %v3876 = vrot.slane %v3862, %v3875
    %v3877 = vcombine.high %v3869, %v3869
    %v3878 = vcombine.high %v3876, %v3876
    %v3879 = vcombine.high %v3047, %v3047
    %v3881 = vunpack.c.l.s4 1983009808
    %v3882 = vunpack.c.0.s8 %v3881
    %v3883 = vlaneseq
    %v3884 = vshrl.u32 %v3883, 7
    %v3885 = vsub.s32 %v3882, %v3884
    %v3886 = vrot.slane %v3047, %v3885
    %v3888 = vunpack.c.l.s4 1983009808
    %v3889 = vunpack.c.0.s8 %v3888
    %v3890 = vlaneseq
    %v3891 = vshrl.u32 %v3890, 7
    %v3892 = vsub.s32 %v3889, %v3891
    %v3893 = vrot.slane %v3879, %v3892
    %v3894 = vcombine.high %v3886, %v3886
    %v3895 = vcombine.high %v3893, %v3893
    %v3896 = vcombine.high %v3048, %v3048
    %v3898 = vunpack.c.l.s4 1983009808
    %v3899 = vunpack.c.0.s8 %v3898
    %v3900 = vlaneseq
    %v3901 = vshrl.u32 %v3900, 7
    %v3902 = vsub.s32 %v3899, %v3901
    %v3903 = vrot.slane %v3048, %v3902
    %v3905 = vunpack.c.l.s4 1983009808
    %v3906 = vunpack.c.0.s8 %v3905
    %v3907 = vlaneseq
    %v3908 = vshrl.u32 %v3907, 7
    %v3909 = vsub.s32 %v3906, %v3908
    %v3910 = vrot.slane %v3896, %v3909
    %v3911 = vcombine.high %v3903, %v3903
    %v3912 = vcombine.high %v3910, %v3910
    %v3913 = vcombine.high %v3049, %v3049
    %v3915 = vunpack.c.l.s4 1983009808
    %v3916 = vunpack.c.0.s8 %v3915
    %v3917 = vlaneseq
    %v3918 = vshrl.u32 %v3917, 7
    %v3919 = vsub.s32 %v3916, %v3918
    %v3920 = vrot.slane %v3049, %v3919
    %v3922 = vunpack.c.l.s4 1983009808
    %v3923 = vunpack.c.0.s8 %v3922
    %v3924 = vlaneseq
    %v3925 = vshrl.u32 %v3924, 7
    %v3926 = vsub.s32 %v3923, %v3925
    %v3927 = vrot.slane %v3913, %v3926
    %v3928 = vcombine.high %v3920, %v3920
    %v3929 = vcombine.high %v3927, %v3927
    %v3930 = vcombine.high %v3050, %v3050
    %v3932 = vunpack.c.l.s4 1983009808
    %v3933 = vunpack.c.0.s8 %v3932
    %v3934 = vlaneseq
    %v3935 = vshrl.u32 %v3934, 7
    %v3936 = vsub.s32 %v3933, %v3935
    %v3937 = vrot.slane %v3050, %v3936
    %v3939 = vunpack.c.l.s4 1983009808
    %v3940 = vunpack.c.0.s8 %v3939
    %v3941 = vlaneseq
    %v3942 = vshrl.u32 %v3941, 7
    %v3943 = vsub.s32 %v3940, %v3942
    %v3944 = vrot.slane %v3930, %v3943
    %v3945 = vcombine.high %v3937, %v3937
    %v3946 = vcombine.high %v3944, %v3944
    %v3947 = vcombine.high %v3051, %v3051
    %v3949 = vunpack.c.l.s4 1983009808
    %v3950 = vunpack.c.0.s8 %v3949
    %v3951 = vlaneseq
    %v3952 = vshrl.u32 %v3951, 7
    %v3953 = vsub.s32 %v3950, %v3952
    %v3954 = vrot.slane %v3051, %v3953
    %v3956 = vunpack.c.l.s4 1983009808
    %v3957 = vunpack.c.0.s8 %v3956
    %v3958 = vlaneseq
    %v3959 = vshrl.u32 %v3958, 7
    %v3960 = vsub.s32 %v3957, %v3959
    %v3961 = vrot.slane %v3947, %v3960
    %v3962 = vcombine.high %v3954, %v3954
    %v3963 = vcombine.high %v3961, %v3961
    %v3964 = vcombine.high %v3052, %v3052
    %v3966 = vunpack.c.l.s4 1983009808
    %v3967 = vunpack.c.0.s8 %v3966
    %v3968 = vlaneseq
    %v3969 = vshrl.u32 %v3968, 7
    %v3970 = vsub.s32 %v3967, %v3969
    %v3971 = vrot.slane %v3052, %v3970
    %v3973 = vunpack.c.l.s4 1983009808
    %v3974 = vunpack.c.0.s8 %v3973
    %v3975 = vlaneseq
    %v3976 = vshrl.u32 %v3975, 7
    %v3977 = vsub.s32 %v3974, %v3976
    %v3978 = vrot.slane %v3964, %v3977
    %v3979 = vcombine.high %v3971, %v3971
    %v3980 = vcombine.high %v3978, %v3978
    %v3981 = vcombine.high %v3053, %v3053
    %v3983 = vunpack.c.l.s4 1983009808
    %v3984 = vunpack.c.0.s8 %v3983
    %v3985 = vlaneseq
    %v3986 = vshrl.u32 %v3985, 7
    %v3987 = vsub.s32 %v3984, %v3986
    %v3988 = vrot.slane %v3053, %v3987
    %v3990 = vunpack.c.l.s4 1983009808
    %v3991 = vunpack.c.0.s8 %v3990
    %v3992 = vlaneseq
    %v3993 = vshrl.u32 %v3992, 7
    %v3994 = vsub.s32 %v3991, %v3993
    %v3995 = vrot.slane %v3981, %v3994
    %v3996 = vcombine.high %v3988, %v3988
    %v3997 = vcombine.high %v3995, %v3995
    %v3998 = vcombine.high %v3054, %v3054
    %v4000 = vunpack.c.l.s4 1983009808
    %v4001 = vunpack.c.0.s8 %v4000
    %v4002 = vlaneseq
    %v4003 = vshrl.u32 %v4002, 7
    %v4004 = vsub.s32 %v4001, %v4003
    %v4005 = vrot.slane %v3054, %v4004
    %v4007 = vunpack.c.l.s4 1983009808
    %v4008 = vunpack.c.0.s8 %v4007
    %v4009 = vlaneseq
    %v4010 = vshrl.u32 %v4009, 7
    %v4011 = vsub.s32 %v4008, %v4010
    %v4012 = vrot.slane %v3998, %v4011
    %v4013 = vcombine.high %v4005, %v4005
    %v4014 = vcombine.high %v4012, %v4012
    %v4015 = vcombine.high %v3055, %v3055
    %v4017 = vunpack.c.l.s4 1983009808
    %v4018 = vunpack.c.0.s8 %v4017
    %v4019 = vlaneseq
    %v4020 = vshrl.u32 %v4019, 7
    %v4021 = vsub.s32 %v4018, %v4020
    %v4022 = vrot.slane %v3055, %v4021
    %v4024 = vunpack.c.l.s4 1983009808
    %v4025 = vunpack.c.0.s8 %v4024
    %v4026 = vlaneseq
    %v4027 = vshrl.u32 %v4026, 7
    %v4028 = vsub.s32 %v4025, %v4027
    %v4029 = vrot.slane %v4015, %v4028
    %v4030 = vcombine.high %v4022, %v4022
    %v4031 = vcombine.high %v4029, %v4029
    %v4032 = vcombine.high %v3056, %v3056
    %v4034 = vunpack.c.l.s4 1983009808
    %v4035 = vunpack.c.0.s8 %v4034
    %v4036 = vlaneseq
    %v4037 = vshrl.u32 %v4036, 7
    %v4038 = vsub.s32 %v4035, %v4037
    %v4039 = vrot.slane %v3056, %v4038
    %v4041 = vunpack.c.l.s4 1983009808
    %v4042 = vunpack.c.0.s8 %v4041
    %v4043 = vlaneseq
    %v4044 = vshrl.u32 %v4043, 7
    %v4045 = vsub.s32 %v4042, %v4044
    %v4046 = vrot.slane %v4032, %v4045
    %v4047 = vcombine.high %v4039, %v4039
    %v4048 = vcombine.high %v4046, %v4046
    %v4049 = vcombine.high %v3057, %v3057
    %v4051 = vunpack.c.l.s4 1983009808
    %v4052 = vunpack.c.0.s8 %v4051
    %v4053 = vlaneseq
    %v4054 = vshrl.u32 %v4053, 7
    %v4055 = vsub.s32 %v4052, %v4054
    %v4056 = vrot.slane %v3057, %v4055
    %v4058 = vunpack.c.l.s4 1983009808
    %v4059 = vunpack.c.0.s8 %v4058
    %v4060 = vlaneseq
    %v4061 = vshrl.u32 %v4060, 7
    %v4062 = vsub.s32 %v4059, %v4061
    %v4063 = vrot.slane %v4049, %v4062
    %v4064 = vcombine.high %v4056, %v4056
    %v4065 = vcombine.high %v4063, %v4063
    %v4066 = vcombine.high %v3058, %v3058
    %v4068 = vunpack.c.l.s4 1983009808
    %v4069 = vunpack.c.0.s8 %v4068
    %v4070 = vlaneseq
    %v4071 = vshrl.u32 %v4070, 7
    %v4072 = vsub.s32 %v4069, %v4071
    %v4073 = vrot.slane %v3058, %v4072
    %v4075 = vunpack.c.l.s4 1983009808
    %v4076 = vunpack.c.0.s8 %v4075
    %v4077 = vlaneseq
    %v4078 = vshrl.u32 %v4077, 7
    %v4079 = vsub.s32 %v4076, %v4078
    %v4080 = vrot.slane %v4066, %v4079
    %v4081 = vcombine.high %v4073, %v4073
    %v4082 = vcombine.high %v4080, %v4080
    %v4083 = vcombine.high %v3059, %v3059
    %v4085 = vunpack.c.l.s4 1983009808
    %v4086 = vunpack.c.0.s8 %v4085
    %v4087 = vlaneseq
    %v4088 = vshrl.u32 %v4087, 7
    %v4089 = vsub.s32 %v4086, %v4088
    %v4090 = vrot.slane %v3059, %v4089
    %v4092 = vunpack.c.l.s4 1983009808
    %v4093 = vunpack.c.0.s8 %v4092
    %v4094 = vlaneseq
    %v4095 = vshrl.u32 %v4094, 7
    %v4096 = vsub.s32 %v4093, %v4095
    %v4097 = vrot.slane %v4083, %v4096
    %v4098 = vcombine.high %v4090, %v4090
    %v4099 = vcombine.high %v4097, %v4097
    %v4100 = vcombine.high %v3060, %v3060
    %v4102 = vunpack.c.l.s4 1983009808
    %v4103 = vunpack.c.0.s8 %v4102
    %v4104 = vlaneseq
    %v4105 = vshrl.u32 %v4104, 7
    %v4106 = vsub.s32 %v4103, %v4105
    %v4107 = vrot.slane %v3060, %v4106
    %v4109 = vunpack.c.l.s4 1983009808
    %v4110 = vunpack.c.0.s8 %v4109
    %v4111 = vlaneseq
    %v4112 = vshrl.u32 %v4111, 7
    %v4113 = vsub.s32 %v4110, %v4112
    %v4114 = vrot.slane %v4100, %v4113
    %v4115 = vcombine.high %v4107, %v4107
    %v4116 = vcombine.high %v4114, %v4114
    %v4117 = vcombine.high %v3061, %v3061
    %v4119 = vunpack.c.l.s4 1983009808
    %v4120 = vunpack.c.0.s8 %v4119
    %v4121 = vlaneseq
    %v4122 = vshrl.u32 %v4121, 7
    %v4123 = vsub.s32 %v4120, %v4122
    %v4124 = vrot.slane %v3061, %v4123
    %v4126 = vunpack.c.l.s4 1983009808
    %v4127 = vunpack.c.0.s8 %v4126
    %v4128 = vlaneseq
    %v4129 = vshrl.u32 %v4128, 7
    %v4130 = vsub.s32 %v4127, %v4129
    %v4131 = vrot.slane %v4117, %v4130
    %v4132 = vcombine.high %v4124, %v4124
    %v4133 = vcombine.high %v4131, %v4131
    %v4134 = vcombine.high %v3062, %v3062
    %v4136 = vunpack.c.l.s4 1983009808
    %v4137 = vunpack.c.0.s8 %v4136
    %v4138 = vlaneseq
    %v4139 = vshrl.u32 %v4138, 7
    %v4140 = vsub.s32 %v4137, %v4139
    %v4141 = vrot.slane %v3062, %v4140
    %v4143 = vunpack.c.l.s4 1983009808
    %v4144 = vunpack.c.0.s8 %v4143
    %v4145 = vlaneseq
    %v4146 = vshrl.u32 %v4145, 7
    %v4147 = vsub.s32 %v4144, %v4146
    %v4148 = vrot.slane %v4134, %v4147
    %v4149 = vcombine.high %v4141, %v4141
    %v4150 = vcombine.high %v4148, %v4148
    %v4151 = vcombine.high %v3063, %v3063
    %v4153 = vunpack.c.l.s4 1983009808
    %v4154 = vunpack.c.0.s8 %v4153
    %v4155 = vlaneseq
    %v4156 = vshrl.u32 %v4155, 7
    %v4157 = vsub.s32 %v4154, %v4156
    %v4158 = vrot.slane %v3063, %v4157
    %v4160 = vunpack.c.l.s4 1983009808
    %v4161 = vunpack.c.0.s8 %v4160
    %v4162 = vlaneseq
    %v4163 = vshrl.u32 %v4162, 7
    %v4164 = vsub.s32 %v4161, %v4163
    %v4165 = vrot.slane %v4151, %v4164
    %v4166 = vcombine.high %v4158, %v4158
    %v4167 = vcombine.high %v4165, %v4165
    %v4168 = vcombine.high %v3064, %v3064
    %v4170 = vunpack.c.l.s4 1983009808
    %v4171 = vunpack.c.0.s8 %v4170
    %v4172 = vlaneseq
    %v4173 = vshrl.u32 %v4172, 7
    %v4174 = vsub.s32 %v4171, %v4173
    %v4175 = vrot.slane %v3064, %v4174
    %v4177 = vunpack.c.l.s4 1983009808
    %v4178 = vunpack.c.0.s8 %v4177
    %v4179 = vlaneseq
    %v4180 = vshrl.u32 %v4179, 7
    %v4181 = vsub.s32 %v4178, %v4180
    %v4182 = vrot.slane %v4168, %v4181
    %v4183 = vcombine.high %v4175, %v4175
    %v4184 = vcombine.high %v4182, %v4182
    %v4185 = vcombine.high %v3065, %v3065
    %v4187 = vunpack.c.l.s4 1983009808
    %v4188 = vunpack.c.0.s8 %v4187
    %v4189 = vlaneseq
    %v4190 = vshrl.u32 %v4189, 7
    %v4191 = vsub.s32 %v4188, %v4190
    %v4192 = vrot.slane %v3065, %v4191
    %v4194 = vunpack.c.l.s4 1983009808
    %v4195 = vunpack.c.0.s8 %v4194
    %v4196 = vlaneseq
    %v4197 = vshrl.u32 %v4196, 7
    %v4198 = vsub.s32 %v4195, %v4197
    %v4199 = vrot.slane %v4185, %v4198
    %v4200 = vcombine.high %v4192, %v4192
    %v4201 = vcombine.high %v4199, %v4199
    %v4202 = vcombine.high %v3066, %v3066
    %v4204 = vunpack.c.l.s4 1983009808
    %v4205 = vunpack.c.0.s8 %v4204
    %v4206 = vlaneseq
    %v4207 = vshrl.u32 %v4206, 7
    %v4208 = vsub.s32 %v4205, %v4207
    %v4209 = vrot.slane %v3066, %v4208
    %v4211 = vunpack.c.l.s4 1983009808
    %v4212 = vunpack.c.0.s8 %v4211
    %v4213 = vlaneseq
    %v4214 = vshrl.u32 %v4213, 7
    %v4215 = vsub.s32 %v4212, %v4214
    %v4216 = vrot.slane %v4202, %v4215
    %v4217 = vcombine.high %v4209, %v4209
    %v4218 = vcombine.high %v4216, %v4216
    %v4475 = vrot.slane %v3138, 7
    %v4476 = vrot.slane %v4475, 2
    %v4477 = vrot.slane %v3146, 7
    %v4478 = vrot.slane %v4477, 2
    %v4479 = vrot.slane %v3145, 7
    %v4480 = vrot.slane %v4479, 2
    %v4481 = vrot.slane %v3147, 7
    %v4482 = vrot.slane %v4481, 2
    %v4483 = vrot.slane %v3155, 7
    %v4484 = vrot.slane %v4483, 2
    %v4485 = vrot.slane %v3163, 7
    %v4486 = vrot.slane %v4485, 2
    %v4487 = vrot.slane %v3162, 7
    %v4488 = vrot.slane %v4487, 2
    %v4489 = vrot.slane %v3164, 7
    %v4490 = vrot.slane %v4489, 2
    %v4491 = vrot.slane %v3172, 7
    %v4492 = vrot.slane %v4491, 2
    %v4493 = vrot.slane %v3180, 7
    %v4494 = vrot.slane %v4493, 2
    %v4495 = vrot.slane %v3179, 7
    %v4496 = vrot.slane %v4495, 2
    %v4497 = vrot.slane %v3181, 7
    %v4498 = vrot.slane %v4497, 2
    %v4499 = vrot.slane %v3189, 7
    %v4500 = vrot.slane %v4499, 2
    %v4501 = vrot.slane %v3197, 7
    %v4502 = vrot.slane %v4501, 2
    %v4503 = vrot.slane %v3196, 7
    %v4504 = vrot.slane %v4503, 2
    %v4505 = vrot.slane %v3198, 7
    %v4506 = vrot.slane %v4505, 2
    %v4507 = vrot.slane %v3206, 7
    %v4508 = vrot.slane %v4507, 2
    %v4509 = vrot.slane %v3214, 7
    %v4510 = vrot.slane %v4509, 2
    %v4511 = vrot.slane %v3213, 7
    %v4512 = vrot.slane %v4511, 2
    %v4513 = vrot.slane %v3215, 7
    %v4514 = vrot.slane %v4513, 2
    %v4515 = vrot.slane %v3223, 7
    %v4516 = vrot.slane %v4515, 2
    %v4517 = vrot.slane %v3231, 7
    %v4518 = vrot.slane %v4517, 2
    %v4519 = vrot.slane %v3230, 7
    %v4520 = vrot.slane %v4519, 2
    %v4521 = vrot.slane %v3232, 7
    %v4522 = vrot.slane %v4521, 2
    %v4523 = vrot.slane %v3240, 7
    %v4524 = vrot.slane %v4523, 2
    %v4525 = vrot.slane %v3248, 7
    %v4526 = vrot.slane %v4525, 2
    %v4527 = vrot.slane %v3247, 7
    %v4528 = vrot.slane %v4527, 2
    %v4529 = vrot.slane %v3249, 7
    %v4530 = vrot.slane %v4529, 2
    %v4531 = vrot.slane %v3257, 7
    %v4532 = vrot.slane %v4531, 2
    %v4533 = vrot.slane %v3265, 7
    %v4534 = vrot.slane %v4533, 2
    %v4535 = vrot.slane %v3264, 7
    %v4536 = vrot.slane %v4535, 2
    %v4537 = vrot.slane %v3266, 7
    %v4538 = vrot.slane %v4537, 2
    %v4539 = vrot.slane %v3274, 7
    %v4540 = vrot.slane %v4539, 2
    %v4541 = vrot.slane %v3282, 7
    %v4542 = vrot.slane %v4541, 2
    %v4543 = vrot.slane %v3281, 7
    %v4544 = vrot.slane %v4543, 2
    %v4545 = vrot.slane %v3283, 7
    %v4546 = vrot.slane %v4545, 2
    %v4547 = vrot.slane %v3291, 7
    %v4548 = vrot.slane %v4547, 2
    %v4549 = vrot.slane %v3299, 7
    %v4550 = vrot.slane %v4549, 2
    %v4551 = vrot.slane %v3298, 7
    %v4552 = vrot.slane %v4551, 2
    %v4553 = vrot.slane %v3300, 7
    %v4554 = vrot.slane %v4553, 2
    %v4555 = vrot.slane %v3308, 7
    %v4556 = vrot.slane %v4555, 2
    %v4557 = vrot.slane %v3316, 7
    %v4558 = vrot.slane %v4557, 2
    %v4559 = vrot.slane %v3315, 7
    %v4560 = vrot.slane %v4559, 2
    %v4561 = vrot.slane %v3317, 7
    %v4562 = vrot.slane %v4561, 2
    %v4563 = vrot.slane %v3325, 7
    %v4564 = vrot.slane %v4563, 2
    %v4565 = vrot.slane %v3333, 7
    %v4566 = vrot.slane %v4565, 2
    %v4567 = vrot.slane %v3332, 7
    %v4568 = vrot.slane %v4567, 2
    %v4569 = vrot.slane %v3334, 7
    %v4570 = vrot.slane %v4569, 2
    %v4571 = vrot.slane %v3342, 7
    %v4572 = vrot.slane %v4571, 2
    %v4573 = vrot.slane %v3350, 7
    %v4574 = vrot.slane %v4573, 2
    %v4575 = vrot.slane %v3349, 7
    %v4576 = vrot.slane %v4575, 2
    %v4577 = vrot.slane %v3351, 7
    %v4578 = vrot.slane %v4577, 2
    %v4579 = vrot.slane %v3359, 7
    %v4580 = vrot.slane %v4579, 2
    %v4581 = vrot.slane %v3367, 7
    %v4582 = vrot.slane %v4581, 2
    %v4583 = vrot.slane %v3366, 7
    %v4584 = vrot.slane %v4583, 2
    %v4585 = vrot.slane %v3368, 7
    %v4586 = vrot.slane %v4585, 2
    %v4587 = vrot.slane %v3376, 7
    %v4588 = vrot.slane %v4587, 2
    %v4589 = vrot.slane %v3384, 7
    %v4590 = vrot.slane %v4589, 2
    %v4591 = vrot.slane %v3383, 7
    %v4592 = vrot.slane %v4591, 2
    %v4593 = vrot.slane %v3385, 7
    %v4594 = vrot.slane %v4593, 2
    %v4595 = vrot.slane %v3393, 7
    %v4596 = vrot.slane %v4595, 2
    %v4597 = vrot.slane %v3401, 7
    %v4598 = vrot.slane %v4597, 2
    %v4599 = vrot.slane %v3400, 7
    %v4600 = vrot.slane %v4599, 2
    %v4601 = vrot.slane %v3402, 7
    %v4602 = vrot.slane %v4601, 2
    %v4603 = vrot.slane %v3410, 7
    %v4604 = vrot.slane %v4603, 2
    %v4605 = vrot.slane %v3418, 7
    %v4606 = vrot.slane %v4605, 2
    %v4607 = vrot.slane %v3417, 7
    %v4608 = vrot.slane %v4607, 2
    %v4609 = vrot.slane %v3419, 7
    %v4610 = vrot.slane %v4609, 2
    %v4611 = vrot.slane %v3427, 7
    %v4612 = vrot.slane %v4611, 2
    %v4613 = vrot.slane %v3435, 7
    %v4614 = vrot.slane %v4613, 2
    %v4615 = vrot.slane %v3434, 7
    %v4616 = vrot.slane %v4615, 2
    %v4617 = vrot.slane %v3436, 7
    %v4618 = vrot.slane %v4617, 2
    %v4619 = vrot.slane %v3444, 7
    %v4620 = vrot.slane %v4619, 2
    %v4621 = vrot.slane %v3452, 7
    %v4622 = vrot.slane %v4621, 2
    %v4623 = vrot.slane %v3451, 7
    %v4624 = vrot.slane %v4623, 2
    %v4625 = vrot.slane %v3453, 7
    %v4626 = vrot.slane %v4625, 2
    %v4627 = vrot.slane %v3461, 7
    %v4628 = vrot.slane %v4627, 2
    %v4629 = vrot.slane %v3469, 7
    %v4630 = vrot.slane %v4629, 2
    %v4631 = vrot.slane %v3468, 7
    %v4632 = vrot.slane %v4631, 2
    %v4633 = vrot.slane %v3470, 7
    %v4634 = vrot.slane %v4633, 2
    %v4635 = vrot.slane %v3478, 7
    %v4636 = vrot.slane %v4635, 2
    %v4637 = vrot.slane %v3486, 7
    %v4638 = vrot.slane %v4637, 2
    %v4639 = vrot.slane %v3485, 7
    %v4640 = vrot.slane %v4639, 2
    %v4641 = vrot.slane %v3487, 7
    %v4642 = vrot.slane %v4641, 2
    %v4643 = vrot.slane %v3495, 7
    %v4644 = vrot.slane %v4643, 2
    %v4645 = vrot.slane %v3503, 7
    %v4646 = vrot.slane %v4645, 2
    %v4647 = vrot.slane %v3502, 7
    %v4648 = vrot.slane %v4647, 2
    %v4649 = vrot.slane %v3504, 7
    %v4650 = vrot.slane %v4649, 2
    %v4651 = vrot.slane %v3512, 7
    %v4652 = vrot.slane %v4651, 2
    %v4653 = vrot.slane %v3520, 7
    %v4654 = vrot.slane %v4653, 2
    %v4655 = vrot.slane %v3519, 7
    %v4656 = vrot.slane %v4655, 2
    %v4657 = vrot.slane %v3521, 7
    %v4658 = vrot.slane %v4657, 2
    %v4659 = vrot.slane %v3529, 7
    %v4660 = vrot.slane %v4659, 2
    %v4661 = vrot.slane %v3537, 7
    %v4662 = vrot.slane %v4661, 2
    %v4663 = vrot.slane %v3536, 7
    %v4664 = vrot.slane %v4663, 2
    %v4665 = vrot.slane %v3538, 7
    %v4666 = vrot.slane %v4665, 2
    %v4667 = vrot.slane %v3546, 7
    %v4668 = vrot.slane %v4667, 2
    %v4669 = vrot.slane %v3554, 7
    %v4670 = vrot.slane %v4669, 2
    %v4671 = vrot.slane %v3553, 7
    %v4672 = vrot.slane %v4671, 2
    %v4673 = vrot.slane %v3555, 7
    %v4674 = vrot.slane %v4673, 2
    %v4675 = vrot.slane %v3563, 7
    %v4676 = vrot.slane %v4675, 2
    %v4677 = vrot.slane %v3571, 7
    %v4678 = vrot.slane %v4677, 2
    %v4679 = vrot.slane %v3570, 7
    %v4680 = vrot.slane %v4679, 2
    %v4681 = vrot.slane %v3572, 7
    %v4682 = vrot.slane %v4681, 2
    %v4683 = vrot.slane %v3580, 7
    %v4684 = vrot.slane %v4683, 2
    %v4685 = vrot.slane %v3588, 7
    %v4686 = vrot.slane %v4685, 2
    %v4687 = vrot.slane %v3587, 7
    %v4688 = vrot.slane %v4687, 2
    %v4689 = vrot.slane %v3589, 7
    %v4690 = vrot.slane %v4689, 2
    %v4691 = vrot.slane %v3597, 7
    %v4692 = vrot.slane %v4691, 2
    %v4693 = vrot.slane %v3605, 7
    %v4694 = vrot.slane %v4693, 2
    %v4695 = vrot.slane %v3604, 7
    %v4696 = vrot.slane %v4695, 2
    %v4697 = vrot.slane %v3606, 7
    %v4698 = vrot.slane %v4697, 2
    %v4699 = vrot.slane %v3614, 7
    %v4700 = vrot.slane %v4699, 2
    %v4701 = vrot.slane %v3622, 7
    %v4702 = vrot.slane %v4701, 2
    %v4703 = vrot.slane %v3621, 7
    %v4704 = vrot.slane %v4703, 2
    %v4705 = vrot.slane %v3623, 7
    %v4706 = vrot.slane %v4705, 2
    %v4707 = vrot.slane %v3631, 7
    %v4708 = vrot.slane %v4707, 2
    %v4709 = vrot.slane %v3639, 7
    %v4710 = vrot.slane %v4709, 2
    %v4711 = vrot.slane %v3638, 7
    %v4712 = vrot.slane %v4711, 2
    %v4713 = vrot.slane %v3640, 7
    %v4714 = vrot.slane %v4713, 2
    %v4715 = vrot.slane %v3648, 7
    %v4716 = vrot.slane %v4715, 2
    %v4717 = vrot.slane %v3656, 7
    %v4718 = vrot.slane %v4717, 2
    %v4719 = vrot.slane %v3655, 7
    %v4720 = vrot.slane %v4719, 2
    %v4721 = vrot.slane %v3657, 7
    %v4722 = vrot.slane %v4721, 2
    %v4723 = vrot.slane %v3665, 7
    %v4724 = vrot.slane %v4723, 2
    %v4725 = vrot.slane %v3673, 7
    %v4726 = vrot.slane %v4725, 2
    %v4727 = vrot.slane %v3672, 7
    %v4728 = vrot.slane %v4727, 2
    %v4729 = vrot.slane %v3674, 7
    %v4730 = vrot.slane %v4729, 2
    %v4731 = vrot.slane %v3682, 7
    %v4732 = vrot.slane %v4731, 2
    %v4733 = vrot.slane %v3690, 7
    %v4734 = vrot.slane %v4733, 2
    %v4735 = vrot.slane %v3689, 7
    %v4736 = vrot.slane %v4735, 2
    %v4737 = vrot.slane %v3691, 7
    %v4738 = vrot.slane %v4737, 2
    %v4739 = vrot.slane %v3699, 7
    %v4740 = vrot.slane %v4739, 2
    %v4741 = vrot.slane %v3707, 7
    %v4742 = vrot.slane %v4741, 2
    %v4743 = vrot.slane %v3706, 7
    %v4744 = vrot.slane %v4743, 2
    %v4745 = vrot.slane %v3708, 7
    %v4746 = vrot.slane %v4745, 2
    %v4747 = vrot.slane %v3716, 7
    %v4748 = vrot.slane %v4747, 2
    %v4749 = vrot.slane %v3724, 7
    %v4750 = vrot.slane %v4749, 2
    %v4751 = vrot.slane %v3723, 7
    %v4752 = vrot.slane %v4751, 2
    %v4753 = vrot.slane %v3725, 7
    %v4754 = vrot.slane %v4753, 2
    %v4755 = vrot.slane %v3733, 7
    %v4756 = vrot.slane %v4755, 2
    %v4757 = vrot.slane %v3741, 7
    %v4758 = vrot.slane %v4757, 2
    %v4759 = vrot.slane %v3740, 7
    %v4760 = vrot.slane %v4759, 2
    %v4761 = vrot.slane %v3742, 7
    %v4762 = vrot.slane %v4761, 2
    %v4763 = vrot.slane %v3750, 7
    %v4764 = vrot.slane %v4763, 2
    %v4765 = vrot.slane %v3758, 7
    %v4766 = vrot.slane %v4765, 2
    %v4767 = vrot.slane %v3757, 7
    %v4768 = vrot.slane %v4767, 2
    %v4769 = vrot.slane %v3759, 7
    %v4770 = vrot.slane %v4769, 2
    %v4771 = vrot.slane %v3767, 7
    %v4772 = vrot.slane %v4771, 2
    %v4773 = vrot.slane %v3775, 7
    %v4774 = vrot.slane %v4773, 2
    %v4775 = vrot.slane %v3774, 7
    %v4776 = vrot.slane %v4775, 2
    %v4777 = vrot.slane %v3776, 7
    %v4778 = vrot.slane %v4777, 2
    %v4779 = vrot.slane %v3784, 7
    %v4780 = vrot.slane %v4779, 2
    %v4781 = vrot.slane %v3792, 7
    %v4782 = vrot.slane %v4781, 2
    %v4783 = vrot.slane %v3791, 7
    %v4784 = vrot.slane %v4783, 2
    %v4785 = vrot.slane %v3793, 7
    %v4786 = vrot.slane %v4785, 2
    %v4787 = vrot.slane %v3801, 7
    %v4788 = vrot.slane %v4787, 2
    %v4789 = vrot.slane %v3809, 7
    %v4790 = vrot.slane %v4789, 2
    %v4791 = vrot.slane %v3808, 7
    %v4792 = vrot.slane %v4791, 2
    %v4793 = vrot.slane %v3810, 7
    %v4794 = vrot.slane %v4793, 2
    %v4795 = vrot.slane %v3818, 7
    %v4796 = vrot.slane %v4795, 2
    %v4797 = vrot.slane %v3826, 7
    %v4798 = vrot.slane %v4797, 2
    %v4799 = vrot.slane %v3825, 7
    %v4800 = vrot.slane %v4799, 2
    %v4801 = vrot.slane %v3827, 7
    %v4802 = vrot.slane %v4801, 2
    %v4803 = vrot.slane %v3835, 7
    %v4804 = vrot.slane %v4803, 2
    %v4805 = vrot.slane %v3843, 7
    %v4806 = vrot.slane %v4805, 2
    %v4807 = vrot.slane %v3842, 7
    %v4808 = vrot.slane %v4807, 2
    %v4809 = vrot.slane %v3844, 7
    %v4810 = vrot.slane %v4809, 2
    %v4811 = vrot.slane %v3852, 7
    %v4812 = vrot.slane %v4811, 2
    %v4813 = vrot.slane %v3860, 7
    %v4814 = vrot.slane %v4813, 2
    %v4815 = vrot.slane %v3859, 7
    %v4816 = vrot.slane %v4815, 2
    %v4817 = vrot.slane %v3861, 7
    %v4818 = vrot.slane %v4817, 2
    %v4819 = vrot.slane %v3869, 7
    %v4820 = vrot.slane %v4819, 2
    %v4821 = vrot.slane %v3877, 7
    %v4822 = vrot.slane %v4821, 2
    %v4823 = vrot.slane %v3876, 7
    %v4824 = vrot.slane %v4823, 2
    %v4825 = vrot.slane %v3878, 7
    %v4826 = vrot.slane %v4825, 2
    %v4827 = vrot.slane %v3886, 7
    %v4828 = vrot.slane %v4827, 2
    %v4829 = vrot.slane %v3894, 7
    %v4830 = vrot.slane %v4829, 2
    %v4831 = vrot.slane %v3893, 7
    %v4832 = vrot.slane %v4831, 2
    %v4833 = vrot.slane %v3895, 7
    %v4834 = vrot.slane %v4833, 2
    %v4835 = vrot.slane %v3903, 7
    %v4836 = vrot.slane %v4835, 2
    %v4837 = vrot.slane %v3911, 7
    %v4838 = vrot.slane %v4837, 2
    %v4839 = vrot.slane %v3910, 7
    %v4840 = vrot.slane %v4839, 2
    %v4841 = vrot.slane %v3912, 7
    %v4842 = vrot.slane %v4841, 2
    %v4843 = vrot.slane %v3920, 7
    %v4844 = vrot.slane %v4843, 2
    %v4845 = vrot.slane %v3928, 7
    %v4846 = vrot.slane %v4845, 2
    %v4847 = vrot.slane %v3927, 7
    %v4848 = vrot.slane %v4847, 2
    %v4849 = vrot.slane %v3929, 7
    %v4850 = vrot.slane %v4849, 2
    %v4851 = vrot.slane %v3937, 7
    %v4852 = vrot.slane %v4851, 2
    %v4853 = vrot.slane %v3945, 7
    %v4854 = vrot.slane %v4853, 2
    %v4855 = vrot.slane %v3944, 7
    %v4856 = vrot.slane %v4855, 2
    %v4857 = vrot.slane %v3946, 7
    %v4858 = vrot.slane %v4857, 2
    %v4859 = vrot.slane %v3954, 7
    %v4860 = vrot.slane %v4859, 2
    %v4861 = vrot.slane %v3962, 7
    %v4862 = vrot.slane %v4861, 2
    %v4863 = vrot.slane %v3961, 7
    %v4864 = vrot.slane %v4863, 2
    %v4865 = vrot.slane %v3963, 7
    %v4866 = vrot.slane %v4865, 2
    %v4867 = vrot.slane %v3971, 7
    %v4868 = vrot.slane %v4867, 2
    %v4869 = vrot.slane %v3979, 7
    %v4870 = vrot.slane %v4869, 2
    %v4871 = vrot.slane %v3978, 7
    %v4872 = vrot.slane %v4871, 2
    %v4873 = vrot.slane %v3980, 7
    %v4874 = vrot.slane %v4873, 2
    %v4875 = vrot.slane %v3988, 7
    %v4876 = vrot.slane %v4875, 2
    %v4877 = vrot.slane %v3996, 7
    %v4878 = vrot.slane %v4877, 2
    %v4879 = vrot.slane %v3995, 7
    %v4880 = vrot.slane %v4879, 2
    %v4881 = vrot.slane %v3997, 7
    %v4882 = vrot.slane %v4881, 2
    %v4883 = vrot.slane %v4005, 7
    %v4884 = vrot.slane %v4883, 2
    %v4885 = vrot.slane %v4013, 7
    %v4886 = vrot.slane %v4885, 2
    %v4887 = vrot.slane %v4012, 7
    %v4888 = vrot.slane %v4887, 2
    %v4889 = vrot.slane %v4014, 7
    %v4890 = vrot.slane %v4889, 2
    %v4891 = vrot.slane %v4022, 7
    %v4892 = vrot.slane %v4891, 2
    %v4893 = vrot.slane %v4030, 7
    %v4894 = vrot.slane %v4893, 2
    %v4895 = vrot.slane %v4029, 7
    %v4896 = vrot.slane %v4895, 2
    %v4897 = vrot.slane %v4031, 7
    %v4898 = vrot.slane %v4897, 2
    %v4899 = vrot.slane %v4039, 7
    %v4900 = vrot.slane %v4899, 2
    %v4901 = vrot.slane %v4047, 7
    %v4902 = vrot.slane %v4901, 2
    %v4903 = vrot.slane %v4046, 7
    %v4904 = vrot.slane %v4903, 2
    %v4905 = vrot.slane %v4048, 7
    %v4906 = vrot.slane %v4905, 2
    %v4907 = vrot.slane %v4056, 7
    %v4908 = vrot.slane %v4907, 2
    %v4909 = vrot.slane %v4064, 7
    %v4910 = vrot.slane %v4909, 2
    %v4911 = vrot.slane %v4063, 7
    %v4912 = vrot.slane %v4911, 2
    %v4913 = vrot.slane %v4065, 7
    %v4914 = vrot.slane %v4913, 2
    %v4915 = vrot.slane %v4073, 7
    %v4916 = vrot.slane %v4915, 2
    %v4917 = vrot.slane %v4081, 7
    %v4918 = vrot.slane %v4917, 2
    %v4919 = vrot.slane %v4080, 7
    %v4920 = vrot.slane %v4919, 2
    %v4921 = vrot.slane %v4082, 7
    %v4922 = vrot.slane %v4921, 2
    %v4923 = vrot.slane %v4090, 7
    %v4924 = vrot.slane %v4923, 2
    %v4925 = vrot.slane %v4098, 7
    %v4926 = vrot.slane %v4925, 2
    %v4927 = vrot.slane %v4097, 7
    %v4928 = vrot.slane %v4927, 2
    %v4929 = vrot.slane %v4099, 7
    %v4930 = vrot.slane %v4929, 2
    %v4931 = vrot.slane %v4107, 7
    %v4932 = vrot.slane %v4931, 2
    %v4933 = vrot.slane %v4115, 7
    %v4934 = vrot.slane %v4933, 2
    %v4935 = vrot.slane %v4114, 7
    %v4936 = vrot.slane %v4935, 2
    %v4937 = vrot.slane %v4116, 7
    %v4938 = vrot.slane %v4937, 2
    %v4939 = vrot.slane %v4124, 7
    %v4940 = vrot.slane %v4939, 2
    %v4941 = vrot.slane %v4132, 7
    %v4942 = vrot.slane %v4941, 2
    %v4943 = vrot.slane %v4131, 7
    %v4944 = vrot.slane %v4943, 2
    %v4945 = vrot.slane %v4133, 7
    %v4946 = vrot.slane %v4945, 2
    %v4947 = vrot.slane %v4141, 7
    %v4948 = vrot.slane %v4947, 2
    %v4949 = vrot.slane %v4149, 7
    %v4950 = vrot.slane %v4949, 2
    %v4951 = vrot.slane %v4148, 7
    %v4952 = vrot.slane %v4951, 2
    %v4953 = vrot.slane %v4150, 7
    %v4954 = vrot.slane %v4953, 2
    %v4955 = vrot.slane %v4158, 7
    %v4956 = vrot.slane %v4955, 2
    %v4957 = vrot.slane %v4166, 7
    %v4958 = vrot.slane %v4957, 2
    %v4959 = vrot.slane %v4165, 7
    %v4960 = vrot.slane %v4959, 2
    %v4961 = vrot.slane %v4167, 7
    %v4962 = vrot.slane %v4961, 2
    %v4963 = vrot.slane %v4175, 7
    %v4964 = vrot.slane %v4963, 2
    %v4965 = vrot.slane %v4183, 7
    %v4966 = vrot.slane %v4965, 2
    %v4967 = vrot.slane %v4182, 7
    %v4968 = vrot.slane %v4967, 2
    %v4969 = vrot.slane %v4184, 7
    %v4970 = vrot.slane %v4969, 2
    %v4971 = vrot.slane %v4192, 7
    %v4972 = vrot.slane %v4971, 2
    %v4973 = vrot.slane %v4200, 7
    %v4974 = vrot.slane %v4973, 2
    %v4975 = vrot.slane %v4199, 7
    %v4976 = vrot.slane %v4975, 2
    %v4977 = vrot.slane %v4201, 7
    %v4978 = vrot.slane %v4977, 2
    %v4979 = vrot.slane %v4209, 7
    %v4980 = vrot.slane %v4979, 2
    %v4981 = vrot.slane %v4217, 7
    %v4982 = vrot.slane %v4981, 2
    %v4983 = vrot.slane %v4216, 7
    %v4984 = vrot.slane %v4983, 2
    %v4985 = vrot.slane %v4218, 7
    %v4986 = vrot.slane %v4985, 2
    %v5243 = vmax.f32 %v3138, %v4476
    %v5244 = vmax.f32 %v3146, %v4478
    %v5245 = vmax.f32 %v3145, %v4480
    %v5246 = vmax.f32 %v3147, %v4482
    %v5247 = vmax.f32 %v3155, %v4484
    %v5248 = vmax.f32 %v3163, %v4486
    %v5249 = vmax.f32 %v3162, %v4488
    %v5250 = vmax.f32 %v3164, %v4490
    %v5251 = vmax.f32 %v3172, %v4492
    %v5252 = vmax.f32 %v3180, %v4494
    %v5253 = vmax.f32 %v3179, %v4496
    %v5254 = vmax.f32 %v3181, %v4498
    %v5255 = vmax.f32 %v3189, %v4500
    %v5256 = vmax.f32 %v3197, %v4502
    %v5257 = vmax.f32 %v3196, %v4504
    %v5258 = vmax.f32 %v3198, %v4506
    %v5259 = vmax.f32 %v3206, %v4508
    %v5260 = vmax.f32 %v3214, %v4510
    %v5261 = vmax.f32 %v3213, %v4512
    %v5262 = vmax.f32 %v3215, %v4514
    %v5263 = vmax.f32 %v3223, %v4516
    %v5264 = vmax.f32 %v3231, %v4518
    %v5265 = vmax.f32 %v3230, %v4520
    %v5266 = vmax.f32 %v3232, %v4522
    %v5267 = vmax.f32 %v3240, %v4524
    %v5268 = vmax.f32 %v3248, %v4526
    %v5269 = vmax.f32 %v3247, %v4528
    %v5270 = vmax.f32 %v3249, %v4530
    %v5271 = vmax.f32 %v3257, %v4532
    %v5272 = vmax.f32 %v3265, %v4534
    %v5273 = vmax.f32 %v3264, %v4536
    %v5274 = vmax.f32 %v3266, %v4538
    %v5275 = vmax.f32 %v3274, %v4540
    %v5276 = vmax.f32 %v3282, %v4542
    %v5277 = vmax.f32 %v3281, %v4544
    %v5278 = vmax.f32 %v3283, %v4546
    %v5279 = vmax.f32 %v3291, %v4548
    %v5280 = vmax.f32 %v3299, %v4550
    %v5281 = vmax.f32 %v3298, %v4552
    %v5282 = vmax.f32 %v3300, %v4554
    %v5283 = vmax.f32 %v3308, %v4556
    %v5284 = vmax.f32 %v3316, %v4558
    %v5285 = vmax.f32 %v3315, %v4560
    %v5286 = vmax.f32 %v3317, %v4562
    %v5287 = vmax.f32 %v3325, %v4564
    %v5288 = vmax.f32 %v3333, %v4566
    %v5289 = vmax.f32 %v3332, %v4568
    %v5290 = vmax.f32 %v3334, %v4570
    %v5291 = vmax.f32 %v3342, %v4572
    %v5292 = vmax.f32 %v3350, %v4574
    %v5293 = vmax.f32 %v3349, %v4576
    %v5294 = vmax.f32 %v3351, %v4578
    %v5295 = vmax.f32 %v3359, %v4580
    %v5296 = vmax.f32 %v3367, %v4582
    %v5297 = vmax.f32 %v3366, %v4584
    %v5298 = vmax.f32 %v3368, %v4586
    %v5299 = vmax.f32 %v3376, %v4588
    %v5300 = vmax.f32 %v3384, %v4590
    %v5301 = vmax.f32 %v3383, %v4592
    %v5302 = vmax.f32 %v3385, %v4594
    %v5303 = vmax.f32 %v3393, %v4596
    %v5304 = vmax.f32 %v3401, %v4598
    %v5305 = vmax.f32 %v3400, %v4600
    %v5306 = vmax.f32 %v3402, %v4602
    %v5307 = vmax.f32 %v3410, %v4604
    %v5308 = vmax.f32 %v3418, %v4606
    %v5309 = vmax.f32 %v3417, %v4608
    %v5310 = vmax.f32 %v3419, %v4610
    %v5311 = vmax.f32 %v3427, %v4612
    %v5312 = vmax.f32 %v3435, %v4614
    %v5313 = vmax.f32 %v3434, %v4616
    %v5314 = vmax.f32 %v3436, %v4618
    %v5315 = vmax.f32 %v3444, %v4620
    %v5316 = vmax.f32 %v3452, %v4622
    %v5317 = vmax.f32 %v3451, %v4624
    %v5318 = vmax.f32 %v3453, %v4626
    %v5319 = vmax.f32 %v3461, %v4628
    %v5320 = vmax.f32 %v3469, %v4630
    %v5321 = vmax.f32 %v3468, %v4632
    %v5322 = vmax.f32 %v3470, %v4634
    %v5323 = vmax.f32 %v3478, %v4636
    %v5324 = vmax.f32 %v3486, %v4638
    %v5325 = vmax.f32 %v3485, %v4640
    %v5326 = vmax.f32 %v3487, %v4642
    %v5327 = vmax.f32 %v3495, %v4644
    %v5328 = vmax.f32 %v3503, %v4646
    %v5329 = vmax.f32 %v3502, %v4648
    %v5330 = vmax.f32 %v3504, %v4650
    %v5331 = vmax.f32 %v3512, %v4652
    %v5332 = vmax.f32 %v3520, %v4654
    %v5333 = vmax.f32 %v3519, %v4656
    %v5334 = vmax.f32 %v3521, %v4658
    %v5335 = vmax.f32 %v3529, %v4660
    %v5336 = vmax.f32 %v3537, %v4662
    %v5337 = vmax.f32 %v3536, %v4664
    %v5338 = vmax.f32 %v3538, %v4666
    %v5339 = vmax.f32 %v3546, %v4668
    %v5340 = vmax.f32 %v3554, %v4670
    %v5341 = vmax.f32 %v3553, %v4672
    %v5342 = vmax.f32 %v3555, %v4674
    %v5343 = vmax.f32 %v3563, %v4676
    %v5344 = vmax.f32 %v3571, %v4678
    %v5345 = vmax.f32 %v3570, %v4680
    %v5346 = vmax.f32 %v3572, %v4682
    %v5347 = vmax.f32 %v3580, %v4684
    %v5348 = vmax.f32 %v3588, %v4686
    %v5349 = vmax.f32 %v3587, %v4688
    %v5350 = vmax.f32 %v3589, %v4690
    %v5351 = vmax.f32 %v3597, %v4692
    %v5352 = vmax.f32 %v3605, %v4694
    %v5353 = vmax.f32 %v3604, %v4696
    %v5354 = vmax.f32 %v3606, %v4698
    %v5355 = vmax.f32 %v3614, %v4700
    %v5356 = vmax.f32 %v3622, %v4702
    %v5357 = vmax.f32 %v3621, %v4704
    %v5358 = vmax.f32 %v3623, %v4706
    %v5359 = vmax.f32 %v3631, %v4708
    %v5360 = vmax.f32 %v3639, %v4710
    %v5361 = vmax.f32 %v3638, %v4712
    %v5362 = vmax.f32 %v3640, %v4714
    %v5363 = vmax.f32 %v3648, %v4716
    %v5364 = vmax.f32 %v3656, %v4718
    %v5365 = vmax.f32 %v3655, %v4720
    %v5366 = vmax.f32 %v3657, %v4722
    %v5367 = vmax.f32 %v3665, %v4724
    %v5368 = vmax.f32 %v3673, %v4726
    %v5369 = vmax.f32 %v3672, %v4728
    %v5370 = vmax.f32 %v3674, %v4730
    %v5371 = vmax.f32 %v3682, %v4732
    %v5372 = vmax.f32 %v3690, %v4734
    %v5373 = vmax.f32 %v3689, %v4736
    %v5374 = vmax.f32 %v3691, %v4738
    %v5375 = vmax.f32 %v3699, %v4740
    %v5376 = vmax.f32 %v3707, %v4742
    %v5377 = vmax.f32 %v3706, %v4744
    %v5378 = vmax.f32 %v3708, %v4746
    %v5379 = vmax.f32 %v3716, %v4748
    %v5380 = vmax.f32 %v3724, %v4750
    %v5381 = vmax.f32 %v3723, %v4752
    %v5382 = vmax.f32 %v3725, %v4754
    %v5383 = vmax.f32 %v3733, %v4756
    %v5384 = vmax.f32 %v3741, %v4758
    %v5385 = vmax.f32 %v3740, %v4760
    %v5386 = vmax.f32 %v3742, %v4762
    %v5387 = vmax.f32 %v3750, %v4764
    %v5388 = vmax.f32 %v3758, %v4766
    %v5389 = vmax.f32 %v3757, %v4768
    %v5390 = vmax.f32 %v3759, %v4770
    %v5391 = vmax.f32 %v3767, %v4772
    %v5392 = vmax.f32 %v3775, %v4774
    %v5393 = vmax.f32 %v3774, %v4776
    %v5394 = vmax.f32 %v3776, %v4778
    %v5395 = vmax.f32 %v3784, %v4780
    %v5396 = vmax.f32 %v3792, %v4782
    %v5397 = vmax.f32 %v3791, %v4784
    %v5398 = vmax.f32 %v3793, %v4786
    %v5399 = vmax.f32 %v3801, %v4788
    %v5400 = vmax.f32 %v3809, %v4790
    %v5401 = vmax.f32 %v3808, %v4792
    %v5402 = vmax.f32 %v3810, %v4794
    %v5403 = vmax.f32 %v3818, %v4796
    %v5404 = vmax.f32 %v3826, %v4798
    %v5405 = vmax.f32 %v3825, %v4800
    %v5406 = vmax.f32 %v3827, %v4802
    %v5407 = vmax.f32 %v3835, %v4804
    %v5408 = vmax.f32 %v3843, %v4806
    %v5409 = vmax.f32 %v3842, %v4808
    %v5410 = vmax.f32 %v3844, %v4810
    %v5411 = vmax.f32 %v3852, %v4812
    %v5412 = vmax.f32 %v3860, %v4814
    %v5413 = vmax.f32 %v3859, %v4816
    %v5414 = vmax.f32 %v3861, %v4818
    %v5415 = vmax.f32 %v3869, %v4820
    %v5416 = vmax.f32 %v3877, %v4822
    %v5417 = vmax.f32 %v3876, %v4824
    %v5418 = vmax.f32 %v3878, %v4826
    %v5419 = vmax.f32 %v3886, %v4828
    %v5420 = vmax.f32 %v3894, %v4830
    %v5421 = vmax.f32 %v3893, %v4832
    %v5422 = vmax.f32 %v3895, %v4834
    %v5423 = vmax.f32 %v3903, %v4836
    %v5424 = vmax.f32 %v3911, %v4838
    %v5425 = vmax.f32 %v3910, %v4840
    %v5426 = vmax.f32 %v3912, %v4842
    %v5427 = vmax.f32 %v3920, %v4844
    %v5428 = vmax.f32 %v3928, %v4846
    %v5429 = vmax.f32 %v3927, %v4848
    %v5430 = vmax.f32 %v3929, %v4850
    %v5431 = vmax.f32 %v3937, %v4852
    %v5432 = vmax.f32 %v3945, %v4854
    %v5433 = vmax.f32 %v3944, %v4856
    %v5434 = vmax.f32 %v3946, %v4858
    %v5435 = vmax.f32 %v3954, %v4860
    %v5436 = vmax.f32 %v3962, %v4862
    %v5437 = vmax.f32 %v3961, %v4864
    %v5438 = vmax.f32 %v3963, %v4866
    %v5439 = vmax.f32 %v3971, %v4868
    %v5440 = vmax.f32 %v3979, %v4870
    %v5441 = vmax.f32 %v3978, %v4872
    %v5442 = vmax.f32 %v3980, %v4874
    %v5443 = vmax.f32 %v3988, %v4876
    %v5444 = vmax.f32 %v3996, %v4878
    %v5445 = vmax.f32 %v3995, %v4880
    %v5446 = vmax.f32 %v3997, %v4882
    %v5447 = vmax.f32 %v4005, %v4884
    %v5448 = vmax.f32 %v4013, %v4886
    %v5449 = vmax.f32 %v4012, %v4888
    %v5450 = vmax.f32 %v4014, %v4890
    %v5451 = vmax.f32 %v4022, %v4892
    %v5452 = vmax.f32 %v4030, %v4894
    %v5453 = vmax.f32 %v4029, %v4896
    %v5454 = vmax.f32 %v4031, %v4898
    %v5455 = vmax.f32 %v4039, %v4900
    %v5456 = vmax.f32 %v4047, %v4902
    %v5457 = vmax.f32 %v4046, %v4904
    %v5458 = vmax.f32 %v4048, %v4906
    %v5459 = vmax.f32 %v4056, %v4908
    %v5460 = vmax.f32 %v4064, %v4910
    %v5461 = vmax.f32 %v4063, %v4912
    %v5462 = vmax.f32 %v4065, %v4914
    %v5463 = vmax.f32 %v4073, %v4916
    %v5464 = vmax.f32 %v4081, %v4918
    %v5465 = vmax.f32 %v4080, %v4920
    %v5466 = vmax.f32 %v4082, %v4922
    %v5467 = vmax.f32 %v4090, %v4924
    %v5468 = vmax.f32 %v4098, %v4926
    %v5469 = vmax.f32 %v4097, %v4928
    %v5470 = vmax.f32 %v4099, %v4930
    %v5471 = vmax.f32 %v4107, %v4932
    %v5472 = vmax.f32 %v4115, %v4934
    %v5473 = vmax.f32 %v4114, %v4936
    %v5474 = vmax.f32 %v4116, %v4938
    %v5475 = vmax.f32 %v4124, %v4940
    %v5476 = vmax.f32 %v4132, %v4942
    %v5477 = vmax.f32 %v4131, %v4944
    %v5478 = vmax.f32 %v4133, %v4946
    %v5479 = vmax.f32 %v4141, %v4948
    %v5480 = vmax.f32 %v4149, %v4950
    %v5481 = vmax.f32 %v4148, %v4952
    %v5482 = vmax.f32 %v4150, %v4954
    %v5483 = vmax.f32 %v4158, %v4956
    %v5484 = vmax.f32 %v4166, %v4958
    %v5485 = vmax.f32 %v4165, %v4960
    %v5486 = vmax.f32 %v4167, %v4962
    %v5487 = vmax.f32 %v4175, %v4964
    %v5488 = vmax.f32 %v4183, %v4966
    %v5489 = vmax.f32 %v4182, %v4968
    %v5490 = vmax.f32 %v4184, %v4970
    %v5491 = vmax.f32 %v4192, %v4972
    %v5492 = vmax.f32 %v4200, %v4974
    %v5493 = vmax.f32 %v4199, %v4976
    %v5494 = vmax.f32 %v4201, %v4978
    %v5495 = vmax.f32 %v4209, %v4980
    %v5496 = vmax.f32 %v4217, %v4982
    %v5497 = vmax.f32 %v4216, %v4984
    %v5498 = vmax.f32 %v4218, %v4986
    %v5499 = vmax.f32 %v5243, %v5251
    %v5500 = vmax.f32 %v5244, %v5252
    %v5501 = vmax.f32 %v5245, %v5253
    %v5502 = vmax.f32 %v5246, %v5254
    %v5503 = vmax.f32 %v5247, %v5255
    %v5504 = vmax.f32 %v5248, %v5256
    %v5505 = vmax.f32 %v5249, %v5257
    %v5506 = vmax.f32 %v5250, %v5258
    %v5507 = vmax.f32 %v5259, %v5267
    %v5508 = vmax.f32 %v5260, %v5268
    %v5509 = vmax.f32 %v5261, %v5269
    %v5510 = vmax.f32 %v5262, %v5270
    %v5511 = vmax.f32 %v5263, %v5271
    %v5512 = vmax.f32 %v5264, %v5272
    %v5513 = vmax.f32 %v5265, %v5273
    %v5514 = vmax.f32 %v5266, %v5274
    %v5515 = vmax.f32 %v5275, %v5283
    %v5516 = vmax.f32 %v5276, %v5284
    %v5517 = vmax.f32 %v5277, %v5285
    %v5518 = vmax.f32 %v5278, %v5286
    %v5519 = vmax.f32 %v5279, %v5287
    %v5520 = vmax.f32 %v5280, %v5288
    %v5521 = vmax.f32 %v5281, %v5289
    %v5522 = vmax.f32 %v5282, %v5290
    %v5523 = vmax.f32 %v5291, %v5299
    %v5524 = vmax.f32 %v5292, %v5300
    %v5525 = vmax.f32 %v5293, %v5301
    %v5526 = vmax.f32 %v5294, %v5302
    %v5527 = vmax.f32 %v5295, %v5303
    %v5528 = vmax.f32 %v5296, %v5304
    %v5529 = vmax.f32 %v5297, %v5305
    %v5530 = vmax.f32 %v5298, %v5306
    %v5531 = vmax.f32 %v5307, %v5315
    %v5532 = vmax.f32 %v5308, %v5316
    %v5533 = vmax.f32 %v5309, %v5317
    %v5534 = vmax.f32 %v5310, %v5318
    %v5535 = vmax.f32 %v5311, %v5319
    %v5536 = vmax.f32 %v5312, %v5320
    %v5537 = vmax.f32 %v5313, %v5321
    %v5538 = vmax.f32 %v5314, %v5322
    %v5539 = vmax.f32 %v5323, %v5331
    %v5540 = vmax.f32 %v5324, %v5332
    %v5541 = vmax.f32 %v5325, %v5333
    %v5542 = vmax.f32 %v5326, %v5334
    %v5543 = vmax.f32 %v5327, %v5335
    %v5544 = vmax.f32 %v5328, %v5336
    %v5545 = vmax.f32 %v5329, %v5337
    %v5546 = vmax.f32 %v5330, %v5338
    %v5547 = vmax.f32 %v5339, %v5347
    %v5548 = vmax.f32 %v5340, %v5348
    %v5549 = vmax.f32 %v5341, %v5349
    %v5550 = vmax.f32 %v5342, %v5350
    %v5551 = vmax.f32 %v5343, %v5351
    %v5552 = vmax.f32 %v5344, %v5352
    %v5553 = vmax.f32 %v5345, %v5353
    %v5554 = vmax.f32 %v5346, %v5354
    %v5555 = vmax.f32 %v5355, %v5363
    %v5556 = vmax.f32 %v5356, %v5364
    %v5557 = vmax.f32 %v5357, %v5365
    %v5558 = vmax.f32 %v5358, %v5366
    %v5559 = vmax.f32 %v5359, %v5367
    %v5560 = vmax.f32 %v5360, %v5368
    %v5561 = vmax.f32 %v5361, %v5369
    %v5562 = vmax.f32 %v5362, %v5370
    %v5563 = vmax.f32 %v5371, %v5379
    %v5564 = vmax.f32 %v5372, %v5380
    %v5565 = vmax.f32 %v5373, %v5381
    %v5566 = vmax.f32 %v5374, %v5382
    %v5567 = vmax.f32 %v5375, %v5383
    %v5568 = vmax.f32 %v5376, %v5384
    %v5569 = vmax.f32 %v5377, %v5385
    %v5570 = vmax.f32 %v5378, %v5386
    %v5571 = vmax.f32 %v5387, %v5395
    %v5572 = vmax.f32 %v5388, %v5396
    %v5573 = vmax.f32 %v5389, %v5397
    %v5574 = vmax.f32 %v5390, %v5398
    %v5575 = vmax.f32 %v5391, %v5399
    %v5576 = vmax.f32 %v5392, %v5400
    %v5577 = vmax.f32 %v5393, %v5401
    %v5578 = vmax.f32 %v5394, %v5402
    %v5579 = vmax.f32 %v5403, %v5411
    %v5580 = vmax.f32 %v5404, %v5412
    %v5581 = vmax.f32 %v5405, %v5413
    %v5582 = vmax.f32 %v5406, %v5414
    %v5583 = vmax.f32 %v5407, %v5415
    %v5584 = vmax.f32 %v5408, %v5416
    %v5585 = vmax.f32 %v5409, %v5417
    %v5586 = vmax.f32 %v5410, %v5418
    %v5587 = vmax.f32 %v5419, %v5427
    %v5588 = vmax.f32 %v5420, %v5428
    %v5589 = vmax.f32 %v5421, %v5429
    %v5590 = vmax.f32 %v5422, %v5430
    %v5591 = vmax.f32 %v5423, %v5431
    %v5592 = vmax.f32 %v5424, %v5432
    %v5593 = vmax.f32 %v5425, %v5433
    %v5594 = vmax.f32 %v5426, %v5434
    %v5595 = vmax.f32 %v5435, %v5443
    %v5596 = vmax.f32 %v5436, %v5444
    %v5597 = vmax.f32 %v5437, %v5445
    %v5598 = vmax.f32 %v5438, %v5446
    %v5599 = vmax.f32 %v5439, %v5447
    %v5600 = vmax.f32 %v5440, %v5448
    %v5601 = vmax.f32 %v5441, %v5449
    %v5602 = vmax.f32 %v5442, %v5450
    %v5603 = vmax.f32 %v5451, %v5459
    %v5604 = vmax.f32 %v5452, %v5460
    %v5605 = vmax.f32 %v5453, %v5461
    %v5606 = vmax.f32 %v5454, %v5462
    %v5607 = vmax.f32 %v5455, %v5463
    %v5608 = vmax.f32 %v5456, %v5464
    %v5609 = vmax.f32 %v5457, %v5465
    %v5610 = vmax.f32 %v5458, %v5466
    %v5611 = vmax.f32 %v5467, %v5475
    %v5612 = vmax.f32 %v5468, %v5476
    %v5613 = vmax.f32 %v5469, %v5477
    %v5614 = vmax.f32 %v5470, %v5478
    %v5615 = vmax.f32 %v5471, %v5479
    %v5616 = vmax.f32 %v5472, %v5480
    %v5617 = vmax.f32 %v5473, %v5481
    %v5618 = vmax.f32 %v5474, %v5482
    %v5619 = vmax.f32 %v5483, %v5491
    %v5620 = vmax.f32 %v5484, %v5492
    %v5621 = vmax.f32 %v5485, %v5493
    %v5622 = vmax.f32 %v5486, %v5494
    %v5623 = vmax.f32 %v5487, %v5495
    %v5624 = vmax.f32 %v5488, %v5496
    %v5625 = vmax.f32 %v5489, %v5497
    %v5626 = vmax.f32 %v5490, %v5498
    %vm5627 = vcmask 588800
    %5628 = vst.msk [vmem:[#allocation3] sm:$0xff] %vm5627, 0.0
    %5629 = vst.msk [vmem:[#allocation3 + $0x8] sm:$0xff] %vm5627, 0.0
    %5630 = vst.msk [vmem:[#allocation3 + $0x10] sm:$0xff] %vm5627, 0.0
    %5631 = vst.msk [vmem:[#allocation3 + $0x18] sm:$0xff] %vm5627, 0.0
    %5632 = vst.msk [vmem:[#allocation3 + $0x20] sm:$0xff] %vm5627, 0.0
    %5633 = vst.msk [vmem:[#allocation3 + $0x28] sm:$0xff] %vm5627, 0.0
    %5634 = vst.msk [vmem:[#allocation3 + $0x30] sm:$0xff] %vm5627, 0.0
    %5635 = vst.msk [vmem:[#allocation3 + $0x38] sm:$0xff] %vm5627, 0.0
    %5636 = vst.msk [vmem:[#allocation3 + $0x40] sm:$0xff] %vm5627, 0.0
    %5637 = vst.msk [vmem:[#allocation3 + $0x48] sm:$0xff] %vm5627, 0.0
    %5638 = vst.msk [vmem:[#allocation3 + $0x50] sm:$0xff] %vm5627, 0.0
    %5639 = vst.msk [vmem:[#allocation3 + $0x58] sm:$0xff] %vm5627, 0.0
    %5640 = vst.msk [vmem:[#allocation3 + $0x60] sm:$0xff] %vm5627, 0.0
    %5641 = vst.msk [vmem:[#allocation3 + $0x68] sm:$0xff] %vm5627, 0.0
    %5642 = vst.msk [vmem:[#allocation3 + $0x70] sm:$0xff] %vm5627, 0.0
    %5643 = vst.msk [vmem:[#allocation3 + $0x78] sm:$0xff] %vm5627, 0.0
    %v5742 = vlaneseq
    %v5743 = vshrl.u32 %v5742, 7
    %v5744 = vsub.s32 0, %v5743
    %v5745 = vrot.slane %v5499, %v5744
    %v5746 = vlaneseq
    %v5747 = vshrl.u32 %v5746, 7
    %v5748 = vsub.s32 0, %v5747
    %v5749 = vrot.slane %v5500, %v5748
    %v5750 = vlaneseq
    %v5751 = vshrl.u32 %v5750, 7
    %v5752 = vsub.s32 0, %v5751
    %v5753 = vrot.slane %v5501, %v5752
    %v5754 = vlaneseq
    %v5755 = vshrl.u32 %v5754, 7
    %v5756 = vsub.s32 0, %v5755
    %v5757 = vrot.slane %v5502, %v5756
    %v5758 = vlaneseq
    %v5759 = vshrl.u32 %v5758, 7
    %v5760 = vsub.s32 0, %v5759
    %v5761 = vrot.slane %v5503, %v5760
    %v5762 = vlaneseq
    %v5763 = vshrl.u32 %v5762, 7
    %v5764 = vsub.s32 0, %v5763
    %v5765 = vrot.slane %v5504, %v5764
    %v5766 = vlaneseq
    %v5767 = vshrl.u32 %v5766, 7
    %v5768 = vsub.s32 0, %v5767
    %v5769 = vrot.slane %v5505, %v5768
    %v5770 = vlaneseq
    %v5771 = vshrl.u32 %v5770, 7
    %v5772 = vsub.s32 0, %v5771
    %v5773 = vrot.slane %v5507, %v5772
    %v5774 = vlaneseq
    %v5775 = vshrl.u32 %v5774, 7
    %v5776 = vsub.s32 0, %v5775
    %v5777 = vrot.slane %v5508, %v5776
    %v5778 = vlaneseq
    %v5779 = vshrl.u32 %v5778, 7
    %v5780 = vsub.s32 0, %v5779
    %v5781 = vrot.slane %v5509, %v5780
    %v5782 = vlaneseq
    %v5783 = vshrl.u32 %v5782, 7
    %v5784 = vsub.s32 0, %v5783
    %v5785 = vrot.slane %v5510, %v5784
    %v5786 = vlaneseq
    %v5787 = vshrl.u32 %v5786, 7
    %v5788 = vsub.s32 0, %v5787
    %v5789 = vrot.slane %v5511, %v5788
    %v5790 = vlaneseq
    %v5791 = vshrl.u32 %v5790, 7
    %v5792 = vsub.s32 0, %v5791
    %v5793 = vrot.slane %v5512, %v5792
    %v5794 = vlaneseq
    %v5795 = vshrl.u32 %v5794, 7
    %v5796 = vsub.s32 0, %v5795
    %v5797 = vrot.slane %v5513, %v5796
    %v5798 = vlaneseq
    %v5799 = vshrl.u32 %v5798, 7
    %v5800 = vsub.s32 0, %v5799
    %v5801 = vrot.slane %v5515, %v5800
    %v5802 = vlaneseq
    %v5803 = vshrl.u32 %v5802, 7
    %v5804 = vsub.s32 0, %v5803
    %v5805 = vrot.slane %v5516, %v5804
    %v5806 = vlaneseq
    %v5807 = vshrl.u32 %v5806, 7
    %v5808 = vsub.s32 0, %v5807
    %v5809 = vrot.slane %v5517, %v5808
    %v5810 = vlaneseq
    %v5811 = vshrl.u32 %v5810, 7
    %v5812 = vsub.s32 0, %v5811
    %v5813 = vrot.slane %v5518, %v5812
    %v5814 = vlaneseq
    %v5815 = vshrl.u32 %v5814, 7
    %v5816 = vsub.s32 0, %v5815
    %v5817 = vrot.slane %v5519, %v5816
    %v5818 = vlaneseq
    %v5819 = vshrl.u32 %v5818, 7
    %v5820 = vsub.s32 0, %v5819
    %v5821 = vrot.slane %v5520, %v5820
    %v5822 = vlaneseq
    %v5823 = vshrl.u32 %v5822, 7
    %v5824 = vsub.s32 0, %v5823
    %v5825 = vrot.slane %v5521, %v5824
    %v5826 = vlaneseq
    %v5827 = vshrl.u32 %v5826, 7
    %v5828 = vsub.s32 0, %v5827
    %v5829 = vrot.slane %v5523, %v5828
    %v5830 = vlaneseq
    %v5831 = vshrl.u32 %v5830, 7
    %v5832 = vsub.s32 0, %v5831
    %v5833 = vrot.slane %v5524, %v5832
    %v5834 = vlaneseq
    %v5835 = vshrl.u32 %v5834, 7
    %v5836 = vsub.s32 0, %v5835
    %v5837 = vrot.slane %v5525, %v5836
    %v5838 = vlaneseq
    %v5839 = vshrl.u32 %v5838, 7
    %v5840 = vsub.s32 0, %v5839
    %v5841 = vrot.slane %v5526, %v5840
    %v5842 = vlaneseq
    %v5843 = vshrl.u32 %v5842, 7
    %v5844 = vsub.s32 0, %v5843
    %v5845 = vrot.slane %v5527, %v5844
    %v5846 = vlaneseq
    %v5847 = vshrl.u32 %v5846, 7
    %v5848 = vsub.s32 0, %v5847
    %v5849 = vrot.slane %v5528, %v5848
    %v5850 = vlaneseq
    %v5851 = vshrl.u32 %v5850, 7
    %v5852 = vsub.s32 0, %v5851
    %v5853 = vrot.slane %v5529, %v5852
    %v5854 = vlaneseq
    %v5855 = vshrl.u32 %v5854, 7
    %v5856 = vsub.s32 0, %v5855
    %v5857 = vrot.slane %v5531, %v5856
    %v5858 = vlaneseq
    %v5859 = vshrl.u32 %v5858, 7
    %v5860 = vsub.s32 0, %v5859
    %v5861 = vrot.slane %v5532, %v5860
    %v5862 = vlaneseq
    %v5863 = vshrl.u32 %v5862, 7
    %v5864 = vsub.s32 0, %v5863
    %v5865 = vrot.slane %v5533, %v5864
    %v5866 = vlaneseq
    %v5867 = vshrl.u32 %v5866, 7
    %v5868 = vsub.s32 0, %v5867
    %v5869 = vrot.slane %v5534, %v5868
    %v5870 = vlaneseq
    %v5871 = vshrl.u32 %v5870, 7
    %v5872 = vsub.s32 0, %v5871
    %v5873 = vrot.slane %v5535, %v5872
    %v5874 = vlaneseq
    %v5875 = vshrl.u32 %v5874, 7
    %v5876 = vsub.s32 0, %v5875
    %v5877 = vrot.slane %v5536, %v5876
    %v5878 = vlaneseq
    %v5879 = vshrl.u32 %v5878, 7
    %v5880 = vsub.s32 0, %v5879
    %v5881 = vrot.slane %v5537, %v5880
    %v5882 = vlaneseq
    %v5883 = vshrl.u32 %v5882, 7
    %v5884 = vsub.s32 0, %v5883
    %v5885 = vrot.slane %v5539, %v5884
    %v5886 = vlaneseq
    %v5887 = vshrl.u32 %v5886, 7
    %v5888 = vsub.s32 0, %v5887
    %v5889 = vrot.slane %v5540, %v5888
    %v5890 = vlaneseq
    %v5891 = vshrl.u32 %v5890, 7
    %v5892 = vsub.s32 0, %v5891
    %v5893 = vrot.slane %v5541, %v5892
    %v5894 = vlaneseq
    %v5895 = vshrl.u32 %v5894, 7
    %v5896 = vsub.s32 0, %v5895
    %v5897 = vrot.slane %v5542, %v5896
    %v5898 = vlaneseq
    %v5899 = vshrl.u32 %v5898, 7
    %v5900 = vsub.s32 0, %v5899
    %v5901 = vrot.slane %v5543, %v5900
    %v5902 = vlaneseq
    %v5903 = vshrl.u32 %v5902, 7
    %v5904 = vsub.s32 0, %v5903
    %v5905 = vrot.slane %v5544, %v5904
    %v5906 = vlaneseq
    %v5907 = vshrl.u32 %v5906, 7
    %v5908 = vsub.s32 0, %v5907
    %v5909 = vrot.slane %v5545, %v5908
    %v5910 = vlaneseq
    %v5911 = vshrl.u32 %v5910, 7
    %v5912 = vsub.s32 0, %v5911
    %v5913 = vrot.slane %v5547, %v5912
    %v5914 = vlaneseq
    %v5915 = vshrl.u32 %v5914, 7
    %v5916 = vsub.s32 0, %v5915
    %v5917 = vrot.slane %v5548, %v5916
    %v5918 = vlaneseq
    %v5919 = vshrl.u32 %v5918, 7
    %v5920 = vsub.s32 0, %v5919
    %v5921 = vrot.slane %v5549, %v5920
    %v5922 = vlaneseq
    %v5923 = vshrl.u32 %v5922, 7
    %v5924 = vsub.s32 0, %v5923
    %v5925 = vrot.slane %v5550, %v5924
    %v5926 = vlaneseq
    %v5927 = vshrl.u32 %v5926, 7
    %v5928 = vsub.s32 0, %v5927
    %v5929 = vrot.slane %v5551, %v5928
    %v5930 = vlaneseq
    %v5931 = vshrl.u32 %v5930, 7
    %v5932 = vsub.s32 0, %v5931
    %v5933 = vrot.slane %v5552, %v5932
    %v5934 = vlaneseq
    %v5935 = vshrl.u32 %v5934, 7
    %v5936 = vsub.s32 0, %v5935
    %v5937 = vrot.slane %v5553, %v5936
    %v5938 = vlaneseq
    %v5939 = vshrl.u32 %v5938, 7
    %v5940 = vsub.s32 0, %v5939
    %v5941 = vrot.slane %v5563, %v5940
    %v5942 = vlaneseq
    %v5943 = vshrl.u32 %v5942, 7
    %v5944 = vsub.s32 0, %v5943
    %v5945 = vrot.slane %v5564, %v5944
    %v5946 = vlaneseq
    %v5947 = vshrl.u32 %v5946, 7
    %v5948 = vsub.s32 0, %v5947
    %v5949 = vrot.slane %v5565, %v5948
    %v5950 = vlaneseq
    %v5951 = vshrl.u32 %v5950, 7
    %v5952 = vsub.s32 0, %v5951
    %v5953 = vrot.slane %v5566, %v5952
    %v5954 = vlaneseq
    %v5955 = vshrl.u32 %v5954, 7
    %v5956 = vsub.s32 0, %v5955
    %v5957 = vrot.slane %v5567, %v5956
    %v5958 = vlaneseq
    %v5959 = vshrl.u32 %v5958, 7
    %v5960 = vsub.s32 0, %v5959
    %v5961 = vrot.slane %v5568, %v5960
    %v5962 = vlaneseq
    %v5963 = vshrl.u32 %v5962, 7
    %v5964 = vsub.s32 0, %v5963
    %v5965 = vrot.slane %v5569, %v5964
    %v5966 = vlaneseq
    %v5967 = vshrl.u32 %v5966, 7
    %v5968 = vsub.s32 0, %v5967
    %v5969 = vrot.slane %v5571, %v5968
    %v5970 = vlaneseq
    %v5971 = vshrl.u32 %v5970, 7
    %v5972 = vsub.s32 0, %v5971
    %v5973 = vrot.slane %v5572, %v5972
    %v5974 = vlaneseq
    %v5975 = vshrl.u32 %v5974, 7
    %v5976 = vsub.s32 0, %v5975
    %v5977 = vrot.slane %v5573, %v5976
    %v5978 = vlaneseq
    %v5979 = vshrl.u32 %v5978, 7
    %v5980 = vsub.s32 0, %v5979
    %v5981 = vrot.slane %v5574, %v5980
    %v5982 = vlaneseq
    %v5983 = vshrl.u32 %v5982, 7
    %v5984 = vsub.s32 0, %v5983
    %v5985 = vrot.slane %v5575, %v5984
    %v5986 = vlaneseq
    %v5987 = vshrl.u32 %v5986, 7
    %v5988 = vsub.s32 0, %v5987
    %v5989 = vrot.slane %v5576, %v5988
    %v5990 = vlaneseq
    %v5991 = vshrl.u32 %v5990, 7
    %v5992 = vsub.s32 0, %v5991
    %v5993 = vrot.slane %v5577, %v5992
    %v5994 = vlaneseq
    %v5995 = vshrl.u32 %v5994, 7
    %v5996 = vsub.s32 0, %v5995
    %v5997 = vrot.slane %v5579, %v5996
    %v5998 = vlaneseq
    %v5999 = vshrl.u32 %v5998, 7
    %v6000 = vsub.s32 0, %v5999
    %v6001 = vrot.slane %v5580, %v6000
    %v6002 = vlaneseq
    %v6003 = vshrl.u32 %v6002, 7
    %v6004 = vsub.s32 0, %v6003
    %v6005 = vrot.slane %v5581, %v6004
    %v6006 = vlaneseq
    %v6007 = vshrl.u32 %v6006, 7
    %v6008 = vsub.s32 0, %v6007
    %v6009 = vrot.slane %v5582, %v6008
    %v6010 = vlaneseq
    %v6011 = vshrl.u32 %v6010, 7
    %v6012 = vsub.s32 0, %v6011
    %v6013 = vrot.slane %v5583, %v6012
    %v6014 = vlaneseq
    %v6015 = vshrl.u32 %v6014, 7
    %v6016 = vsub.s32 0, %v6015
    %v6017 = vrot.slane %v5584, %v6016
    %v6018 = vlaneseq
    %v6019 = vshrl.u32 %v6018, 7
    %v6020 = vsub.s32 0, %v6019
    %v6021 = vrot.slane %v5585, %v6020
    %v6022 = vlaneseq
    %v6023 = vshrl.u32 %v6022, 7
    %v6024 = vsub.s32 0, %v6023
    %v6025 = vrot.slane %v5587, %v6024
    %v6026 = vlaneseq
    %v6027 = vshrl.u32 %v6026, 7
    %v6028 = vsub.s32 0, %v6027
    %v6029 = vrot.slane %v5588, %v6028
    %v6030 = vlaneseq
    %v6031 = vshrl.u32 %v6030, 7
    %v6032 = vsub.s32 0, %v6031
    %v6033 = vrot.slane %v5589, %v6032
    %v6034 = vlaneseq
    %v6035 = vshrl.u32 %v6034, 7
    %v6036 = vsub.s32 0, %v6035
    %v6037 = vrot.slane %v5590, %v6036
    %v6038 = vlaneseq
    %v6039 = vshrl.u32 %v6038, 7
    %v6040 = vsub.s32 0, %v6039
    %v6041 = vrot.slane %v5591, %v6040
    %v6042 = vlaneseq
    %v6043 = vshrl.u32 %v6042, 7
    %v6044 = vsub.s32 0, %v6043
    %v6045 = vrot.slane %v5592, %v6044
    %v6046 = vlaneseq
    %v6047 = vshrl.u32 %v6046, 7
    %v6048 = vsub.s32 0, %v6047
    %v6049 = vrot.slane %v5593, %v6048
    %v6050 = vlaneseq
    %v6051 = vshrl.u32 %v6050, 7
    %v6052 = vsub.s32 0, %v6051
    %v6053 = vrot.slane %v5595, %v6052
    %v6054 = vlaneseq
    %v6055 = vshrl.u32 %v6054, 7
    %v6056 = vsub.s32 0, %v6055
    %v6057 = vrot.slane %v5596, %v6056
    %v6058 = vlaneseq
    %v6059 = vshrl.u32 %v6058, 7
    %v6060 = vsub.s32 0, %v6059
    %v6061 = vrot.slane %v5597, %v6060
    %v6062 = vlaneseq
    %v6063 = vshrl.u32 %v6062, 7
    %v6064 = vsub.s32 0, %v6063
    %v6065 = vrot.slane %v5598, %v6064
    %v6066 = vlaneseq
    %v6067 = vshrl.u32 %v6066, 7
    %v6068 = vsub.s32 0, %v6067
    %v6069 = vrot.slane %v5599, %v6068
    %v6070 = vlaneseq
    %v6071 = vshrl.u32 %v6070, 7
    %v6072 = vsub.s32 0, %v6071
    %v6073 = vrot.slane %v5600, %v6072
    %v6074 = vlaneseq
    %v6075 = vshrl.u32 %v6074, 7
    %v6076 = vsub.s32 0, %v6075
    %v6077 = vrot.slane %v5601, %v6076
    %v6078 = vlaneseq
    %v6079 = vshrl.u32 %v6078, 7
    %v6080 = vsub.s32 0, %v6079
    %v6081 = vrot.slane %v5603, %v6080
    %v6082 = vlaneseq
    %v6083 = vshrl.u32 %v6082, 7
    %v6084 = vsub.s32 0, %v6083
    %v6085 = vrot.slane %v5604, %v6084
    %v6086 = vlaneseq
    %v6087 = vshrl.u32 %v6086, 7
    %v6088 = vsub.s32 0, %v6087
    %v6089 = vrot.slane %v5605, %v6088
    %v6090 = vlaneseq
    %v6091 = vshrl.u32 %v6090, 7
    %v6092 = vsub.s32 0, %v6091
    %v6093 = vrot.slane %v5606, %v6092
    %v6094 = vlaneseq
    %v6095 = vshrl.u32 %v6094, 7
    %v6096 = vsub.s32 0, %v6095
    %v6097 = vrot.slane %v5607, %v6096
    %v6098 = vlaneseq
    %v6099 = vshrl.u32 %v6098, 7
    %v6100 = vsub.s32 0, %v6099
    %v6101 = vrot.slane %v5608, %v6100
    %v6102 = vlaneseq
    %v6103 = vshrl.u32 %v6102, 7
    %v6104 = vsub.s32 0, %v6103
    %v6105 = vrot.slane %v5609, %v6104
    %v6106 = vlaneseq
    %v6107 = vshrl.u32 %v6106, 7
    %v6108 = vsub.s32 0, %v6107
    %v6109 = vrot.slane %v5611, %v6108
    %v6110 = vlaneseq
    %v6111 = vshrl.u32 %v6110, 7
    %v6112 = vsub.s32 0, %v6111
    %v6113 = vrot.slane %v5612, %v6112
    %v6114 = vlaneseq
    %v6115 = vshrl.u32 %v6114, 7
    %v6116 = vsub.s32 0, %v6115
    %v6117 = vrot.slane %v5613, %v6116
    %v6118 = vlaneseq
    %v6119 = vshrl.u32 %v6118, 7
    %v6120 = vsub.s32 0, %v6119
    %v6121 = vrot.slane %v5614, %v6120
    %v6122 = vlaneseq
    %v6123 = vshrl.u32 %v6122, 7
    %v6124 = vsub.s32 0, %v6123
    %v6125 = vrot.slane %v5615, %v6124
    %v6126 = vlaneseq
    %v6127 = vshrl.u32 %v6126, 7
    %v6128 = vsub.s32 0, %v6127
    %v6129 = vrot.slane %v5616, %v6128
    %v6130 = vlaneseq
    %v6131 = vshrl.u32 %v6130, 7
    %v6132 = vsub.s32 0, %v6131
    %v6133 = vrot.slane %v5617, %v6132
    %vm6134 = vcmask 1041409
    %v6135 = vsel %vm6134, %v5749, %v5745
    %vm6136 = vcmask 1042434
    %v6137 = vsel %vm6136, %v5753, %v6135
    %vm6138 = vcmask 1043459
    %v6139 = vsel %vm6138, %v5757, %v6137
    %vm6140 = vcmask 1044484
    %v6141 = vsel %vm6140, %v5761, %v6139
    %vm6142 = vcmask 1045509
    %v6143 = vsel %vm6142, %v5765, %v6141
    %vm6144 = vcmask 1046534
    %v6145 = vsel %vm6144, %v5769, %v6143
    %v6146 = vsel %vm6134, %v5777, %v5773
    %v6147 = vsel %vm6136, %v5781, %v6146
    %v6148 = vsel %vm6138, %v5785, %v6147
    %v6149 = vsel %vm6140, %v5789, %v6148
    %v6150 = vsel %vm6142, %v5793, %v6149
    %v6151 = vsel %vm6144, %v5797, %v6150
    %v6152 = vsel %vm6134, %v5805, %v5801
    %v6153 = vsel %vm6136, %v5809, %v6152
    %v6154 = vsel %vm6138, %v5813, %v6153
    %v6155 = vsel %vm6140, %v5817, %v6154
    %v6156 = vsel %vm6142, %v5821, %v6155
    %v6157 = vsel %vm6144, %v5825, %v6156
    %v6158 = vsel %vm6134, %v5833, %v5829
    %v6159 = vsel %vm6136, %v5837, %v6158
    %v6160 = vsel %vm6138, %v5841, %v6159
    %v6161 = vsel %vm6140, %v5845, %v6160
    %v6162 = vsel %vm6142, %v5849, %v6161
    %v6163 = vsel %vm6144, %v5853, %v6162
    %v6164 = vsel %vm6134, %v5861, %v5857
    %v6165 = vsel %vm6136, %v5865, %v6164
    %v6166 = vsel %vm6138, %v5869, %v6165
    %v6167 = vsel %vm6140, %v5873, %v6166
    %v6168 = vsel %vm6142, %v5877, %v6167
    %v6169 = vsel %vm6144, %v5881, %v6168
    %v6170 = vsel %vm6134, %v5889, %v5885
    %v6171 = vsel %vm6136, %v5893, %v6170
    %v6172 = vsel %vm6138, %v5897, %v6171
    %v6173 = vsel %vm6140, %v5901, %v6172
    %v6174 = vsel %vm6142, %v5905, %v6173
    %v6175 = vsel %vm6144, %v5909, %v6174
    %v6176 = vsel %vm6134, %v5917, %v5913
    %v6177 = vsel %vm6136, %v5921, %v6176
    %v6178 = vsel %vm6138, %v5925, %v6177
    %v6179 = vsel %vm6140, %v5929, %v6178
    %v6180 = vsel %vm6142, %v5933, %v6179
    %v6181 = vsel %vm6144, %v5937, %v6180
    %v6182 = vsel %vm6134, %v5945, %v5941
    %v6183 = vsel %vm6136, %v5949, %v6182
    %v6184 = vsel %vm6138, %v5953, %v6183
    %v6185 = vsel %vm6140, %v5957, %v6184
    %v6186 = vsel %vm6142, %v5961, %v6185
    %v6187 = vsel %vm6144, %v5965, %v6186
    %v6188 = vsel %vm6134, %v5973, %v5969
    %v6189 = vsel %vm6136, %v5977, %v6188
    %v6190 = vsel %vm6138, %v5981, %v6189
    %v6191 = vsel %vm6140, %v5985, %v6190
    %v6192 = vsel %vm6142, %v5989, %v6191
    %v6193 = vsel %vm6144, %v5993, %v6192
    %v6194 = vsel %vm6134, %v6001, %v5997
    %v6195 = vsel %vm6136, %v6005, %v6194
    %v6196 = vsel %vm6138, %v6009, %v6195
    %v6197 = vsel %vm6140, %v6013, %v6196
    %v6198 = vsel %vm6142, %v6017, %v6197
    %v6199 = vsel %vm6144, %v6021, %v6198
    %v6200 = vsel %vm6134, %v6029, %v6025
    %v6201 = vsel %vm6136, %v6033, %v6200
    %v6202 = vsel %vm6138, %v6037, %v6201
    %v6203 = vsel %vm6140, %v6041, %v6202
    %v6204 = vsel %vm6142, %v6045, %v6203
    %v6205 = vsel %vm6144, %v6049, %v6204
    %v6206 = vsel %vm6134, %v6057, %v6053
    %v6207 = vsel %vm6136, %v6061, %v6206
    %v6208 = vsel %vm6138, %v6065, %v6207
    %v6209 = vsel %vm6140, %v6069, %v6208
    %v6210 = vsel %vm6142, %v6073, %v6209
    %v6211 = vsel %vm6144, %v6077, %v6210
    %v6212 = vsel %vm6134, %v6085, %v6081
    %v6213 = vsel %vm6136, %v6089, %v6212
    %v6214 = vsel %vm6138, %v6093, %v6213
    %v6215 = vsel %vm6140, %v6097, %v6214
    %v6216 = vsel %vm6142, %v6101, %v6215
    %v6217 = vsel %vm6144, %v6105, %v6216
    %v6218 = vsel %vm6134, %v6113, %v6109
    %v6219 = vsel %vm6136, %v6117, %v6218
    %v6220 = vsel %vm6138, %v6121, %v6219
    %v6221 = vsel %vm6140, %v6125, %v6220
    %v6222 = vsel %vm6142, %v6129, %v6221
    %v6223 = vsel %vm6144, %v6133, %v6222
    %s6238 = scalar_lea.vmem [#allocation3], 8
    %vm6239 = vcmask 63488
    %6240 = vst.msk [vmem:[%s6238 + $0x1] sm:$0x7f] %vm6239, %v6145
    %6241 = vst.msk [vmem:[%s6238 + $0x9] sm:$0x7f] %vm6239, %v6151
    %6242 = vst.msk [vmem:[%s6238 + $0x11] sm:$0x7f] %vm6239, %v6157
    %6243 = vst.msk [vmem:[%s6238 + $0x19] sm:$0x7f] %vm6239, %v6163
    %6244 = vst.msk [vmem:[%s6238 + $0x21] sm:$0x7f] %vm6239, %v6169
    %6245 = vst.msk [vmem:[%s6238 + $0x29] sm:$0x7f] %vm6239, %v6175
    %6246 = vst.msk [vmem:[%s6238 + $0x31] sm:$0x7f] %vm6239, %v6181
    %6247 = vst.msk [vmem:[%s6238 + $0x41] sm:$0x7f] %vm6239, %v6187
    %6248 = vst.msk [vmem:[%s6238 + $0x49] sm:$0x7f] %vm6239, %v6193
    %6249 = vst.msk [vmem:[%s6238 + $0x51] sm:$0x7f] %vm6239, %v6199
    %6250 = vst.msk [vmem:[%s6238 + $0x59] sm:$0x7f] %vm6239, %v6205
    %6251 = vst.msk [vmem:[%s6238 + $0x61] sm:$0x7f] %vm6239, %v6211
    %6252 = vst.msk [vmem:[%s6238 + $0x69] sm:$0x7f] %vm6239, %v6217
    %6253 = vst.msk [vmem:[%s6238 + $0x71] sm:$0x7f] %vm6239, %v6223
    %v6268 = vlaneseq
    %v6269 = vshrl.u32 %v6268, 7
    %v6270 = vsub.s32 0, %v6269
    %v6271 = vrot.slane %v5506, %v6270
    %v6272 = vlaneseq
    %v6273 = vshrl.u32 %v6272, 7
    %v6274 = vsub.s32 0, %v6273
    %v6275 = vrot.slane %v5514, %v6274
    %v6276 = vlaneseq
    %v6277 = vshrl.u32 %v6276, 7
    %v6278 = vsub.s32 0, %v6277
    %v6279 = vrot.slane %v5522, %v6278
    %v6280 = vlaneseq
    %v6281 = vshrl.u32 %v6280, 7
    %v6282 = vsub.s32 0, %v6281
    %v6283 = vrot.slane %v5530, %v6282
    %v6284 = vlaneseq
    %v6285 = vshrl.u32 %v6284, 7
    %v6286 = vsub.s32 0, %v6285
    %v6287 = vrot.slane %v5538, %v6286
    %v6288 = vlaneseq
    %v6289 = vshrl.u32 %v6288, 7
    %v6290 = vsub.s32 0, %v6289
    %v6291 = vrot.slane %v5546, %v6290
    %v6292 = vlaneseq
    %v6293 = vshrl.u32 %v6292, 7
    %v6294 = vsub.s32 0, %v6293
    %v6295 = vrot.slane %v5554, %v6294
    %v6296 = vlaneseq
    %v6297 = vshrl.u32 %v6296, 7
    %v6298 = vsub.s32 0, %v6297
    %v6299 = vrot.slane %v5570, %v6298
    %v6300 = vlaneseq
    %v6301 = vshrl.u32 %v6300, 7
    %v6302 = vsub.s32 0, %v6301
    %v6303 = vrot.slane %v5578, %v6302
    %v6304 = vlaneseq
    %v6305 = vshrl.u32 %v6304, 7
    %v6306 = vsub.s32 0, %v6305
    %v6307 = vrot.slane %v5586, %v6306
    %v6308 = vlaneseq
    %v6309 = vshrl.u32 %v6308, 7
    %v6310 = vsub.s32 0, %v6309
    %v6311 = vrot.slane %v5594, %v6310
    %v6312 = vlaneseq
    %v6313 = vshrl.u32 %v6312, 7
    %v6314 = vsub.s32 0, %v6313
    %v6315 = vrot.slane %v5602, %v6314
    %v6316 = vlaneseq
    %v6317 = vshrl.u32 %v6316, 7
    %v6318 = vsub.s32 0, %v6317
    %v6319 = vrot.slane %v5610, %v6318
    %v6320 = vlaneseq
    %v6321 = vshrl.u32 %v6320, 7
    %v6322 = vsub.s32 0, %v6321
    %v6323 = vrot.slane %v5618, %v6322
    %vm6324 = vcmask 1047559
    %v6325 = vsel %vm6324, %v6271, %v6145
    %v6326 = vsel %vm6324, %v6275, %v6151
    %v6327 = vsel %vm6324, %v6279, %v6157
    %v6328 = vsel %vm6324, %v6283, %v6163
    %v6329 = vsel %vm6324, %v6287, %v6169
    %v6330 = vsel %vm6324, %v6291, %v6175
    %v6331 = vsel %vm6324, %v6295, %v6181
    %v6332 = vsel %vm6324, %v6299, %v6187
    %v6333 = vsel %vm6324, %v6303, %v6193
    %v6334 = vsel %vm6324, %v6307, %v6199
    %v6335 = vsel %vm6324, %v6311, %v6205
    %v6336 = vsel %vm6324, %v6315, %v6211
    %v6337 = vsel %vm6324, %v6319, %v6217
    %v6338 = vsel %vm6324, %v6323, %v6223
    %6339 = vrot.lane.b32.xlu0 %v6325, 8
    %v6340 = vpop.permute.xlu0 %6339
    %6341 = vrot.lane.b32.xlu0 %v6326, 8
    %v6342 = vpop.permute.xlu0 %6341
    %6343 = vrot.lane.b32.xlu0 %v6327, 8
    %v6344 = vpop.permute.xlu0 %6343
    %6345 = vrot.lane.b32.xlu0 %v6328, 8
    %v6346 = vpop.permute.xlu0 %6345
    %6347 = vrot.lane.b32.xlu0 %v6329, 8
    %v6348 = vpop.permute.xlu0 %6347
    %6349 = vrot.lane.b32.xlu0 %v6330, 8
    %v6350 = vpop.permute.xlu0 %6349
    %6351 = vrot.lane.b32.xlu0 %v6331, 8
    %v6352 = vpop.permute.xlu0 %6351
    %6353 = vrot.lane.b32.xlu0 %v6332, 8
    %v6354 = vpop.permute.xlu0 %6353
    %6355 = vrot.lane.b32.xlu0 %v6333, 8
    %v6356 = vpop.permute.xlu0 %6355
    %6357 = vrot.lane.b32.xlu0 %v6334, 8
    %v6358 = vpop.permute.xlu0 %6357
    %6359 = vrot.lane.b32.xlu0 %v6335, 8
    %v6360 = vpop.permute.xlu0 %6359
    %6361 = vrot.lane.b32.xlu0 %v6336, 8
    %v6362 = vpop.permute.xlu0 %6361
    %6363 = vrot.lane.b32.xlu0 %v6337, 8
    %v6364 = vpop.permute.xlu0 %6363
    %6365 = vrot.lane.b32.xlu0 %v6338, 8
    %v6366 = vpop.permute.xlu0 %6365
    %vm6381 = vcmask 130112
    %6382 = vst.msk [vmem:[%s6238] sm:$0xff] %vm6381, %v6340
    %6383 = vst.msk [vmem:[%s6238 + $0x8] sm:$0xff] %vm6381, %v6342
    %6384 = vst.msk [vmem:[%s6238 + $0x10] sm:$0xff] %vm6381, %v6344
    %6385 = vst.msk [vmem:[%s6238 + $0x18] sm:$0xff] %vm6381, %v6346
    %6386 = vst.msk [vmem:[%s6238 + $0x20] sm:$0xff] %vm6381, %v6348
    %6387 = vst.msk [vmem:[%s6238 + $0x28] sm:$0xff] %vm6381, %v6350
    %6388 = vst.msk [vmem:[%s6238 + $0x30] sm:$0xff] %vm6381, %v6352
    %6389 = vst.msk [vmem:[%s6238 + $0x40] sm:$0xff] %vm6381, %v6354
    %6390 = vst.msk [vmem:[%s6238 + $0x48] sm:$0xff] %vm6381, %v6356
    %6391 = vst.msk [vmem:[%s6238 + $0x50] sm:$0xff] %vm6381, %v6358
    %6392 = vst.msk [vmem:[%s6238 + $0x58] sm:$0xff] %vm6381, %v6360
    %6393 = vst.msk [vmem:[%s6238 + $0x60] sm:$0xff] %vm6381, %v6362
    %6394 = vst.msk [vmem:[%s6238 + $0x68] sm:$0xff] %vm6381, %v6364
    %6395 = vst.msk [vmem:[%s6238 + $0x70] sm:$0xff] %vm6381, %v6366
    %v6396 = vsel %vm6134, %v5753, %v5749
    %v6397 = vsel %vm6136, %v5757, %v6396
    %v6398 = vsel %vm6138, %v5761, %v6397
    %v6399 = vsel %vm6140, %v5765, %v6398
    %v6400 = vsel %vm6142, %v5769, %v6399
    %v6401 = vsel %vm6144, %v6271, %v6400
    %v6402 = vsel %vm6134, %v5781, %v5777
    %v6403 = vsel %vm6136, %v5785, %v6402
    %v6404 = vsel %vm6138, %v5789, %v6403
    %v6405 = vsel %vm6140, %v5793, %v6404
    %v6406 = vsel %vm6142, %v5797, %v6405
    %v6407 = vsel %vm6144, %v6275, %v6406
    %v6408 = vsel %vm6134, %v5809, %v5805
    %v6409 = vsel %vm6136, %v5813, %v6408
    %v6410 = vsel %vm6138, %v5817, %v6409
    %v6411 = vsel %vm6140, %v5821, %v6410
    %v6412 = vsel %vm6142, %v5825, %v6411
    %v6413 = vsel %vm6144, %v6279, %v6412
    %v6414 = vsel %vm6134, %v5837, %v5833
    %v6415 = vsel %vm6136, %v5841, %v6414
    %v6416 = vsel %vm6138, %v5845, %v6415
    %v6417 = vsel %vm6140, %v5849, %v6416
    %v6418 = vsel %vm6142, %v5853, %v6417
    %v6419 = vsel %vm6144, %v6283, %v6418
    %v6420 = vsel %vm6134, %v5865, %v5861
    %v6421 = vsel %vm6136, %v5869, %v6420
    %v6422 = vsel %vm6138, %v5873, %v6421
    %v6423 = vsel %vm6140, %v5877, %v6422
    %v6424 = vsel %vm6142, %v5881, %v6423
    %v6425 = vsel %vm6144, %v6287, %v6424
    %v6426 = vsel %vm6134, %v5893, %v5889
    %v6427 = vsel %vm6136, %v5897, %v6426
    %v6428 = vsel %vm6138, %v5901, %v6427
    %v6429 = vsel %vm6140, %v5905, %v6428
    %v6430 = vsel %vm6142, %v5909, %v6429
    %v6431 = vsel %vm6144, %v6291, %v6430
    %v6432 = vsel %vm6134, %v5921, %v5917
    %v6433 = vsel %vm6136, %v5925, %v6432
    %v6434 = vsel %vm6138, %v5929, %v6433
    %v6435 = vsel %vm6140, %v5933, %v6434
    %v6436 = vsel %vm6142, %v5937, %v6435
    %v6437 = vsel %vm6144, %v6295, %v6436
    %v6438 = vsel %vm6134, %v5949, %v5945
    %v6439 = vsel %vm6136, %v5953, %v6438
    %v6440 = vsel %vm6138, %v5957, %v6439
    %v6441 = vsel %vm6140, %v5961, %v6440
    %v6442 = vsel %vm6142, %v5965, %v6441
    %v6443 = vsel %vm6144, %v6299, %v6442
    %v6444 = vsel %vm6134, %v5977, %v5973
    %v6445 = vsel %vm6136, %v5981, %v6444
    %v6446 = vsel %vm6138, %v5985, %v6445
    %v6447 = vsel %vm6140, %v5989, %v6446
    %v6448 = vsel %vm6142, %v5993, %v6447
    %v6449 = vsel %vm6144, %v6303, %v6448
    %v6450 = vsel %vm6134, %v6005, %v6001
    %v6451 = vsel %vm6136, %v6009, %v6450
    %v6452 = vsel %vm6138, %v6013, %v6451
    %v6453 = vsel %vm6140, %v6017, %v6452
    %v6454 = vsel %vm6142, %v6021, %v6453
    %v6455 = vsel %vm6144, %v6307, %v6454
    %v6456 = vsel %vm6134, %v6033, %v6029
    %v6457 = vsel %vm6136, %v6037, %v6456
    %v6458 = vsel %vm6138, %v6041, %v6457
    %v6459 = vsel %vm6140, %v6045, %v6458
    %v6460 = vsel %vm6142, %v6049, %v6459
    %v6461 = vsel %vm6144, %v6311, %v6460
    %v6462 = vsel %vm6134, %v6061, %v6057
    %v6463 = vsel %vm6136, %v6065, %v6462
    %v6464 = vsel %vm6138, %v6069, %v6463
    %v6465 = vsel %vm6140, %v6073, %v6464
    %v6466 = vsel %vm6142, %v6077, %v6465
    %v6467 = vsel %vm6144, %v6315, %v6466
    %v6468 = vsel %vm6134, %v6089, %v6085
    %v6469 = vsel %vm6136, %v6093, %v6468
    %v6470 = vsel %vm6138, %v6097, %v6469
    %v6471 = vsel %vm6140, %v6101, %v6470
    %v6472 = vsel %vm6142, %v6105, %v6471
    %v6473 = vsel %vm6144, %v6319, %v6472
    %v6474 = vsel %vm6134, %v6117, %v6113
    %v6475 = vsel %vm6136, %v6121, %v6474
    %v6476 = vsel %vm6138, %v6125, %v6475
    %v6477 = vsel %vm6140, %v6129, %v6476
    %v6478 = vsel %vm6142, %v6133, %v6477
    %v6479 = vsel %vm6144, %v6323, %v6478
    %6480 = vrot.lane.b32.xlu0 %v6401, 16
    %v6481 = vpop.permute.xlu0 %6480
    %6482 = vrot.lane.b32.xlu0 %v6407, 16
    %v6483 = vpop.permute.xlu0 %6482
    %6484 = vrot.lane.b32.xlu0 %v6413, 16
    %v6485 = vpop.permute.xlu0 %6484
    %6486 = vrot.lane.b32.xlu0 %v6419, 16
    %v6487 = vpop.permute.xlu0 %6486
    %6488 = vrot.lane.b32.xlu0 %v6425, 16
    %v6489 = vpop.permute.xlu0 %6488
    %6490 = vrot.lane.b32.xlu0 %v6431, 16
    %v6491 = vpop.permute.xlu0 %6490
    %6492 = vrot.lane.b32.xlu0 %v6437, 16
    %v6493 = vpop.permute.xlu0 %6492
    %6494 = vrot.lane.b32.xlu0 %v6443, 16
    %v6495 = vpop.permute.xlu0 %6494
    %6496 = vrot.lane.b32.xlu0 %v6449, 16
    %v6497 = vpop.permute.xlu0 %6496
    %6498 = vrot.lane.b32.xlu0 %v6455, 16
    %v6499 = vpop.permute.xlu0 %6498
    %6500 = vrot.lane.b32.xlu0 %v6461, 16
    %v6501 = vpop.permute.xlu0 %6500
    %6502 = vrot.lane.b32.xlu0 %v6467, 16
    %v6503 = vpop.permute.xlu0 %6502
    %6504 = vrot.lane.b32.xlu0 %v6473, 16
    %v6505 = vpop.permute.xlu0 %6504
    %6506 = vrot.lane.b32.xlu0 %v6479, 16
    %v6507 = vpop.permute.xlu0 %6506
    %vm6522 = vcmask 194688
    %6523 = vst.msk [vmem:[%s6238] sm:$0x7f] %vm6522, %v6481
    %6524 = vst.msk [vmem:[%s6238 + $0x8] sm:$0x7f] %vm6522, %v6483
    %6525 = vst.msk [vmem:[%s6238 + $0x10] sm:$0x7f] %vm6522, %v6485
    %6526 = vst.msk [vmem:[%s6238 + $0x18] sm:$0x7f] %vm6522, %v6487
    %6527 = vst.msk [vmem:[%s6238 + $0x20] sm:$0x7f] %vm6522, %v6489
    %6528 = vst.msk [vmem:[%s6238 + $0x28] sm:$0x7f] %vm6522, %v6491
    %6529 = vst.msk [vmem:[%s6238 + $0x30] sm:$0x7f] %vm6522, %v6493
    %6530 = vst.msk [vmem:[%s6238 + $0x40] sm:$0x7f] %vm6522, %v6495
    %6531 = vst.msk [vmem:[%s6238 + $0x48] sm:$0x7f] %vm6522, %v6497
    %6532 = vst.msk [vmem:[%s6238 + $0x50] sm:$0x7f] %vm6522, %v6499
    %6533 = vst.msk [vmem:[%s6238 + $0x58] sm:$0x7f] %vm6522, %v6501
    %6534 = vst.msk [vmem:[%s6238 + $0x60] sm:$0x7f] %vm6522, %v6503
    %6535 = vst.msk [vmem:[%s6238 + $0x68] sm:$0x7f] %vm6522, %v6505
    %6536 = vst.msk [vmem:[%s6238 + $0x70] sm:$0x7f] %vm6522, %v6507
    %v6551 = vlaneseq
    %v6552 = vshrl.u32 %v6551, 7
    %v6553 = vsub.s32 0, %v6552
    %v6554 = vrot.slane %v5555, %v6553
    %v6555 = vlaneseq
    %v6556 = vshrl.u32 %v6555, 7
    %v6557 = vsub.s32 0, %v6556
    %v6558 = vrot.slane %v5556, %v6557
    %v6559 = vlaneseq
    %v6560 = vshrl.u32 %v6559, 7
    %v6561 = vsub.s32 0, %v6560
    %v6562 = vrot.slane %v5557, %v6561
    %v6563 = vlaneseq
    %v6564 = vshrl.u32 %v6563, 7
    %v6565 = vsub.s32 0, %v6564
    %v6566 = vrot.slane %v5558, %v6565
    %v6567 = vlaneseq
    %v6568 = vshrl.u32 %v6567, 7
    %v6569 = vsub.s32 0, %v6568
    %v6570 = vrot.slane %v5559, %v6569
    %v6571 = vlaneseq
    %v6572 = vshrl.u32 %v6571, 7
    %v6573 = vsub.s32 0, %v6572
    %v6574 = vrot.slane %v5560, %v6573
    %v6575 = vlaneseq
    %v6576 = vshrl.u32 %v6575, 7
    %v6577 = vsub.s32 0, %v6576
    %v6578 = vrot.slane %v5561, %v6577
    %v6579 = vlaneseq
    %v6580 = vshrl.u32 %v6579, 7
    %v6581 = vsub.s32 0, %v6580
    %v6582 = vrot.slane %v5619, %v6581
    %v6583 = vlaneseq
    %v6584 = vshrl.u32 %v6583, 7
    %v6585 = vsub.s32 0, %v6584
    %v6586 = vrot.slane %v5620, %v6585
    %v6587 = vlaneseq
    %v6588 = vshrl.u32 %v6587, 7
    %v6589 = vsub.s32 0, %v6588
    %v6590 = vrot.slane %v5621, %v6589
    %v6591 = vlaneseq
    %v6592 = vshrl.u32 %v6591, 7
    %v6593 = vsub.s32 0, %v6592
    %v6594 = vrot.slane %v5622, %v6593
    %v6595 = vlaneseq
    %v6596 = vshrl.u32 %v6595, 7
    %v6597 = vsub.s32 0, %v6596
    %v6598 = vrot.slane %v5623, %v6597
    %v6599 = vlaneseq
    %v6600 = vshrl.u32 %v6599, 7
    %v6601 = vsub.s32 0, %v6600
    %v6602 = vrot.slane %v5624, %v6601
    %v6603 = vlaneseq
    %v6604 = vshrl.u32 %v6603, 7
    %v6605 = vsub.s32 0, %v6604
    %v6606 = vrot.slane %v5625, %v6605
    %v6607 = vsel %vm6134, %v6558, %v6554
    %v6608 = vsel %vm6136, %v6562, %v6607
    %v6609 = vsel %vm6138, %v6566, %v6608
    %v6610 = vsel %vm6140, %v6570, %v6609
    %v6611 = vsel %vm6142, %v6574, %v6610
    %v6612 = vsel %vm6144, %v6578, %v6611
    %v6613 = vsel %vm6134, %v6586, %v6582
    %v6614 = vsel %vm6136, %v6590, %v6613
    %v6615 = vsel %vm6138, %v6594, %v6614
    %v6616 = vsel %vm6140, %v6598, %v6615
    %v6617 = vsel %vm6142, %v6602, %v6616
    %v6618 = vsel %vm6144, %v6606, %v6617
    %6619 = vrot.lane.b32.xlu0 %v6145, 24
    %v6620 = vpop.permute.xlu0 %6619
    %6621 = vrot.lane.b32.xlu0 %v6151, 24
    %v6622 = vpop.permute.xlu0 %6621
    %6623 = vrot.lane.b32.xlu0 %v6157, 24
    %v6624 = vpop.permute.xlu0 %6623
    %6625 = vrot.lane.b32.xlu0 %v6163, 24
    %v6626 = vpop.permute.xlu0 %6625
    %6627 = vrot.lane.b32.xlu0 %v6169, 24
    %v6628 = vpop.permute.xlu0 %6627
    %6629 = vrot.lane.b32.xlu0 %v6175, 24
    %v6630 = vpop.permute.xlu0 %6629
    %6631 = vrot.lane.b32.xlu0 %v6181, 24
    %v6632 = vpop.permute.xlu0 %6631
    %6633 = vrot.lane.b32.xlu0 %v6612, 24
    %v6634 = vpop.permute.xlu0 %6633
    %6635 = vrot.lane.b32.xlu0 %v6187, 24
    %v6636 = vpop.permute.xlu0 %6635
    %6637 = vrot.lane.b32.xlu0 %v6193, 24
    %v6638 = vpop.permute.xlu0 %6637
    %6639 = vrot.lane.b32.xlu0 %v6199, 24
    %v6640 = vpop.permute.xlu0 %6639
    %6641 = vrot.lane.b32.xlu0 %v6205, 24
    %v6642 = vpop.permute.xlu0 %6641
    %6643 = vrot.lane.b32.xlu0 %v6211, 24
    %v6644 = vpop.permute.xlu0 %6643
    %6645 = vrot.lane.b32.xlu0 %v6217, 24
    %v6646 = vpop.permute.xlu0 %6645
    %6647 = vrot.lane.b32.xlu0 %v6223, 24
    %v6648 = vpop.permute.xlu0 %6647
    %6649 = vrot.lane.b32.xlu0 %v6618, 24
    %v6650 = vpop.permute.xlu0 %6649
    %vm6667 = vcmask 260288
    %6668 = vst.msk [vmem:[#allocation3 + $0x1] sm:$0x7f] %vm6667, %v6620
    %6669 = vst.msk [vmem:[#allocation3 + $0x9] sm:$0x7f] %vm6667, %v6622
    %6670 = vst.msk [vmem:[#allocation3 + $0x11] sm:$0x7f] %vm6667, %v6624
    %6671 = vst.msk [vmem:[#allocation3 + $0x19] sm:$0x7f] %vm6667, %v6626
    %6672 = vst.msk [vmem:[#allocation3 + $0x21] sm:$0x7f] %vm6667, %v6628
    %6673 = vst.msk [vmem:[#allocation3 + $0x29] sm:$0x7f] %vm6667, %v6630
    %6674 = vst.msk [vmem:[#allocation3 + $0x31] sm:$0x7f] %vm6667, %v6632
    %6675 = vst.msk [vmem:[#allocation3 + $0x39] sm:$0x7f] %vm6667, %v6634
    %6676 = vst.msk [vmem:[#allocation3 + $0x41] sm:$0x7f] %vm6667, %v6636
    %6677 = vst.msk [vmem:[#allocation3 + $0x49] sm:$0x7f] %vm6667, %v6638
    %6678 = vst.msk [vmem:[#allocation3 + $0x51] sm:$0x7f] %vm6667, %v6640
    %6679 = vst.msk [vmem:[#allocation3 + $0x59] sm:$0x7f] %vm6667, %v6642
    %6680 = vst.msk [vmem:[#allocation3 + $0x61] sm:$0x7f] %vm6667, %v6644
    %6681 = vst.msk [vmem:[#allocation3 + $0x69] sm:$0x7f] %vm6667, %v6646
    %6682 = vst.msk [vmem:[#allocation3 + $0x71] sm:$0x7f] %vm6667, %v6648
    %6683 = vst.msk [vmem:[#allocation3 + $0x79] sm:$0x7f] %vm6667, %v6650
    %v6686 = vlaneseq
    %v6687 = vshrl.u32 %v6686, 7
    %v6688 = vsub.s32 0, %v6687
    %v6689 = vrot.slane %v5562, %v6688
    %v6690 = vlaneseq
    %v6691 = vshrl.u32 %v6690, 7
    %v6692 = vsub.s32 0, %v6691
    %v6693 = vrot.slane %v5626, %v6692
    %v6694 = vsel %vm6324, %v6689, %v6612
    %v6695 = vsel %vm6324, %v6693, %v6618
    %6696 = vrot.lane.b32.xlu0 %v6325, 32
    %v6697 = vpop.permute.xlu0 %6696
    %6698 = vrot.lane.b32.xlu0 %v6326, 32
    %v6699 = vpop.permute.xlu0 %6698
    %6700 = vrot.lane.b32.xlu0 %v6327, 32
    %v6701 = vpop.permute.xlu0 %6700
    %6702 = vrot.lane.b32.xlu0 %v6328, 32
    %v6703 = vpop.permute.xlu0 %6702
    %6704 = vrot.lane.b32.xlu0 %v6329, 32
    %v6705 = vpop.permute.xlu0 %6704
    %6706 = vrot.lane.b32.xlu0 %v6330, 32
    %v6707 = vpop.permute.xlu0 %6706
    %6708 = vrot.lane.b32.xlu0 %v6331, 32
    %v6709 = vpop.permute.xlu0 %6708
    %6710 = vrot.lane.b32.xlu0 %v6694, 32
    %v6711 = vpop.permute.xlu0 %6710
    %6712 = vrot.lane.b32.xlu0 %v6332, 32
    %v6713 = vpop.permute.xlu0 %6712
    %6714 = vrot.lane.b32.xlu0 %v6333, 32
    %v6715 = vpop.permute.xlu0 %6714
    %6716 = vrot.lane.b32.xlu0 %v6334, 32
    %v6717 = vpop.permute.xlu0 %6716
    %6718 = vrot.lane.b32.xlu0 %v6335, 32
    %v6719 = vpop.permute.xlu0 %6718
    %6720 = vrot.lane.b32.xlu0 %v6336, 32
    %v6721 = vpop.permute.xlu0 %6720
    %6722 = vrot.lane.b32.xlu0 %v6337, 32
    %v6723 = vpop.permute.xlu0 %6722
    %6724 = vrot.lane.b32.xlu0 %v6338, 32
    %v6725 = vpop.permute.xlu0 %6724
    %6726 = vrot.lane.b32.xlu0 %v6695, 32
    %v6727 = vpop.permute.xlu0 %6726
    %vm6744 = vcmask 326912
    %6745 = vst.msk [vmem:[#allocation3] sm:$0xff] %vm6744, %v6697
    %6746 = vst.msk [vmem:[#allocation3 + $0x8] sm:$0xff] %vm6744, %v6699
    %6747 = vst.msk [vmem:[#allocation3 + $0x10] sm:$0xff] %vm6744, %v6701
    %6748 = vst.msk [vmem:[#allocation3 + $0x18] sm:$0xff] %vm6744, %v6703
    %6749 = vst.msk [vmem:[#allocation3 + $0x20] sm:$0xff] %vm6744, %v6705
    %6750 = vst.msk [vmem:[#allocation3 + $0x28] sm:$0xff] %vm6744, %v6707
    %6751 = vst.msk [vmem:[#allocation3 + $0x30] sm:$0xff] %vm6744, %v6709
    %6752 = vst.msk [vmem:[#allocation3 + $0x38] sm:$0xff] %vm6744, %v6711
    %6753 = vst.msk [vmem:[#allocation3 + $0x40] sm:$0xff] %vm6744, %v6713
    %6754 = vst.msk [vmem:[#allocation3 + $0x48] sm:$0xff] %vm6744, %v6715
    %6755 = vst.msk [vmem:[#allocation3 + $0x50] sm:$0xff] %vm6744, %v6717
    %6756 = vst.msk [vmem:[#allocation3 + $0x58] sm:$0xff] %vm6744, %v6719
    %6757 = vst.msk [vmem:[#allocation3 + $0x60] sm:$0xff] %vm6744, %v6721
    %6758 = vst.msk [vmem:[#allocation3 + $0x68] sm:$0xff] %vm6744, %v6723
    %6759 = vst.msk [vmem:[#allocation3 + $0x70] sm:$0xff] %vm6744, %v6725
    %6760 = vst.msk [vmem:[#allocation3 + $0x78] sm:$0xff] %vm6744, %v6727
    %v6761 = vsel %vm6134, %v6562, %v6558
    %v6762 = vsel %vm6136, %v6566, %v6761
    %v6763 = vsel %vm6138, %v6570, %v6762
    %v6764 = vsel %vm6140, %v6574, %v6763
    %v6765 = vsel %vm6142, %v6578, %v6764
    %v6766 = vsel %vm6144, %v6689, %v6765
    %v6767 = vsel %vm6134, %v6590, %v6586
    %v6768 = vsel %vm6136, %v6594, %v6767
    %v6769 = vsel %vm6138, %v6598, %v6768
    %v6770 = vsel %vm6140, %v6602, %v6769
    %v6771 = vsel %vm6142, %v6606, %v6770
    %v6772 = vsel %vm6144, %v6693, %v6771
    %6773 = vrot.lane.b32.xlu0 %v6401, 40
    %v6774 = vpop.permute.xlu0 %6773
    %6775 = vrot.lane.b32.xlu0 %v6407, 40
    %v6776 = vpop.permute.xlu0 %6775
    %6777 = vrot.lane.b32.xlu0 %v6413, 40
    %v6778 = vpop.permute.xlu0 %6777
    %6779 = vrot.lane.b32.xlu0 %v6419, 40
    %v6780 = vpop.permute.xlu0 %6779
    %6781 = vrot.lane.b32.xlu0 %v6425, 40
    %v6782 = vpop.permute.xlu0 %6781
    %6783 = vrot.lane.b32.xlu0 %v6431, 40
    %v6784 = vpop.permute.xlu0 %6783
    %6785 = vrot.lane.b32.xlu0 %v6437, 40
    %v6786 = vpop.permute.xlu0 %6785
    %6787 = vrot.lane.b32.xlu0 %v6766, 40
    %v6788 = vpop.permute.xlu0 %6787
    %6789 = vrot.lane.b32.xlu0 %v6443, 40
    %v6790 = vpop.permute.xlu0 %6789
    %6791 = vrot.lane.b32.xlu0 %v6449, 40
    %v6792 = vpop.permute.xlu0 %6791
    %6793 = vrot.lane.b32.xlu0 %v6455, 40
    %v6794 = vpop.permute.xlu0 %6793
    %6795 = vrot.lane.b32.xlu0 %v6461, 40
    %v6796 = vpop.permute.xlu0 %6795
    %6797 = vrot.lane.b32.xlu0 %v6467, 40
    %v6798 = vpop.permute.xlu0 %6797
    %6799 = vrot.lane.b32.xlu0 %v6473, 40
    %v6800 = vpop.permute.xlu0 %6799
    %6801 = vrot.lane.b32.xlu0 %v6479, 40
    %v6802 = vpop.permute.xlu0 %6801
    %6803 = vrot.lane.b32.xlu0 %v6772, 40
    %v6804 = vpop.permute.xlu0 %6803
    %vm6821 = vcmask 391488
    %6822 = vst.msk [vmem:[#allocation3] sm:$0x7f] %vm6821, %v6774
    %6823 = vst.msk [vmem:[#allocation3 + $0x8] sm:$0x7f] %vm6821, %v6776
    %6824 = vst.msk [vmem:[#allocation3 + $0x10] sm:$0x7f] %vm6821, %v6778
    %6825 = vst.msk [vmem:[#allocation3 + $0x18] sm:$0x7f] %vm6821, %v6780
    %6826 = vst.msk [vmem:[#allocation3 + $0x20] sm:$0x7f] %vm6821, %v6782
    %6827 = vst.msk [vmem:[#allocation3 + $0x28] sm:$0x7f] %vm6821, %v6784
    %6828 = vst.msk [vmem:[#allocation3 + $0x30] sm:$0x7f] %vm6821, %v6786
    %6829 = vst.msk [vmem:[#allocation3 + $0x38] sm:$0x7f] %vm6821, %v6788
    %6830 = vst.msk [vmem:[#allocation3 + $0x40] sm:$0x7f] %vm6821, %v6790
    %6831 = vst.msk [vmem:[#allocation3 + $0x48] sm:$0x7f] %vm6821, %v6792
    %6832 = vst.msk [vmem:[#allocation3 + $0x50] sm:$0x7f] %vm6821, %v6794
    %6833 = vst.msk [vmem:[#allocation3 + $0x58] sm:$0x7f] %vm6821, %v6796
    %6834 = vst.msk [vmem:[#allocation3 + $0x60] sm:$0x7f] %vm6821, %v6798
    %6835 = vst.msk [vmem:[#allocation3 + $0x68] sm:$0x7f] %vm6821, %v6800
    %6836 = vst.msk [vmem:[#allocation3 + $0x70] sm:$0x7f] %vm6821, %v6802
    %6837 = vst.msk [vmem:[#allocation3 + $0x78] sm:$0x7f] %vm6821, %v6804
    %6838 = vrot.lane.b32.xlu0 %v6151, 48
    %v6839 = vpop.permute.xlu0 %6838
    %6840 = vrot.lane.b32.xlu0 %v6157, 48
    %v6841 = vpop.permute.xlu0 %6840
    %6842 = vrot.lane.b32.xlu0 %v6163, 48
    %v6843 = vpop.permute.xlu0 %6842
    %6844 = vrot.lane.b32.xlu0 %v6169, 48
    %v6845 = vpop.permute.xlu0 %6844
    %6846 = vrot.lane.b32.xlu0 %v6175, 48
    %v6847 = vpop.permute.xlu0 %6846
    %6848 = vrot.lane.b32.xlu0 %v6181, 48
    %v6849 = vpop.permute.xlu0 %6848
    %6850 = vrot.lane.b32.xlu0 %v6612, 48
    %v6851 = vpop.permute.xlu0 %6850
    %6852 = vrot.lane.b32.xlu0 %v6193, 48
    %v6853 = vpop.permute.xlu0 %6852
    %6854 = vrot.lane.b32.xlu0 %v6199, 48
    %v6855 = vpop.permute.xlu0 %6854
    %6856 = vrot.lane.b32.xlu0 %v6205, 48
    %v6857 = vpop.permute.xlu0 %6856
    %6858 = vrot.lane.b32.xlu0 %v6211, 48
    %v6859 = vpop.permute.xlu0 %6858
    %6860 = vrot.lane.b32.xlu0 %v6217, 48
    %v6861 = vpop.permute.xlu0 %6860
    %6862 = vrot.lane.b32.xlu0 %v6223, 48
    %v6863 = vpop.permute.xlu0 %6862
    %6864 = vrot.lane.b32.xlu0 %v6618, 48
    %v6865 = vpop.permute.xlu0 %6864
    %vm6880 = vcmask 457088
    %6881 = vst.msk [vmem:[#allocation3 + $0x1] sm:$0x7f] %vm6880, %v6839
    %6882 = vst.msk [vmem:[#allocation3 + $0x9] sm:$0x7f] %vm6880, %v6841
    %6883 = vst.msk [vmem:[#allocation3 + $0x11] sm:$0x7f] %vm6880, %v6843
    %6884 = vst.msk [vmem:[#allocation3 + $0x19] sm:$0x7f] %vm6880, %v6845
    %6885 = vst.msk [vmem:[#allocation3 + $0x21] sm:$0x7f] %vm6880, %v6847
    %6886 = vst.msk [vmem:[#allocation3 + $0x29] sm:$0x7f] %vm6880, %v6849
    %6887 = vst.msk [vmem:[#allocation3 + $0x31] sm:$0x7f] %vm6880, %v6851
    %6888 = vst.msk [vmem:[#allocation3 + $0x41] sm:$0x7f] %vm6880, %v6853
    %6889 = vst.msk [vmem:[#allocation3 + $0x49] sm:$0x7f] %vm6880, %v6855
    %6890 = vst.msk [vmem:[#allocation3 + $0x51] sm:$0x7f] %vm6880, %v6857
    %6891 = vst.msk [vmem:[#allocation3 + $0x59] sm:$0x7f] %vm6880, %v6859
    %6892 = vst.msk [vmem:[#allocation3 + $0x61] sm:$0x7f] %vm6880, %v6861
    %6893 = vst.msk [vmem:[#allocation3 + $0x69] sm:$0x7f] %vm6880, %v6863
    %6894 = vst.msk [vmem:[#allocation3 + $0x71] sm:$0x7f] %vm6880, %v6865
    %6895 = vrot.lane.b32.xlu0 %v6326, 56
    %v6896 = vpop.permute.xlu0 %6895
    %6897 = vrot.lane.b32.xlu0 %v6327, 56
    %v6898 = vpop.permute.xlu0 %6897
    %6899 = vrot.lane.b32.xlu0 %v6328, 56
    %v6900 = vpop.permute.xlu0 %6899
    %6901 = vrot.lane.b32.xlu0 %v6329, 56
    %v6902 = vpop.permute.xlu0 %6901
    %6903 = vrot.lane.b32.xlu0 %v6330, 56
    %v6904 = vpop.permute.xlu0 %6903
    %6905 = vrot.lane.b32.xlu0 %v6331, 56
    %v6906 = vpop.permute.xlu0 %6905
    %6907 = vrot.lane.b32.xlu0 %v6694, 56
    %v6908 = vpop.permute.xlu0 %6907
    %6909 = vrot.lane.b32.xlu0 %v6333, 56
    %v6910 = vpop.permute.xlu0 %6909
    %6911 = vrot.lane.b32.xlu0 %v6334, 56
    %v6912 = vpop.permute.xlu0 %6911
    %6913 = vrot.lane.b32.xlu0 %v6335, 56
    %v6914 = vpop.permute.xlu0 %6913
    %6915 = vrot.lane.b32.xlu0 %v6336, 56
    %v6916 = vpop.permute.xlu0 %6915
    %6917 = vrot.lane.b32.xlu0 %v6337, 56
    %v6918 = vpop.permute.xlu0 %6917
    %6919 = vrot.lane.b32.xlu0 %v6338, 56
    %v6920 = vpop.permute.xlu0 %6919
    %6921 = vrot.lane.b32.xlu0 %v6695, 56
    %v6922 = vpop.permute.xlu0 %6921
    %vm6937 = vcmask 523712
    %6938 = vst.msk [vmem:[#allocation3] sm:$0xff] %vm6937, %v6896
    %6939 = vst.msk [vmem:[#allocation3 + $0x8] sm:$0xff] %vm6937, %v6898
    %6940 = vst.msk [vmem:[#allocation3 + $0x10] sm:$0xff] %vm6937, %v6900
    %6941 = vst.msk [vmem:[#allocation3 + $0x18] sm:$0xff] %vm6937, %v6902
    %6942 = vst.msk [vmem:[#allocation3 + $0x20] sm:$0xff] %vm6937, %v6904
    %6943 = vst.msk [vmem:[#allocation3 + $0x28] sm:$0xff] %vm6937, %v6906
    %6944 = vst.msk [vmem:[#allocation3 + $0x30] sm:$0xff] %vm6937, %v6908
    %6945 = vst.msk [vmem:[#allocation3 + $0x40] sm:$0xff] %vm6937, %v6910
    %6946 = vst.msk [vmem:[#allocation3 + $0x48] sm:$0xff] %vm6937, %v6912
    %6947 = vst.msk [vmem:[#allocation3 + $0x50] sm:$0xff] %vm6937, %v6914
    %6948 = vst.msk [vmem:[#allocation3 + $0x58] sm:$0xff] %vm6937, %v6916
    %6949 = vst.msk [vmem:[#allocation3 + $0x60] sm:$0xff] %vm6937, %v6918
    %6950 = vst.msk [vmem:[#allocation3 + $0x68] sm:$0xff] %vm6937, %v6920
    %6951 = vst.msk [vmem:[#allocation3 + $0x70] sm:$0xff] %vm6937, %v6922
    %6952 = vrot.lane.b32.xlu0 %v6407, 64
    %v6953 = vpop.permute.xlu0 %6952
    %6954 = vrot.lane.b32.xlu0 %v6413, 64
    %v6955 = vpop.permute.xlu0 %6954
    %6956 = vrot.lane.b32.xlu0 %v6419, 64
    %v6957 = vpop.permute.xlu0 %6956
    %6958 = vrot.lane.b32.xlu0 %v6425, 64
    %v6959 = vpop.permute.xlu0 %6958
    %6960 = vrot.lane.b32.xlu0 %v6431, 64
    %v6961 = vpop.permute.xlu0 %6960
    %6962 = vrot.lane.b32.xlu0 %v6437, 64
    %v6963 = vpop.permute.xlu0 %6962
    %6964 = vrot.lane.b32.xlu0 %v6766, 64
    %v6965 = vpop.permute.xlu0 %6964
    %6966 = vrot.lane.b32.xlu0 %v6449, 64
    %v6967 = vpop.permute.xlu0 %6966
    %6968 = vrot.lane.b32.xlu0 %v6455, 64
    %v6969 = vpop.permute.xlu0 %6968
    %6970 = vrot.lane.b32.xlu0 %v6461, 64
    %v6971 = vpop.permute.xlu0 %6970
    %6972 = vrot.lane.b32.xlu0 %v6467, 64
    %v6973 = vpop.permute.xlu0 %6972
    %6974 = vrot.lane.b32.xlu0 %v6473, 64
    %v6975 = vpop.permute.xlu0 %6974
    %6976 = vrot.lane.b32.xlu0 %v6479, 64
    %v6977 = vpop.permute.xlu0 %6976
    %6978 = vrot.lane.b32.xlu0 %v6772, 64
    %v6979 = vpop.permute.xlu0 %6978
    %vm6994 = vcmask 588288
    %6995 = vst.msk [vmem:[#allocation3] sm:$0x7f] %vm6994, %v6953
    %6996 = vst.msk [vmem:[#allocation3 + $0x8] sm:$0x7f] %vm6994, %v6955
    %6997 = vst.msk [vmem:[#allocation3 + $0x10] sm:$0x7f] %vm6994, %v6957
    %6998 = vst.msk [vmem:[#allocation3 + $0x18] sm:$0x7f] %vm6994, %v6959
    %6999 = vst.msk [vmem:[#allocation3 + $0x20] sm:$0x7f] %vm6994, %v6961
    %7000 = vst.msk [vmem:[#allocation3 + $0x28] sm:$0x7f] %vm6994, %v6963
    %7001 = vst.msk [vmem:[#allocation3 + $0x30] sm:$0x7f] %vm6994, %v6965
    %7002 = vst.msk [vmem:[#allocation3 + $0x40] sm:$0x7f] %vm6994, %v6967
    %7003 = vst.msk [vmem:[#allocation3 + $0x48] sm:$0x7f] %vm6994, %v6969
    %7004 = vst.msk [vmem:[#allocation3 + $0x50] sm:$0x7f] %vm6994, %v6971
    %7005 = vst.msk [vmem:[#allocation3 + $0x58] sm:$0x7f] %vm6994, %v6973
    %7006 = vst.msk [vmem:[#allocation3 + $0x60] sm:$0x7f] %vm6994, %v6975
    %7007 = vst.msk [vmem:[#allocation3 + $0x68] sm:$0x7f] %vm6994, %v6977
    %7008 = vst.msk [vmem:[#allocation3 + $0x70] sm:$0x7f] %vm6994, %v6979
    %v7009 = vld [vmem:[#allocation3] sm:$0xff]
    %v7010 = vld [vmem:[#allocation3 + $0x8] sm:$0xff]
    %v7011 = vld [vmem:[#allocation3 + $0x10] sm:$0xff]
    %v7012 = vld [vmem:[#allocation3 + $0x18] sm:$0xff]
    %v7013 = vld [vmem:[#allocation3 + $0x20] sm:$0xff]
    %v7014 = vld [vmem:[#allocation3 + $0x28] sm:$0xff]
    %v7015 = vld [vmem:[#allocation3 + $0x30] sm:$0xff]
    %v7016 = vld [vmem:[#allocation3 + $0x38] sm:$0xff]
    %v7017 = vld [vmem:[#allocation3 + $0x40] sm:$0xff]
    %v7018 = vld [vmem:[#allocation3 + $0x48] sm:$0xff]
    %v7019 = vld [vmem:[#allocation3 + $0x50] sm:$0xff]
    %v7020 = vld [vmem:[#allocation3 + $0x58] sm:$0xff]
    %v7021 = vld [vmem:[#allocation3 + $0x60] sm:$0xff]
    %v7022 = vld [vmem:[#allocation3 + $0x68] sm:$0xff]
    %v7023 = vld [vmem:[#allocation3 + $0x70] sm:$0xff]
    %v7024 = vld [vmem:[#allocation3 + $0x78] sm:$0xff]
    %v7025 = vld [vmem:[%s2] sm:$0xff]
    %v7026 = vld [vmem:[%s2 + $0x8] sm:$0xff]
    %v7027 = vld [vmem:[%s2 + $0x10] sm:$0xff]
    %v7028 = vld [vmem:[%s2 + $0x18] sm:$0xff]
    %v7029 = vld [vmem:[%s2 + $0x20] sm:$0xff]
    %v7030 = vld [vmem:[%s2 + $0x28] sm:$0xff]
    %v7031 = vld [vmem:[%s2 + $0x30] sm:$0xff]
    %v7032 = vld [vmem:[%s2 + $0x38] sm:$0xff]
    %v7033 = vld [vmem:[%s2 + $0x40] sm:$0xff]
    %v7034 = vld [vmem:[%s7] sm:$0x1]
    %v7036 = vlaneseq
    %v7037 = vshrl.u32 %v7036, 7
    %v7038 = vsub.s32 0, %v7037
    %v7039 = vrot.slane %v7034, %v7038
    %v7042 = vsel %vm5627, %v7009, 0
    %v7045 = vsel %vm5627, %v7010, 0
    %v7048 = vsel %vm5627, %v7011, 0
    %v7051 = vsel %vm5627, %v7012, 0
    %v7054 = vsel %vm5627, %v7013, 0
    %v7057 = vsel %vm5627, %v7014, 0
    %v7060 = vsel %vm5627, %v7015, 0
    %v7063 = vsel %vm5627, %v7016, 0
    %v7066 = vsel %vm5627, %v7017, 0
    %v7069 = vsel %vm5627, %v7018, 0
    %v7072 = vsel %vm5627, %v7019, 0
    %v7075 = vsel %vm5627, %v7020, 0
    %v7078 = vsel %vm5627, %v7021, 0
    %v7081 = vsel %vm5627, %v7022, 0
    %v7084 = vsel %vm5627, %v7023, 0
    %v7087 = vsel %vm5627, %v7024, 0
    %7089 = vmatprep.subr.mxu0 0.0
    %7090 = vmatpush1.msra.mxu0 %v7025
    %7091 = vmatprep.subr.mxu0 0.0
    %7092 = vmatpush1.msra.mxu0 %v7026
    %7093 = vmatprep.subr.mxu0 0.0
    %7094 = vmatpush1.msra.mxu0 %v7027
    %7095 = vmatprep.subr.mxu0 0.0
    %7096 = vmatpush1.msra.mxu0 %v7028
    %7097 = vmatprep.subr.mxu0 0.0
    %7098 = vmatpush1.msra.mxu0 %v7029
    %7099 = vmatprep.subr.mxu0 0.0
    %7100 = vmatpush1.msra.mxu0 %v7030
    %7101 = vmatprep.subr.mxu0 0.0
    %7102 = vmatpush1.msra.mxu0 %v7031
    %7103 = vmatprep.subr.mxu0 0.0
    %7104 = vmatpush1.msra.mxu0 %v7032
    %7105 = vmatprep.subr.mxu0 0.0
    %7106 = vmatpush1.msra.mxu0 %v7033
    %7107 = vmatprep.subr.mxu0 0.0
    %7108 = vmatpush1.msra.mxu0 0.0
    %7109 = vmatprep.subr.mxu0 0.0
    %7110 = vmatpush1.msra.mxu0 0.0
    %7111 = vmatprep.subr.mxu0 0.0
    %7112 = vmatpush1.msra.mxu0 0.0
    %7113 = vmatprep.subr.mxu0 0.0
    %7114 = vmatpush1.msra.mxu0 0.0
    %7115 = vmatprep.subr.mxu0 0.0
    %7116 = vmatpush1.msra.mxu0 0.0
    %7117 = vmatprep.subr.mxu0 0.0
    %7118 = vmatpush1.msra.mxu0 0.0
    %7119 = vmatprep.subr.mxu0 0.0
    %7120 = vmatpush1.msra.mxu0 0.0
    %7121 = vmatprep.subr.mxu0 0.0
    %7122 = vmatpush1.msra.mxu0 0.0
    %7123 = vmatprep.subr.mxu0 0.0
    %7124 = vmatpush1.msra.mxu0 0.0
    %7125 = vmatprep.subr.mxu0 0.0
    %7126 = vmatpush1.msra.mxu0 0.0
    %7127 = vmatprep.subr.mxu0 0.0
    %7128 = vmatpush1.msra.mxu0 0.0
    %7129 = vmatprep.subr.mxu0 0.0
    %7130 = vmatpush1.msra.mxu0 0.0
    %7131 = vmatprep.subr.mxu0 0.0
    %7132 = vmatpush1.msra.mxu0 0.0
    %7133 = vmatprep.subr.mxu0 0.0
    %7134 = vmatpush1.msra.mxu0 0.0
    %7135 = vmatprep.subr.mxu0 0.0
    %7136 = vmatpush1.msra.mxu0 0.0
    %7137 = vmatprep.subr.mxu0 0.0
    %7138 = vmatpush1.msra.mxu0 0.0
    %7139 = vmatprep.subr.mxu0 0.0
    %7140 = vmatpush1.msra.mxu0 0.0
    %7141 = vmatprep.subr.mxu0 0.0
    %7142 = vmatpush1.msra.mxu0 0.0
    %7143 = vmatprep.subr.mxu0 0.0
    %7144 = vmatpush1.msra.mxu0 0.0
    %7145 = vmatprep.subr.mxu0 0.0
    %7146 = vmatpush1.msra.mxu0 0.0
    %7147 = vmatprep.subr.mxu0 0.0
    %7148 = vmatpush1.msra.mxu0 0.0
    %7149 = vmatprep.subr.mxu0 0.0
    %7150 = vmatpush1.msra.mxu0 0.0
    %7151 = vmatprep.subr.mxu0 0.0
    %7152 = vmatpush1.msra.mxu0 0.0
    %7153 = vmatprep.mubr.f32.mxu0 0.0
    %7154 = vmatmul.mubr.f32.gmra.mrb[0].mxu0 %v7042
    %v7155 = vpop.f32.mrb[0].mxu0
    %v7156 = vadd.f32 %v7039, %v7155
    %v7157 = vpop.f32.mrb[0].mxu0
    %7158 = vmatprep.mubr.f32.mxu0 0.0
    %7159 = vmatmul.mubr.f32.gmra.mrb[0].mxu0 %v7045
    %v7160 = vpop.f32.mrb[0].mxu0
    %v7161 = vadd.f32 %v7039, %v7160
    %v7162 = vpop.f32.mrb[0].mxu0
    %7163 = vmatprep.mubr.f32.mxu0 0.0
    %7164 = vmatmul.mubr.f32.gmra.mrb[0].mxu0 %v7048
    %v7165 = vpop.f32.mrb[0].mxu0
    %v7166 = vadd.f32 %v7039, %v7165
    %v7167 = vpop.f32.mrb[0].mxu0
    %7168 = vmatprep.mubr.f32.mxu0 0.0
    %7169 = vmatmul.mubr.f32.gmra.mrb[0].mxu0 %v7051
    %v7170 = vpop.f32.mrb[0].mxu0
    %v7171 = vadd.f32 %v7039, %v7170
    %v7172 = vpop.f32.mrb[0].mxu0
    %7173 = vmatprep.mubr.f32.mxu0 0.0
    %7174 = vmatmul.mubr.f32.gmra.mrb[0].mxu0 %v7054
    %v7175 = vpop.f32.mrb[0].mxu0
    %v7176 = vadd.f32 %v7039, %v7175
    %v7177 = vpop.f32.mrb[0].mxu0
    %7178 = vmatprep.mubr.f32.mxu0 0.0
    %7179 = vmatmul.mubr.f32.gmra.mrb[0].mxu0 %v7057
    %v7180 = vpop.f32.mrb[0].mxu0
    %v7181 = vadd.f32 %v7039, %v7180
    %v7182 = vpop.f32.mrb[0].mxu0
    %7183 = vmatprep.mubr.f32.mxu0 0.0
    %7184 = vmatmul.mubr.f32.gmra.mrb[0].mxu0 %v7060
    %v7185 = vpop.f32.mrb[0].mxu0
    %v7186 = vadd.f32 %v7039, %v7185
    %v7187 = vpop.f32.mrb[0].mxu0
    %7188 = vmatprep.mubr.f32.mxu0 0.0
    %7189 = vmatmul.mubr.f32.gmra.mrb[0].mxu0 %v7063
    %v7190 = vpop.f32.mrb[0].mxu0
    %v7191 = vadd.f32 %v7039, %v7190
    %v7192 = vpop.f32.mrb[0].mxu0
    %7193 = vmatprep.mubr.f32.mxu0 0.0
    %7194 = vmatmul.mubr.f32.gmra.mrb[0].mxu0 %v7066
    %v7195 = vpop.f32.mrb[0].mxu0
    %v7196 = vadd.f32 %v7039, %v7195
    %v7197 = vpop.f32.mrb[0].mxu0
    %7198 = vmatprep.mubr.f32.mxu0 0.0
    %7199 = vmatmul.mubr.f32.gmra.mrb[0].mxu0 %v7069
    %v7200 = vpop.f32.mrb[0].mxu0
    %v7201 = vadd.f32 %v7039, %v7200
    %v7202 = vpop.f32.mrb[0].mxu0
    %7203 = vmatprep.mubr.f32.mxu0 0.0
    %7204 = vmatmul.mubr.f32.gmra.mrb[0].mxu0 %v7072
    %v7205 = vpop.f32.mrb[0].mxu0
    %v7206 = vadd.f32 %v7039, %v7205
    %v7207 = vpop.f32.mrb[0].mxu0
    %7208 = vmatprep.mubr.f32.mxu0 0.0
    %7209 = vmatmul.mubr.f32.gmra.mrb[0].mxu0 %v7075
    %v7210 = vpop.f32.mrb[0].mxu0
    %v7211 = vadd.f32 %v7039, %v7210
    %v7212 = vpop.f32.mrb[0].mxu0
    %7213 = vmatprep.mubr.f32.mxu0 0.0
    %7214 = vmatmul.mubr.f32.gmra.mrb[0].mxu0 %v7078
    %v7215 = vpop.f32.mrb[0].mxu0
    %v7216 = vadd.f32 %v7039, %v7215
    %v7217 = vpop.f32.mrb[0].mxu0
    %7218 = vmatprep.mubr.f32.mxu0 0.0
    %7219 = vmatmul.mubr.f32.gmra.mrb[0].mxu0 %v7081
    %v7220 = vpop.f32.mrb[0].mxu0
    %v7221 = vadd.f32 %v7039, %v7220
    %v7222 = vpop.f32.mrb[0].mxu0
    %7223 = vmatprep.mubr.f32.mxu0 0.0
    %7224 = vmatmul.mubr.f32.gmra.mrb[0].mxu0 %v7084
    %v7225 = vpop.f32.mrb[0].mxu0
    %v7226 = vadd.f32 %v7039, %v7225
    %v7227 = vpop.f32.mrb[0].mxu0
    %7228 = vmatprep.mubr.f32.mxu0 0.0
    %7229 = vmatmul.mubr.f32.gmra.mrb[0].mxu0 %v7087
    %v7230 = vpop.f32.mrb[0].mxu0
    %v7231 = vadd.f32 %v7039, %v7230
    %v7232 = vpop.f32.mrb[0].mxu0
    %7233 = vdwg.mxu0
    %v7234 = vmul.f32 %v7156, 0.01
    %v7235 = vmul.f32 %v7161, 0.01
    %v7236 = vmul.f32 %v7166, 0.01
    %v7237 = vmul.f32 %v7171, 0.01
    %v7238 = vmul.f32 %v7176, 0.01
    %v7239 = vmul.f32 %v7181, 0.01
    %v7240 = vmul.f32 %v7186, 0.01
    %v7241 = vmul.f32 %v7191, 0.01
    %v7242 = vmul.f32 %v7196, 0.01
    %v7243 = vmul.f32 %v7201, 0.01
    %v7244 = vmul.f32 %v7206, 0.01
    %v7245 = vmul.f32 %v7211, 0.01
    %v7246 = vmul.f32 %v7216, 0.01
    %v7247 = vmul.f32 %v7221, 0.01
    %v7248 = vmul.f32 %v7226, 0.01
    %v7249 = vmul.f32 %v7231, 0.01
    %v7250 = vmax.f32 %v7156, %v7234
    %v7251 = vmax.f32 %v7161, %v7235
    %v7252 = vmax.f32 %v7166, %v7236
    %v7253 = vmax.f32 %v7171, %v7237
    %v7254 = vmax.f32 %v7176, %v7238
    %v7255 = vmax.f32 %v7181, %v7239
    %v7256 = vmax.f32 %v7186, %v7240
    %v7257 = vmax.f32 %v7191, %v7241
    %v7258 = vmax.f32 %v7196, %v7242
    %v7259 = vmax.f32 %v7201, %v7243
    %v7260 = vmax.f32 %v7206, %v7244
    %v7261 = vmax.f32 %v7211, %v7245
    %v7262 = vmax.f32 %v7216, %v7246
    %v7263 = vmax.f32 %v7221, %v7247
    %v7264 = vmax.f32 %v7226, %v7248
    %v7265 = vmax.f32 %v7231, %v7249
    %7266 = vst [vmem:[#allocation4] sm:$0xff] 0.0
    %vm7267 = vcmask 130048
    %7268 = vst.msk [vmem:[#allocation4 + $0x8] sm:$0xff] %vm7267, 0.0
    %7269 = vst [vmem:[#allocation4 + $0x10] sm:$0xff] 0.0
    %7270 = vst.msk [vmem:[#allocation4 + $0x18] sm:$0xff] %vm7267, 0.0
    %7271 = vst [vmem:[#allocation4 + $0x20] sm:$0xff] 0.0
    %7272 = vst.msk [vmem:[#allocation4 + $0x28] sm:$0xff] %vm7267, 0.0
    %7273 = vst [vmem:[#allocation4 + $0x30] sm:$0xff] 0.0
    %7274 = vst.msk [vmem:[#allocation4 + $0x38] sm:$0xff] %vm7267, 0.0
    %7275 = vst [vmem:[#allocation4 + $0x40] sm:$0xff] 0.0
    %7276 = vst.msk [vmem:[#allocation4 + $0x48] sm:$0xff] %vm7267, 0.0
    %7277 = vst [vmem:[#allocation4 + $0x50] sm:$0xff] 0.0
    %7278 = vst.msk [vmem:[#allocation4 + $0x58] sm:$0xff] %vm7267, 0.0
    %7279 = vst [vmem:[#allocation4 + $0x60] sm:$0xff] 0.0
    %7280 = vst.msk [vmem:[#allocation4 + $0x68] sm:$0xff] %vm7267, 0.0
    %7281 = vst [vmem:[#allocation4 + $0x70] sm:$0xff] 0.0
    %7282 = vst.msk [vmem:[#allocation4 + $0x78] sm:$0xff] %vm7267, 0.0
    %7283 = vst [vmem:[#allocation4 + $0x80] sm:$0xff] 0.0
    %7284 = vst.msk [vmem:[#allocation4 + $0x88] sm:$0xff] %vm7267, 0.0
    %7285 = vst [vmem:[#allocation4 + $0x90] sm:$0xff] 0.0
    %7286 = vst.msk [vmem:[#allocation4 + $0x98] sm:$0xff] %vm7267, 0.0
    %7287 = vst [vmem:[#allocation4 + $0xa0] sm:$0xff] 0.0
    %7288 = vst.msk [vmem:[#allocation4 + $0xa8] sm:$0xff] %vm7267, 0.0
    %7289 = vst [vmem:[#allocation4 + $0xb0] sm:$0xff] 0.0
    %7290 = vst.msk [vmem:[#allocation4 + $0xb8] sm:$0xff] %vm7267, 0.0
    %7291 = vst [vmem:[#allocation4 + $0xc0] sm:$0xff] 0.0
    %7292 = vst.msk [vmem:[#allocation4 + $0xc8] sm:$0xff] %vm7267, 0.0
    %7293 = vst [vmem:[#allocation4 + $0xd0] sm:$0xff] 0.0
    %7294 = vst.msk [vmem:[#allocation4 + $0xd8] sm:$0xff] %vm7267, 0.0
    %7295 = vst [vmem:[#allocation4 + $0xe0] sm:$0xff] 0.0
    %7296 = vst.msk [vmem:[#allocation4 + $0xe8] sm:$0xff] %vm7267, 0.0
    %7297 = vst [vmem:[#allocation4 + $0xf0] sm:$0xff] 0.0
    %7298 = vst.msk [vmem:[#allocation4 + $0xf8] sm:$0xff] %vm7267, 0.0
    %v7313 = vrot.slane %v7250, 7
    %v7314 = vrot.slane %v7251, 7
    %v7315 = vrot.slane %v7252, 7
    %v7316 = vrot.slane %v7253, 7
    %v7317 = vrot.slane %v7254, 7
    %v7318 = vrot.slane %v7255, 7
    %v7319 = vrot.slane %v7256, 7
    %v7320 = vrot.slane %v7258, 7
    %v7321 = vrot.slane %v7259, 7
    %v7322 = vrot.slane %v7260, 7
    %v7323 = vrot.slane %v7261, 7
    %v7324 = vrot.slane %v7262, 7
    %v7325 = vrot.slane %v7263, 7
    %v7326 = vrot.slane %v7264, 7
    %s7341 = scalar_lea.vmem [#allocation4], 16
    %vm7342 = vcmask 130049
    %7343 = vst.msk [vmem:[%s7341] sm:$0xfe] %vm7342, %v7313
    %7344 = vst.msk [vmem:[%s7341 + $0x10] sm:$0xfe] %vm7342, %v7314
    %7345 = vst.msk [vmem:[%s7341 + $0x20] sm:$0xfe] %vm7342, %v7315
    %7346 = vst.msk [vmem:[%s7341 + $0x30] sm:$0xfe] %vm7342, %v7316
    %7347 = vst.msk [vmem:[%s7341 + $0x40] sm:$0xfe] %vm7342, %v7317
    %7348 = vst.msk [vmem:[%s7341 + $0x50] sm:$0xfe] %vm7342, %v7318
    %7349 = vst.msk [vmem:[%s7341 + $0x60] sm:$0xfe] %vm7342, %v7319
    %7350 = vst.msk [vmem:[%s7341 + $0x80] sm:$0xfe] %vm7342, %v7320
    %7351 = vst.msk [vmem:[%s7341 + $0x90] sm:$0xfe] %vm7342, %v7321
    %7352 = vst.msk [vmem:[%s7341 + $0xa0] sm:$0xfe] %vm7342, %v7322
    %7353 = vst.msk [vmem:[%s7341 + $0xb0] sm:$0xfe] %vm7342, %v7323
    %7354 = vst.msk [vmem:[%s7341 + $0xc0] sm:$0xfe] %vm7342, %v7324
    %7355 = vst.msk [vmem:[%s7341 + $0xd0] sm:$0xfe] %vm7342, %v7325
    %7356 = vst.msk [vmem:[%s7341 + $0xe0] sm:$0xfe] %vm7342, %v7326
    %7357 = vrot.lane.b32.xlu0 %v7250, 16
    %v7358 = vpop.permute.xlu0 %7357
    %7359 = vrot.lane.b32.xlu0 %v7251, 16
    %v7360 = vpop.permute.xlu0 %7359
    %7361 = vrot.lane.b32.xlu0 %v7252, 16
    %v7362 = vpop.permute.xlu0 %7361
    %7363 = vrot.lane.b32.xlu0 %v7253, 16
    %v7364 = vpop.permute.xlu0 %7363
    %7365 = vrot.lane.b32.xlu0 %v7254, 16
    %v7366 = vpop.permute.xlu0 %7365
    %7367 = vrot.lane.b32.xlu0 %v7255, 16
    %v7368 = vpop.permute.xlu0 %7367
    %7369 = vrot.lane.b32.xlu0 %v7256, 16
    %v7370 = vpop.permute.xlu0 %7369
    %7371 = vrot.lane.b32.xlu0 %v7258, 16
    %v7372 = vpop.permute.xlu0 %7371
    %7373 = vrot.lane.b32.xlu0 %v7259, 16
    %v7374 = vpop.permute.xlu0 %7373
    %7375 = vrot.lane.b32.xlu0 %v7260, 16
    %v7376 = vpop.permute.xlu0 %7375
    %7377 = vrot.lane.b32.xlu0 %v7261, 16
    %v7378 = vpop.permute.xlu0 %7377
    %7379 = vrot.lane.b32.xlu0 %v7262, 16
    %v7380 = vpop.permute.xlu0 %7379
    %7381 = vrot.lane.b32.xlu0 %v7263, 16
    %v7382 = vpop.permute.xlu0 %7381
    %7383 = vrot.lane.b32.xlu0 %v7264, 16
    %v7384 = vpop.permute.xlu0 %7383
    %vm7399 = vcmask 261248
    %7400 = vst.msk [vmem:[%s7341] sm:$0xff] %vm7399, %v7358
    %7401 = vst.msk [vmem:[%s7341 + $0x10] sm:$0xff] %vm7399, %v7360
    %7402 = vst.msk [vmem:[%s7341 + $0x20] sm:$0xff] %vm7399, %v7362
    %7403 = vst.msk [vmem:[%s7341 + $0x30] sm:$0xff] %vm7399, %v7364
    %7404 = vst.msk [vmem:[%s7341 + $0x40] sm:$0xff] %vm7399, %v7366
    %7405 = vst.msk [vmem:[%s7341 + $0x50] sm:$0xff] %vm7399, %v7368
    %7406 = vst.msk [vmem:[%s7341 + $0x60] sm:$0xff] %vm7399, %v7370
    %7407 = vst.msk [vmem:[%s7341 + $0x80] sm:$0xff] %vm7399, %v7372
    %7408 = vst.msk [vmem:[%s7341 + $0x90] sm:$0xff] %vm7399, %v7374
    %7409 = vst.msk [vmem:[%s7341 + $0xa0] sm:$0xff] %vm7399, %v7376
    %7410 = vst.msk [vmem:[%s7341 + $0xb0] sm:$0xff] %vm7399, %v7378
    %7411 = vst.msk [vmem:[%s7341 + $0xc0] sm:$0xff] %vm7399, %v7380
    %7412 = vst.msk [vmem:[%s7341 + $0xd0] sm:$0xff] %vm7399, %v7382
    %7413 = vst.msk [vmem:[%s7341 + $0xe0] sm:$0xff] %vm7399, %v7384
    %v7414 = vrot.slane %v7250, 1
    %v7415 = vrot.slane %v7251, 1
    %v7416 = vrot.slane %v7252, 1
    %v7417 = vrot.slane %v7253, 1
    %v7418 = vrot.slane %v7254, 1
    %v7419 = vrot.slane %v7255, 1
    %v7420 = vrot.slane %v7256, 1
    %v7421 = vrot.slane %v7258, 1
    %v7422 = vrot.slane %v7259, 1
    %v7423 = vrot.slane %v7260, 1
    %v7424 = vrot.slane %v7261, 1
    %v7425 = vrot.slane %v7262, 1
    %v7426 = vrot.slane %v7263, 1
    %v7427 = vrot.slane %v7264, 1
    %7428 = vrot.lane.b32.xlu0 %v7414, 32
    %v7429 = vpop.permute.xlu0 %7428
    %7430 = vrot.lane.b32.xlu0 %v7415, 32
    %v7431 = vpop.permute.xlu0 %7430
    %7432 = vrot.lane.b32.xlu0 %v7416, 32
    %v7433 = vpop.permute.xlu0 %7432
    %7434 = vrot.lane.b32.xlu0 %v7417, 32
    %v7435 = vpop.permute.xlu0 %7434
    %7436 = vrot.lane.b32.xlu0 %v7418, 32
    %v7437 = vpop.permute.xlu0 %7436
    %7438 = vrot.lane.b32.xlu0 %v7419, 32
    %v7439 = vpop.permute.xlu0 %7438
    %7440 = vrot.lane.b32.xlu0 %v7420, 32
    %v7441 = vpop.permute.xlu0 %7440
    %7442 = vrot.lane.b32.xlu0 %v7421, 32
    %v7443 = vpop.permute.xlu0 %7442
    %7444 = vrot.lane.b32.xlu0 %v7422, 32
    %v7445 = vpop.permute.xlu0 %7444
    %7446 = vrot.lane.b32.xlu0 %v7423, 32
    %v7447 = vpop.permute.xlu0 %7446
    %7448 = vrot.lane.b32.xlu0 %v7424, 32
    %v7449 = vpop.permute.xlu0 %7448
    %7450 = vrot.lane.b32.xlu0 %v7425, 32
    %v7451 = vpop.permute.xlu0 %7450
    %7452 = vrot.lane.b32.xlu0 %v7426, 32
    %v7453 = vpop.permute.xlu0 %7452
    %7454 = vrot.lane.b32.xlu0 %v7427, 32
    %v7455 = vpop.permute.xlu0 %7454
    %vm7470 = vcmask 391424
    %7471 = vst.msk [vmem:[%s7341] sm:$0x7f] %vm7470, %v7429
    %7472 = vst.msk [vmem:[%s7341 + $0x10] sm:$0x7f] %vm7470, %v7431
    %7473 = vst.msk [vmem:[%s7341 + $0x20] sm:$0x7f] %vm7470, %v7433
    %7474 = vst.msk [vmem:[%s7341 + $0x30] sm:$0x7f] %vm7470, %v7435
    %7475 = vst.msk [vmem:[%s7341 + $0x40] sm:$0x7f] %vm7470, %v7437
    %7476 = vst.msk [vmem:[%s7341 + $0x50] sm:$0x7f] %vm7470, %v7439
    %7477 = vst.msk [vmem:[%s7341 + $0x60] sm:$0x7f] %vm7470, %v7441
    %7478 = vst.msk [vmem:[%s7341 + $0x80] sm:$0x7f] %vm7470, %v7443
    %7479 = vst.msk [vmem:[%s7341 + $0x90] sm:$0x7f] %vm7470, %v7445
    %7480 = vst.msk [vmem:[%s7341 + $0xa0] sm:$0x7f] %vm7470, %v7447
    %7481 = vst.msk [vmem:[%s7341 + $0xb0] sm:$0x7f] %vm7470, %v7449
    %7482 = vst.msk [vmem:[%s7341 + $0xc0] sm:$0x7f] %vm7470, %v7451
    %7483 = vst.msk [vmem:[%s7341 + $0xd0] sm:$0x7f] %vm7470, %v7453
    %7484 = vst.msk [vmem:[%s7341 + $0xe0] sm:$0x7f] %vm7470, %v7455
    %v7487 = vrot.slane %v7257, 7
    %v7488 = vrot.slane %v7265, 7
    %7489 = vrot.lane.b32.xlu0 %v7313, 48
    %v7490 = vpop.permute.xlu0 %7489
    %7491 = vrot.lane.b32.xlu0 %v7314, 48
    %v7492 = vpop.permute.xlu0 %7491
    %7493 = vrot.lane.b32.xlu0 %v7315, 48
    %v7494 = vpop.permute.xlu0 %7493
    %7495 = vrot.lane.b32.xlu0 %v7316, 48
    %v7496 = vpop.permute.xlu0 %7495
    %7497 = vrot.lane.b32.xlu0 %v7317, 48
    %v7498 = vpop.permute.xlu0 %7497
    %7499 = vrot.lane.b32.xlu0 %v7318, 48
    %v7500 = vpop.permute.xlu0 %7499
    %7501 = vrot.lane.b32.xlu0 %v7319, 48
    %v7502 = vpop.permute.xlu0 %7501
    %7503 = vrot.lane.b32.xlu0 %v7487, 48
    %v7504 = vpop.permute.xlu0 %7503
    %7505 = vrot.lane.b32.xlu0 %v7320, 48
    %v7506 = vpop.permute.xlu0 %7505
    %7507 = vrot.lane.b32.xlu0 %v7321, 48
    %v7508 = vpop.permute.xlu0 %7507
    %7509 = vrot.lane.b32.xlu0 %v7322, 48
    %v7510 = vpop.permute.xlu0 %7509
    %7511 = vrot.lane.b32.xlu0 %v7323, 48
    %v7512 = vpop.permute.xlu0 %7511
    %7513 = vrot.lane.b32.xlu0 %v7324, 48
    %v7514 = vpop.permute.xlu0 %7513
    %7515 = vrot.lane.b32.xlu0 %v7325, 48
    %v7516 = vpop.permute.xlu0 %7515
    %7517 = vrot.lane.b32.xlu0 %v7326, 48
    %v7518 = vpop.permute.xlu0 %7517
    %7519 = vrot.lane.b32.xlu0 %v7488, 48
    %v7520 = vpop.permute.xlu0 %7519
    %vm7537 = vcmask 523649
    %7538 = vst.msk [vmem:[#allocation4] sm:$0xfe] %vm7537, %v7490
    %7539 = vst.msk [vmem:[#allocation4 + $0x10] sm:$0xfe] %vm7537, %v7492
    %7540 = vst.msk [vmem:[#allocation4 + $0x20] sm:$0xfe] %vm7537, %v7494
    %7541 = vst.msk [vmem:[#allocation4 + $0x30] sm:$0xfe] %vm7537, %v7496
    %7542 = vst.msk [vmem:[#allocation4 + $0x40] sm:$0xfe] %vm7537, %v7498
    %7543 = vst.msk [vmem:[#allocation4 + $0x50] sm:$0xfe] %vm7537, %v7500
    %7544 = vst.msk [vmem:[#allocation4 + $0x60] sm:$0xfe] %vm7537, %v7502
    %7545 = vst.msk [vmem:[#allocation4 + $0x70] sm:$0xfe] %vm7537, %v7504
    %7546 = vst.msk [vmem:[#allocation4 + $0x80] sm:$0xfe] %vm7537, %v7506
    %7547 = vst.msk [vmem:[#allocation4 + $0x90] sm:$0xfe] %vm7537, %v7508
    %7548 = vst.msk [vmem:[#allocation4 + $0xa0] sm:$0xfe] %vm7537, %v7510
    %7549 = vst.msk [vmem:[#allocation4 + $0xb0] sm:$0xfe] %vm7537, %v7512
    %7550 = vst.msk [vmem:[#allocation4 + $0xc0] sm:$0xfe] %vm7537, %v7514
    %7551 = vst.msk [vmem:[#allocation4 + $0xd0] sm:$0xfe] %vm7537, %v7516
    %7552 = vst.msk [vmem:[#allocation4 + $0xe0] sm:$0xfe] %vm7537, %v7518
    %7553 = vst.msk [vmem:[#allocation4 + $0xf0] sm:$0xfe] %vm7537, %v7520
    %7554 = vrot.lane.b32.xlu0 %v7250, 64
    %v7555 = vpop.permute.xlu0 %7554
    %7556 = vrot.lane.b32.xlu0 %v7251, 64
    %v7557 = vpop.permute.xlu0 %7556
    %7558 = vrot.lane.b32.xlu0 %v7252, 64
    %v7559 = vpop.permute.xlu0 %7558
    %7560 = vrot.lane.b32.xlu0 %v7253, 64
    %v7561 = vpop.permute.xlu0 %7560
    %7562 = vrot.lane.b32.xlu0 %v7254, 64
    %v7563 = vpop.permute.xlu0 %7562
    %7564 = vrot.lane.b32.xlu0 %v7255, 64
    %v7565 = vpop.permute.xlu0 %7564
    %7566 = vrot.lane.b32.xlu0 %v7256, 64
    %v7567 = vpop.permute.xlu0 %7566
    %7568 = vrot.lane.b32.xlu0 %v7257, 64
    %v7569 = vpop.permute.xlu0 %7568
    %7570 = vrot.lane.b32.xlu0 %v7258, 64
    %v7571 = vpop.permute.xlu0 %7570
    %7572 = vrot.lane.b32.xlu0 %v7259, 64
    %v7573 = vpop.permute.xlu0 %7572
    %7574 = vrot.lane.b32.xlu0 %v7260, 64
    %v7575 = vpop.permute.xlu0 %7574
    %7576 = vrot.lane.b32.xlu0 %v7261, 64
    %v7577 = vpop.permute.xlu0 %7576
    %7578 = vrot.lane.b32.xlu0 %v7262, 64
    %v7579 = vpop.permute.xlu0 %7578
    %7580 = vrot.lane.b32.xlu0 %v7263, 64
    %v7581 = vpop.permute.xlu0 %7580
    %7582 = vrot.lane.b32.xlu0 %v7264, 64
    %v7583 = vpop.permute.xlu0 %7582
    %7584 = vrot.lane.b32.xlu0 %v7265, 64
    %v7585 = vpop.permute.xlu0 %7584
    %vm7602 = vcmask 654848
    %7603 = vst.msk [vmem:[#allocation4] sm:$0xff] %vm7602, %v7555
    %7604 = vst.msk [vmem:[#allocation4 + $0x10] sm:$0xff] %vm7602, %v7557
    %7605 = vst.msk [vmem:[#allocation4 + $0x20] sm:$0xff] %vm7602, %v7559
    %7606 = vst.msk [vmem:[#allocation4 + $0x30] sm:$0xff] %vm7602, %v7561
    %7607 = vst.msk [vmem:[#allocation4 + $0x40] sm:$0xff] %vm7602, %v7563
    %7608 = vst.msk [vmem:[#allocation4 + $0x50] sm:$0xff] %vm7602, %v7565
    %7609 = vst.msk [vmem:[#allocation4 + $0x60] sm:$0xff] %vm7602, %v7567
    %7610 = vst.msk [vmem:[#allocation4 + $0x70] sm:$0xff] %vm7602, %v7569
    %7611 = vst.msk [vmem:[#allocation4 + $0x80] sm:$0xff] %vm7602, %v7571
    %7612 = vst.msk [vmem:[#allocation4 + $0x90] sm:$0xff] %vm7602, %v7573
    %7613 = vst.msk [vmem:[#allocation4 + $0xa0] sm:$0xff] %vm7602, %v7575
    %7614 = vst.msk [vmem:[#allocation4 + $0xb0] sm:$0xff] %vm7602, %v7577
    %7615 = vst.msk [vmem:[#allocation4 + $0xc0] sm:$0xff] %vm7602, %v7579
    %7616 = vst.msk [vmem:[#allocation4 + $0xd0] sm:$0xff] %vm7602, %v7581
    %7617 = vst.msk [vmem:[#allocation4 + $0xe0] sm:$0xff] %vm7602, %v7583
    %7618 = vst.msk [vmem:[#allocation4 + $0xf0] sm:$0xff] %vm7602, %v7585
    %v7619 = vrot.slane %v7257, 1
    %v7620 = vrot.slane %v7265, 1
    %7621 = vrot.lane.b32.xlu0 %v7414, 80
    %v7622 = vpop.permute.xlu0 %7621
    %7623 = vrot.lane.b32.xlu0 %v7415, 80
    %v7624 = vpop.permute.xlu0 %7623
    %7625 = vrot.lane.b32.xlu0 %v7416, 80
    %v7626 = vpop.permute.xlu0 %7625
    %7627 = vrot.lane.b32.xlu0 %v7417, 80
    %v7628 = vpop.permute.xlu0 %7627
    %7629 = vrot.lane.b32.xlu0 %v7418, 80
    %v7630 = vpop.permute.xlu0 %7629
    %7631 = vrot.lane.b32.xlu0 %v7419, 80
    %v7632 = vpop.permute.xlu0 %7631
    %7633 = vrot.lane.b32.xlu0 %v7420, 80
    %v7634 = vpop.permute.xlu0 %7633
    %7635 = vrot.lane.b32.xlu0 %v7619, 80
    %v7636 = vpop.permute.xlu0 %7635
    %7637 = vrot.lane.b32.xlu0 %v7421, 80
    %v7638 = vpop.permute.xlu0 %7637
    %7639 = vrot.lane.b32.xlu0 %v7422, 80
    %v7640 = vpop.permute.xlu0 %7639
    %7641 = vrot.lane.b32.xlu0 %v7423, 80
    %v7642 = vpop.permute.xlu0 %7641
    %7643 = vrot.lane.b32.xlu0 %v7424, 80
    %v7644 = vpop.permute.xlu0 %7643
    %7645 = vrot.lane.b32.xlu0 %v7425, 80
    %v7646 = vpop.permute.xlu0 %7645
    %7647 = vrot.lane.b32.xlu0 %v7426, 80
    %v7648 = vpop.permute.xlu0 %7647
    %7649 = vrot.lane.b32.xlu0 %v7427, 80
    %v7650 = vpop.permute.xlu0 %7649
    %7651 = vrot.lane.b32.xlu0 %v7620, 80
    %v7652 = vpop.permute.xlu0 %7651
    %vm7669 = vcmask 785024
    %7670 = vst.msk [vmem:[#allocation4] sm:$0x7f] %vm7669, %v7622
    %7671 = vst.msk [vmem:[#allocation4 + $0x10] sm:$0x7f] %vm7669, %v7624
    %7672 = vst.msk [vmem:[#allocation4 + $0x20] sm:$0x7f] %vm7669, %v7626
    %7673 = vst.msk [vmem:[#allocation4 + $0x30] sm:$0x7f] %vm7669, %v7628
    %7674 = vst.msk [vmem:[#allocation4 + $0x40] sm:$0x7f] %vm7669, %v7630
    %7675 = vst.msk [vmem:[#allocation4 + $0x50] sm:$0x7f] %vm7669, %v7632
    %7676 = vst.msk [vmem:[#allocation4 + $0x60] sm:$0x7f] %vm7669, %v7634
    %7677 = vst.msk [vmem:[#allocation4 + $0x70] sm:$0x7f] %vm7669, %v7636
    %7678 = vst.msk [vmem:[#allocation4 + $0x80] sm:$0x7f] %vm7669, %v7638
    %7679 = vst.msk [vmem:[#allocation4 + $0x90] sm:$0x7f] %vm7669, %v7640
    %7680 = vst.msk [vmem:[#allocation4 + $0xa0] sm:$0x7f] %vm7669, %v7642
    %7681 = vst.msk [vmem:[#allocation4 + $0xb0] sm:$0x7f] %vm7669, %v7644
    %7682 = vst.msk [vmem:[#allocation4 + $0xc0] sm:$0x7f] %vm7669, %v7646
    %7683 = vst.msk [vmem:[#allocation4 + $0xd0] sm:$0x7f] %vm7669, %v7648
    %7684 = vst.msk [vmem:[#allocation4 + $0xe0] sm:$0x7f] %vm7669, %v7650
    %7685 = vst.msk [vmem:[#allocation4 + $0xf0] sm:$0x7f] %vm7669, %v7652
    %7686 = vrot.lane.b32.xlu0 %v7314, 96
    %v7687 = vpop.permute.xlu0 %7686
    %7688 = vrot.lane.b32.xlu0 %v7315, 96
    %v7689 = vpop.permute.xlu0 %7688
    %7690 = vrot.lane.b32.xlu0 %v7316, 96
    %v7691 = vpop.permute.xlu0 %7690
    %7692 = vrot.lane.b32.xlu0 %v7317, 96
    %v7693 = vpop.permute.xlu0 %7692
    %7694 = vrot.lane.b32.xlu0 %v7318, 96
    %v7695 = vpop.permute.xlu0 %7694
    %7696 = vrot.lane.b32.xlu0 %v7319, 96
    %v7697 = vpop.permute.xlu0 %7696
    %7698 = vrot.lane.b32.xlu0 %v7487, 96
    %v7699 = vpop.permute.xlu0 %7698
    %7700 = vrot.lane.b32.xlu0 %v7321, 96
    %v7701 = vpop.permute.xlu0 %7700
    %7702 = vrot.lane.b32.xlu0 %v7322, 96
    %v7703 = vpop.permute.xlu0 %7702
    %7704 = vrot.lane.b32.xlu0 %v7323, 96
    %v7705 = vpop.permute.xlu0 %7704
    %7706 = vrot.lane.b32.xlu0 %v7324, 96
    %v7707 = vpop.permute.xlu0 %7706
    %7708 = vrot.lane.b32.xlu0 %v7325, 96
    %v7709 = vpop.permute.xlu0 %7708
    %7710 = vrot.lane.b32.xlu0 %v7326, 96
    %v7711 = vpop.permute.xlu0 %7710
    %7712 = vrot.lane.b32.xlu0 %v7488, 96
    %v7713 = vpop.permute.xlu0 %7712
    %vm7728 = vcmask 917249
    %7729 = vst.msk [vmem:[#allocation4] sm:$0xfe] %vm7728, %v7687
    %7730 = vst.msk [vmem:[#allocation4 + $0x10] sm:$0xfe] %vm7728, %v7689
    %7731 = vst.msk [vmem:[#allocation4 + $0x20] sm:$0xfe] %vm7728, %v7691
    %7732 = vst.msk [vmem:[#allocation4 + $0x30] sm:$0xfe] %vm7728, %v7693
    %7733 = vst.msk [vmem:[#allocation4 + $0x40] sm:$0xfe] %vm7728, %v7695
    %7734 = vst.msk [vmem:[#allocation4 + $0x50] sm:$0xfe] %vm7728, %v7697
    %7735 = vst.msk [vmem:[#allocation4 + $0x60] sm:$0xfe] %vm7728, %v7699
    %7736 = vst.msk [vmem:[#allocation4 + $0x80] sm:$0xfe] %vm7728, %v7701
    %7737 = vst.msk [vmem:[#allocation4 + $0x90] sm:$0xfe] %vm7728, %v7703
    %7738 = vst.msk [vmem:[#allocation4 + $0xa0] sm:$0xfe] %vm7728, %v7705
    %7739 = vst.msk [vmem:[#allocation4 + $0xb0] sm:$0xfe] %vm7728, %v7707
    %7740 = vst.msk [vmem:[#allocation4 + $0xc0] sm:$0xfe] %vm7728, %v7709
    %7741 = vst.msk [vmem:[#allocation4 + $0xd0] sm:$0xfe] %vm7728, %v7711
    %7742 = vst.msk [vmem:[#allocation4 + $0xe0] sm:$0xfe] %vm7728, %v7713
    %7743 = vrot.lane.b32.xlu0 %v7251, 112
    %v7744 = vpop.permute.xlu0 %7743
    %7745 = vrot.lane.b32.xlu0 %v7252, 112
    %v7746 = vpop.permute.xlu0 %7745
    %7747 = vrot.lane.b32.xlu0 %v7253, 112
    %v7748 = vpop.permute.xlu0 %7747
    %7749 = vrot.lane.b32.xlu0 %v7254, 112
    %v7750 = vpop.permute.xlu0 %7749
    %7751 = vrot.lane.b32.xlu0 %v7255, 112
    %v7752 = vpop.permute.xlu0 %7751
    %7753 = vrot.lane.b32.xlu0 %v7256, 112
    %v7754 = vpop.permute.xlu0 %7753
    %7755 = vrot.lane.b32.xlu0 %v7257, 112
    %v7756 = vpop.permute.xlu0 %7755
    %7757 = vrot.lane.b32.xlu0 %v7259, 112
    %v7758 = vpop.permute.xlu0 %7757
    %7759 = vrot.lane.b32.xlu0 %v7260, 112
    %v7760 = vpop.permute.xlu0 %7759
    %7761 = vrot.lane.b32.xlu0 %v7261, 112
    %v7762 = vpop.permute.xlu0 %7761
    %7763 = vrot.lane.b32.xlu0 %v7262, 112
    %v7764 = vpop.permute.xlu0 %7763
    %7765 = vrot.lane.b32.xlu0 %v7263, 112
    %v7766 = vpop.permute.xlu0 %7765
    %7767 = vrot.lane.b32.xlu0 %v7264, 112
    %v7768 = vpop.permute.xlu0 %7767
    %7769 = vrot.lane.b32.xlu0 %v7265, 112
    %v7770 = vpop.permute.xlu0 %7769
    %vm7785 = vcmask 1048448
    %7786 = vst.msk [vmem:[#allocation4] sm:$0xff] %vm7785, %v7744
    %7787 = vst.msk [vmem:[#allocation4 + $0x10] sm:$0xff] %vm7785, %v7746
    %7788 = vst.msk [vmem:[#allocation4 + $0x20] sm:$0xff] %vm7785, %v7748
    %7789 = vst.msk [vmem:[#allocation4 + $0x30] sm:$0xff] %vm7785, %v7750
    %7790 = vst.msk [vmem:[#allocation4 + $0x40] sm:$0xff] %vm7785, %v7752
    %7791 = vst.msk [vmem:[#allocation4 + $0x50] sm:$0xff] %vm7785, %v7754
    %7792 = vst.msk [vmem:[#allocation4 + $0x60] sm:$0xff] %vm7785, %v7756
    %7793 = vst.msk [vmem:[#allocation4 + $0x80] sm:$0xff] %vm7785, %v7758
    %7794 = vst.msk [vmem:[#allocation4 + $0x90] sm:$0xff] %vm7785, %v7760
    %7795 = vst.msk [vmem:[#allocation4 + $0xa0] sm:$0xff] %vm7785, %v7762
    %7796 = vst.msk [vmem:[#allocation4 + $0xb0] sm:$0xff] %vm7785, %v7764
    %7797 = vst.msk [vmem:[#allocation4 + $0xc0] sm:$0xff] %vm7785, %v7766
    %7798 = vst.msk [vmem:[#allocation4 + $0xd0] sm:$0xff] %vm7785, %v7768
    %7799 = vst.msk [vmem:[#allocation4 + $0xe0] sm:$0xff] %vm7785, %v7770
    %vm7814 = vcmask 129024
    %7815 = vst.msk [vmem:[#allocation4 + $0x8] sm:$0x7f] %vm7814, %v7415
    %7816 = vst.msk [vmem:[#allocation4 + $0x18] sm:$0x7f] %vm7814, %v7416
    %7817 = vst.msk [vmem:[#allocation4 + $0x28] sm:$0x7f] %vm7814, %v7417
    %7818 = vst.msk [vmem:[#allocation4 + $0x38] sm:$0x7f] %vm7814, %v7418
    %7819 = vst.msk [vmem:[#allocation4 + $0x48] sm:$0x7f] %vm7814, %v7419
    %7820 = vst.msk [vmem:[#allocation4 + $0x58] sm:$0x7f] %vm7814, %v7420
    %7821 = vst.msk [vmem:[#allocation4 + $0x68] sm:$0x7f] %vm7814, %v7619
    %7822 = vst.msk [vmem:[#allocation4 + $0x88] sm:$0x7f] %vm7814, %v7422
    %7823 = vst.msk [vmem:[#allocation4 + $0x98] sm:$0x7f] %vm7814, %v7423
    %7824 = vst.msk [vmem:[#allocation4 + $0xa8] sm:$0x7f] %vm7814, %v7424
    %7825 = vst.msk [vmem:[#allocation4 + $0xb8] sm:$0x7f] %vm7814, %v7425
    %7826 = vst.msk [vmem:[#allocation4 + $0xc8] sm:$0x7f] %vm7814, %v7426
    %7827 = vst.msk [vmem:[#allocation4 + $0xd8] sm:$0x7f] %vm7814, %v7427
    %7828 = vst.msk [vmem:[#allocation4 + $0xe8] sm:$0x7f] %vm7814, %v7620
    %v7829 = vld [vmem:[#allocation4] sm:$0xff]
    %v7830 = vld [vmem:[#allocation4 + $0x8] sm:$0xff]
    %v7831 = vld [vmem:[#allocation4 + $0x10] sm:$0xff]
    %v7832 = vld [vmem:[#allocation4 + $0x18] sm:$0xff]
    %v7833 = vld [vmem:[#allocation4 + $0x20] sm:$0xff]
    %v7834 = vld [vmem:[#allocation4 + $0x28] sm:$0xff]
    %v7835 = vld [vmem:[#allocation4 + $0x30] sm:$0xff]
    %v7836 = vld [vmem:[#allocation4 + $0x38] sm:$0xff]
    %v7837 = vld [vmem:[#allocation4 + $0x40] sm:$0xff]
    %v7838 = vld [vmem:[#allocation4 + $0x48] sm:$0xff]
    %v7839 = vld [vmem:[#allocation4 + $0x50] sm:$0xff]
    %v7840 = vld [vmem:[#allocation4 + $0x58] sm:$0xff]
    %v7841 = vld [vmem:[#allocation4 + $0x60] sm:$0xff]
    %v7842 = vld [vmem:[#allocation4 + $0x68] sm:$0xff]
    %v7843 = vld [vmem:[#allocation4 + $0x70] sm:$0xff]
    %v7844 = vld [vmem:[#allocation4 + $0x78] sm:$0xff]
    %v7845 = vld [vmem:[#allocation4 + $0x80] sm:$0xff]
    %v7846 = vld [vmem:[#allocation4 + $0x88] sm:$0xff]
    %v7847 = vld [vmem:[#allocation4 + $0x90] sm:$0xff]
    %v7848 = vld [vmem:[#allocation4 + $0x98] sm:$0xff]
    %v7849 = vld [vmem:[#allocation4 + $0xa0] sm:$0xff]
    %v7850 = vld [vmem:[#allocation4 + $0xa8] sm:$0xff]
    %v7851 = vld [vmem:[#allocation4 + $0xb0] sm:$0xff]
    %v7852 = vld [vmem:[#allocation4 + $0xb8] sm:$0xff]
    %v7853 = vld [vmem:[#allocation4 + $0xc0] sm:$0xff]
    %v7854 = vld [vmem:[#allocation4 + $0xc8] sm:$0xff]
    %v7855 = vld [vmem:[#allocation4 + $0xd0] sm:$0xff]
    %v7856 = vld [vmem:[#allocation4 + $0xd8] sm:$0xff]
    %v7857 = vld [vmem:[#allocation4 + $0xe0] sm:$0xff]
    %v7858 = vld [vmem:[#allocation4 + $0xe8] sm:$0xff]
    %v7859 = vld [vmem:[#allocation4 + $0xf0] sm:$0xff]
    %v7860 = vld [vmem:[#allocation4 + $0xf8] sm:$0xff]
    %v7861 = vld [vmem:[%s3] sm:$0xff]
    %v7862 = vld [vmem:[%s3 + $0x8] sm:$0xff]
    %v7863 = vld [vmem:[%s3 + $0x10] sm:$0xff]
    %v7864 = vld [vmem:[%s3 + $0x18] sm:$0xff]
    %v7865 = vld [vmem:[%s3 + $0x20] sm:$0xff]
    %v7866 = vld [vmem:[%s3 + $0x28] sm:$0xff]
    %v7867 = vld [vmem:[%s3 + $0x30] sm:$0xff]
    %v7868 = vld [vmem:[%s3 + $0x38] sm:$0xff]
    %v7869 = vld [vmem:[%s3 + $0x40] sm:$0xff]
    %v7870 = vld [vmem:[%s3 + $0x48] sm:$0xff]
    %v7871 = vld [vmem:[%s3 + $0x50] sm:$0xff]
    %v7872 = vld [vmem:[%s3 + $0x58] sm:$0xff]
    %v7873 = vld [vmem:[%s3 + $0x60] sm:$0xff]
    %v7874 = vld [vmem:[%s3 + $0x68] sm:$0xff]
    %v7875 = vld [vmem:[%s3 + $0x70] sm:$0xff]
    %v7876 = vld [vmem:[%s3 + $0x78] sm:$0xff]
    %v7877 = vld [vmem:[%s3 + $0x80] sm:$0xff]
    %v7878 = vld [vmem:[%s3 + $0x88] sm:$0xff]
    %v7879 = vld [vmem:[%s8] sm:$0x1]
    %v7881 = vlaneseq
    %v7882 = vshrl.u32 %v7881, 7
    %v7883 = vsub.s32 0, %v7882
    %v7884 = vrot.slane %v7879, %v7883
    %v7887 = vsel %vm7267, %v7830, 0
    %v7890 = vsel %vm7267, %v7832, 0
    %v7893 = vsel %vm7267, %v7834, 0
    %v7896 = vsel %vm7267, %v7836, 0
    %v7899 = vsel %vm7267, %v7838, 0
    %v7902 = vsel %vm7267, %v7840, 0
    %v7905 = vsel %vm7267, %v7842, 0
    %v7908 = vsel %vm7267, %v7844, 0
    %v7911 = vsel %vm7267, %v7846, 0
    %v7914 = vsel %vm7267, %v7848, 0
    %v7917 = vsel %vm7267, %v7850, 0
    %v7920 = vsel %vm7267, %v7852, 0
    %v7923 = vsel %vm7267, %v7854, 0
    %v7926 = vsel %vm7267, %v7856, 0
    %v7929 = vsel %vm7267, %v7858, 0
    %v7932 = vsel %vm7267, %v7860, 0
    %7934 = vmatprep.subr.mxu0 0.0
    %7935 = vmatpush1.msra.mxu0 %v7861
    %7936 = vmatprep.subr.mxu0 0.0
    %7937 = vmatpush1.msra.mxu0 %v7862
    %7938 = vmatprep.subr.mxu0 0.0
    %7939 = vmatpush1.msra.mxu0 %v7863
    %7940 = vmatprep.subr.mxu0 0.0
    %7941 = vmatpush1.msra.mxu0 %v7864
    %7942 = vmatprep.subr.mxu0 0.0
    %7943 = vmatpush1.msra.mxu0 %v7865
    %7944 = vmatprep.subr.mxu0 0.0
    %7945 = vmatpush1.msra.mxu0 %v7866
    %7946 = vmatprep.subr.mxu0 0.0
    %7947 = vmatpush1.msra.mxu0 %v7867
    %7948 = vmatprep.subr.mxu0 0.0
    %7949 = vmatpush1.msra.mxu0 %v7868
    %7950 = vmatprep.subr.mxu0 0.0
    %7951 = vmatpush1.msra.mxu0 %v7869
    %7952 = vmatprep.subr.mxu0 0.0
    %7953 = vmatpush1.msra.mxu0 %v7870
    %7954 = vmatprep.subr.mxu0 0.0
    %7955 = vmatpush1.msra.mxu0 %v7871
    %7956 = vmatprep.subr.mxu0 0.0
    %7957 = vmatpush1.msra.mxu0 %v7872
    %7958 = vmatprep.subr.mxu0 0.0
    %7959 = vmatpush1.msra.mxu0 %v7873
    %7960 = vmatprep.subr.mxu0 0.0
    %7961 = vmatpush1.msra.mxu0 %v7874
    %7962 = vmatprep.subr.mxu0 0.0
    %7963 = vmatpush1.msra.mxu0 %v7875
    %7964 = vmatprep.subr.mxu0 0.0
    %7965 = vmatpush1.msra.mxu0 %v7876
    %7966 = vmatprep.subr.mxu0 0.0
    %7967 = vmatpush1.msra.mxu0 %v7877
    %7968 = vmatprep.subr.mxu0 0.0
    %7969 = vmatpush1.msra.mxu0 %v7878
    %7970 = vmatprep.subr.mxu0 0.0
    %7971 = vmatpush1.msra.mxu0 0.0
    %7972 = vmatprep.subr.mxu0 0.0
    %7973 = vmatpush1.msra.mxu0 0.0
    %7974 = vmatprep.subr.mxu0 0.0
    %7975 = vmatpush1.msra.mxu0 0.0
    %7976 = vmatprep.subr.mxu0 0.0
    %7977 = vmatpush1.msra.mxu0 0.0
    %7978 = vmatprep.subr.mxu0 0.0
    %7979 = vmatpush1.msra.mxu0 0.0
    %7980 = vmatprep.subr.mxu0 0.0
    %7981 = vmatpush1.msra.mxu0 0.0
    %7982 = vmatprep.subr.mxu0 0.0
    %7983 = vmatpush1.msra.mxu0 0.0
    %7984 = vmatprep.subr.mxu0 0.0
    %7985 = vmatpush1.msra.mxu0 0.0
    %7986 = vmatprep.subr.mxu0 0.0
    %7987 = vmatpush1.msra.mxu0 0.0
    %7988 = vmatprep.subr.mxu0 0.0
    %7989 = vmatpush1.msra.mxu0 0.0
    %7990 = vmatprep.subr.mxu0 0.0
    %7991 = vmatpush1.msra.mxu0 0.0
    %7992 = vmatprep.subr.mxu0 0.0
    %7993 = vmatpush1.msra.mxu0 0.0
    %7994 = vmatprep.subr.mxu0 0.0
    %7995 = vmatpush1.msra.mxu0 0.0
    %7996 = vmatprep.subr.mxu0 0.0
    %7997 = vmatpush1.msra.mxu0 0.0
    %7998 = vmatprep.mubr.f32.mxu0 %v7887
    %7999 = vmatmul.mubr.f32.gmra.mrb[0].mxu0 %v7829
    %v8000 = vpop.f32.mrb[0].mxu0
    %v8001 = vadd.f32 %v7884, %v8000
    %v8002 = vpop.f32.mrb[0].mxu0
    %8003 = vmatprep.mubr.f32.mxu0 %v7890
    %8004 = vmatmul.mubr.f32.gmra.mrb[0].mxu0 %v7831
    %v8005 = vpop.f32.mrb[0].mxu0
    %v8006 = vadd.f32 %v7884, %v8005
    %v8007 = vpop.f32.mrb[0].mxu0
    %8008 = vmatprep.mubr.f32.mxu0 %v7893
    %8009 = vmatmul.mubr.f32.gmra.mrb[0].mxu0 %v7833
    %v8010 = vpop.f32.mrb[0].mxu0
    %v8011 = vadd.f32 %v7884, %v8010
    %v8012 = vpop.f32.mrb[0].mxu0
    %8013 = vmatprep.mubr.f32.mxu0 %v7896
    %8014 = vmatmul.mubr.f32.gmra.mrb[0].mxu0 %v7835
    %v8015 = vpop.f32.mrb[0].mxu0
    %v8016 = vadd.f32 %v7884, %v8015
    %v8017 = vpop.f32.mrb[0].mxu0
    %8018 = vmatprep.mubr.f32.mxu0 %v7899
    %8019 = vmatmul.mubr.f32.gmra.mrb[0].mxu0 %v7837
    %v8020 = vpop.f32.mrb[0].mxu0
    %v8021 = vadd.f32 %v7884, %v8020
    %v8022 = vpop.f32.mrb[0].mxu0
    %8023 = vmatprep.mubr.f32.mxu0 %v7902
    %8024 = vmatmul.mubr.f32.gmra.mrb[0].mxu0 %v7839
    %v8025 = vpop.f32.mrb[0].mxu0
    %v8026 = vadd.f32 %v7884, %v8025
    %v8027 = vpop.f32.mrb[0].mxu0
    %8028 = vmatprep.mubr.f32.mxu0 %v7905
    %8029 = vmatmul.mubr.f32.gmra.mrb[0].mxu0 %v7841
    %v8030 = vpop.f32.mrb[0].mxu0
    %v8031 = vadd.f32 %v7884, %v8030
    %v8032 = vpop.f32.mrb[0].mxu0
    %8033 = vmatprep.mubr.f32.mxu0 %v7908
    %8034 = vmatmul.mubr.f32.gmra.mrb[0].mxu0 %v7843
    %v8035 = vpop.f32.mrb[0].mxu0
    %v8036 = vadd.f32 %v7884, %v8035
    %v8037 = vpop.f32.mrb[0].mxu0
    %8038 = vmatprep.mubr.f32.mxu0 %v7911
    %8039 = vmatmul.mubr.f32.gmra.mrb[0].mxu0 %v7845
    %v8040 = vpop.f32.mrb[0].mxu0
    %v8041 = vadd.f32 %v7884, %v8040
    %v8042 = vpop.f32.mrb[0].mxu0
    %8043 = vmatprep.mubr.f32.mxu0 %v7914
    %8044 = vmatmul.mubr.f32.gmra.mrb[0].mxu0 %v7847
    %v8045 = vpop.f32.mrb[0].mxu0
    %v8046 = vadd.f32 %v7884, %v8045
    %v8047 = vpop.f32.mrb[0].mxu0
    %8048 = vmatprep.mubr.f32.mxu0 %v7917
    %8049 = vmatmul.mubr.f32.gmra.mrb[0].mxu0 %v7849
    %v8050 = vpop.f32.mrb[0].mxu0
    %v8051 = vadd.f32 %v7884, %v8050
    %v8052 = vpop.f32.mrb[0].mxu0
    %8053 = vmatprep.mubr.f32.mxu0 %v7920
    %8054 = vmatmul.mubr.f32.gmra.mrb[0].mxu0 %v7851
    %v8055 = vpop.f32.mrb[0].mxu0
    %v8056 = vadd.f32 %v7884, %v8055
    %v8057 = vpop.f32.mrb[0].mxu0
    %8058 = vmatprep.mubr.f32.mxu0 %v7923
    %8059 = vmatmul.mubr.f32.gmra.mrb[0].mxu0 %v7853
    %v8060 = vpop.f32.mrb[0].mxu0
    %v8061 = vadd.f32 %v7884, %v8060
    %v8062 = vpop.f32.mrb[0].mxu0
    %8063 = vmatprep.mubr.f32.mxu0 %v7926
    %8064 = vmatmul.mubr.f32.gmra.mrb[0].mxu0 %v7855
    %v8065 = vpop.f32.mrb[0].mxu0
    %v8066 = vadd.f32 %v7884, %v8065
    %v8067 = vpop.f32.mrb[0].mxu0
    %8068 = vmatprep.mubr.f32.mxu0 %v7929
    %8069 = vmatmul.mubr.f32.gmra.mrb[0].mxu0 %v7857
    %v8070 = vpop.f32.mrb[0].mxu0
    %v8071 = vadd.f32 %v7884, %v8070
    %v8072 = vpop.f32.mrb[0].mxu0
    %8073 = vmatprep.mubr.f32.mxu0 %v7932
    %8074 = vmatmul.mubr.f32.gmra.mrb[0].mxu0 %v7859
    %v8075 = vpop.f32.mrb[0].mxu0
    %v8076 = vadd.f32 %v7884, %v8075
    %v8077 = vpop.f32.mrb[0].mxu0
    %8078 = vdwg.mxu0
    %v8079 = vmul.f32 %v8001, 0.01
    %v8080 = vmul.f32 %v8006, 0.01
    %v8081 = vmul.f32 %v8011, 0.01
    %v8082 = vmul.f32 %v8016, 0.01
    %v8083 = vmul.f32 %v8021, 0.01
    %v8084 = vmul.f32 %v8026, 0.01
    %v8085 = vmul.f32 %v8031, 0.01
    %v8086 = vmul.f32 %v8036, 0.01
    %v8087 = vmul.f32 %v8041, 0.01
    %v8088 = vmul.f32 %v8046, 0.01
    %v8089 = vmul.f32 %v8051, 0.01
    %v8090 = vmul.f32 %v8056, 0.01
    %v8091 = vmul.f32 %v8061, 0.01
    %v8092 = vmul.f32 %v8066, 0.01
    %v8093 = vmul.f32 %v8071, 0.01
    %v8094 = vmul.f32 %v8076, 0.01
    %v8095 = vmax.f32 %v8001, %v8079
    %v8096 = vmax.f32 %v8006, %v8080
    %v8097 = vmax.f32 %v8011, %v8081
    %v8098 = vmax.f32 %v8016, %v8082
    %v8099 = vmax.f32 %v8021, %v8083
    %v8100 = vmax.f32 %v8026, %v8084
    %v8101 = vmax.f32 %v8031, %v8085
    %v8102 = vmax.f32 %v8036, %v8086
    %v8103 = vmax.f32 %v8041, %v8087
    %v8104 = vmax.f32 %v8046, %v8088
    %v8105 = vmax.f32 %v8051, %v8089
    %v8106 = vmax.f32 %v8056, %v8090
    %v8107 = vmax.f32 %v8061, %v8091
    %v8108 = vmax.f32 %v8066, %v8092
    %v8109 = vmax.f32 %v8071, %v8093
    %v8110 = vmax.f32 %v8076, %v8094
    %v8127 = vcombine.high %v8095, %v8095
    %v8129 = vunpack.c.l.s4 1983009808
    %v8130 = vunpack.c.0.s8 %v8129
    %v8131 = vlaneseq
    %v8132 = vshrl.u32 %v8131, 7
    %v8133 = vsub.s32 %v8130, %v8132
    %v8134 = vrot.slane %v8095, %v8133
    %v8136 = vunpack.c.l.s4 1983009808
    %v8137 = vunpack.c.0.s8 %v8136
    %v8138 = vlaneseq
    %v8139 = vshrl.u32 %v8138, 7
    %v8140 = vsub.s32 %v8137, %v8139
    %v8141 = vrot.slane %v8127, %v8140
    %v8142 = vcombine.high %v8134, %v8134
    %v8143 = vcombine.high %v8141, %v8141
    %v8144 = vcombine.high %v8096, %v8096
    %v8146 = vunpack.c.l.s4 1983009808
    %v8147 = vunpack.c.0.s8 %v8146
    %v8148 = vlaneseq
    %v8149 = vshrl.u32 %v8148, 7
    %v8150 = vsub.s32 %v8147, %v8149
    %v8151 = vrot.slane %v8096, %v8150
    %v8153 = vunpack.c.l.s4 1983009808
    %v8154 = vunpack.c.0.s8 %v8153
    %v8155 = vlaneseq
    %v8156 = vshrl.u32 %v8155, 7
    %v8157 = vsub.s32 %v8154, %v8156
    %v8158 = vrot.slane %v8144, %v8157
    %v8159 = vcombine.high %v8151, %v8151
    %v8160 = vcombine.high %v8158, %v8158
    %v8161 = vcombine.high %v8097, %v8097
    %v8163 = vunpack.c.l.s4 1983009808
    %v8164 = vunpack.c.0.s8 %v8163
    %v8165 = vlaneseq
    %v8166 = vshrl.u32 %v8165, 7
    %v8167 = vsub.s32 %v8164, %v8166
    %v8168 = vrot.slane %v8097, %v8167
    %v8170 = vunpack.c.l.s4 1983009808
    %v8171 = vunpack.c.0.s8 %v8170
    %v8172 = vlaneseq
    %v8173 = vshrl.u32 %v8172, 7
    %v8174 = vsub.s32 %v8171, %v8173
    %v8175 = vrot.slane %v8161, %v8174
    %v8176 = vcombine.high %v8168, %v8168
    %v8177 = vcombine.high %v8175, %v8175
    %v8178 = vcombine.high %v8098, %v8098
    %v8180 = vunpack.c.l.s4 1983009808
    %v8181 = vunpack.c.0.s8 %v8180
    %v8182 = vlaneseq
    %v8183 = vshrl.u32 %v8182, 7
    %v8184 = vsub.s32 %v8181, %v8183
    %v8185 = vrot.slane %v8098, %v8184
    %v8187 = vunpack.c.l.s4 1983009808
    %v8188 = vunpack.c.0.s8 %v8187
    %v8189 = vlaneseq
    %v8190 = vshrl.u32 %v8189, 7
    %v8191 = vsub.s32 %v8188, %v8190
    %v8192 = vrot.slane %v8178, %v8191
    %v8193 = vcombine.high %v8185, %v8185
    %v8194 = vcombine.high %v8192, %v8192
    %v8195 = vcombine.high %v8099, %v8099
    %v8197 = vunpack.c.l.s4 1983009808
    %v8198 = vunpack.c.0.s8 %v8197
    %v8199 = vlaneseq
    %v8200 = vshrl.u32 %v8199, 7
    %v8201 = vsub.s32 %v8198, %v8200
    %v8202 = vrot.slane %v8099, %v8201
    %v8204 = vunpack.c.l.s4 1983009808
    %v8205 = vunpack.c.0.s8 %v8204
    %v8206 = vlaneseq
    %v8207 = vshrl.u32 %v8206, 7
    %v8208 = vsub.s32 %v8205, %v8207
    %v8209 = vrot.slane %v8195, %v8208
    %v8210 = vcombine.high %v8202, %v8202
    %v8211 = vcombine.high %v8209, %v8209
    %v8212 = vcombine.high %v8100, %v8100
    %v8214 = vunpack.c.l.s4 1983009808
    %v8215 = vunpack.c.0.s8 %v8214
    %v8216 = vlaneseq
    %v8217 = vshrl.u32 %v8216, 7
    %v8218 = vsub.s32 %v8215, %v8217
    %v8219 = vrot.slane %v8100, %v8218
    %v8221 = vunpack.c.l.s4 1983009808
    %v8222 = vunpack.c.0.s8 %v8221
    %v8223 = vlaneseq
    %v8224 = vshrl.u32 %v8223, 7
    %v8225 = vsub.s32 %v8222, %v8224
    %v8226 = vrot.slane %v8212, %v8225
    %v8227 = vcombine.high %v8219, %v8219
    %v8228 = vcombine.high %v8226, %v8226
    %v8229 = vcombine.high %v8101, %v8101
    %v8231 = vunpack.c.l.s4 1983009808
    %v8232 = vunpack.c.0.s8 %v8231
    %v8233 = vlaneseq
    %v8234 = vshrl.u32 %v8233, 7
    %v8235 = vsub.s32 %v8232, %v8234
    %v8236 = vrot.slane %v8101, %v8235
    %v8238 = vunpack.c.l.s4 1983009808
    %v8239 = vunpack.c.0.s8 %v8238
    %v8240 = vlaneseq
    %v8241 = vshrl.u32 %v8240, 7
    %v8242 = vsub.s32 %v8239, %v8241
    %v8243 = vrot.slane %v8229, %v8242
    %v8244 = vcombine.high %v8236, %v8236
    %v8245 = vcombine.high %v8243, %v8243
    %v8246 = vcombine.high %v8102, %v8102
    %v8248 = vunpack.c.l.s4 1983009808
    %v8249 = vunpack.c.0.s8 %v8248
    %v8250 = vlaneseq
    %v8251 = vshrl.u32 %v8250, 7
    %v8252 = vsub.s32 %v8249, %v8251
    %v8253 = vrot.slane %v8102, %v8252
    %v8255 = vunpack.c.l.s4 1983009808
    %v8256 = vunpack.c.0.s8 %v8255
    %v8257 = vlaneseq
    %v8258 = vshrl.u32 %v8257, 7
    %v8259 = vsub.s32 %v8256, %v8258
    %v8260 = vrot.slane %v8246, %v8259
    %v8261 = vcombine.high %v8253, %v8253
    %v8262 = vcombine.high %v8260, %v8260
    %v8263 = vcombine.high %v8103, %v8103
    %v8265 = vunpack.c.l.s4 1983009808
    %v8266 = vunpack.c.0.s8 %v8265
    %v8267 = vlaneseq
    %v8268 = vshrl.u32 %v8267, 7
    %v8269 = vsub.s32 %v8266, %v8268
    %v8270 = vrot.slane %v8103, %v8269
    %v8272 = vunpack.c.l.s4 1983009808
    %v8273 = vunpack.c.0.s8 %v8272
    %v8274 = vlaneseq
    %v8275 = vshrl.u32 %v8274, 7
    %v8276 = vsub.s32 %v8273, %v8275
    %v8277 = vrot.slane %v8263, %v8276
    %v8278 = vcombine.high %v8270, %v8270
    %v8279 = vcombine.high %v8277, %v8277
    %v8280 = vcombine.high %v8104, %v8104
    %v8282 = vunpack.c.l.s4 1983009808
    %v8283 = vunpack.c.0.s8 %v8282
    %v8284 = vlaneseq
    %v8285 = vshrl.u32 %v8284, 7
    %v8286 = vsub.s32 %v8283, %v8285
    %v8287 = vrot.slane %v8104, %v8286
    %v8289 = vunpack.c.l.s4 1983009808
    %v8290 = vunpack.c.0.s8 %v8289
    %v8291 = vlaneseq
    %v8292 = vshrl.u32 %v8291, 7
    %v8293 = vsub.s32 %v8290, %v8292
    %v8294 = vrot.slane %v8280, %v8293
    %v8295 = vcombine.high %v8287, %v8287
    %v8296 = vcombine.high %v8294, %v8294
    %v8297 = vcombine.high %v8105, %v8105
    %v8299 = vunpack.c.l.s4 1983009808
    %v8300 = vunpack.c.0.s8 %v8299
    %v8301 = vlaneseq
    %v8302 = vshrl.u32 %v8301, 7
    %v8303 = vsub.s32 %v8300, %v8302
    %v8304 = vrot.slane %v8105, %v8303
    %v8306 = vunpack.c.l.s4 1983009808
    %v8307 = vunpack.c.0.s8 %v8306
    %v8308 = vlaneseq
    %v8309 = vshrl.u32 %v8308, 7
    %v8310 = vsub.s32 %v8307, %v8309
    %v8311 = vrot.slane %v8297, %v8310
    %v8312 = vcombine.high %v8304, %v8304
    %v8313 = vcombine.high %v8311, %v8311
    %v8314 = vcombine.high %v8106, %v8106
    %v8316 = vunpack.c.l.s4 1983009808
    %v8317 = vunpack.c.0.s8 %v8316
    %v8318 = vlaneseq
    %v8319 = vshrl.u32 %v8318, 7
    %v8320 = vsub.s32 %v8317, %v8319
    %v8321 = vrot.slane %v8106, %v8320
    %v8323 = vunpack.c.l.s4 1983009808
    %v8324 = vunpack.c.0.s8 %v8323
    %v8325 = vlaneseq
    %v8326 = vshrl.u32 %v8325, 7
    %v8327 = vsub.s32 %v8324, %v8326
    %v8328 = vrot.slane %v8314, %v8327
    %v8329 = vcombine.high %v8321, %v8321
    %v8330 = vcombine.high %v8328, %v8328
    %v8331 = vcombine.high %v8107, %v8107
    %v8333 = vunpack.c.l.s4 1983009808
    %v8334 = vunpack.c.0.s8 %v8333
    %v8335 = vlaneseq
    %v8336 = vshrl.u32 %v8335, 7
    %v8337 = vsub.s32 %v8334, %v8336
    %v8338 = vrot.slane %v8107, %v8337
    %v8340 = vunpack.c.l.s4 1983009808
    %v8341 = vunpack.c.0.s8 %v8340
    %v8342 = vlaneseq
    %v8343 = vshrl.u32 %v8342, 7
    %v8344 = vsub.s32 %v8341, %v8343
    %v8345 = vrot.slane %v8331, %v8344
    %v8346 = vcombine.high %v8338, %v8338
    %v8347 = vcombine.high %v8345, %v8345
    %v8348 = vcombine.high %v8108, %v8108
    %v8350 = vunpack.c.l.s4 1983009808
    %v8351 = vunpack.c.0.s8 %v8350
    %v8352 = vlaneseq
    %v8353 = vshrl.u32 %v8352, 7
    %v8354 = vsub.s32 %v8351, %v8353
    %v8355 = vrot.slane %v8108, %v8354
    %v8357 = vunpack.c.l.s4 1983009808
    %v8358 = vunpack.c.0.s8 %v8357
    %v8359 = vlaneseq
    %v8360 = vshrl.u32 %v8359, 7
    %v8361 = vsub.s32 %v8358, %v8360
    %v8362 = vrot.slane %v8348, %v8361
    %v8363 = vcombine.high %v8355, %v8355
    %v8364 = vcombine.high %v8362, %v8362
    %v8365 = vcombine.high %v8109, %v8109
    %v8367 = vunpack.c.l.s4 1983009808
    %v8368 = vunpack.c.0.s8 %v8367
    %v8369 = vlaneseq
    %v8370 = vshrl.u32 %v8369, 7
    %v8371 = vsub.s32 %v8368, %v8370
    %v8372 = vrot.slane %v8109, %v8371
    %v8374 = vunpack.c.l.s4 1983009808
    %v8375 = vunpack.c.0.s8 %v8374
    %v8376 = vlaneseq
    %v8377 = vshrl.u32 %v8376, 7
    %v8378 = vsub.s32 %v8375, %v8377
    %v8379 = vrot.slane %v8365, %v8378
    %v8380 = vcombine.high %v8372, %v8372
    %v8381 = vcombine.high %v8379, %v8379
    %v8382 = vcombine.high %v8110, %v8110
    %v8384 = vunpack.c.l.s4 1983009808
    %v8385 = vunpack.c.0.s8 %v8384
    %v8386 = vlaneseq
    %v8387 = vshrl.u32 %v8386, 7
    %v8388 = vsub.s32 %v8385, %v8387
    %v8389 = vrot.slane %v8110, %v8388
    %v8391 = vunpack.c.l.s4 1983009808
    %v8392 = vunpack.c.0.s8 %v8391
    %v8393 = vlaneseq
    %v8394 = vshrl.u32 %v8393, 7
    %v8395 = vsub.s32 %v8392, %v8394
    %v8396 = vrot.slane %v8382, %v8395
    %v8397 = vcombine.high %v8389, %v8389
    %v8398 = vcombine.high %v8396, %v8396
    %v8463 = vrot.slane %v8134, 7
    %v8464 = vrot.slane %v8463, 2
    %v8465 = vrot.slane %v8142, 7
    %v8466 = vrot.slane %v8465, 2
    %v8467 = vrot.slane %v8141, 7
    %v8468 = vrot.slane %v8467, 2
    %v8469 = vrot.slane %v8143, 7
    %v8470 = vrot.slane %v8469, 2
    %v8471 = vrot.slane %v8151, 7
    %v8472 = vrot.slane %v8471, 2
    %v8473 = vrot.slane %v8159, 7
    %v8474 = vrot.slane %v8473, 2
    %v8475 = vrot.slane %v8158, 7
    %v8476 = vrot.slane %v8475, 2
    %v8477 = vrot.slane %v8160, 7
    %v8478 = vrot.slane %v8477, 2
    %v8479 = vrot.slane %v8168, 7
    %v8480 = vrot.slane %v8479, 2
    %v8481 = vrot.slane %v8176, 7
    %v8482 = vrot.slane %v8481, 2
    %v8483 = vrot.slane %v8175, 7
    %v8484 = vrot.slane %v8483, 2
    %v8485 = vrot.slane %v8177, 7
    %v8486 = vrot.slane %v8485, 2
    %v8487 = vrot.slane %v8185, 7
    %v8488 = vrot.slane %v8487, 2
    %v8489 = vrot.slane %v8193, 7
    %v8490 = vrot.slane %v8489, 2
    %v8491 = vrot.slane %v8192, 7
    %v8492 = vrot.slane %v8491, 2
    %v8493 = vrot.slane %v8194, 7
    %v8494 = vrot.slane %v8493, 2
    %v8495 = vrot.slane %v8202, 7
    %v8496 = vrot.slane %v8495, 2
    %v8497 = vrot.slane %v8210, 7
    %v8498 = vrot.slane %v8497, 2
    %v8499 = vrot.slane %v8209, 7
    %v8500 = vrot.slane %v8499, 2
    %v8501 = vrot.slane %v8211, 7
    %v8502 = vrot.slane %v8501, 2
    %v8503 = vrot.slane %v8219, 7
    %v8504 = vrot.slane %v8503, 2
    %v8505 = vrot.slane %v8227, 7
    %v8506 = vrot.slane %v8505, 2
    %v8507 = vrot.slane %v8226, 7
    %v8508 = vrot.slane %v8507, 2
    %v8509 = vrot.slane %v8228, 7
    %v8510 = vrot.slane %v8509, 2
    %v8511 = vrot.slane %v8236, 7
    %v8512 = vrot.slane %v8511, 2
    %v8513 = vrot.slane %v8244, 7
    %v8514 = vrot.slane %v8513, 2
    %v8515 = vrot.slane %v8243, 7
    %v8516 = vrot.slane %v8515, 2
    %v8517 = vrot.slane %v8245, 7
    %v8518 = vrot.slane %v8517, 2
    %v8519 = vrot.slane %v8253, 7
    %v8520 = vrot.slane %v8519, 2
    %v8521 = vrot.slane %v8261, 7
    %v8522 = vrot.slane %v8521, 2
    %v8523 = vrot.slane %v8260, 7
    %v8524 = vrot.slane %v8523, 2
    %v8525 = vrot.slane %v8262, 7
    %v8526 = vrot.slane %v8525, 2
    %v8527 = vrot.slane %v8270, 7
    %v8528 = vrot.slane %v8527, 2
    %v8529 = vrot.slane %v8278, 7
    %v8530 = vrot.slane %v8529, 2
    %v8531 = vrot.slane %v8277, 7
    %v8532 = vrot.slane %v8531, 2
    %v8533 = vrot.slane %v8279, 7
    %v8534 = vrot.slane %v8533, 2
    %v8535 = vrot.slane %v8287, 7
    %v8536 = vrot.slane %v8535, 2
    %v8537 = vrot.slane %v8295, 7
    %v8538 = vrot.slane %v8537, 2
    %v8539 = vrot.slane %v8294, 7
    %v8540 = vrot.slane %v8539, 2
    %v8541 = vrot.slane %v8296, 7
    %v8542 = vrot.slane %v8541, 2
    %v8543 = vrot.slane %v8304, 7
    %v8544 = vrot.slane %v8543, 2
    %v8545 = vrot.slane %v8312, 7
    %v8546 = vrot.slane %v8545, 2
    %v8547 = vrot.slane %v8311, 7
    %v8548 = vrot.slane %v8547, 2
    %v8549 = vrot.slane %v8313, 7
    %v8550 = vrot.slane %v8549, 2
    %v8551 = vrot.slane %v8321, 7
    %v8552 = vrot.slane %v8551, 2
    %v8553 = vrot.slane %v8329, 7
    %v8554 = vrot.slane %v8553, 2
    %v8555 = vrot.slane %v8328, 7
    %v8556 = vrot.slane %v8555, 2
    %v8557 = vrot.slane %v8330, 7
    %v8558 = vrot.slane %v8557, 2
    %v8559 = vrot.slane %v8338, 7
    %v8560 = vrot.slane %v8559, 2
    %v8561 = vrot.slane %v8346, 7
    %v8562 = vrot.slane %v8561, 2
    %v8563 = vrot.slane %v8345, 7
    %v8564 = vrot.slane %v8563, 2
    %v8565 = vrot.slane %v8347, 7
    %v8566 = vrot.slane %v8565, 2
    %v8567 = vrot.slane %v8355, 7
    %v8568 = vrot.slane %v8567, 2
    %v8569 = vrot.slane %v8363, 7
    %v8570 = vrot.slane %v8569, 2
    %v8571 = vrot.slane %v8362, 7
    %v8572 = vrot.slane %v8571, 2
    %v8573 = vrot.slane %v8364, 7
    %v8574 = vrot.slane %v8573, 2
    %v8575 = vrot.slane %v8372, 7
    %v8576 = vrot.slane %v8575, 2
    %v8577 = vrot.slane %v8380, 7
    %v8578 = vrot.slane %v8577, 2
    %v8579 = vrot.slane %v8379, 7
    %v8580 = vrot.slane %v8579, 2
    %v8581 = vrot.slane %v8381, 7
    %v8582 = vrot.slane %v8581, 2
    %v8583 = vrot.slane %v8389, 7
    %v8584 = vrot.slane %v8583, 2
    %v8585 = vrot.slane %v8397, 7
    %v8586 = vrot.slane %v8585, 2
    %v8587 = vrot.slane %v8396, 7
    %v8588 = vrot.slane %v8587, 2
    %v8589 = vrot.slane %v8398, 7
    %v8590 = vrot.slane %v8589, 2
    %v8655 = vmax.f32 %v8134, %v8464
    %v8656 = vmax.f32 %v8142, %v8466
    %v8657 = vmax.f32 %v8141, %v8468
    %v8658 = vmax.f32 %v8143, %v8470
    %v8659 = vmax.f32 %v8151, %v8472
    %v8660 = vmax.f32 %v8159, %v8474
    %v8661 = vmax.f32 %v8158, %v8476
    %v8662 = vmax.f32 %v8160, %v8478
    %v8663 = vmax.f32 %v8168, %v8480
    %v8664 = vmax.f32 %v8176, %v8482
    %v8665 = vmax.f32 %v8175, %v8484
    %v8666 = vmax.f32 %v8177, %v8486
    %v8667 = vmax.f32 %v8185, %v8488
    %v8668 = vmax.f32 %v8193, %v8490
    %v8669 = vmax.f32 %v8192, %v8492
    %v8670 = vmax.f32 %v8194, %v8494
    %v8671 = vmax.f32 %v8202, %v8496
    %v8672 = vmax.f32 %v8210, %v8498
    %v8673 = vmax.f32 %v8209, %v8500
    %v8674 = vmax.f32 %v8211, %v8502
    %v8675 = vmax.f32 %v8219, %v8504
    %v8676 = vmax.f32 %v8227, %v8506
    %v8677 = vmax.f32 %v8226, %v8508
    %v8678 = vmax.f32 %v8228, %v8510
    %v8679 = vmax.f32 %v8236, %v8512
    %v8680 = vmax.f32 %v8244, %v8514
    %v8681 = vmax.f32 %v8243, %v8516
    %v8682 = vmax.f32 %v8245, %v8518
    %v8683 = vmax.f32 %v8253, %v8520
    %v8684 = vmax.f32 %v8261, %v8522
    %v8685 = vmax.f32 %v8260, %v8524
    %v8686 = vmax.f32 %v8262, %v8526
    %v8687 = vmax.f32 %v8270, %v8528
    %v8688 = vmax.f32 %v8278, %v8530
    %v8689 = vmax.f32 %v8277, %v8532
    %v8690 = vmax.f32 %v8279, %v8534
    %v8691 = vmax.f32 %v8287, %v8536
    %v8692 = vmax.f32 %v8295, %v8538
    %v8693 = vmax.f32 %v8294, %v8540
    %v8694 = vmax.f32 %v8296, %v8542
    %v8695 = vmax.f32 %v8304, %v8544
    %v8696 = vmax.f32 %v8312, %v8546
    %v8697 = vmax.f32 %v8311, %v8548
    %v8698 = vmax.f32 %v8313, %v8550
    %v8699 = vmax.f32 %v8321, %v8552
    %v8700 = vmax.f32 %v8329, %v8554
    %v8701 = vmax.f32 %v8328, %v8556
    %v8702 = vmax.f32 %v8330, %v8558
    %v8703 = vmax.f32 %v8338, %v8560
    %v8704 = vmax.f32 %v8346, %v8562
    %v8705 = vmax.f32 %v8345, %v8564
    %v8706 = vmax.f32 %v8347, %v8566
    %v8707 = vmax.f32 %v8355, %v8568
    %v8708 = vmax.f32 %v8363, %v8570
    %v8709 = vmax.f32 %v8362, %v8572
    %v8710 = vmax.f32 %v8364, %v8574
    %v8711 = vmax.f32 %v8372, %v8576
    %v8712 = vmax.f32 %v8380, %v8578
    %v8713 = vmax.f32 %v8379, %v8580
    %v8714 = vmax.f32 %v8381, %v8582
    %v8715 = vmax.f32 %v8389, %v8584
    %v8716 = vmax.f32 %v8397, %v8586
    %v8717 = vmax.f32 %v8396, %v8588
    %v8718 = vmax.f32 %v8398, %v8590
    %v8719 = vmax.f32 %v8655, %v8659
    %v8720 = vmax.f32 %v8656, %v8660
    %v8721 = vmax.f32 %v8657, %v8661
    %v8722 = vmax.f32 %v8658, %v8662
    %v8723 = vmax.f32 %v8663, %v8667
    %v8724 = vmax.f32 %v8664, %v8668
    %v8725 = vmax.f32 %v8665, %v8669
    %v8726 = vmax.f32 %v8666, %v8670
    %v8727 = vmax.f32 %v8671, %v8675
    %v8728 = vmax.f32 %v8672, %v8676
    %v8729 = vmax.f32 %v8673, %v8677
    %v8730 = vmax.f32 %v8674, %v8678
    %v8731 = vmax.f32 %v8679, %v8683
    %v8732 = vmax.f32 %v8680, %v8684
    %v8733 = vmax.f32 %v8681, %v8685
    %v8734 = vmax.f32 %v8682, %v8686
    %v8735 = vmax.f32 %v8687, %v8691
    %v8736 = vmax.f32 %v8688, %v8692
    %v8737 = vmax.f32 %v8689, %v8693
    %v8738 = vmax.f32 %v8690, %v8694
    %v8739 = vmax.f32 %v8695, %v8699
    %v8740 = vmax.f32 %v8696, %v8700
    %v8741 = vmax.f32 %v8697, %v8701
    %v8742 = vmax.f32 %v8698, %v8702
    %v8743 = vmax.f32 %v8703, %v8707
    %v8744 = vmax.f32 %v8704, %v8708
    %v8745 = vmax.f32 %v8705, %v8709
    %v8746 = vmax.f32 %v8706, %v8710
    %v8747 = vmax.f32 %v8711, %v8715
    %v8748 = vmax.f32 %v8712, %v8716
    %v8749 = vmax.f32 %v8713, %v8717
    %v8750 = vmax.f32 %v8714, %v8718
    %vm8751 = vcmask 1043456
    %vm8752 = vcmask 130052
    %vm8753 = vmor %vm8752, %vm8751
    %8754 = vst.msk [vmem:[#allocation5] sm:$0xff] %vm8753, 0.0
    %8755 = vst.msk [vmem:[#allocation5 + $0x8] sm:$0xff] %vm8753, 0.0
    %8756 = vst.msk [vmem:[#allocation5 + $0x10] sm:$0xff] %vm8753, 0.0
    %8757 = vst.msk [vmem:[#allocation5 + $0x18] sm:$0xff] %vm8753, 0.0
    %8758 = vst.msk [vmem:[#allocation5 + $0x20] sm:$0xff] %vm8753, 0.0
    %8759 = vst.msk [vmem:[#allocation5 + $0x28] sm:$0xff] %vm8753, 0.0
    %8760 = vst.msk [vmem:[#allocation5 + $0x30] sm:$0xff] %vm8753, 0.0
    %8761 = vst.msk [vmem:[#allocation5 + $0x38] sm:$0xff] %vm8753, 0.0
    %v8781 = vunpack.c.l.s4 572653568
    %v8782 = vunpack.c.0.s8 %v8781
    %v8783 = vlaneseq
    %v8784 = vshrl.u32 %v8783, 7
    %v8785 = vsub.s32 %v8782, %v8784
    %v8786 = vrot.slane %v8719, %v8785
    %v8788 = vunpack.c.l.s4 572653568
    %v8789 = vunpack.c.0.s8 %v8788
    %v8790 = vlaneseq
    %v8791 = vshrl.u32 %v8790, 7
    %v8792 = vsub.s32 %v8789, %v8791
    %v8793 = vrot.slane %v8720, %v8792
    %v8795 = vunpack.c.l.s4 572653568
    %v8796 = vunpack.c.0.s8 %v8795
    %v8797 = vlaneseq
    %v8798 = vshrl.u32 %v8797, 7
    %v8799 = vsub.s32 %v8796, %v8798
    %v8800 = vrot.slane %v8721, %v8799
    %v8802 = vunpack.c.l.s4 572653568
    %v8803 = vunpack.c.0.s8 %v8802
    %v8804 = vlaneseq
    %v8805 = vshrl.u32 %v8804, 7
    %v8806 = vsub.s32 %v8803, %v8805
    %v8807 = vrot.slane %v8723, %v8806
    %v8809 = vunpack.c.l.s4 572653568
    %v8810 = vunpack.c.0.s8 %v8809
    %v8811 = vlaneseq
    %v8812 = vshrl.u32 %v8811, 7
    %v8813 = vsub.s32 %v8810, %v8812
    %v8814 = vrot.slane %v8724, %v8813
    %v8816 = vunpack.c.l.s4 572653568
    %v8817 = vunpack.c.0.s8 %v8816
    %v8818 = vlaneseq
    %v8819 = vshrl.u32 %v8818, 7
    %v8820 = vsub.s32 %v8817, %v8819
    %v8821 = vrot.slane %v8725, %v8820
    %v8823 = vunpack.c.l.s4 572653568
    %v8824 = vunpack.c.0.s8 %v8823
    %v8825 = vlaneseq
    %v8826 = vshrl.u32 %v8825, 7
    %v8827 = vsub.s32 %v8824, %v8826
    %v8828 = vrot.slane %v8727, %v8827
    %v8830 = vunpack.c.l.s4 572653568
    %v8831 = vunpack.c.0.s8 %v8830
    %v8832 = vlaneseq
    %v8833 = vshrl.u32 %v8832, 7
    %v8834 = vsub.s32 %v8831, %v8833
    %v8835 = vrot.slane %v8728, %v8834
    %v8837 = vunpack.c.l.s4 572653568
    %v8838 = vunpack.c.0.s8 %v8837
    %v8839 = vlaneseq
    %v8840 = vshrl.u32 %v8839, 7
    %v8841 = vsub.s32 %v8838, %v8840
    %v8842 = vrot.slane %v8729, %v8841
    %v8844 = vunpack.c.l.s4 572653568
    %v8845 = vunpack.c.0.s8 %v8844
    %v8846 = vlaneseq
    %v8847 = vshrl.u32 %v8846, 7
    %v8848 = vsub.s32 %v8845, %v8847
    %v8849 = vrot.slane %v8735, %v8848
    %v8851 = vunpack.c.l.s4 572653568
    %v8852 = vunpack.c.0.s8 %v8851
    %v8853 = vlaneseq
    %v8854 = vshrl.u32 %v8853, 7
    %v8855 = vsub.s32 %v8852, %v8854
    %v8856 = vrot.slane %v8736, %v8855
    %v8858 = vunpack.c.l.s4 572653568
    %v8859 = vunpack.c.0.s8 %v8858
    %v8860 = vlaneseq
    %v8861 = vshrl.u32 %v8860, 7
    %v8862 = vsub.s32 %v8859, %v8861
    %v8863 = vrot.slane %v8737, %v8862
    %v8865 = vunpack.c.l.s4 572653568
    %v8866 = vunpack.c.0.s8 %v8865
    %v8867 = vlaneseq
    %v8868 = vshrl.u32 %v8867, 7
    %v8869 = vsub.s32 %v8866, %v8868
    %v8870 = vrot.slane %v8739, %v8869
    %v8872 = vunpack.c.l.s4 572653568
    %v8873 = vunpack.c.0.s8 %v8872
    %v8874 = vlaneseq
    %v8875 = vshrl.u32 %v8874, 7
    %v8876 = vsub.s32 %v8873, %v8875
    %v8877 = vrot.slane %v8740, %v8876
    %v8879 = vunpack.c.l.s4 572653568
    %v8880 = vunpack.c.0.s8 %v8879
    %v8881 = vlaneseq
    %v8882 = vshrl.u32 %v8881, 7
    %v8883 = vsub.s32 %v8880, %v8882
    %v8884 = vrot.slane %v8741, %v8883
    %v8886 = vunpack.c.l.s4 572653568
    %v8887 = vunpack.c.0.s8 %v8886
    %v8888 = vlaneseq
    %v8889 = vshrl.u32 %v8888, 7
    %v8890 = vsub.s32 %v8887, %v8889
    %v8891 = vrot.slane %v8743, %v8890
    %v8893 = vunpack.c.l.s4 572653568
    %v8894 = vunpack.c.0.s8 %v8893
    %v8895 = vlaneseq
    %v8896 = vshrl.u32 %v8895, 7
    %v8897 = vsub.s32 %v8894, %v8896
    %v8898 = vrot.slane %v8744, %v8897
    %v8900 = vunpack.c.l.s4 572653568
    %v8901 = vunpack.c.0.s8 %v8900
    %v8902 = vlaneseq
    %v8903 = vshrl.u32 %v8902, 7
    %v8904 = vsub.s32 %v8901, %v8903
    %v8905 = vrot.slane %v8745, %v8904
    %v8906 = vsel %vm6136, %v8793, %v8786
    %v8907 = vsel %vm6144, %v8793, %v8906
    %v8908 = vsel %vm6138, %v8800, %v8907
    %v8909 = vsel %vm6324, %v8800, %v8908
    %v8910 = vsel %vm6136, %v8814, %v8807
    %v8911 = vsel %vm6144, %v8814, %v8910
    %v8912 = vsel %vm6138, %v8821, %v8911
    %v8913 = vsel %vm6324, %v8821, %v8912
    %v8914 = vsel %vm6136, %v8835, %v8828
    %v8915 = vsel %vm6144, %v8835, %v8914
    %v8916 = vsel %vm6138, %v8842, %v8915
    %v8917 = vsel %vm6324, %v8842, %v8916
    %v8918 = vsel %vm6136, %v8856, %v8849
    %v8919 = vsel %vm6144, %v8856, %v8918
    %v8920 = vsel %vm6138, %v8863, %v8919
    %v8921 = vsel %vm6324, %v8863, %v8920
    %v8922 = vsel %vm6136, %v8877, %v8870
    %v8923 = vsel %vm6144, %v8877, %v8922
    %v8924 = vsel %vm6138, %v8884, %v8923
    %v8925 = vsel %vm6324, %v8884, %v8924
    %v8926 = vsel %vm6136, %v8898, %v8891
    %v8927 = vsel %vm6144, %v8898, %v8926
    %v8928 = vsel %vm6138, %v8905, %v8927
    %v8929 = vsel %vm6324, %v8905, %v8928
    %s8936 = scalar_lea.vmem [#allocation5], 8
    %vm8937 = vcmask 125953
    %8938 = vst.msk [vmem:[%s8936] sm:$0xe] %vm8937, %v8909
    %8939 = vst.msk [vmem:[%s8936 + $0x8] sm:$0xe] %vm8937, %v8913
    %8940 = vst.msk [vmem:[%s8936 + $0x10] sm:$0xe] %vm8937, %v8917
    %8941 = vst.msk [vmem:[%s8936 + $0x20] sm:$0xe] %vm8937, %v8921
    %8942 = vst.msk [vmem:[%s8936 + $0x28] sm:$0xe] %vm8937, %v8925
    %8943 = vst.msk [vmem:[%s8936 + $0x30] sm:$0xe] %vm8937, %v8929
    %v8951 = vunpack.c.l.s4 572653568
    %v8952 = vunpack.c.0.s8 %v8951
    %v8953 = vlaneseq
    %v8954 = vshrl.u32 %v8953, 7
    %v8955 = vsub.s32 %v8952, %v8954
    %v8956 = vrot.slane %v8722, %v8955
    %v8958 = vunpack.c.l.s4 572653568
    %v8959 = vunpack.c.0.s8 %v8958
    %v8960 = vlaneseq
    %v8961 = vshrl.u32 %v8960, 7
    %v8962 = vsub.s32 %v8959, %v8961
    %v8963 = vrot.slane %v8726, %v8962
    %v8965 = vunpack.c.l.s4 572653568
    %v8966 = vunpack.c.0.s8 %v8965
    %v8967 = vlaneseq
    %v8968 = vshrl.u32 %v8967, 7
    %v8969 = vsub.s32 %v8966, %v8968
    %v8970 = vrot.slane %v8730, %v8969
    %v8972 = vunpack.c.l.s4 572653568
    %v8973 = vunpack.c.0.s8 %v8972
    %v8974 = vlaneseq
    %v8975 = vshrl.u32 %v8974, 7
    %v8976 = vsub.s32 %v8973, %v8975
    %v8977 = vrot.slane %v8738, %v8976
    %v8979 = vunpack.c.l.s4 572653568
    %v8980 = vunpack.c.0.s8 %v8979
    %v8981 = vlaneseq
    %v8982 = vshrl.u32 %v8981, 7
    %v8983 = vsub.s32 %v8980, %v8982
    %v8984 = vrot.slane %v8742, %v8983
    %v8986 = vunpack.c.l.s4 572653568
    %v8987 = vunpack.c.0.s8 %v8986
    %v8988 = vlaneseq
    %v8989 = vshrl.u32 %v8988, 7
    %v8990 = vsub.s32 %v8987, %v8989
    %v8991 = vrot.slane %v8746, %v8990
    %v8992 = vsel %vm6134, %v8793, %v8786
    %v8993 = vsel %vm6142, %v8793, %v8992
    %v8994 = vsel %vm6136, %v8800, %v8993
    %v8995 = vsel %vm6144, %v8800, %v8994
    %v8996 = vsel %vm6138, %v8956, %v8995
    %v8997 = vsel %vm6324, %v8956, %v8996
    %v8998 = vsel %vm6134, %v8814, %v8807
    %v8999 = vsel %vm6142, %v8814, %v8998
    %v9000 = vsel %vm6136, %v8821, %v8999
    %v9001 = vsel %vm6144, %v8821, %v9000
    %v9002 = vsel %vm6138, %v8963, %v9001
    %v9003 = vsel %vm6324, %v8963, %v9002
    %v9004 = vsel %vm6134, %v8835, %v8828
    %v9005 = vsel %vm6142, %v8835, %v9004
    %v9006 = vsel %vm6136, %v8842, %v9005
    %v9007 = vsel %vm6144, %v8842, %v9006
    %v9008 = vsel %vm6138, %v8970, %v9007
    %v9009 = vsel %vm6324, %v8970, %v9008
    %v9010 = vsel %vm6134, %v8856, %v8849
    %v9011 = vsel %vm6142, %v8856, %v9010
    %v9012 = vsel %vm6136, %v8863, %v9011
    %v9013 = vsel %vm6144, %v8863, %v9012
    %v9014 = vsel %vm6138, %v8977, %v9013
    %v9015 = vsel %vm6324, %v8977, %v9014
    %v9016 = vsel %vm6134, %v8877, %v8870
    %v9017 = vsel %vm6142, %v8877, %v9016
    %v9018 = vsel %vm6136, %v8884, %v9017
    %v9019 = vsel %vm6144, %v8884, %v9018
    %v9020 = vsel %vm6138, %v8984, %v9019
    %v9021 = vsel %vm6324, %v8984, %v9020
    %v9022 = vsel %vm6134, %v8898, %v8891
    %v9023 = vsel %vm6142, %v8898, %v9022
    %v9024 = vsel %vm6136, %v8905, %v9023
    %v9025 = vsel %vm6144, %v8905, %v9024
    %v9026 = vsel %vm6138, %v8991, %v9025
    %v9027 = vsel %vm6324, %v8991, %v9026
    %9028 = vrot.lane.b32.xlu0 %v8997, 16
    %v9029 = vpop.permute.xlu0 %9028
    %9030 = vrot.lane.b32.xlu0 %v9003, 16
    %v9031 = vpop.permute.xlu0 %9030
    %9032 = vrot.lane.b32.xlu0 %v9009, 16
    %v9033 = vpop.permute.xlu0 %9032
    %9034 = vrot.lane.b32.xlu0 %v9015, 16
    %v9035 = vpop.permute.xlu0 %9034
    %9036 = vrot.lane.b32.xlu0 %v9021, 16
    %v9037 = vpop.permute.xlu0 %9036
    %9038 = vrot.lane.b32.xlu0 %v9027, 16
    %v9039 = vpop.permute.xlu0 %9038
    %vm9046 = vcmask 257152
    %9047 = vst.msk [vmem:[%s8936] sm:$0xf] %vm9046, %v9029
    %9048 = vst.msk [vmem:[%s8936 + $0x8] sm:$0xf] %vm9046, %v9031
    %9049 = vst.msk [vmem:[%s8936 + $0x10] sm:$0xf] %vm9046, %v9033
    %9050 = vst.msk [vmem:[%s8936 + $0x20] sm:$0xf] %vm9046, %v9035
    %9051 = vst.msk [vmem:[%s8936 + $0x28] sm:$0xf] %vm9046, %v9037
    %9052 = vst.msk [vmem:[%s8936 + $0x30] sm:$0xf] %vm9046, %v9039
    %v9053 = vsel %vm6134, %v8800, %v8793
    %v9054 = vsel %vm6142, %v8800, %v9053
    %v9055 = vsel %vm6136, %v8956, %v9054
    %v9056 = vsel %vm6144, %v8956, %v9055
    %v9057 = vsel %vm6134, %v8821, %v8814
    %v9058 = vsel %vm6142, %v8821, %v9057
    %v9059 = vsel %vm6136, %v8963, %v9058
    %v9060 = vsel %vm6144, %v8963, %v9059
    %v9061 = vsel %vm6134, %v8842, %v8835
    %v9062 = vsel %vm6142, %v8842, %v9061
    %v9063 = vsel %vm6136, %v8970, %v9062
    %v9064 = vsel %vm6144, %v8970, %v9063
    %v9065 = vsel %vm6134, %v8863, %v8856
    %v9066 = vsel %vm6142, %v8863, %v9065
    %v9067 = vsel %vm6136, %v8977, %v9066
    %v9068 = vsel %vm6144, %v8977, %v9067
    %v9069 = vsel %vm6134, %v8884, %v8877
    %v9070 = vsel %vm6142, %v8884, %v9069
    %v9071 = vsel %vm6136, %v8984, %v9070
    %v9072 = vsel %vm6144, %v8984, %v9071
    %v9073 = vsel %vm6134, %v8905, %v8898
    %v9074 = vsel %vm6142, %v8905, %v9073
    %v9075 = vsel %vm6136, %v8991, %v9074
    %v9076 = vsel %vm6144, %v8991, %v9075
    %9077 = vrot.lane.b32.xlu0 %v9056, 32
    %v9078 = vpop.permute.xlu0 %9077
    %9079 = vrot.lane.b32.xlu0 %v9060, 32
    %v9080 = vpop.permute.xlu0 %9079
    %9081 = vrot.lane.b32.xlu0 %v9064, 32
    %v9082 = vpop.permute.xlu0 %9081
    %9083 = vrot.lane.b32.xlu0 %v9068, 32
    %v9084 = vpop.permute.xlu0 %9083
    %9085 = vrot.lane.b32.xlu0 %v9072, 32
    %v9086 = vpop.permute.xlu0 %9085
    %9087 = vrot.lane.b32.xlu0 %v9076, 32
    %v9088 = vpop.permute.xlu0 %9087
    %vm9095 = vcmask 387328
    %9096 = vst.msk [vmem:[%s8936] sm:$0x7] %vm9095, %v9078
    %9097 = vst.msk [vmem:[%s8936 + $0x8] sm:$0x7] %vm9095, %v9080
    %9098 = vst.msk [vmem:[%s8936 + $0x10] sm:$0x7] %vm9095, %v9082
    %9099 = vst.msk [vmem:[%s8936 + $0x20] sm:$0x7] %vm9095, %v9084
    %9100 = vst.msk [vmem:[%s8936 + $0x28] sm:$0x7] %vm9095, %v9086
    %9101 = vst.msk [vmem:[%s8936 + $0x30] sm:$0x7] %vm9095, %v9088
    %v9109 = vunpack.c.l.s4 572653568
    %v9110 = vunpack.c.0.s8 %v9109
    %v9111 = vlaneseq
    %v9112 = vshrl.u32 %v9111, 7
    %v9113 = vsub.s32 %v9110, %v9112
    %v9114 = vrot.slane %v8731, %v9113
    %v9116 = vunpack.c.l.s4 572653568
    %v9117 = vunpack.c.0.s8 %v9116
    %v9118 = vlaneseq
    %v9119 = vshrl.u32 %v9118, 7
    %v9120 = vsub.s32 %v9117, %v9119
    %v9121 = vrot.slane %v8732, %v9120
    %v9123 = vunpack.c.l.s4 572653568
    %v9124 = vunpack.c.0.s8 %v9123
    %v9125 = vlaneseq
    %v9126 = vshrl.u32 %v9125, 7
    %v9127 = vsub.s32 %v9124, %v9126
    %v9128 = vrot.slane %v8733, %v9127
    %v9130 = vunpack.c.l.s4 572653568
    %v9131 = vunpack.c.0.s8 %v9130
    %v9132 = vlaneseq
    %v9133 = vshrl.u32 %v9132, 7
    %v9134 = vsub.s32 %v9131, %v9133
    %v9135 = vrot.slane %v8747, %v9134
    %v9137 = vunpack.c.l.s4 572653568
    %v9138 = vunpack.c.0.s8 %v9137
    %v9139 = vlaneseq
    %v9140 = vshrl.u32 %v9139, 7
    %v9141 = vsub.s32 %v9138, %v9140
    %v9142 = vrot.slane %v8748, %v9141
    %v9144 = vunpack.c.l.s4 572653568
    %v9145 = vunpack.c.0.s8 %v9144
    %v9146 = vlaneseq
    %v9147 = vshrl.u32 %v9146, 7
    %v9148 = vsub.s32 %v9145, %v9147
    %v9149 = vrot.slane %v8749, %v9148
    %v9150 = vsel %vm6136, %v9121, %v9114
    %v9151 = vsel %vm6144, %v9121, %v9150
    %v9152 = vsel %vm6138, %v9128, %v9151
    %v9153 = vsel %vm6324, %v9128, %v9152
    %v9154 = vsel %vm6136, %v9142, %v9135
    %v9155 = vsel %vm6144, %v9142, %v9154
    %v9156 = vsel %vm6138, %v9149, %v9155
    %v9157 = vsel %vm6324, %v9149, %v9156
    %9158 = vrot.lane.b32.xlu0 %v8909, 48
    %v9159 = vpop.permute.xlu0 %9158
    %9160 = vrot.lane.b32.xlu0 %v8913, 48
    %v9161 = vpop.permute.xlu0 %9160
    %9162 = vrot.lane.b32.xlu0 %v8917, 48
    %v9163 = vpop.permute.xlu0 %9162
    %9164 = vrot.lane.b32.xlu0 %v9153, 48
    %v9165 = vpop.permute.xlu0 %9164
    %9166 = vrot.lane.b32.xlu0 %v8921, 48
    %v9167 = vpop.permute.xlu0 %9166
    %9168 = vrot.lane.b32.xlu0 %v8925, 48
    %v9169 = vpop.permute.xlu0 %9168
    %9170 = vrot.lane.b32.xlu0 %v8929, 48
    %v9171 = vpop.permute.xlu0 %9170
    %9172 = vrot.lane.b32.xlu0 %v9157, 48
    %v9173 = vpop.permute.xlu0 %9172
    %vm9182 = vcmask 519553
    %9183 = vst.msk [vmem:[#allocation5] sm:$0xe] %vm9182, %v9159
    %9184 = vst.msk [vmem:[#allocation5 + $0x8] sm:$0xe] %vm9182, %v9161
    %9185 = vst.msk [vmem:[#allocation5 + $0x10] sm:$0xe] %vm9182, %v9163
    %9186 = vst.msk [vmem:[#allocation5 + $0x18] sm:$0xe] %vm9182, %v9165
    %9187 = vst.msk [vmem:[#allocation5 + $0x20] sm:$0xe] %vm9182, %v9167
    %9188 = vst.msk [vmem:[#allocation5 + $0x28] sm:$0xe] %vm9182, %v9169
    %9189 = vst.msk [vmem:[#allocation5 + $0x30] sm:$0xe] %vm9182, %v9171
    %9190 = vst.msk [vmem:[#allocation5 + $0x38] sm:$0xe] %vm9182, %v9173
    %v9194 = vunpack.c.l.s4 572653568
    %v9195 = vunpack.c.0.s8 %v9194
    %v9196 = vlaneseq
    %v9197 = vshrl.u32 %v9196, 7
    %v9198 = vsub.s32 %v9195, %v9197
    %v9199 = vrot.slane %v8734, %v9198
    %v9201 = vunpack.c.l.s4 572653568
    %v9202 = vunpack.c.0.s8 %v9201
    %v9203 = vlaneseq
    %v9204 = vshrl.u32 %v9203, 7
    %v9205 = vsub.s32 %v9202, %v9204
    %v9206 = vrot.slane %v8750, %v9205
    %v9207 = vsel %vm6134, %v9121, %v9114
    %v9208 = vsel %vm6142, %v9121, %v9207
    %v9209 = vsel %vm6136, %v9128, %v9208
    %v9210 = vsel %vm6144, %v9128, %v9209
    %v9211 = vsel %vm6138, %v9199, %v9210
    %v9212 = vsel %vm6324, %v9199, %v9211
    %v9213 = vsel %vm6134, %v9142, %v9135
    %v9214 = vsel %vm6142, %v9142, %v9213
    %v9215 = vsel %vm6136, %v9149, %v9214
    %v9216 = vsel %vm6144, %v9149, %v9215
    %v9217 = vsel %vm6138, %v9206, %v9216
    %v9218 = vsel %vm6324, %v9206, %v9217
    %9219 = vrot.lane.b32.xlu0 %v8997, 64
    %v9220 = vpop.permute.xlu0 %9219
    %9221 = vrot.lane.b32.xlu0 %v9003, 64
    %v9222 = vpop.permute.xlu0 %9221
    %9223 = vrot.lane.b32.xlu0 %v9009, 64
    %v9224 = vpop.permute.xlu0 %9223
    %9225 = vrot.lane.b32.xlu0 %v9212, 64
    %v9226 = vpop.permute.xlu0 %9225
    %9227 = vrot.lane.b32.xlu0 %v9015, 64
    %v9228 = vpop.permute.xlu0 %9227
    %9229 = vrot.lane.b32.xlu0 %v9021, 64
    %v9230 = vpop.permute.xlu0 %9229
    %9231 = vrot.lane.b32.xlu0 %v9027, 64
    %v9232 = vpop.permute.xlu0 %9231
    %9233 = vrot.lane.b32.xlu0 %v9218, 64
    %v9234 = vpop.permute.xlu0 %9233
    %vm9243 = vcmask 650752
    %9244 = vst.msk [vmem:[#allocation5] sm:$0xf] %vm9243, %v9220
    %9245 = vst.msk [vmem:[#allocation5 + $0x8] sm:$0xf] %vm9243, %v9222
    %9246 = vst.msk [vmem:[#allocation5 + $0x10] sm:$0xf] %vm9243, %v9224
    %9247 = vst.msk [vmem:[#allocation5 + $0x18] sm:$0xf] %vm9243, %v9226
    %9248 = vst.msk [vmem:[#allocation5 + $0x20] sm:$0xf] %vm9243, %v9228
    %9249 = vst.msk [vmem:[#allocation5 + $0x28] sm:$0xf] %vm9243, %v9230
    %9250 = vst.msk [vmem:[#allocation5 + $0x30] sm:$0xf] %vm9243, %v9232
    %9251 = vst.msk [vmem:[#allocation5 + $0x38] sm:$0xf] %vm9243, %v9234
    %v9252 = vsel %vm6134, %v9128, %v9121
    %v9253 = vsel %vm6142, %v9128, %v9252
    %v9254 = vsel %vm6136, %v9199, %v9253
    %v9255 = vsel %vm6144, %v9199, %v9254
    %v9256 = vsel %vm6134, %v9149, %v9142
    %v9257 = vsel %vm6142, %v9149, %v9256
    %v9258 = vsel %vm6136, %v9206, %v9257
    %v9259 = vsel %vm6144, %v9206, %v9258
    %9260 = vrot.lane.b32.xlu0 %v9056, 80
    %v9261 = vpop.permute.xlu0 %9260
    %9262 = vrot.lane.b32.xlu0 %v9060, 80
    %v9263 = vpop.permute.xlu0 %9262
    %9264 = vrot.lane.b32.xlu0 %v9064, 80
    %v9265 = vpop.permute.xlu0 %9264
    %9266 = vrot.lane.b32.xlu0 %v9255, 80
    %v9267 = vpop.permute.xlu0 %9266
    %9268 = vrot.lane.b32.xlu0 %v9068, 80
    %v9269 = vpop.permute.xlu0 %9268
    %9270 = vrot.lane.b32.xlu0 %v9072, 80
    %v9271 = vpop.permute.xlu0 %9270
    %9272 = vrot.lane.b32.xlu0 %v9076, 80
    %v9273 = vpop.permute.xlu0 %9272
    %9274 = vrot.lane.b32.xlu0 %v9259, 80
    %v9275 = vpop.permute.xlu0 %9274
    %vm9284 = vcmask 780928
    %9285 = vst.msk [vmem:[#allocation5] sm:$0x7] %vm9284, %v9261
    %9286 = vst.msk [vmem:[#allocation5 + $0x8] sm:$0x7] %vm9284, %v9263
    %9287 = vst.msk [vmem:[#allocation5 + $0x10] sm:$0x7] %vm9284, %v9265
    %9288 = vst.msk [vmem:[#allocation5 + $0x18] sm:$0x7] %vm9284, %v9267
    %9289 = vst.msk [vmem:[#allocation5 + $0x20] sm:$0x7] %vm9284, %v9269
    %9290 = vst.msk [vmem:[#allocation5 + $0x28] sm:$0x7] %vm9284, %v9271
    %9291 = vst.msk [vmem:[#allocation5 + $0x30] sm:$0x7] %vm9284, %v9273
    %9292 = vst.msk [vmem:[#allocation5 + $0x38] sm:$0x7] %vm9284, %v9275
    %9293 = vrot.lane.b32.xlu0 %v8913, 96
    %v9294 = vpop.permute.xlu0 %9293
    %9295 = vrot.lane.b32.xlu0 %v8917, 96
    %v9296 = vpop.permute.xlu0 %9295
    %9297 = vrot.lane.b32.xlu0 %v9153, 96
    %v9298 = vpop.permute.xlu0 %9297
    %9299 = vrot.lane.b32.xlu0 %v8925, 96
    %v9300 = vpop.permute.xlu0 %9299
    %9301 = vrot.lane.b32.xlu0 %v8929, 96
    %v9302 = vpop.permute.xlu0 %9301
    %9303 = vrot.lane.b32.xlu0 %v9157, 96
    %v9304 = vpop.permute.xlu0 %9303
    %vm9311 = vcmask 913153
    %9312 = vst.msk [vmem:[#allocation5] sm:$0xe] %vm9311, %v9294
    %9313 = vst.msk [vmem:[#allocation5 + $0x8] sm:$0xe] %vm9311, %v9296
    %9314 = vst.msk [vmem:[#allocation5 + $0x10] sm:$0xe] %vm9311, %v9298
    %9315 = vst.msk [vmem:[#allocation5 + $0x20] sm:$0xe] %vm9311, %v9300
    %9316 = vst.msk [vmem:[#allocation5 + $0x28] sm:$0xe] %vm9311, %v9302
    %9317 = vst.msk [vmem:[#allocation5 + $0x30] sm:$0xe] %vm9311, %v9304
    %9318 = vrot.lane.b32.xlu0 %v9003, 112
    %v9319 = vpop.permute.xlu0 %9318
    %9320 = vrot.lane.b32.xlu0 %v9009, 112
    %v9321 = vpop.permute.xlu0 %9320
    %9322 = vrot.lane.b32.xlu0 %v9212, 112
    %v9323 = vpop.permute.xlu0 %9322
    %9324 = vrot.lane.b32.xlu0 %v9021, 112
    %v9325 = vpop.permute.xlu0 %9324
    %9326 = vrot.lane.b32.xlu0 %v9027, 112
    %v9327 = vpop.permute.xlu0 %9326
    %9328 = vrot.lane.b32.xlu0 %v9218, 112
    %v9329 = vpop.permute.xlu0 %9328
    %vm9336 = vcmask 1044352
    %9337 = vst.msk [vmem:[#allocation5] sm:$0xf] %vm9336, %v9319
    %9338 = vst.msk [vmem:[#allocation5 + $0x8] sm:$0xf] %vm9336, %v9321
    %9339 = vst.msk [vmem:[#allocation5 + $0x10] sm:$0xf] %vm9336, %v9323
    %9340 = vst.msk [vmem:[#allocation5 + $0x20] sm:$0xf] %vm9336, %v9325
    %9341 = vst.msk [vmem:[#allocation5 + $0x28] sm:$0xf] %vm9336, %v9327
    %9342 = vst.msk [vmem:[#allocation5 + $0x30] sm:$0xf] %vm9336, %v9329
    %vm9349 = vcmask 124928
    %9350 = vst.msk [vmem:[#allocation5 + $0x4] sm:$0x7] %vm9349, %v9060
    %9351 = vst.msk [vmem:[#allocation5 + $0xc] sm:$0x7] %vm9349, %v9064
    %9352 = vst.msk [vmem:[#allocation5 + $0x14] sm:$0x7] %vm9349, %v9255
    %9353 = vst.msk [vmem:[#allocation5 + $0x24] sm:$0x7] %vm9349, %v9072
    %9354 = vst.msk [vmem:[#allocation5 + $0x2c] sm:$0x7] %vm9349, %v9076
    %9355 = vst.msk [vmem:[#allocation5 + $0x34] sm:$0x7] %vm9349, %v9259
    %v9356 = vld [vmem:[#allocation5] sm:$0xff]
    %v9357 = vld [vmem:[#allocation5 + $0x8] sm:$0xff]
    %v9358 = vld [vmem:[#allocation5 + $0x10] sm:$0xff]
    %v9359 = vld [vmem:[#allocation5 + $0x18] sm:$0xff]
    %v9360 = vld [vmem:[#allocation5 + $0x20] sm:$0xff]
    %v9361 = vld [vmem:[#allocation5 + $0x28] sm:$0xff]
    %v9362 = vld [vmem:[#allocation5 + $0x30] sm:$0xff]
    %v9363 = vld [vmem:[#allocation5 + $0x38] sm:$0xff]
    %v9364 = vld [vmem:[%s4] sm:$0xff]
    %v9365 = vld [vmem:[%s4 + $0x8] sm:$0xff]
    %v9366 = vld [vmem:[%s4 + $0x10] sm:$0xff]
    %v9367 = vld [vmem:[%s4 + $0x18] sm:$0xff]
    %v9368 = vld [vmem:[%s4 + $0x20] sm:$0xff]
    %v9369 = vld [vmem:[%s4 + $0x28] sm:$0xff]
    %v9370 = vld [vmem:[%s4 + $0x30] sm:$0xff]
    %v9371 = vld [vmem:[%s4 + $0x38] sm:$0xff]
    %v9372 = vld [vmem:[%s4 + $0x40] sm:$0xff]
    %v9373 = vld [vmem:[%s4 + $0x48] sm:$0xff]
    %v9374 = vld [vmem:[%s4 + $0x50] sm:$0xff]
    %v9375 = vld [vmem:[%s4 + $0x58] sm:$0xff]
    %v9376 = vld [vmem:[%s4 + $0x60] sm:$0xff]
    %v9377 = vld [vmem:[%s4 + $0x68] sm:$0xff]
    %v9378 = vld [vmem:[%s4 + $0x70] sm:$0xff]
    %v9379 = vld [vmem:[%s4 + $0x78] sm:$0xff]
    %v9380 = vld [vmem:[%s4 + $0x80] sm:$0xff]
    %v9381 = vld [vmem:[%s4 + $0x88] sm:$0xff]
    %v9382 = vld [vmem:[%s9] sm:$0x1]
    %v9384 = vlaneseq
    %v9385 = vshrl.u32 %v9384, 7
    %v9386 = vsub.s32 0, %v9385
    %v9387 = vrot.slane %v9382, %v9386
    %v9397 = vcombine.low %v9356, %v9357
    %v9398 = vcombine.high %v9356, %v9357
    %v9399 = vcombine.low %v9358, %v9359
    %v9400 = vcombine.high %v9358, %v9359
    %v9401 = vcombine.low %v9360, %v9361
    %v9402 = vcombine.high %v9360, %v9361
    %v9403 = vcombine.low %v9362, %v9363
    %v9404 = vcombine.high %v9362, %v9363
    %v9409 = vsel %vm7267, %v9398, 0
    %v9411 = vsel %vm7267, %v9400, 0
    %v9413 = vsel %vm7267, %v9402, 0
    %v9415 = vsel %vm7267, %v9404, 0
    %9417 = vmatprep.subr.mxu0 0.0
    %9418 = vmatpush1.msra.mxu0 %v9364
    %9419 = vmatprep.subr.mxu0 0.0
    %9420 = vmatpush1.msra.mxu0 %v9365
    %9421 = vmatprep.subr.mxu0 0.0
    %9422 = vmatpush1.msra.mxu0 %v9366
    %9423 = vmatprep.subr.mxu0 0.0
    %9424 = vmatpush1.msra.mxu0 %v9367
    %9425 = vmatprep.subr.mxu0 0.0
    %9426 = vmatpush1.msra.mxu0 %v9368
    %9427 = vmatprep.subr.mxu0 0.0
    %9428 = vmatpush1.msra.mxu0 %v9369
    %9429 = vmatprep.subr.mxu0 0.0
    %9430 = vmatpush1.msra.mxu0 %v9370
    %9431 = vmatprep.subr.mxu0 0.0
    %9432 = vmatpush1.msra.mxu0 %v9371
    %9433 = vmatprep.subr.mxu0 0.0
    %9434 = vmatpush1.msra.mxu0 %v9372
    %9435 = vmatprep.subr.mxu0 0.0
    %9436 = vmatpush1.msra.mxu0 %v9373
    %9437 = vmatprep.subr.mxu0 0.0
    %9438 = vmatpush1.msra.mxu0 %v9374
    %9439 = vmatprep.subr.mxu0 0.0
    %9440 = vmatpush1.msra.mxu0 %v9375
    %9441 = vmatprep.subr.mxu0 0.0
    %9442 = vmatpush1.msra.mxu0 %v9376
    %9443 = vmatprep.subr.mxu0 0.0
    %9444 = vmatpush1.msra.mxu0 %v9377
    %9445 = vmatprep.subr.mxu0 0.0
    %9446 = vmatpush1.msra.mxu0 %v9378
    %9447 = vmatprep.subr.mxu0 0.0
    %9448 = vmatpush1.msra.mxu0 %v9379
    %9449 = vmatprep.subr.mxu0 0.0
    %9450 = vmatpush1.msra.mxu0 %v9380
    %9451 = vmatprep.subr.mxu0 0.0
    %9452 = vmatpush1.msra.mxu0 %v9381
    %9453 = vmatprep.subr.mxu0 0.0
    %9454 = vmatpush1.msra.mxu0 0.0
    %9455 = vmatprep.subr.mxu0 0.0
    %9456 = vmatpush1.msra.mxu0 0.0
    %9457 = vmatprep.subr.mxu0 0.0
    %9458 = vmatpush1.msra.mxu0 0.0
    %9459 = vmatprep.subr.mxu0 0.0
    %9460 = vmatpush1.msra.mxu0 0.0
    %9461 = vmatprep.subr.mxu0 0.0
    %9462 = vmatpush1.msra.mxu0 0.0
    %9463 = vmatprep.subr.mxu0 0.0
    %9464 = vmatpush1.msra.mxu0 0.0
    %9465 = vmatprep.subr.mxu0 0.0
    %9466 = vmatpush1.msra.mxu0 0.0
    %9467 = vmatprep.subr.mxu0 0.0
    %9468 = vmatpush1.msra.mxu0 0.0
    %9469 = vmatprep.subr.mxu0 0.0
    %9470 = vmatpush1.msra.mxu0 0.0
    %9471 = vmatprep.subr.mxu0 0.0
    %9472 = vmatpush1.msra.mxu0 0.0
    %9473 = vmatprep.subr.mxu0 0.0
    %9474 = vmatpush1.msra.mxu0 0.0
    %9475 = vmatprep.subr.mxu0 0.0
    %9476 = vmatpush1.msra.mxu0 0.0
    %9477 = vmatprep.subr.mxu0 0.0
    %9478 = vmatpush1.msra.mxu0 0.0
    %9479 = vmatprep.subr.mxu0 0.0
    %9480 = vmatpush1.msra.mxu0 0.0
    %9481 = vmatprep.mubr.f32.mxu0 %v9409
    %9482 = vmatmul.mubr.f32.gmra.mrb[0].mxu0 %v9397
    %v9483 = vpop.f32.mrb[0].mxu0
    %v9484 = vadd.f32 %v9387, %v9483
    %v9485 = vpop.f32.mrb[0].mxu0
    %9486 = vmatprep.mubr.f32.mxu0 %v9411
    %9487 = vmatmul.mubr.f32.gmra.mrb[0].mxu0 %v9399
    %v9488 = vpop.f32.mrb[0].mxu0
    %v9489 = vadd.f32 %v9387, %v9488
    %v9490 = vpop.f32.mrb[0].mxu0
    %9491 = vmatprep.mubr.f32.mxu0 %v9413
    %9492 = vmatmul.mubr.f32.gmra.mrb[0].mxu0 %v9401
    %v9493 = vpop.f32.mrb[0].mxu0
    %v9494 = vadd.f32 %v9387, %v9493
    %v9495 = vpop.f32.mrb[0].mxu0
    %9496 = vmatprep.mubr.f32.mxu0 %v9415
    %9497 = vmatmul.mubr.f32.gmra.mrb[0].mxu0 %v9403
    %v9498 = vpop.f32.mrb[0].mxu0
    %v9499 = vadd.f32 %v9387, %v9498
    %v9500 = vpop.f32.mrb[0].mxu0
    %9501 = vdwg.mxu0
    %v9502 = vmul.f32 %v9484, 0.01
    %v9503 = vmul.f32 %v9489, 0.01
    %v9504 = vmul.f32 %v9494, 0.01
    %v9505 = vmul.f32 %v9499, 0.01
    %v9506 = vmax.f32 %v9484, %v9502
    %v9507 = vmax.f32 %v9489, %v9503
    %v9508 = vmax.f32 %v9494, %v9504
    %v9509 = vmax.f32 %v9499, %v9505
    %v9514 = vcombine.high %v9506, %v9506
    %v9515 = vcombine.high %v9507, %v9507
    %v9516 = vcombine.high %v9508, %v9508
    %v9517 = vcombine.high %v9509, %v9509
    %9522 = vst [vmem:[#allocation6] sm:$0xff] 0.0
    %vm9523 = vcmask 257024
    %9524 = vst.msk [vmem:[#allocation6 + $0x8] sm:$0xf] %vm9523, 0.0
    %9525 = vst [vmem:[#allocation6 + $0xc] sm:$0xff] 0.0
    %9526 = vst.msk [vmem:[#allocation6 + $0x14] sm:$0xf] %vm9523, 0.0
    %9527 = vst [vmem:[#allocation6 + $0x18] sm:$0xff] 0.0
    %9528 = vst.msk [vmem:[#allocation6 + $0x20] sm:$0xf] %vm9523, 0.0
    %9529 = vst [vmem:[#allocation6 + $0x24] sm:$0xff] 0.0
    %9530 = vst.msk [vmem:[#allocation6 + $0x2c] sm:$0xf] %vm9523, 0.0
    %9531 = vst [vmem:[#allocation6 + $0x30] sm:$0xff] 0.0
    %9532 = vst.msk [vmem:[#allocation6 + $0x38] sm:$0xf] %vm9523, 0.0
    %9533 = vst [vmem:[#allocation6 + $0x3c] sm:$0xff] 0.0
    %9534 = vst.msk [vmem:[#allocation6 + $0x44] sm:$0xf] %vm9523, 0.0
    %9535 = vst [vmem:[#allocation6 + $0x48] sm:$0xff] 0.0
    %9536 = vst.msk [vmem:[#allocation6 + $0x50] sm:$0xf] %vm9523, 0.0
    %9537 = vst [vmem:[#allocation6 + $0x54] sm:$0xff] 0.0
    %9538 = vst.msk [vmem:[#allocation6 + $0x5c] sm:$0xf] %vm9523, 0.0
    %v9539 = vrot.slane %v9506, 7
    %v9540 = vrot.slane %v9514, 7
    %v9541 = vrot.slane %v9507, 7
    %v9542 = vrot.slane %v9508, 7
    %v9543 = vrot.slane %v9516, 7
    %v9544 = vrot.slane %v9509, 7
    %s9551 = scalar_lea.vmem [#allocation6], 12
    %vm9552 = vcmask 257025
    %9553 = vst.msk [vmem:[%s9551] sm:$0xe] %vm9552, %v9539
    %9554 = vst.msk [vmem:[%s9551 + $0xc] sm:$0xe] %vm9552, %v9540
    %9555 = vst.msk [vmem:[%s9551 + $0x18] sm:$0xe] %vm9552, %v9541
    %9556 = vst.msk [vmem:[%s9551 + $0x30] sm:$0xe] %vm9552, %v9542
    %9557 = vst.msk [vmem:[%s9551 + $0x3c] sm:$0xe] %vm9552, %v9543
    %9558 = vst.msk [vmem:[%s9551 + $0x48] sm:$0xe] %vm9552, %v9544
    %9559 = vrot.lane.b32.xlu0 %v9506, 32
    %v9560 = vpop.permute.xlu0 %9559
    %9561 = vrot.lane.b32.xlu0 %v9514, 32
    %v9562 = vpop.permute.xlu0 %9561
    %9563 = vrot.lane.b32.xlu0 %v9507, 32
    %v9564 = vpop.permute.xlu0 %9563
    %9565 = vrot.lane.b32.xlu0 %v9508, 32
    %v9566 = vpop.permute.xlu0 %9565
    %9567 = vrot.lane.b32.xlu0 %v9516, 32
    %v9568 = vpop.permute.xlu0 %9567
    %9569 = vrot.lane.b32.xlu0 %v9509, 32
    %v9570 = vpop.permute.xlu0 %9569
    %vm9577 = vcmask 519424
    %9578 = vst.msk [vmem:[%s9551] sm:$0xf] %vm9577, %v9560
    %9579 = vst.msk [vmem:[%s9551 + $0xc] sm:$0xf] %vm9577, %v9562
    %9580 = vst.msk [vmem:[%s9551 + $0x18] sm:$0xf] %vm9577, %v9564
    %9581 = vst.msk [vmem:[%s9551 + $0x30] sm:$0xf] %vm9577, %v9566
    %9582 = vst.msk [vmem:[%s9551 + $0x3c] sm:$0xf] %vm9577, %v9568
    %9583 = vst.msk [vmem:[%s9551 + $0x48] sm:$0xf] %vm9577, %v9570
    %v9584 = vrot.slane %v9506, 5
    %v9585 = vrot.slane %v9584, 4
    %v9586 = vrot.slane %v9514, 5
    %v9587 = vrot.slane %v9586, 4
    %v9588 = vrot.slane %v9507, 5
    %v9589 = vrot.slane %v9588, 4
    %v9590 = vrot.slane %v9508, 5
    %v9591 = vrot.slane %v9590, 4
    %v9592 = vrot.slane %v9516, 5
    %v9593 = vrot.slane %v9592, 4
    %v9594 = vrot.slane %v9509, 5
    %v9595 = vrot.slane %v9594, 4
    %9596 = vrot.lane.b32.xlu0 %v9585, 64
    %v9597 = vpop.permute.xlu0 %9596
    %9598 = vrot.lane.b32.xlu0 %v9587, 64
    %v9599 = vpop.permute.xlu0 %9598
    %9600 = vrot.lane.b32.xlu0 %v9589, 64
    %v9601 = vpop.permute.xlu0 %9600
    %9602 = vrot.lane.b32.xlu0 %v9591, 64
    %v9603 = vpop.permute.xlu0 %9602
    %9604 = vrot.lane.b32.xlu0 %v9593, 64
    %v9605 = vpop.permute.xlu0 %9604
    %9606 = vrot.lane.b32.xlu0 %v9595, 64
    %v9607 = vpop.permute.xlu0 %9606
    %vm9614 = vcmask 780800
    %9615 = vst.msk [vmem:[%s9551] sm:$0x7] %vm9614, %v9597
    %9616 = vst.msk [vmem:[%s9551 + $0xc] sm:$0x7] %vm9614, %v9599
    %9617 = vst.msk [vmem:[%s9551 + $0x18] sm:$0x7] %vm9614, %v9601
    %9618 = vst.msk [vmem:[%s9551 + $0x30] sm:$0x7] %vm9614, %v9603
    %9619 = vst.msk [vmem:[%s9551 + $0x3c] sm:$0x7] %vm9614, %v9605
    %9620 = vst.msk [vmem:[%s9551 + $0x48] sm:$0x7] %vm9614, %v9607
    %v9621 = vrot.slane %v9515, 7
    %v9622 = vrot.slane %v9517, 7
    %9623 = vrot.lane.b32.xlu0 %v9539, 96
    %v9624 = vpop.permute.xlu0 %9623
    %9625 = vrot.lane.b32.xlu0 %v9540, 96
    %v9626 = vpop.permute.xlu0 %9625
    %9627 = vrot.lane.b32.xlu0 %v9541, 96
    %v9628 = vpop.permute.xlu0 %9627
    %9629 = vrot.lane.b32.xlu0 %v9621, 96
    %v9630 = vpop.permute.xlu0 %9629
    %9631 = vrot.lane.b32.xlu0 %v9542, 96
    %v9632 = vpop.permute.xlu0 %9631
    %9633 = vrot.lane.b32.xlu0 %v9543, 96
    %v9634 = vpop.permute.xlu0 %9633
    %9635 = vrot.lane.b32.xlu0 %v9544, 96
    %v9636 = vpop.permute.xlu0 %9635
    %9637 = vrot.lane.b32.xlu0 %v9622, 96
    %v9638 = vpop.permute.xlu0 %9637
    %vm9647 = vcmask 1044225
    %9648 = vst.msk [vmem:[#allocation6] sm:$0xe] %vm9647, %v9624
    %9649 = vst.msk [vmem:[#allocation6 + $0xc] sm:$0xe] %vm9647, %v9626
    %9650 = vst.msk [vmem:[#allocation6 + $0x18] sm:$0xe] %vm9647, %v9628
    %9651 = vst.msk [vmem:[#allocation6 + $0x24] sm:$0xe] %vm9647, %v9630
    %9652 = vst.msk [vmem:[#allocation6 + $0x30] sm:$0xe] %vm9647, %v9632
    %9653 = vst.msk [vmem:[#allocation6 + $0x3c] sm:$0xe] %vm9647, %v9634
    %9654 = vst.msk [vmem:[#allocation6 + $0x48] sm:$0xe] %vm9647, %v9636
    %9655 = vst.msk [vmem:[#allocation6 + $0x54] sm:$0xe] %vm9647, %v9638
    %9656 = vst.msk [vmem:[#allocation6 + $0x4] sm:$0xf] %vm9523, %v9506
    %9657 = vst.msk [vmem:[#allocation6 + $0x10] sm:$0xf] %vm9523, %v9514
    %9658 = vst.msk [vmem:[#allocation6 + $0x1c] sm:$0xf] %vm9523, %v9507
    %9659 = vst.msk [vmem:[#allocation6 + $0x28] sm:$0xf] %vm9523, %v9515
    %9660 = vst.msk [vmem:[#allocation6 + $0x34] sm:$0xf] %vm9523, %v9508
    %9661 = vst.msk [vmem:[#allocation6 + $0x40] sm:$0xf] %vm9523, %v9516
    %9662 = vst.msk [vmem:[#allocation6 + $0x4c] sm:$0xf] %vm9523, %v9509
    %9663 = vst.msk [vmem:[#allocation6 + $0x58] sm:$0xf] %vm9523, %v9517
    %v9664 = vrot.slane %v9515, 5
    %v9665 = vrot.slane %v9664, 4
    %v9666 = vrot.slane %v9517, 5
    %v9667 = vrot.slane %v9666, 4
    %9668 = vrot.lane.b32.xlu0 %v9585, 32
    %v9669 = vpop.permute.xlu0 %9668
    %9670 = vrot.lane.b32.xlu0 %v9587, 32
    %v9671 = vpop.permute.xlu0 %9670
    %9672 = vrot.lane.b32.xlu0 %v9589, 32
    %v9673 = vpop.permute.xlu0 %9672
    %9674 = vrot.lane.b32.xlu0 %v9665, 32
    %v9675 = vpop.permute.xlu0 %9674
    %9676 = vrot.lane.b32.xlu0 %v9591, 32
    %v9677 = vpop.permute.xlu0 %9676
    %9678 = vrot.lane.b32.xlu0 %v9593, 32
    %v9679 = vpop.permute.xlu0 %9678
    %9680 = vrot.lane.b32.xlu0 %v9595, 32
    %v9681 = vpop.permute.xlu0 %9680
    %9682 = vrot.lane.b32.xlu0 %v9667, 32
    %v9683 = vpop.permute.xlu0 %9682
    %vm9692 = vcmask 518400
    %9693 = vst.msk [vmem:[#allocation6 + $0x4] sm:$0x7] %vm9692, %v9669
    %9694 = vst.msk [vmem:[#allocation6 + $0x10] sm:$0x7] %vm9692, %v9671
    %9695 = vst.msk [vmem:[#allocation6 + $0x1c] sm:$0x7] %vm9692, %v9673
    %9696 = vst.msk [vmem:[#allocation6 + $0x28] sm:$0x7] %vm9692, %v9675
    %9697 = vst.msk [vmem:[#allocation6 + $0x34] sm:$0x7] %vm9692, %v9677
    %9698 = vst.msk [vmem:[#allocation6 + $0x40] sm:$0x7] %vm9692, %v9679
    %9699 = vst.msk [vmem:[#allocation6 + $0x4c] sm:$0x7] %vm9692, %v9681
    %9700 = vst.msk [vmem:[#allocation6 + $0x58] sm:$0x7] %vm9692, %v9683
    %9701 = vrot.lane.b32.xlu0 %v9540, 64
    %v9702 = vpop.permute.xlu0 %9701
    %9703 = vrot.lane.b32.xlu0 %v9541, 64
    %v9704 = vpop.permute.xlu0 %9703
    %9705 = vrot.lane.b32.xlu0 %v9621, 64
    %v9706 = vpop.permute.xlu0 %9705
    %9707 = vrot.lane.b32.xlu0 %v9543, 64
    %v9708 = vpop.permute.xlu0 %9707
    %9709 = vrot.lane.b32.xlu0 %v9544, 64
    %v9710 = vpop.permute.xlu0 %9709
    %9711 = vrot.lane.b32.xlu0 %v9622, 64
    %v9712 = vpop.permute.xlu0 %9711
    %vm9719 = vcmask 781825
    %9720 = vst.msk [vmem:[#allocation6 + $0x4] sm:$0xe] %vm9719, %v9702
    %9721 = vst.msk [vmem:[#allocation6 + $0x10] sm:$0xe] %vm9719, %v9704
    %9722 = vst.msk [vmem:[#allocation6 + $0x1c] sm:$0xe] %vm9719, %v9706
    %9723 = vst.msk [vmem:[#allocation6 + $0x34] sm:$0xe] %vm9719, %v9708
    %9724 = vst.msk [vmem:[#allocation6 + $0x40] sm:$0xe] %vm9719, %v9710
    %9725 = vst.msk [vmem:[#allocation6 + $0x4c] sm:$0xe] %vm9719, %v9712
    %9726 = vrot.lane.b32.xlu0 %v9514, 96
    %v9727 = vpop.permute.xlu0 %9726
    %9728 = vrot.lane.b32.xlu0 %v9507, 96
    %v9729 = vpop.permute.xlu0 %9728
    %9730 = vrot.lane.b32.xlu0 %v9515, 96
    %v9731 = vpop.permute.xlu0 %9730
    %9732 = vrot.lane.b32.xlu0 %v9516, 96
    %v9733 = vpop.permute.xlu0 %9732
    %9734 = vrot.lane.b32.xlu0 %v9509, 96
    %v9735 = vpop.permute.xlu0 %9734
    %9736 = vrot.lane.b32.xlu0 %v9517, 96
    %v9737 = vpop.permute.xlu0 %9736
    %vm9744 = vcmask 1044224
    %9745 = vst.msk [vmem:[#allocation6 + $0x4] sm:$0xf] %vm9744, %v9727
    %9746 = vst.msk [vmem:[#allocation6 + $0x10] sm:$0xf] %vm9744, %v9729
    %9747 = vst.msk [vmem:[#allocation6 + $0x1c] sm:$0xf] %vm9744, %v9731
    %9748 = vst.msk [vmem:[#allocation6 + $0x34] sm:$0xf] %vm9744, %v9733
    %9749 = vst.msk [vmem:[#allocation6 + $0x40] sm:$0xf] %vm9744, %v9735
    %9750 = vst.msk [vmem:[#allocation6 + $0x4c] sm:$0xf] %vm9744, %v9737
    %vm9757 = vcmask 256000
    %9758 = vst.msk [vmem:[#allocation6 + $0x8] sm:$0x7] %vm9757, %v9587
    %9759 = vst.msk [vmem:[#allocation6 + $0x14] sm:$0x7] %vm9757, %v9589
    %9760 = vst.msk [vmem:[#allocation6 + $0x20] sm:$0x7] %vm9757, %v9665
    %9761 = vst.msk [vmem:[#allocation6 + $0x38] sm:$0x7] %vm9757, %v9593
    %9762 = vst.msk [vmem:[#allocation6 + $0x44] sm:$0x7] %vm9757, %v9595
    %9763 = vst.msk [vmem:[#allocation6 + $0x50] sm:$0x7] %vm9757, %v9667
    %v9764 = vld [vmem:[#allocation6] sm:$0xff]
    %v9765 = vld [vmem:[#allocation6 + $0x8] sm:$0xf]
    %v9766 = vld [vmem:[#allocation6 + $0xc] sm:$0xff]
    %v9767 = vld [vmem:[#allocation6 + $0x14] sm:$0xf]
    %v9768 = vld [vmem:[#allocation6 + $0x18] sm:$0xff]
    %v9769 = vld [vmem:[#allocation6 + $0x20] sm:$0xf]
    %v9770 = vld [vmem:[#allocation6 + $0x24] sm:$0xff]
    %v9771 = vld [vmem:[#allocation6 + $0x2c] sm:$0xf]
    %v9772 = vld [vmem:[#allocation6 + $0x30] sm:$0xff]
    %v9773 = vld [vmem:[#allocation6 + $0x38] sm:$0xf]
    %v9774 = vld [vmem:[#allocation6 + $0x3c] sm:$0xff]
    %v9775 = vld [vmem:[#allocation6 + $0x44] sm:$0xf]
    %v9776 = vld [vmem:[#allocation6 + $0x48] sm:$0xff]
    %v9777 = vld [vmem:[#allocation6 + $0x50] sm:$0xf]
    %v9778 = vld [vmem:[#allocation6 + $0x54] sm:$0xff]
    %v9779 = vld [vmem:[#allocation6 + $0x5c] sm:$0xf]
    %v9780 = vld [vmem:[%s5] sm:$0xff]
    %v9781 = vld [vmem:[%s5 + $0x8] sm:$0xff]
    %v9782 = vld [vmem:[%s5 + $0x10] sm:$0xff]
    %v9783 = vld [vmem:[%s5 + $0x18] sm:$0xff]
    %v9784 = vld [vmem:[%s5 + $0x20] sm:$0xff]
    %v9785 = vld [vmem:[%s5 + $0x28] sm:$0xff]
    %v9786 = vld [vmem:[%s5 + $0x30] sm:$0xff]
    %v9787 = vld [vmem:[%s5 + $0x38] sm:$0xff]
    %v9788 = vld [vmem:[%s5 + $0x40] sm:$0xff]
    %v9789 = vld [vmem:[%s5 + $0x48] sm:$0xff]
    %v9790 = vld [vmem:[%s5 + $0x50] sm:$0xff]
    %v9791 = vld [vmem:[%s5 + $0x58] sm:$0xff]
    %v9792 = vld [vmem:[%s5 + $0x60] sm:$0xff]
    %v9793 = vld [vmem:[%s5 + $0x68] sm:$0xff]
    %v9794 = vld [vmem:[%s5 + $0x70] sm:$0xff]
    %v9795 = vld [vmem:[%s5 + $0x78] sm:$0xff]
    %v9796 = vld [vmem:[%s5 + $0x80] sm:$0xff]
    %v9797 = vld [vmem:[%s5 + $0x88] sm:$0xff]
    %v9798 = vld [vmem:[%s5 + $0x90] sm:$0xff]
    %v9799 = vld [vmem:[%s5 + $0x98] sm:$0xff]
    %v9800 = vld [vmem:[%s5 + $0xa0] sm:$0xff]
    %v9801 = vld [vmem:[%s5 + $0xa8] sm:$0xff]
    %v9802 = vld [vmem:[%s5 + $0xb0] sm:$0xff]
    %v9803 = vld [vmem:[%s5 + $0xb8] sm:$0xff]
    %v9804 = vld [vmem:[%s5 + $0xc0] sm:$0xff]
    %v9805 = vld [vmem:[%s5 + $0xc8] sm:$0xff]
    %v9806 = vld [vmem:[%s5 + $0xd0] sm:$0xff]
    %v9807 = vld [vmem:[%s5 + $0xd8] sm:$0xff]
    %v9808 = vld [vmem:[%s5 + $0xe0] sm:$0xff]
    %v9809 = vld [vmem:[%s5 + $0xe8] sm:$0xff]
    %v9810 = vld [vmem:[%s5 + $0xf0] sm:$0xff]
    %v9811 = vld [vmem:[%s5 + $0xf8] sm:$0xff]
    %v9812 = vld [vmem:[%s5 + $0x100] sm:$0xff]
    %v9813 = vld [vmem:[%s5 + $0x108] sm:$0xff]
    %v9814 = vld [vmem:[%s5 + $0x110] sm:$0xff]
    %v9815 = vld [vmem:[%s5 + $0x118] sm:$0xff]
    %v9816 = vld [vmem:[%s10] sm:$0x1]
    %v9818 = vlaneseq
    %v9819 = vshrl.u32 %v9818, 7
    %v9820 = vsub.s32 0, %v9819
    %v9821 = vrot.slane %v9816, %v9820
    %v9839 = vcombine.low %v9764, %v9766
    %v9840 = vcombine.high %v9764, %v9766
    %v9841 = vcombine.low %v9765, %v9767
    %v9842 = vcombine.low %v9768, %v9770
    %v9843 = vcombine.high %v9768, %v9770
    %v9844 = vcombine.low %v9769, %v9771
    %v9845 = vcombine.low %v9772, %v9774
    %v9846 = vcombine.high %v9772, %v9774
    %v9847 = vcombine.low %v9773, %v9775
    %v9848 = vcombine.low %v9776, %v9778
    %v9849 = vcombine.high %v9776, %v9778
    %v9850 = vcombine.low %v9777, %v9779
    %vm9859 = vcmask 261120
    %v9860 = vsel %vm9859, %v9841, 0
    %v9862 = vsel %vm9859, %v9844, 0
    %v9864 = vsel %vm9859, %v9847, 0
    %v9866 = vsel %vm9859, %v9850, 0
    %9868 = vmatprep.subr.mxu0 0.0
    %9869 = vmatpush1.msra.mxu0 %v9780
    %9870 = vmatprep.subr.mxu0 0.0
    %9871 = vmatpush1.msra.mxu0 %v9781
    %9872 = vmatprep.subr.mxu0 0.0
    %9873 = vmatpush1.msra.mxu0 %v9782
    %9874 = vmatprep.subr.mxu0 0.0
    %9875 = vmatpush1.msra.mxu0 %v9783
    %9876 = vmatprep.subr.mxu0 0.0
    %9877 = vmatpush1.msra.mxu0 %v9784
    %9878 = vmatprep.subr.mxu0 0.0
    %9879 = vmatpush1.msra.mxu0 %v9785
    %9880 = vmatprep.subr.mxu0 0.0
    %9881 = vmatpush1.msra.mxu0 %v9786
    %9882 = vmatprep.subr.mxu0 0.0
    %9883 = vmatpush1.msra.mxu0 %v9787
    %9884 = vmatprep.subr.mxu0 0.0
    %9885 = vmatpush1.msra.mxu0 %v9788
    %9886 = vmatprep.subr.mxu0 0.0
    %9887 = vmatpush1.msra.mxu0 %v9789
    %9888 = vmatprep.subr.mxu0 0.0
    %9889 = vmatpush1.msra.mxu0 %v9790
    %9890 = vmatprep.subr.mxu0 0.0
    %9891 = vmatpush1.msra.mxu0 %v9791
    %9892 = vmatprep.subr.mxu0 0.0
    %9893 = vmatpush1.msra.mxu0 %v9792
    %9894 = vmatprep.subr.mxu0 0.0
    %9895 = vmatpush1.msra.mxu0 %v9793
    %9896 = vmatprep.subr.mxu0 0.0
    %9897 = vmatpush1.msra.mxu0 %v9794
    %9898 = vmatprep.subr.mxu0 0.0
    %9899 = vmatpush1.msra.mxu0 %v9795
    %9900 = vmatprep.subr.mxu0 0.0
    %9901 = vmatpush1.msra.mxu0 %v9796
    %9902 = vmatprep.subr.mxu0 0.0
    %9903 = vmatpush1.msra.mxu0 %v9797
    %9904 = vmatprep.subr.mxu0 0.0
    %9905 = vmatpush1.msra.mxu0 %v9798
    %9906 = vmatprep.subr.mxu0 0.0
    %9907 = vmatpush1.msra.mxu0 %v9799
    %9908 = vmatprep.subr.mxu0 0.0
    %9909 = vmatpush1.msra.mxu0 %v9800
    %9910 = vmatprep.subr.mxu0 0.0
    %9911 = vmatpush1.msra.mxu0 %v9801
    %9912 = vmatprep.subr.mxu0 0.0
    %9913 = vmatpush1.msra.mxu0 %v9802
    %9914 = vmatprep.subr.mxu0 0.0
    %9915 = vmatpush1.msra.mxu0 %v9803
    %9916 = vmatprep.subr.mxu0 0.0
    %9917 = vmatpush1.msra.mxu0 %v9804
    %9918 = vmatprep.subr.mxu0 0.0
    %9919 = vmatpush1.msra.mxu0 %v9805
    %9920 = vmatprep.subr.mxu0 0.0
    %9921 = vmatpush1.msra.mxu0 %v9806
    %9922 = vmatprep.subr.mxu0 0.0
    %9923 = vmatpush1.msra.mxu0 %v9807
    %9924 = vmatprep.subr.mxu0 0.0
    %9925 = vmatpush1.msra.mxu0 %v9808
    %9926 = vmatprep.subr.mxu0 0.0
    %9927 = vmatpush1.msra.mxu0 %v9809
    %9928 = vmatprep.subr.mxu0 0.0
    %9929 = vmatpush1.msra.mxu0 %v9810
    %9930 = vmatprep.subr.mxu0 0.0
    %9931 = vmatpush1.msra.mxu0 %v9811
    %9932 = vmatprep.mubr.f32.mxu0 %v9840
    %9933 = vmatmul.mubr.f32.gmra.mrb[0].mxu0 %v9839
    %v9934 = vpop.f32.mrb[0].mxu0
    %v9935 = vadd.f32 %v9821, %v9934
    %v9936 = vpop.f32.mrb[0].mxu0
    %9937 = vmatprep.mubr.f32.mxu0 %v9843
    %9938 = vmatmul.mubr.f32.gmra.mrb[0].mxu0 %v9842
    %v9939 = vpop.f32.mrb[0].mxu0
    %v9940 = vadd.f32 %v9821, %v9939
    %v9941 = vpop.f32.mrb[0].mxu0
    %9942 = vmatprep.mubr.f32.mxu0 %v9846
    %9943 = vmatmul.mubr.f32.gmra.mrb[0].mxu0 %v9845
    %v9944 = vpop.f32.mrb[0].mxu0
    %v9945 = vadd.f32 %v9821, %v9944
    %v9946 = vpop.f32.mrb[0].mxu0
    %9947 = vmatprep.mubr.f32.mxu0 %v9849
    %9948 = vmatmul.mubr.f32.gmra.mrb[0].mxu0 %v9848
    %v9949 = vpop.f32.mrb[0].mxu0
    %v9950 = vadd.f32 %v9821, %v9949
    %v9951 = vpop.f32.mrb[0].mxu0
    %9952 = vdwg.mxu0
    %9953 = vmatprep.subr.mxu0 0.0
    %9954 = vmatpush1.msra.mxu0 %v9812
    %9955 = vmatprep.subr.mxu0 0.0
    %9956 = vmatpush1.msra.mxu0 %v9813
    %9957 = vmatprep.subr.mxu0 0.0
    %9958 = vmatpush1.msra.mxu0 %v9814
    %9959 = vmatprep.subr.mxu0 0.0
    %9960 = vmatpush1.msra.mxu0 %v9815
    %9961 = vmatprep.subr.mxu0 0.0
    %9962 = vmatpush1.msra.mxu0 0.0
    %9963 = vmatprep.subr.mxu0 0.0
    %9964 = vmatpush1.msra.mxu0 0.0
    %9965 = vmatprep.subr.mxu0 0.0
    %9966 = vmatpush1.msra.mxu0 0.0
    %9967 = vmatprep.subr.mxu0 0.0
    %9968 = vmatpush1.msra.mxu0 0.0
    %9969 = vmatprep.subr.mxu0 0.0
    %9970 = vmatpush1.msra.mxu0 0.0
    %9971 = vmatprep.subr.mxu0 0.0
    %9972 = vmatpush1.msra.mxu0 0.0
    %9973 = vmatprep.subr.mxu0 0.0
    %9974 = vmatpush1.msra.mxu0 0.0
    %9975 = vmatprep.subr.mxu0 0.0
    %9976 = vmatpush1.msra.mxu0 0.0
    %9977 = vmatprep.subr.mxu0 0.0
    %9978 = vmatpush1.msra.mxu0 0.0
    %9979 = vmatprep.subr.mxu0 0.0
    %9980 = vmatpush1.msra.mxu0 0.0
    %9981 = vmatprep.subr.mxu0 0.0
    %9982 = vmatpush1.msra.mxu0 0.0
    %9983 = vmatprep.subr.mxu0 0.0
    %9984 = vmatpush1.msra.mxu0 0.0
    %9985 = vmatprep.subr.mxu0 0.0
    %9986 = vmatpush1.msra.mxu0 0.0
    %9987 = vmatprep.subr.mxu0 0.0
    %9988 = vmatpush1.msra.mxu0 0.0
    %9989 = vmatprep.subr.mxu0 0.0
    %9990 = vmatpush1.msra.mxu0 0.0
    %9991 = vmatprep.subr.mxu0 0.0
    %9992 = vmatpush1.msra.mxu0 0.0
    %9993 = vmatprep.subr.mxu0 0.0
    %9994 = vmatpush1.msra.mxu0 0.0
    %9995 = vmatprep.subr.mxu0 0.0
    %9996 = vmatpush1.msra.mxu0 0.0
    %9997 = vmatprep.subr.mxu0 0.0
    %9998 = vmatpush1.msra.mxu0 0.0
    %9999 = vmatprep.subr.mxu0 0.0
    %10000 = vmatpush1.msra.mxu0 0.0
    %10001 = vmatprep.subr.mxu0 0.0
    %10002 = vmatpush1.msra.mxu0 0.0
    %10003 = vmatprep.subr.mxu0 0.0
    %10004 = vmatpush1.msra.mxu0 0.0
    %10005 = vmatprep.subr.mxu0 0.0
    %10006 = vmatpush1.msra.mxu0 0.0
    %10007 = vmatprep.subr.mxu0 0.0
    %10008 = vmatpush1.msra.mxu0 0.0
    %10009 = vmatprep.subr.mxu0 0.0
    %10010 = vmatpush1.msra.mxu0 0.0
    %10011 = vmatprep.subr.mxu0 0.0
    %10012 = vmatpush1.msra.mxu0 0.0
    %10013 = vmatprep.subr.mxu0 0.0
    %10014 = vmatpush1.msra.mxu0 0.0
    %10015 = vmatprep.subr.mxu0 0.0
    %10016 = vmatpush1.msra.mxu0 0.0
    %10017 = vmatprep.mubr.f32.mxu0 0.0
    %10018 = vmatmul.mubr.f32.gmra.mrb[0].mxu0 %v9860
    %v10019 = vpop.f32.mrb[0].mxu0
    %v10020 = vadd.f32 %v9935, %v10019
    %v10021 = vpop.f32.mrb[0].mxu0
    %10022 = vmatprep.mubr.f32.mxu0 0.0
    %10023 = vmatmul.mubr.f32.gmra.mrb[0].mxu0 %v9862
    %v10024 = vpop.f32.mrb[0].mxu0
    %v10025 = vadd.f32 %v9940, %v10024
    %v10026 = vpop.f32.mrb[0].mxu0
    %10027 = vmatprep.mubr.f32.mxu0 0.0
    %10028 = vmatmul.mubr.f32.gmra.mrb[0].mxu0 %v9864
    %v10029 = vpop.f32.mrb[0].mxu0
    %v10030 = vadd.f32 %v9945, %v10029
    %v10031 = vpop.f32.mrb[0].mxu0
    %10032 = vmatprep.mubr.f32.mxu0 0.0
    %10033 = vmatmul.mubr.f32.gmra.mrb[0].mxu0 %v9866
    %v10034 = vpop.f32.mrb[0].mxu0
    %v10035 = vadd.f32 %v9950, %v10034
    %v10036 = vpop.f32.mrb[0].mxu0
    %10037 = vdwg.mxu0
    %v10038 = vmul.f32 %v10020, 0.01
    %v10039 = vmul.f32 %v10025, 0.01
    %v10040 = vmul.f32 %v10030, 0.01
    %v10041 = vmul.f32 %v10035, 0.01
    %v10042 = vmax.f32 %v10020, %v10038
    %v10043 = vmax.f32 %v10025, %v10039
    %v10044 = vmax.f32 %v10030, %v10040
    %v10045 = vmax.f32 %v10035, %v10041
    %v10050 = vcombine.high %v10042, %v10042
    %v10051 = vcombine.high %v10043, %v10043
    %v10052 = vcombine.high %v10044, %v10044
    %v10053 = vcombine.high %v10045, %v10045
    %v10058 = vlaneseq
    %vm10059 = vcmp.ge.s32.totalorder %v10058, 0
    %vm10060 = vcmp.lt.s32.totalorder %v10058, 32
    %vm10061 = vmand %vm10059, %vm10060
    %10062 = vst.msk [vmem:[#allocation7] sm:$0x1] %vm10061, %v10042
    %10063 = vst.msk [vmem:[#allocation7 + $0x4] sm:$0x1] %vm10061, %v10044
    %v10065 = vunpack.c.l.s4 1966171168
    %v10066 = vunpack.c.0.s8 %v10065
    %v10067 = vlaneseq
    %v10068 = vshrl.u32 %v10067, 7
    %v10069 = vsub.s32 %v10066, %v10068
    %v10070 = vrot.slane %v10042, %v10069
    %v10071 = vcombine.high %v10070, %v10070
    %v10073 = vunpack.c.l.s4 1966171168
    %v10074 = vunpack.c.0.s8 %v10073
    %v10075 = vlaneseq
    %v10076 = vshrl.u32 %v10075, 7
    %v10077 = vsub.s32 %v10074, %v10076
    %v10078 = vrot.slane %v10070, %v10077
    %v10080 = vunpack.c.l.s4 1966171168
    %v10081 = vunpack.c.0.s8 %v10080
    %v10082 = vlaneseq
    %v10083 = vshrl.u32 %v10082, 7
    %v10084 = vsub.s32 %v10081, %v10083
    %v10085 = vrot.slane %v10071, %v10084
    %v10087 = vunpack.c.l.s4 1966171168
    %v10088 = vunpack.c.0.s8 %v10087
    %v10089 = vlaneseq
    %v10090 = vshrl.u32 %v10089, 7
    %v10091 = vsub.s32 %v10088, %v10090
    %v10092 = vrot.slane %v10044, %v10091
    %v10093 = vcombine.high %v10092, %v10092
    %v10095 = vunpack.c.l.s4 1966171168
    %v10096 = vunpack.c.0.s8 %v10095
    %v10097 = vlaneseq
    %v10098 = vshrl.u32 %v10097, 7
    %v10099 = vsub.s32 %v10096, %v10098
    %v10100 = vrot.slane %v10092, %v10099
    %v10102 = vunpack.c.l.s4 1966171168
    %v10103 = vunpack.c.0.s8 %v10102
    %v10104 = vlaneseq
    %v10105 = vshrl.u32 %v10104, 7
    %v10106 = vsub.s32 %v10103, %v10105
    %v10107 = vrot.slane %v10093, %v10106
    %10108 = vrot.lane.b32.xlu0 %v10085, 32
    %v10109 = vpop.permute.xlu0 %10108
    %10110 = vrot.lane.b32.xlu0 %v10107, 32
    %v10111 = vpop.permute.xlu0 %10110
    %vm10114 = vcmp.ge.s32.totalorder %v10058, 32
    %vm10115 = vcmp.lt.s32.totalorder %v10058, 64
    %vm10116 = vmand %vm10114, %vm10115
    %10117 = vst.msk [vmem:[#allocation7] sm:$0x1] %vm10116, %v10109
    %10118 = vst.msk [vmem:[#allocation7 + $0x4] sm:$0x1] %vm10116, %v10111
    %v10119 = vcombine.high %v10078, %v10078
    %v10120 = vcombine.high %v10100, %v10100
    %10121 = vrot.lane.b32.xlu0 %v10119, 64
    %v10122 = vpop.permute.xlu0 %10121
    %10123 = vrot.lane.b32.xlu0 %v10120, 64
    %v10124 = vpop.permute.xlu0 %10123
    %vm10127 = vcmp.ge.s32.totalorder %v10058, 64
    %vm10128 = vcmp.lt.s32.totalorder %v10058, 96
    %vm10129 = vmand %vm10127, %vm10128
    %10130 = vst.msk [vmem:[#allocation7] sm:$0x1] %vm10129, %v10122
    %10131 = vst.msk [vmem:[#allocation7 + $0x4] sm:$0x1] %vm10129, %v10124
    %v10132 = vcombine.high %v10085, %v10085
    %v10133 = vcombine.high %v10107, %v10107
    %10134 = vrot.lane.b32.xlu0 %v10132, 96
    %v10135 = vpop.permute.xlu0 %10134
    %10136 = vrot.lane.b32.xlu0 %v10133, 96
    %v10137 = vpop.permute.xlu0 %10136
    %vm10140 = vcmp.ge.s32.totalorder %v10058, 96
    %vm10141 = vcmp.lt.s32.totalorder %v10058, 128
    %vm10142 = vmand %vm10140, %vm10141
    %10143 = vst.msk [vmem:[#allocation7] sm:$0x1] %vm10142, %v10135
    %10144 = vst.msk [vmem:[#allocation7 + $0x4] sm:$0x1] %vm10142, %v10137
    %10145 = vst.msk [vmem:[#allocation7 + $0x1] sm:$0x1] %vm10061, %v10050
    %10146 = vst.msk [vmem:[#allocation7 + $0x5] sm:$0x1] %vm10061, %v10052
    %v10148 = vunpack.c.l.s4 1966171168
    %v10149 = vunpack.c.0.s8 %v10148
    %v10150 = vlaneseq
    %v10151 = vshrl.u32 %v10150, 7
    %v10152 = vsub.s32 %v10149, %v10151
    %v10153 = vrot.slane %v10050, %v10152
    %v10154 = vcombine.high %v10153, %v10153
    %v10156 = vunpack.c.l.s4 1966171168
    %v10157 = vunpack.c.0.s8 %v10156
    %v10158 = vlaneseq
    %v10159 = vshrl.u32 %v10158, 7
    %v10160 = vsub.s32 %v10157, %v10159
    %v10161 = vrot.slane %v10153, %v10160
    %v10163 = vunpack.c.l.s4 1966171168
    %v10164 = vunpack.c.0.s8 %v10163
    %v10165 = vlaneseq
    %v10166 = vshrl.u32 %v10165, 7
    %v10167 = vsub.s32 %v10164, %v10166
    %v10168 = vrot.slane %v10154, %v10167
    %v10170 = vunpack.c.l.s4 1966171168
    %v10171 = vunpack.c.0.s8 %v10170
    %v10172 = vlaneseq
    %v10173 = vshrl.u32 %v10172, 7
    %v10174 = vsub.s32 %v10171, %v10173
    %v10175 = vrot.slane %v10052, %v10174
    %v10176 = vcombine.high %v10175, %v10175
    %v10178 = vunpack.c.l.s4 1966171168
    %v10179 = vunpack.c.0.s8 %v10178
    %v10180 = vlaneseq
    %v10181 = vshrl.u32 %v10180, 7
    %v10182 = vsub.s32 %v10179, %v10181
    %v10183 = vrot.slane %v10175, %v10182
    %v10185 = vunpack.c.l.s4 1966171168
    %v10186 = vunpack.c.0.s8 %v10185
    %v10187 = vlaneseq
    %v10188 = vshrl.u32 %v10187, 7
    %v10189 = vsub.s32 %v10186, %v10188
    %v10190 = vrot.slane %v10176, %v10189
    %10191 = vrot.lane.b32.xlu0 %v10168, 32
    %v10192 = vpop.permute.xlu0 %10191
    %10193 = vrot.lane.b32.xlu0 %v10190, 32
    %v10194 = vpop.permute.xlu0 %10193
    %10197 = vst.msk [vmem:[#allocation7 + $0x1] sm:$0x1] %vm10116, %v10192
    %10198 = vst.msk [vmem:[#allocation7 + $0x5] sm:$0x1] %vm10116, %v10194
    %v10199 = vcombine.high %v10161, %v10161
    %v10200 = vcombine.high %v10183, %v10183
    %10201 = vrot.lane.b32.xlu0 %v10199, 64
    %v10202 = vpop.permute.xlu0 %10201
    %10203 = vrot.lane.b32.xlu0 %v10200, 64
    %v10204 = vpop.permute.xlu0 %10203
    %10207 = vst.msk [vmem:[#allocation7 + $0x1] sm:$0x1] %vm10129, %v10202
    %10208 = vst.msk [vmem:[#allocation7 + $0x5] sm:$0x1] %vm10129, %v10204
    %v10209 = vcombine.high %v10168, %v10168
    %v10210 = vcombine.high %v10190, %v10190
    %10211 = vrot.lane.b32.xlu0 %v10209, 96
    %v10212 = vpop.permute.xlu0 %10211
    %10213 = vrot.lane.b32.xlu0 %v10210, 96
    %v10214 = vpop.permute.xlu0 %10213
    %10217 = vst.msk [vmem:[#allocation7 + $0x1] sm:$0x1] %vm10142, %v10212
    %10218 = vst.msk [vmem:[#allocation7 + $0x5] sm:$0x1] %vm10142, %v10214
    %10219 = vst.msk [vmem:[#allocation7 + $0x2] sm:$0x1] %vm10061, %v10043
    %10220 = vst.msk [vmem:[#allocation7 + $0x6] sm:$0x1] %vm10061, %v10045
    %v10222 = vunpack.c.l.s4 1966171168
    %v10223 = vunpack.c.0.s8 %v10222
    %v10224 = vlaneseq
    %v10225 = vshrl.u32 %v10224, 7
    %v10226 = vsub.s32 %v10223, %v10225
    %v10227 = vrot.slane %v10043, %v10226
    %v10228 = vcombine.high %v10227, %v10227
    %v10230 = vunpack.c.l.s4 1966171168
    %v10231 = vunpack.c.0.s8 %v10230
    %v10232 = vlaneseq
    %v10233 = vshrl.u32 %v10232, 7
    %v10234 = vsub.s32 %v10231, %v10233
    %v10235 = vrot.slane %v10227, %v10234
    %v10237 = vunpack.c.l.s4 1966171168
    %v10238 = vunpack.c.0.s8 %v10237
    %v10239 = vlaneseq
    %v10240 = vshrl.u32 %v10239, 7
    %v10241 = vsub.s32 %v10238, %v10240
    %v10242 = vrot.slane %v10228, %v10241
    %v10244 = vunpack.c.l.s4 1966171168
    %v10245 = vunpack.c.0.s8 %v10244
    %v10246 = vlaneseq
    %v10247 = vshrl.u32 %v10246, 7
    %v10248 = vsub.s32 %v10245, %v10247
    %v10249 = vrot.slane %v10045, %v10248
    %v10250 = vcombine.high %v10249, %v10249
    %v10252 = vunpack.c.l.s4 1966171168
    %v10253 = vunpack.c.0.s8 %v10252
    %v10254 = vlaneseq
    %v10255 = vshrl.u32 %v10254, 7
    %v10256 = vsub.s32 %v10253, %v10255
    %v10257 = vrot.slane %v10249, %v10256
    %v10259 = vunpack.c.l.s4 1966171168
    %v10260 = vunpack.c.0.s8 %v10259
    %v10261 = vlaneseq
    %v10262 = vshrl.u32 %v10261, 7
    %v10263 = vsub.s32 %v10260, %v10262
    %v10264 = vrot.slane %v10250, %v10263
    %10265 = vrot.lane.b32.xlu0 %v10242, 32
    %v10266 = vpop.permute.xlu0 %10265
    %10267 = vrot.lane.b32.xlu0 %v10264, 32
    %v10268 = vpop.permute.xlu0 %10267
    %10271 = vst.msk [vmem:[#allocation7 + $0x2] sm:$0x1] %vm10116, %v10266
    %10272 = vst.msk [vmem:[#allocation7 + $0x6] sm:$0x1] %vm10116, %v10268
    %v10273 = vcombine.high %v10235, %v10235
    %v10274 = vcombine.high %v10257, %v10257
    %10275 = vrot.lane.b32.xlu0 %v10273, 64
    %v10276 = vpop.permute.xlu0 %10275
    %10277 = vrot.lane.b32.xlu0 %v10274, 64
    %v10278 = vpop.permute.xlu0 %10277
    %10281 = vst.msk [vmem:[#allocation7 + $0x2] sm:$0x1] %vm10129, %v10276
    %10282 = vst.msk [vmem:[#allocation7 + $0x6] sm:$0x1] %vm10129, %v10278
    %v10283 = vcombine.high %v10242, %v10242
    %v10284 = vcombine.high %v10264, %v10264
    %10285 = vrot.lane.b32.xlu0 %v10283, 96
    %v10286 = vpop.permute.xlu0 %10285
    %10287 = vrot.lane.b32.xlu0 %v10284, 96
    %v10288 = vpop.permute.xlu0 %10287
    %10291 = vst.msk [vmem:[#allocation7 + $0x2] sm:$0x1] %vm10142, %v10286
    %10292 = vst.msk [vmem:[#allocation7 + $0x6] sm:$0x1] %vm10142, %v10288
    %10293 = vst.msk [vmem:[#allocation7 + $0x3] sm:$0x1] %vm10061, %v10051
    %10294 = vst.msk [vmem:[#allocation7 + $0x7] sm:$0x1] %vm10061, %v10053
    %v10296 = vunpack.c.l.s4 1966171168
    %v10297 = vunpack.c.0.s8 %v10296
    %v10298 = vlaneseq
    %v10299 = vshrl.u32 %v10298, 7
    %v10300 = vsub.s32 %v10297, %v10299
    %v10301 = vrot.slane %v10051, %v10300
    %v10302 = vcombine.high %v10301, %v10301
    %v10304 = vunpack.c.l.s4 1966171168
    %v10305 = vunpack.c.0.s8 %v10304
    %v10306 = vlaneseq
    %v10307 = vshrl.u32 %v10306, 7
    %v10308 = vsub.s32 %v10305, %v10307
    %v10309 = vrot.slane %v10301, %v10308
    %v10311 = vunpack.c.l.s4 1966171168
    %v10312 = vunpack.c.0.s8 %v10311
    %v10313 = vlaneseq
    %v10314 = vshrl.u32 %v10313, 7
    %v10315 = vsub.s32 %v10312, %v10314
    %v10316 = vrot.slane %v10302, %v10315
    %v10318 = vunpack.c.l.s4 1966171168
    %v10319 = vunpack.c.0.s8 %v10318
    %v10320 = vlaneseq
    %v10321 = vshrl.u32 %v10320, 7
    %v10322 = vsub.s32 %v10319, %v10321
    %v10323 = vrot.slane %v10053, %v10322
    %v10324 = vcombine.high %v10323, %v10323
    %v10326 = vunpack.c.l.s4 1966171168
    %v10327 = vunpack.c.0.s8 %v10326
    %v10328 = vlaneseq
    %v10329 = vshrl.u32 %v10328, 7
    %v10330 = vsub.s32 %v10327, %v10329
    %v10331 = vrot.slane %v10323, %v10330
    %v10333 = vunpack.c.l.s4 1966171168
    %v10334 = vunpack.c.0.s8 %v10333
    %v10335 = vlaneseq
    %v10336 = vshrl.u32 %v10335, 7
    %v10337 = vsub.s32 %v10334, %v10336
    %v10338 = vrot.slane %v10324, %v10337
    %10339 = vrot.lane.b32.xlu0 %v10316, 32
    %v10340 = vpop.permute.xlu0 %10339
    %10341 = vrot.lane.b32.xlu0 %v10338, 32
    %v10342 = vpop.permute.xlu0 %10341
    %10345 = vst.msk [vmem:[#allocation7 + $0x3] sm:$0x1] %vm10116, %v10340
    %10346 = vst.msk [vmem:[#allocation7 + $0x7] sm:$0x1] %vm10116, %v10342
    %v10347 = vcombine.high %v10309, %v10309
    %v10348 = vcombine.high %v10331, %v10331
    %10349 = vrot.lane.b32.xlu0 %v10347, 64
    %v10350 = vpop.permute.xlu0 %10349
    %10351 = vrot.lane.b32.xlu0 %v10348, 64
    %v10352 = vpop.permute.xlu0 %10351
    %10355 = vst.msk [vmem:[#allocation7 + $0x3] sm:$0x1] %vm10129, %v10350
    %10356 = vst.msk [vmem:[#allocation7 + $0x7] sm:$0x1] %vm10129, %v10352
    %v10357 = vcombine.high %v10316, %v10316
    %v10358 = vcombine.high %v10338, %v10338
    %10359 = vrot.lane.b32.xlu0 %v10357, 96
    %v10360 = vpop.permute.xlu0 %10359
    %10361 = vrot.lane.b32.xlu0 %v10358, 96
    %v10362 = vpop.permute.xlu0 %10361
    %10365 = vst.msk [vmem:[#allocation7 + $0x3] sm:$0x1] %vm10142, %v10360
    %10366 = vst.msk [vmem:[#allocation7 + $0x7] sm:$0x1] %vm10142, %v10362
    %v10367 = vld [vmem:[#allocation7] sm:$0xf]
    %v10368 = vld [vmem:[#allocation7 + $0x4] sm:$0xf]
    %v10369 = vld [vmem:[%s11] sm:$0xff]
    %v10370 = vld [vmem:[%s11 + $0x8] sm:$0xff]
    %v10371 = vld [vmem:[%s11 + $0x10] sm:$0xff]
    %v10372 = vld [vmem:[%s11 + $0x18] sm:$0xff]
    %v10373 = vld [vmem:[%s11 + $0x20] sm:$0xff]
    %v10374 = vld [vmem:[%s11 + $0x28] sm:$0xff]
    %v10375 = vld [vmem:[%s11 + $0x30] sm:$0xff]
    %v10376 = vld [vmem:[%s11 + $0x38] sm:$0xff]
    %v10377 = vld [vmem:[%s11 + $0x40] sm:$0xff]
    %v10378 = vld [vmem:[%s11 + $0x48] sm:$0xff]
    %v10379 = vld [vmem:[%s11 + $0x50] sm:$0xff]
    %v10380 = vld [vmem:[%s11 + $0x58] sm:$0xff]
    %v10381 = vld [vmem:[%s11 + $0x60] sm:$0xff]
    %v10382 = vld [vmem:[%s11 + $0x68] sm:$0xff]
    %v10383 = vld [vmem:[%s11 + $0x70] sm:$0xff]
    %v10384 = vld [vmem:[%s11 + $0x78] sm:$0xff]
    %v10385 = vld [vmem:[%s11 + $0x80] sm:$0xff]
    %v10386 = vld [vmem:[%s11 + $0x88] sm:$0xff]
    %v10387 = vld [vmem:[%s11 + $0x90] sm:$0xff]
    %v10388 = vld [vmem:[%s11 + $0x98] sm:$0xff]
    %v10389 = vld [vmem:[%s11 + $0xa0] sm:$0xff]
    %v10390 = vld [vmem:[%s11 + $0xa8] sm:$0xff]
    %v10391 = vld [vmem:[%s11 + $0xb0] sm:$0xff]
    %v10392 = vld [vmem:[%s11 + $0xb8] sm:$0xff]
    %v10393 = vld [vmem:[%s11 + $0xc0] sm:$0xff]
    %v10394 = vld [vmem:[%s11 + $0xc8] sm:$0xff]
    %v10395 = vld [vmem:[%s11 + $0xd0] sm:$0xff]
    %v10396 = vld [vmem:[%s11 + $0xd8] sm:$0xff]
    %v10397 = vld [vmem:[%s11 + $0xe0] sm:$0xff]
    %v10398 = vld [vmem:[%s11 + $0xe8] sm:$0xff]
    %v10399 = vld [vmem:[%s11 + $0xf0] sm:$0xff]
    %v10400 = vld [vmem:[%s11 + $0xf8] sm:$0xff]
    %v10401 = vld [vmem:[%s11 + $0x100] sm:$0xff]
    %v10402 = vld [vmem:[%s11 + $0x108] sm:$0xff]
    %v10403 = vld [vmem:[%s11 + $0x110] sm:$0xff]
    %v10404 = vld [vmem:[%s11 + $0x118] sm:$0xff]
    %v10405 = vld [vmem:[%s11 + $0x120] sm:$0xff]
    %v10406 = vld [vmem:[%s11 + $0x128] sm:$0xff]
    %v10407 = vld [vmem:[%s11 + $0x130] sm:$0xff]
    %v10408 = vld [vmem:[%s11 + $0x138] sm:$0xff]
    %v10409 = vld [vmem:[%s11 + $0x140] sm:$0xff]
    %v10410 = vld [vmem:[%s11 + $0x148] sm:$0xff]
    %v10411 = vld [vmem:[%s11 + $0x150] sm:$0xff]
    %v10412 = vld [vmem:[%s11 + $0x158] sm:$0xff]
    %v10413 = vld [vmem:[%s11 + $0x160] sm:$0xff]
    %v10414 = vld [vmem:[%s11 + $0x168] sm:$0xff]
    %v10415 = vld [vmem:[%s11 + $0x170] sm:$0xff]
    %v10416 = vld [vmem:[%s11 + $0x178] sm:$0xff]
    %v10417 = vld [vmem:[%s11 + $0x180] sm:$0xff]
    %v10418 = vld [vmem:[%s11 + $0x188] sm:$0xff]
    %v10419 = vld [vmem:[%s11 + $0x190] sm:$0xff]
    %v10420 = vld [vmem:[%s11 + $0x198] sm:$0xff]
    %v10421 = vld [vmem:[%s11 + $0x1a0] sm:$0xff]
    %v10422 = vld [vmem:[%s11 + $0x1a8] sm:$0xff]
    %v10423 = vld [vmem:[%s11 + $0x1b0] sm:$0xff]
    %v10424 = vld [vmem:[%s11 + $0x1b8] sm:$0xff]
    %v10425 = vld [vmem:[%s11 + $0x1c0] sm:$0xff]
    %v10426 = vld [vmem:[%s11 + $0x1c8] sm:$0xff]
    %v10427 = vld [vmem:[%s11 + $0x1d0] sm:$0xff]
    %v10428 = vld [vmem:[%s11 + $0x1d8] sm:$0xff]
    %v10429 = vld [vmem:[%s11 + $0x1e0] sm:$0xff]
    %v10430 = vld [vmem:[%s11 + $0x1e8] sm:$0xff]
    %v10431 = vld [vmem:[%s11 + $0x1f0] sm:$0xff]
    %v10432 = vld [vmem:[%s11 + $0x1f8] sm:$0xff]
    %v10433 = vld [vmem:[%s12] sm:$0x1]
    %v10435 = vlaneseq
    %v10436 = vshrl.u32 %v10435, 7
    %v10437 = vsub.s32 0, %v10436
    %v10438 = vrot.slane %v10433, %v10437
    %v10442 = vcombine.low %v10367, %v10368
    %v10444 = vunpack.c.l.s4 1966171168
    %v10445 = vunpack.c.0.s8 %v10444
    %v10446 = vlaneseq
    %v10447 = vshrl.u32 %v10446, 7
    %v10448 = vsub.s32 %v10445, %v10447
    %v10449 = vrot.slane %v10442, %v10448
    %v10450 = vcombine.high %v10449, %v10449
    %v10452 = vunpack.c.l.s4 1966171168
    %v10453 = vunpack.c.0.s8 %v10452
    %v10454 = vlaneseq
    %v10455 = vshrl.u32 %v10454, 7
    %v10456 = vsub.s32 %v10453, %v10455
    %v10457 = vrot.slane %v10449, %v10456
    %v10459 = vunpack.c.l.s4 1966171168
    %v10460 = vunpack.c.0.s8 %v10459
    %v10461 = vlaneseq
    %v10462 = vshrl.u32 %v10461, 7
    %v10463 = vsub.s32 %v10460, %v10462
    %v10464 = vrot.slane %v10450, %v10463
    %v10465 = vcombine.high %v10457, %v10457
    %v10466 = vcombine.high %v10464, %v10464
    %10471 = vmatprep.subr.mxu0 0.0
    %10472 = vmatpush1.msra.mxu0 %v10369
    %10473 = vmatprep.subr.mxu0 0.0
    %10474 = vmatpush1.msra.mxu0 %v10370
    %10475 = vmatprep.subr.mxu0 0.0
    %10476 = vmatpush1.msra.mxu0 %v10371
    %10477 = vmatprep.subr.mxu0 0.0
    %10478 = vmatpush1.msra.mxu0 %v10372
    %10479 = vmatprep.subr.mxu0 0.0
    %10480 = vmatpush1.msra.mxu0 %v10373
    %10481 = vmatprep.subr.mxu0 0.0
    %10482 = vmatpush1.msra.mxu0 %v10374
    %10483 = vmatprep.subr.mxu0 0.0
    %10484 = vmatpush1.msra.mxu0 %v10375
    %10485 = vmatprep.subr.mxu0 0.0
    %10486 = vmatpush1.msra.mxu0 %v10376
    %10487 = vmatprep.subr.mxu0 0.0
    %10488 = vmatpush1.msra.mxu0 %v10377
    %10489 = vmatprep.subr.mxu0 0.0
    %10490 = vmatpush1.msra.mxu0 %v10378
    %10491 = vmatprep.subr.mxu0 0.0
    %10492 = vmatpush1.msra.mxu0 %v10379
    %10493 = vmatprep.subr.mxu0 0.0
    %10494 = vmatpush1.msra.mxu0 %v10380
    %10495 = vmatprep.subr.mxu0 0.0
    %10496 = vmatpush1.msra.mxu0 %v10381
    %10497 = vmatprep.subr.mxu0 0.0
    %10498 = vmatpush1.msra.mxu0 %v10382
    %10499 = vmatprep.subr.mxu0 0.0
    %10500 = vmatpush1.msra.mxu0 %v10383
    %10501 = vmatprep.subr.mxu0 0.0
    %10502 = vmatpush1.msra.mxu0 %v10384
    %10503 = vmatprep.subr.mxu0 0.0
    %10504 = vmatpush1.msra.mxu0 %v10385
    %10505 = vmatprep.subr.mxu0 0.0
    %10506 = vmatpush1.msra.mxu0 %v10386
    %10507 = vmatprep.subr.mxu0 0.0
    %10508 = vmatpush1.msra.mxu0 %v10387
    %10509 = vmatprep.subr.mxu0 0.0
    %10510 = vmatpush1.msra.mxu0 %v10388
    %10511 = vmatprep.subr.mxu0 0.0
    %10512 = vmatpush1.msra.mxu0 %v10389
    %10513 = vmatprep.subr.mxu0 0.0
    %10514 = vmatpush1.msra.mxu0 %v10390
    %10515 = vmatprep.subr.mxu0 0.0
    %10516 = vmatpush1.msra.mxu0 %v10391
    %10517 = vmatprep.subr.mxu0 0.0
    %10518 = vmatpush1.msra.mxu0 %v10392
    %10519 = vmatprep.subr.mxu0 0.0
    %10520 = vmatpush1.msra.mxu0 %v10393
    %10521 = vmatprep.subr.mxu0 0.0
    %10522 = vmatpush1.msra.mxu0 %v10394
    %10523 = vmatprep.subr.mxu0 0.0
    %10524 = vmatpush1.msra.mxu0 %v10395
    %10525 = vmatprep.subr.mxu0 0.0
    %10526 = vmatpush1.msra.mxu0 %v10396
    %10527 = vmatprep.subr.mxu0 0.0
    %10528 = vmatpush1.msra.mxu0 %v10397
    %10529 = vmatprep.subr.mxu0 0.0
    %10530 = vmatpush1.msra.mxu0 %v10398
    %10531 = vmatprep.subr.mxu0 0.0
    %10532 = vmatpush1.msra.mxu0 %v10399
    %10533 = vmatprep.subr.mxu0 0.0
    %10534 = vmatpush1.msra.mxu0 %v10400
    %10535 = vmatprep.mubr.f32.mxu0 %v10464
    %10536 = vmatmul.mubr.f32.gmra.mrb[0].mxu0 %v10457
    %v10537 = vpop.f32.mrb[0].mxu0
    %v10538 = vadd.f32 %v10438, %v10537
    %v10539 = vpop.f32.mrb[0].mxu0
    %10540 = vdwg.mxu0
    %10541 = vmatprep.subr.mxu0 0.0
    %10542 = vmatpush1.msra.mxu0 %v10401
    %10543 = vmatprep.subr.mxu0 0.0
    %10544 = vmatpush1.msra.mxu0 %v10402
    %10545 = vmatprep.subr.mxu0 0.0
    %10546 = vmatpush1.msra.mxu0 %v10403
    %10547 = vmatprep.subr.mxu0 0.0
    %10548 = vmatpush1.msra.mxu0 %v10404
    %10549 = vmatprep.subr.mxu0 0.0
    %10550 = vmatpush1.msra.mxu0 %v10405
    %10551 = vmatprep.subr.mxu0 0.0
    %10552 = vmatpush1.msra.mxu0 %v10406
    %10553 = vmatprep.subr.mxu0 0.0
    %10554 = vmatpush1.msra.mxu0 %v10407
    %10555 = vmatprep.subr.mxu0 0.0
    %10556 = vmatpush1.msra.mxu0 %v10408
    %10557 = vmatprep.subr.mxu0 0.0
    %10558 = vmatpush1.msra.mxu0 %v10409
    %10559 = vmatprep.subr.mxu0 0.0
    %10560 = vmatpush1.msra.mxu0 %v10410
    %10561 = vmatprep.subr.mxu0 0.0
    %10562 = vmatpush1.msra.mxu0 %v10411
    %10563 = vmatprep.subr.mxu0 0.0
    %10564 = vmatpush1.msra.mxu0 %v10412
    %10565 = vmatprep.subr.mxu0 0.0
    %10566 = vmatpush1.msra.mxu0 %v10413
    %10567 = vmatprep.subr.mxu0 0.0
    %10568 = vmatpush1.msra.mxu0 %v10414
    %10569 = vmatprep.subr.mxu0 0.0
    %10570 = vmatpush1.msra.mxu0 %v10415
    %10571 = vmatprep.subr.mxu0 0.0
    %10572 = vmatpush1.msra.mxu0 %v10416
    %10573 = vmatprep.subr.mxu0 0.0
    %10574 = vmatpush1.msra.mxu0 %v10417
    %10575 = vmatprep.subr.mxu0 0.0
    %10576 = vmatpush1.msra.mxu0 %v10418
    %10577 = vmatprep.subr.mxu0 0.0
    %10578 = vmatpush1.msra.mxu0 %v10419
    %10579 = vmatprep.subr.mxu0 0.0
    %10580 = vmatpush1.msra.mxu0 %v10420
    %10581 = vmatprep.subr.mxu0 0.0
    %10582 = vmatpush1.msra.mxu0 %v10421
    %10583 = vmatprep.subr.mxu0 0.0
    %10584 = vmatpush1.msra.mxu0 %v10422
    %10585 = vmatprep.subr.mxu0 0.0
    %10586 = vmatpush1.msra.mxu0 %v10423
    %10587 = vmatprep.subr.mxu0 0.0
    %10588 = vmatpush1.msra.mxu0 %v10424
    %10589 = vmatprep.subr.mxu0 0.0
    %10590 = vmatpush1.msra.mxu0 %v10425
    %10591 = vmatprep.subr.mxu0 0.0
    %10592 = vmatpush1.msra.mxu0 %v10426
    %10593 = vmatprep.subr.mxu0 0.0
    %10594 = vmatpush1.msra.mxu0 %v10427
    %10595 = vmatprep.subr.mxu0 0.0
    %10596 = vmatpush1.msra.mxu0 %v10428
    %10597 = vmatprep.subr.mxu0 0.0
    %10598 = vmatpush1.msra.mxu0 %v10429
    %10599 = vmatprep.subr.mxu0 0.0
    %10600 = vmatpush1.msra.mxu0 %v10430
    %10601 = vmatprep.subr.mxu0 0.0
    %10602 = vmatpush1.msra.mxu0 %v10431
    %10603 = vmatprep.subr.mxu0 0.0
    %10604 = vmatpush1.msra.mxu0 %v10432
    %10605 = vmatprep.mubr.f32.mxu0 %v10466
    %10606 = vmatmul.mubr.f32.gmra.mrb[0].mxu0 %v10465
    %v10607 = vpop.f32.mrb[0].mxu0
    %v10608 = vadd.f32 %v10538, %v10607
    %v10609 = vpop.f32.mrb[0].mxu0
    %10610 = vdwg.mxu0
    %vm10611 = vcmask 9216
    %10612 = vst.msk [vmem:[#allocation8] sm:$0x3] %vm10611, %v10608
    %v10613 = vmax.f32 %v10608, 0.0
    %v10614 = vand.u32 2147483647, %v10608
    %v10615 = vsub.f32 0.0, %v10614
    %v10616 = vmul.f32 %v10615, 1.442695
    %v10617 = vpow.pop %v10616
    %v10618 = vadd.f32 %v10617, 1.0
    %v10619 = vlog2.pop %v10618
    %v10620 = vmul.f32 %v10619, 0.6931472
    %v10621 = vadd.f32 %v10613, %v10620
    %10623 = vrot.lane.b32.xlu0 %v10621, 126
    %v10624 = vpop.permute.xlu0 %10623
    %10626 = vst.msk [vmem:[#allocation10] sm:$0x3] %vm10611, %v10624
    // Predicated region
    $region54: #{conv_encoder_forward.1} parent=1 // pred_check
      _
    $region55: #{conv_encoder_forward.1} parent=1 // pred_check_branch
      %10628 = sbr.rel (0) target = $region57
    $region56: #{conv_encoder_forward.1} parent=1 // pred_region
      %s10630 = ssub.s32 32, 32
      %10631 = vsyncadd [#allocation9], %s10630
      %s10633 = sshll.u32 [#allocation8], 4
      %s10634 = int_to_ptr.vmem [resolvable:$true] %s10633
      %10636 = dma.vmem_to_hbm [thread:$0]  %s10634, 32, %s13, [#allocation9]
    $region57: #{conv_encoder_forward.1} parent=1 // pred_fallthru
      _
    // Predicated region
    $region58: #{conv_encoder_forward.1} parent=1 // pred_check
      _
    $region59: #{conv_encoder_forward.1} parent=1 // pred_check_branch
      %10638 = sbr.rel (0) target = $region61
    $region60: #{conv_encoder_forward.1} parent=1 // pred_region
      %s10640 = ssub.s32 32, 32
      %10641 = vsyncadd [#allocation11], %s10640
      %s10643 = sshll.u32 [#allocation10], 4
      %s10644 = int_to_ptr.vmem [resolvable:$true] %s10643
      %10646 = dma.vmem_to_hbm [thread:$0]  %s10644, 32, %s14, [#allocation11]
    $region61: #{conv_encoder_forward.1} parent=1 // pred_fallthru
      _
    // Predicated region
    $region62: #{conv_encoder_forward.1} parent=1 // pred_check
      _
    $region63: #{conv_encoder_forward.1} parent=1 // pred_check_branch
      %10648 = sbr.rel (0) target = $region65
    $region64: #{conv_encoder_forward.1} parent=1 // pred_region
      %10649 = dma.done [#allocation9], 32
    $region65: #{conv_encoder_forward.1} parent=1 // pred_fallthru
      _
    // Predicated region
    $region66: #{conv_encoder_forward.1} parent=1 // pred_check
      _
    $region67: #{conv_encoder_forward.1} parent=1 // pred_check_branch
      %10651 = sbr.rel (0) target = $region69
    $region68: #{conv_encoder_forward.1} parent=1 // pred_region
      %10652 = dma.done [#allocation11], 32
    $region69: #{conv_encoder_forward.1} parent=1 // pred_fallthru
      _
    %10653 = vsyncpa [#allocation9], 1
    %10654 = vsyncpa [#allocation11], 1

</llo_original>
